<compile_context>
chip_gen: v7x
topology: tpu7x:2x2x1
jax: 0.10.0
libtpu: 0.0.40
codegen_flags: <defaults>
</compile_context>

<pallas_src>
import math
import functools

import jax
import jax.numpy as jnp
from jax.experimental import pallas as pl
from jax.experimental.pallas import tpu as pltpu


# ------------------------------------------------------------------ kernel ---
def _attn_ae_kernel(x_ref, w_qkv_ref, b_qkv_ref, wo_ref, bo_ref, out_ref, *,
                    num_heads, head_dim, block_b, seq_len, d_model):
    Bt, L, D, H, hd = block_b, seq_len, d_model, num_heads, head_dim
    M = x_ref.shape[-1]
    N = Bt * L

    # Fused (dense_shape + input bias + positional encoding + in_proj) projection:
    #   qkv = x @ (w_in @ w_qkv) + ((pe + b_in) @ w_qkv + b_qkv)
    # The 1/sqrt(head_dim) softmax scale is pre-folded into the Q columns/bias.
    x = x_ref[...].reshape(N, M).astype(jnp.bfloat16)                      # (N, M)
    qkv = jnp.dot(x, w_qkv_ref[...],
                  preferred_element_type=jnp.float32)                      # (N, 3D) f32
    qkv = qkv.reshape(Bt, L, 3 * D) + b_qkv_ref[...][None]                 # + (L, 3D) bias

    q = qkv[:, :, :D].astype(jnp.bfloat16)                                 # (Bt, L, D)
    k = qkv[:, :, D:2 * D].astype(jnp.bfloat16)
    v = qkv[:, :, 2 * D:].astype(jnp.bfloat16)

    wo = wo_ref[...]                                                       # (D, D) bf16

    # Per-head attention; each head's context is accumulated straight into the
    # output projection (no lane-axis concatenation of head outputs).
    y = jnp.zeros((N, D), jnp.float32)
    for hi in range(H):
        sl = slice(hi * hd, (hi + 1) * hd)
        qh, kh, vh = q[:, :, sl], k[:, :, sl], v[:, :, sl]                 # (Bt, L, hd)

        s = jnp.einsum("bqd,bkd->bqk", qh, kh,
                       preferred_element_type=jnp.float32)                 # (Bt, L, L)
        s = s - jnp.max(s, axis=-1, keepdims=True)
        p = jnp.exp(s)
        # approx reciprocal (EUP): ~1e-3 relative error, acceptable for inference.
        p = p * pl.reciprocal(jnp.sum(p, axis=-1, keepdims=True), approx=True)

        oh = jnp.einsum("bqk,bkd->bqd", p.astype(vh.dtype), vh,
                        preferred_element_type=jnp.float32)                # (Bt, L, hd)
        # y += o_h @ wo[hd rows of this head]  (contraction-16 MXU push, MXU is idle)
        y = y + jnp.dot(oh.reshape(N, hd).astype(wo.dtype), wo[sl, :],
                        preferred_element_type=jnp.float32)

    y = (y + bo_ref[...]).reshape(Bt, L, D)
    out_ref[...] = y.astype(out_ref.dtype)                                 # bf16 store
    # NOTE: final_layer=False (module default), so no last_layer Linear here.


# ----------------------------------------------------------------- wrapper ---
def _choose_block_b(B, L, target_rows=512):
    """Pick batch-elements per grid step: ~target_rows flattened rows per step,
    but keep at least two grid steps (megacore / v7x 2-TC) when the batch allows."""
    bb = max(1, target_rows // max(L, 1))
    if bb >= B:
        bb = max(1, (B + 1) // 2) if B > 1 else B
    return bb


def multi_attn_head_ae(x, kp, num_heads, block_b=None):
    B, L, M = x.shape
    D = kp["wo"].shape[0]
    head_dim = D // num_heads
    assert head_dim * num_heads == D

    Bt = _choose_block_b(B, L) if block_b is None else block_b
    Bp = -(-B // Bt) * Bt                       # pad batch up to multiple of Bt
    if Bp != B:
        x = jnp.pad(x, ((0, Bp - B), (0, 0), (0, 0)))
    grid = (Bp // Bt,)

    kernel = functools.partial(
        _attn_ae_kernel, num_heads=num_heads, head_dim=head_dim,
        block_b=Bt, seq_len=L, d_model=D)

    def rep(shape):  # replicated (grid-invariant) operand
        return pl.BlockSpec(shape, lambda b: (0,) * len(shape))

    grid_spec = pltpu.PrefetchScalarGridSpec(
        num_scalar_prefetch=0,
        grid=grid,
        in_specs=[
            pl.BlockSpec((Bt, L, M), lambda b: (b, 0, 0)),   # x (f32, cast in-kernel)
            rep((M, 3 * D)),                                 # fused qkv weight (bf16)
            rep((L, 3 * D)),                                 # fused pe/bias    (f32)
            rep((D, D)),                                     # wo (bf16)
            rep((1, D)),                                     # bo (f32)
        ],
        out_specs=pl.BlockSpec((Bt, L, D), lambda b: (b, 0, 0)),
    )

    flops = (2 * Bp * L * M * 3 * D                          # fused QKV projection
             + 4 * Bp * num_heads * L * L * head_dim         # scores + context
             + 2 * Bp * L * D * D)                           # output projection
    bytes_accessed = (4 * Bp * L * M                         # x (f32)
                      + 2 * (M * 3 * D + D * D)              # bf16 weights
                      + 4 * (L * 3 * D + D)                  # f32 biases
                      + 2 * Bp * L * D)                      # bf16 output
    cost = pl.CostEstimate(flops=flops,
                           transcendentals=Bp * num_heads * L * L,
                           bytes_accessed=bytes_accessed)

    out = pl.pallas_call(
        kernel,
        out_shape=jax.ShapeDtypeStruct((Bp, L, D), jnp.bfloat16),
        grid_spec=grid_spec,
        compiler_params=pltpu.CompilerParams(
            dimension_semantics=("parallel",),
            vmem_limit_bytes=16 * 1024 * 1024),
        cost_estimate=cost,
    )(x, kp["w_qkv"], kp["b_qkv"], kp["wo"], kp["bo"])

    return out[:B]


# -------------------------------------------------------- params / helpers ---
def sinusoidal_pe(L, D):
    position = jnp.arange(L, dtype=jnp.float32)[:, None]              # (L, 1)
    div_term = jnp.exp(jnp.arange(0, D, 2, dtype=jnp.float32)
                       * (-math.log(10000.0) / D))                    # (D//2,)
    ang = position * div_term                                         # (L, D//2)
    pe = jnp.zeros((L, D), dtype=jnp.float32)
    pe = pe.at[:, 0::2].set(jnp.sin(ang))
    pe = pe.at[:, 1::2].set(jnp.cos(ang))
    return pe


def init_params(key, M, D, L):
    ks = jax.random.split(key, 10)
    s = 0.1
    return {
        "w_in": s * jax.random.normal(ks[0], (M, D), jnp.float32),
        "b_in": s * jax.random.normal(ks[1], (1, D), jnp.float32),
        "wq":   s * jax.random.normal(ks[2], (D, D), jnp.float32),
        "bq":   s * jax.random.normal(ks[3], (1, D), jnp.float32),
        "wk":   s * jax.random.normal(ks[4], (D, D), jnp.float32),
        "bk":   s * jax.random.normal(ks[5], (1, D), jnp.float32),
        "wv":   s * jax.random.normal(ks[6], (D, D), jnp.float32),
        "bv":   s * jax.random.normal(ks[7], (1, D), jnp.float32),
        "wo":   s * jax.random.normal(ks[8], (D, D), jnp.float32),
        "bo":   s * jax.random.normal(ks[9], (1, D), jnp.float32),
        "pe":   sinusoidal_pe(L, D),
    }


def prepare_kernel_params(params, num_heads):
    """One-time host-side transform (block_b independent):
    fold dense_shape + input bias + PE + softmax scale into a single fused QKV
    projection, cast MXU weights to bf16."""
    D = params["w_in"].shape[1]
    head_dim = D // num_heads
    scale = 1.0 / math.sqrt(head_dim)

    w_qkv = jnp.concatenate(
        [params["wq"] * scale, params["wk"], params["wv"]], axis=1)   # (D, 3D)
    b_qkv = jnp.concatenate(
        [params["bq"] * scale, params["bk"], params["bv"]], axis=1)   # (1, 3D)

    w_fused = params["w_in"] @ w_qkv                                  # (M, 3D)
    b_fused = (params["pe"] + params["b_in"]) @ w_qkv + b_qkv         # (L, 3D)

    return {
        "w_qkv": w_fused.astype(jnp.bfloat16),
        "b_qkv": b_fused.astype(jnp.float32),
        "wo":    params["wo"].astype(jnp.bfloat16),
        "bo":    params["bo"].astype(jnp.float32),
    }


def ref_forward(x, params, num_heads):
    """Pure-JAX f32 reference mirroring the PyTorch forward (eval mode)."""
    B, L, M = x.shape
    D = params["w_in"].shape[1]
    hd = D // num_heads

    h = x @ params["w_in"] + params["b_in"] + params["pe"][None]
    q = h @ params["wq"] + params["bq"]
    k = h @ params["wk"] + params["bk"]
    v = h @ params["wv"] + params["bv"]

    def split(t):
        return t.reshape(B, L, num_heads, hd).transpose(0, 2, 1, 3)
    qh, kh, vh = split(q), split(k), split(v)

    s = jnp.einsum("bhld,bhmd->bhlm", qh, kh) / math.sqrt(hd)
    p = jax.nn.softmax(s, axis=-1)
    o = jnp.einsum("bhlm,bhmd->bhld", p, vh)
    o = o.transpose(0, 2, 1, 3).reshape(B, L, D)
    return o @ params["wo"] + params["bo"]


# -------------------------------------------------------------------- main ---
if __name__ == "__main__":
    B, L, M = 16, 8, 4         # batch, sequence length, number_time_series
    D, H = 128, 8              # module defaults: d_model=128, num_heads=8 (head_dim=16)

    key = jax.random.PRNGKey(0)
    kx, kparam = jax.random.split(key)
    x = jax.random.normal(kx, (B, L, M), jnp.float32)
    params = init_params(kparam, M, D, L)
    kparams = prepare_kernel_params(params, H)

    out = multi_attn_head_ae(x, kparams, num_heads=H)   # block_b auto -> 8, grid=(2,)
    out = jax.block_until_ready(out)

    ref = ref_forward(x, params, num_heads=H)
    assert out.shape == (B, L, D), out.shape
    # Relative check (bf16 MXU inputs + bf16 output store + approx reciprocal vs f32 ref).
    rel_err = float(jnp.max(jnp.abs(out.astype(jnp.float32) - ref))
                    / jnp.max(jnp.abs(ref)))
    assert rel_err < 3e-2, rel_err

    print("KERNEL_OK")
</pallas_src>

<mosaic_0001>
module attributes {stable_mosaic.version = 11 : i64} {
  func.func @_attn_ae_kernel(%arg0: i32, %arg1: memref<8x8x4xf32, #tpu.memory_space<vmem>>, %arg2: memref<4x384xbf16, #tpu.memory_space<vmem>>, %arg3: memref<8x384xf32, #tpu.memory_space<vmem>>, %arg4: memref<128x128xbf16, #tpu.memory_space<vmem>>, %arg5: memref<1x128xf32, #tpu.memory_space<vmem>>, %arg6: memref<8x8x128xbf16, #tpu.memory_space<vmem>>) attributes {dimension_semantics = [#tpu.dimension_semantics<parallel>], iteration_bounds = array<i64: 2>, scalar_prefetch = 0 : i64, scratch_operands = 0 : i64, tpu.core_type = #tpu.core_type<tc>, window_params = [{transform_indices = @transform_0, window_bounds = array<i64: 8, 8, 4>}, {pipeline_mode = #tpu.pipeline_mode<synchronous>, transform_indices = @transform_1, window_bounds = array<i64: 4, 384>}, {pipeline_mode = #tpu.pipeline_mode<synchronous>, transform_indices = @transform_2, window_bounds = array<i64: 8, 384>}, {pipeline_mode = #tpu.pipeline_mode<synchronous>, transform_indices = @transform_3, window_bounds = array<i64: 128, 128>}, {pipeline_mode = #tpu.pipeline_mode<synchronous>, transform_indices = @transform_4, window_bounds = array<i64: 1, 128>}, {transform_indices = @transform_5, window_bounds = array<i64: 8, 8, 128>}]} {
    %c0 = arith.constant 0 : index
    %c0_0 = arith.constant 0 : index
    %c0_1 = arith.constant 0 : index
    %0 = vector.load %arg1[%c0, %c0_0, %c0_1] : memref<8x8x4xf32, #tpu.memory_space<vmem>>, vector<8x8x4xf32>
    %1 = vector.shape_cast %0 : vector<8x8x4xf32> to vector<64x4xf32>
    %2 = arith.truncf %1 : vector<64x4xf32> to vector<64x4xbf16>
    %c0_2 = arith.constant 0 : index
    %c0_3 = arith.constant 0 : index
    %3 = vector.load %arg2[%c0_2, %c0_3] : memref<4x384xbf16, #tpu.memory_space<vmem>>, vector<4x384xbf16>
    %cst = arith.constant dense<0.000000e+00> : vector<64x384xf32>
    %4 = tpu.matmul %2, %3, %cst {dimension_numbers = #tpu.dot_dimension_numbers<[1], [0], [0], [1], [0, 0, 1, 1], [], []>} : vector<64x4xbf16>, vector<4x384xbf16>, vector<64x384xf32> -> vector<64x384xf32>
    %5 = vector.shape_cast %4 : vector<64x384xf32> to vector<8x8x384xf32>
    %c0_4 = arith.constant 0 : index
    %c0_5 = arith.constant 0 : index
    %6 = vector.load %arg3[%c0_4, %c0_5] : memref<8x384xf32, #tpu.memory_space<vmem>>, vector<8x384xf32>
    %7 = vector.shape_cast %6 : vector<8x384xf32> to vector<1x8x384xf32>
    %8 = vector.broadcast %7 : vector<1x8x384xf32> to vector<8x8x384xf32>
    %9 = arith.addf %5, %8 : vector<8x8x384xf32>
    %10 = vector.extract_strided_slice %9 {offsets = [0, 0, 0], sizes = [8, 8, 128], strides = [1, 1, 1]} : vector<8x8x384xf32> to vector<8x8x128xf32>
    %11 = arith.truncf %10 : vector<8x8x128xf32> to vector<8x8x128xbf16>
    %12 = vector.extract_strided_slice %9 {offsets = [0, 0, 128], sizes = [8, 8, 128], strides = [1, 1, 1]} : vector<8x8x384xf32> to vector<8x8x128xf32>
    %13 = arith.truncf %12 : vector<8x8x128xf32> to vector<8x8x128xbf16>
    %14 = vector.extract_strided_slice %9 {offsets = [0, 0, 256], sizes = [8, 8, 128], strides = [1, 1, 1]} : vector<8x8x384xf32> to vector<8x8x128xf32>
    %15 = arith.truncf %14 : vector<8x8x128xf32> to vector<8x8x128xbf16>
    %c0_6 = arith.constant 0 : index
    %c0_7 = arith.constant 0 : index
    %16 = vector.load %arg4[%c0_6, %c0_7] : memref<128x128xbf16, #tpu.memory_space<vmem>>, vector<128x128xbf16>
    %cst_8 = arith.constant 0.000000e+00 : f32
    %17 = vector.broadcast %cst_8 : f32 to vector<64x128xf32>
    %18 = vector.extract_strided_slice %11 {offsets = [0, 0, 0], sizes = [8, 8, 16], strides = [1, 1, 1]} : vector<8x8x128xbf16> to vector<8x8x16xbf16>
    %19 = vector.extract_strided_slice %13 {offsets = [0, 0, 0], sizes = [8, 8, 16], strides = [1, 1, 1]} : vector<8x8x128xbf16> to vector<8x8x16xbf16>
    %20 = vector.extract_strided_slice %15 {offsets = [0, 0, 0], sizes = [8, 8, 16], strides = [1, 1, 1]} : vector<8x8x128xbf16> to vector<8x8x16xbf16>
    "tpu.trace_start"() <{level = 10 : i32, message = "bqd,bkd->bqk"}> : () -> ()
    %cst_9 = arith.constant dense<0.000000e+00> : vector<8x8x8xf32>
    %21 = tpu.matmul %18, %19, %cst_9 {dimension_numbers = #tpu.dot_dimension_numbers<[2], [2], [1], [1], [0, 0, 0, 1, 1, 1], [0], [0]>} : vector<8x8x16xbf16>, vector<8x8x16xbf16>, vector<8x8x8xf32> -> vector<8x8x8xf32>
    "tpu.trace_stop"() : () -> ()
    %cst_10 = arith.constant dense<0xFF800000> : vector<8x8xf32>
    %22 = vector.multi_reduction <maximumf>, %21, %cst_10 [2] : vector<8x8x8xf32> to vector<8x8xf32>
    %23 = vector.shape_cast %22 : vector<8x8xf32> to vector<8x8x1xf32>
    %24 = vector.broadcast %23 : vector<8x8x1xf32> to vector<8x8x8xf32>
    %25 = arith.subf %21, %24 : vector<8x8x8xf32>
    %26 = math.exp %25 : vector<8x8x8xf32>
    %cst_11 = arith.constant dense<0.000000e+00> : vector<8x8xf32>
    %27 = vector.multi_reduction <add>, %26, %cst_11 [2] : vector<8x8x8xf32> to vector<8x8xf32>
    %28 = vector.shape_cast %27 : vector<8x8xf32> to vector<8x8x1xf32>
    %29 = tpu.reciprocal %28 {approx = true} : vector<8x8x1xf32> -> vector<8x8x1xf32>
    %30 = vector.broadcast %29 : vector<8x8x1xf32> to vector<8x8x8xf32>
    %31 = arith.mulf %26, %30 : vector<8x8x8xf32>
    %32 = arith.truncf %31 : vector<8x8x8xf32> to vector<8x8x8xbf16>
    "tpu.trace_start"() <{level = 10 : i32, message = "bqk,bkd->bqd"}> : () -> ()
    %cst_12 = arith.constant dense<0.000000e+00> : vector<8x8x16xf32>
    %33 = tpu.matmul %32, %20, %cst_12 {dimension_numbers = #tpu.dot_dimension_numbers<[2], [1], [1], [2], [0, 0, 0, 1, 1, 2], [0], [0]>} : vector<8x8x8xbf16>, vector<8x8x16xbf16>, vector<8x8x16xf32> -> vector<8x8x16xf32>
    "tpu.trace_stop"() : () -> ()
    %34 = vector.shape_cast %33 : vector<8x8x16xf32> to vector<64x16xf32>
    %35 = arith.truncf %34 : vector<64x16xf32> to vector<64x16xbf16>
    %36 = vector.extract_strided_slice %16 {offsets = [0, 0], sizes = [16, 128], strides = [1, 1]} : vector<128x128xbf16> to vector<16x128xbf16>
    %cst_13 = arith.constant dense<0.000000e+00> : vector<64x128xf32>
    %37 = tpu.matmul %35, %36, %cst_13 {dimension_numbers = #tpu.dot_dimension_numbers<[1], [0], [0], [1], [0, 0, 1, 1], [], []>} : vector<64x16xbf16>, vector<16x128xbf16>, vector<64x128xf32> -> vector<64x128xf32>
    %38 = arith.addf %17, %37 : vector<64x128xf32>
    %39 = vector.extract_strided_slice %11 {offsets = [0, 0, 16], sizes = [8, 8, 16], strides = [1, 1, 1]} : vector<8x8x128xbf16> to vector<8x8x16xbf16>
    %40 = vector.extract_strided_slice %13 {offsets = [0, 0, 16], sizes = [8, 8, 16], strides = [1, 1, 1]} : vector<8x8x128xbf16> to vector<8x8x16xbf16>
    %41 = vector.extract_strided_slice %15 {offsets = [0, 0, 16], sizes = [8, 8, 16], strides = [1, 1, 1]} : vector<8x8x128xbf16> to vector<8x8x16xbf16>
    "tpu.trace_start"() <{level = 10 : i32, message = "bqd,bkd->bqk"}> : () -> ()
    %cst_14 = arith.constant dense<0.000000e+00> : vector<8x8x8xf32>
    %42 = tpu.matmul %39, %40, %cst_14 {dimension_numbers = #tpu.dot_dimension_numbers<[2], [2], [1], [1], [0, 0, 0, 1, 1, 1], [0], [0]>} : vector<8x8x16xbf16>, vector<8x8x16xbf16>, vector<8x8x8xf32> -> vector<8x8x8xf32>
    "tpu.trace_stop"() : () -> ()
    %cst_15 = arith.constant dense<0xFF800000> : vector<8x8xf32>
    %43 = vector.multi_reduction <maximumf>, %42, %cst_15 [2] : vector<8x8x8xf32> to vector<8x8xf32>
    %44 = vector.shape_cast %43 : vector<8x8xf32> to vector<8x8x1xf32>
    %45 = vector.broadcast %44 : vector<8x8x1xf32> to vector<8x8x8xf32>
    %46 = arith.subf %42, %45 : vector<8x8x8xf32>
    %47 = math.exp %46 : vector<8x8x8xf32>
    %cst_16 = arith.constant dense<0.000000e+00> : vector<8x8xf32>
    %48 = vector.multi_reduction <add>, %47, %cst_16 [2] : vector<8x8x8xf32> to vector<8x8xf32>
    %49 = vector.shape_cast %48 : vector<8x8xf32> to vector<8x8x1xf32>
    %50 = tpu.reciprocal %49 {approx = true} : vector<8x8x1xf32> -> vector<8x8x1xf32>
    %51 = vector.broadcast %50 : vector<8x8x1xf32> to vector<8x8x8xf32>
    %52 = arith.mulf %47, %51 : vector<8x8x8xf32>
    %53 = arith.truncf %52 : vector<8x8x8xf32> to vector<8x8x8xbf16>
    "tpu.trace_start"() <{level = 10 : i32, message = "bqk,bkd->bqd"}> : () -> ()
    %cst_17 = arith.constant dense<0.000000e+00> : vector<8x8x16xf32>
    %54 = tpu.matmul %53, %41, %cst_17 {dimension_numbers = #tpu.dot_dimension_numbers<[2], [1], [1], [2], [0, 0, 0, 1, 1, 2], [0], [0]>} : vector<8x8x8xbf16>, vector<8x8x16xbf16>, vector<8x8x16xf32> -> vector<8x8x16xf32>
    "tpu.trace_stop"() : () -> ()
    %55 = vector.shape_cast %54 : vector<8x8x16xf32> to vector<64x16xf32>
    %56 = arith.truncf %55 : vector<64x16xf32> to vector<64x16xbf16>
    %57 = vector.extract_strided_slice %16 {offsets = [16, 0], sizes = [16, 128], strides = [1, 1]} : vector<128x128xbf16> to vector<16x128xbf16>
    %cst_18 = arith.constant dense<0.000000e+00> : vector<64x128xf32>
    %58 = tpu.matmul %56, %57, %cst_18 {dimension_numbers = #tpu.dot_dimension_numbers<[1], [0], [0], [1], [0, 0, 1, 1], [], []>} : vector<64x16xbf16>, vector<16x128xbf16>, vector<64x128xf32> -> vector<64x128xf32>
    %59 = arith.addf %38, %58 : vector<64x128xf32>
    %60 = vector.extract_strided_slice %11 {offsets = [0, 0, 32], sizes = [8, 8, 16], strides = [1, 1, 1]} : vector<8x8x128xbf16> to vector<8x8x16xbf16>
    %61 = vector.extract_strided_slice %13 {offsets = [0, 0, 32], sizes = [8, 8, 16], strides = [1, 1, 1]} : vector<8x8x128xbf16> to vector<8x8x16xbf16>
    %62 = vector.extract_strided_slice %15 {offsets = [0, 0, 32], sizes = [8, 8, 16], strides = [1, 1, 1]} : vector<8x8x128xbf16> to vector<8x8x16xbf16>
    "tpu.trace_start"() <{level = 10 : i32, message = "bqd,bkd->bqk"}> : () -> ()
    %cst_19 = arith.constant dense<0.000000e+00> : vector<8x8x8xf32>
    %63 = tpu.matmul %60, %61, %cst_19 {dimension_numbers = #tpu.dot_dimension_numbers<[2], [2], [1], [1], [0, 0, 0, 1, 1, 1], [0], [0]>} : vector<8x8x16xbf16>, vector<8x8x16xbf16>, vector<8x8x8xf32> -> vector<8x8x8xf32>
    "tpu.trace_stop"() : () -> ()
    %cst_20 = arith.constant dense<0xFF800000> : vector<8x8xf32>
    %64 = vector.multi_reduction <maximumf>, %63, %cst_20 [2] : vector<8x8x8xf32> to vector<8x8xf32>
    %65 = vector.shape_cast %64 : vector<8x8xf32> to vector<8x8x1xf32>
    %66 = vector.broadcast %65 : vector<8x8x1xf32> to vector<8x8x8xf32>
    %67 = arith.subf %63, %66 : vector<8x8x8xf32>
    %68 = math.exp %67 : vector<8x8x8xf32>
    %cst_21 = arith.constant dense<0.000000e+00> : vector<8x8xf32>
    %69 = vector.multi_reduction <add>, %68, %cst_21 [2] : vector<8x8x8xf32> to vector<8x8xf32>
    %70 = vector.shape_cast %69 : vector<8x8xf32> to vector<8x8x1xf32>
    %71 = tpu.reciprocal %70 {approx = true} : vector<8x8x1xf32> -> vector<8x8x1xf32>
    %72 = vector.broadcast %71 : vector<8x8x1xf32> to vector<8x8x8xf32>
    %73 = arith.mulf %68, %72 : vector<8x8x8xf32>
    %74 = arith.truncf %73 : vector<8x8x8xf32> to vector<8x8x8xbf16>
    "tpu.trace_start"() <{level = 10 : i32, message = "bqk,bkd->bqd"}> : () -> ()
    %cst_22 = arith.constant dense<0.000000e+00> : vector<8x8x16xf32>
    %75 = tpu.matmul %74, %62, %cst_22 {dimension_numbers = #tpu.dot_dimension_numbers<[2], [1], [1], [2], [0, 0, 0, 1, 1, 2], [0], [0]>} : vector<8x8x8xbf16>, vector<8x8x16xbf16>, vector<8x8x16xf32> -> vector<8x8x16xf32>
    "tpu.trace_stop"() : () -> ()
    %76 = vector.shape_cast %75 : vector<8x8x16xf32> to vector<64x16xf32>
    %77 = arith.truncf %76 : vector<64x16xf32> to vector<64x16xbf16>
    %78 = vector.extract_strided_slice %16 {offsets = [32, 0], sizes = [16, 128], strides = [1, 1]} : vector<128x128xbf16> to vector<16x128xbf16>
    %cst_23 = arith.constant dense<0.000000e+00> : vector<64x128xf32>
    %79 = tpu.matmul %77, %78, %cst_23 {dimension_numbers = #tpu.dot_dimension_numbers<[1], [0], [0], [1], [0, 0, 1, 1], [], []>} : vector<64x16xbf16>, vector<16x128xbf16>, vector<64x128xf32> -> vector<64x128xf32>
    %80 = arith.addf %59, %79 : vector<64x128xf32>
    %81 = vector.extract_strided_slice %11 {offsets = [0, 0, 48], sizes = [8, 8, 16], strides = [1, 1, 1]} : vector<8x8x128xbf16> to vector<8x8x16xbf16>
    %82 = vector.extract_strided_slice %13 {offsets = [0, 0, 48], sizes = [8, 8, 16], strides = [1, 1, 1]} : vector<8x8x128xbf16> to vector<8x8x16xbf16>
    %83 = vector.extract_strided_slice %15 {offsets = [0, 0, 48], sizes = [8, 8, 16], strides = [1, 1, 1]} : vector<8x8x128xbf16> to vector<8x8x16xbf16>
    "tpu.trace_start"() <{level = 10 : i32, message = "bqd,bkd->bqk"}> : () -> ()
    %cst_24 = arith.constant dense<0.000000e+00> : vector<8x8x8xf32>
    %84 = tpu.matmul %81, %82, %cst_24 {dimension_numbers = #tpu.dot_dimension_numbers<[2], [2], [1], [1], [0, 0, 0, 1, 1, 1], [0], [0]>} : vector<8x8x16xbf16>, vector<8x8x16xbf16>, vector<8x8x8xf32> -> vector<8x8x8xf32>
    "tpu.trace_stop"() : () -> ()
    %cst_25 = arith.constant dense<0xFF800000> : vector<8x8xf32>
    %85 = vector.multi_reduction <maximumf>, %84, %cst_25 [2] : vector<8x8x8xf32> to vector<8x8xf32>
    %86 = vector.shape_cast %85 : vector<8x8xf32> to vector<8x8x1xf32>
    %87 = vector.broadcast %86 : vector<8x8x1xf32> to vector<8x8x8xf32>
    %88 = arith.subf %84, %87 : vector<8x8x8xf32>
    %89 = math.exp %88 : vector<8x8x8xf32>
    %cst_26 = arith.constant dense<0.000000e+00> : vector<8x8xf32>
    %90 = vector.multi_reduction <add>, %89, %cst_26 [2] : vector<8x8x8xf32> to vector<8x8xf32>
    %91 = vector.shape_cast %90 : vector<8x8xf32> to vector<8x8x1xf32>
    %92 = tpu.reciprocal %91 {approx = true} : vector<8x8x1xf32> -> vector<8x8x1xf32>
    %93 = vector.broadcast %92 : vector<8x8x1xf32> to vector<8x8x8xf32>
    %94 = arith.mulf %89, %93 : vector<8x8x8xf32>
    %95 = arith.truncf %94 : vector<8x8x8xf32> to vector<8x8x8xbf16>
    "tpu.trace_start"() <{level = 10 : i32, message = "bqk,bkd->bqd"}> : () -> ()
    %cst_27 = arith.constant dense<0.000000e+00> : vector<8x8x16xf32>
    %96 = tpu.matmul %95, %83, %cst_27 {dimension_numbers = #tpu.dot_dimension_numbers<[2], [1], [1], [2], [0, 0, 0, 1, 1, 2], [0], [0]>} : vector<8x8x8xbf16>, vector<8x8x16xbf16>, vector<8x8x16xf32> -> vector<8x8x16xf32>
    "tpu.trace_stop"() : () -> ()
    %97 = vector.shape_cast %96 : vector<8x8x16xf32> to vector<64x16xf32>
    %98 = arith.truncf %97 : vector<64x16xf32> to vector<64x16xbf16>
    %99 = vector.extract_strided_slice %16 {offsets = [48, 0], sizes = [16, 128], strides = [1, 1]} : vector<128x128xbf16> to vector<16x128xbf16>
    %cst_28 = arith.constant dense<0.000000e+00> : vector<64x128xf32>
    %100 = tpu.matmul %98, %99, %cst_28 {dimension_numbers = #tpu.dot_dimension_numbers<[1], [0], [0], [1], [0, 0, 1, 1], [], []>} : vector<64x16xbf16>, vector<16x128xbf16>, vector<64x128xf32> -> vector<64x128xf32>
    %101 = arith.addf %80, %100 : vector<64x128xf32>
    %102 = vector.extract_strided_slice %11 {offsets = [0, 0, 64], sizes = [8, 8, 16], strides = [1, 1, 1]} : vector<8x8x128xbf16> to vector<8x8x16xbf16>
    %103 = vector.extract_strided_slice %13 {offsets = [0, 0, 64], sizes = [8, 8, 16], strides = [1, 1, 1]} : vector<8x8x128xbf16> to vector<8x8x16xbf16>
    %104 = vector.extract_strided_slice %15 {offsets = [0, 0, 64], sizes = [8, 8, 16], strides = [1, 1, 1]} : vector<8x8x128xbf16> to vector<8x8x16xbf16>
    "tpu.trace_start"() <{level = 10 : i32, message = "bqd,bkd->bqk"}> : () -> ()
    %cst_29 = arith.constant dense<0.000000e+00> : vector<8x8x8xf32>
    %105 = tpu.matmul %102, %103, %cst_29 {dimension_numbers = #tpu.dot_dimension_numbers<[2], [2], [1], [1], [0, 0, 0, 1, 1, 1], [0], [0]>} : vector<8x8x16xbf16>, vector<8x8x16xbf16>, vector<8x8x8xf32> -> vector<8x8x8xf32>
    "tpu.trace_stop"() : () -> ()
    %cst_30 = arith.constant dense<0xFF800000> : vector<8x8xf32>
    %106 = vector.multi_reduction <maximumf>, %105, %cst_30 [2] : vector<8x8x8xf32> to vector<8x8xf32>
    %107 = vector.shape_cast %106 : vector<8x8xf32> to vector<8x8x1xf32>
    %108 = vector.broadcast %107 : vector<8x8x1xf32> to vector<8x8x8xf32>
    %109 = arith.subf %105, %108 : vector<8x8x8xf32>
    %110 = math.exp %109 : vector<8x8x8xf32>
    %cst_31 = arith.constant dense<0.000000e+00> : vector<8x8xf32>
    %111 = vector.multi_reduction <add>, %110, %cst_31 [2] : vector<8x8x8xf32> to vector<8x8xf32>
    %112 = vector.shape_cast %111 : vector<8x8xf32> to vector<8x8x1xf32>
    %113 = tpu.reciprocal %112 {approx = true} : vector<8x8x1xf32> -> vector<8x8x1xf32>
    %114 = vector.broadcast %113 : vector<8x8x1xf32> to vector<8x8x8xf32>
    %115 = arith.mulf %110, %114 : vector<8x8x8xf32>
    %116 = arith.truncf %115 : vector<8x8x8xf32> to vector<8x8x8xbf16>
    "tpu.trace_start"() <{level = 10 : i32, message = "bqk,bkd->bqd"}> : () -> ()
    %cst_32 = arith.constant dense<0.000000e+00> : vector<8x8x16xf32>
    %117 = tpu.matmul %116, %104, %cst_32 {dimension_numbers = #tpu.dot_dimension_numbers<[2], [1], [1], [2], [0, 0, 0, 1, 1, 2], [0], [0]>} : vector<8x8x8xbf16>, vector<8x8x16xbf16>, vector<8x8x16xf32> -> vector<8x8x16xf32>
    "tpu.trace_stop"() : () -> ()
    %118 = vector.shape_cast %117 : vector<8x8x16xf32> to vector<64x16xf32>
    %119 = arith.truncf %118 : vector<64x16xf32> to vector<64x16xbf16>
    %120 = vector.extract_strided_slice %16 {offsets = [64, 0], sizes = [16, 128], strides = [1, 1]} : vector<128x128xbf16> to vector<16x128xbf16>
    %cst_33 = arith.constant dense<0.000000e+00> : vector<64x128xf32>
    %121 = tpu.matmul %119, %120, %cst_33 {dimension_numbers = #tpu.dot_dimension_numbers<[1], [0], [0], [1], [0, 0, 1, 1], [], []>} : vector<64x16xbf16>, vector<16x128xbf16>, vector<64x128xf32> -> vector<64x128xf32>
    %122 = arith.addf %101, %121 : vector<64x128xf32>
    %123 = vector.extract_strided_slice %11 {offsets = [0, 0, 80], sizes = [8, 8, 16], strides = [1, 1, 1]} : vector<8x8x128xbf16> to vector<8x8x16xbf16>
    %124 = vector.extract_strided_slice %13 {offsets = [0, 0, 80], sizes = [8, 8, 16], strides = [1, 1, 1]} : vector<8x8x128xbf16> to vector<8x8x16xbf16>
    %125 = vector.extract_strided_slice %15 {offsets = [0, 0, 80], sizes = [8, 8, 16], strides = [1, 1, 1]} : vector<8x8x128xbf16> to vector<8x8x16xbf16>
    "tpu.trace_start"() <{level = 10 : i32, message = "bqd,bkd->bqk"}> : () -> ()
    %cst_34 = arith.constant dense<0.000000e+00> : vector<8x8x8xf32>
    %126 = tpu.matmul %123, %124, %cst_34 {dimension_numbers = #tpu.dot_dimension_numbers<[2], [2], [1], [1], [0, 0, 0, 1, 1, 1], [0], [0]>} : vector<8x8x16xbf16>, vector<8x8x16xbf16>, vector<8x8x8xf32> -> vector<8x8x8xf32>
    "tpu.trace_stop"() : () -> ()
    %cst_35 = arith.constant dense<0xFF800000> : vector<8x8xf32>
    %127 = vector.multi_reduction <maximumf>, %126, %cst_35 [2] : vector<8x8x8xf32> to vector<8x8xf32>
    %128 = vector.shape_cast %127 : vector<8x8xf32> to vector<8x8x1xf32>
    %129 = vector.broadcast %128 : vector<8x8x1xf32> to vector<8x8x8xf32>
    %130 = arith.subf %126, %129 : vector<8x8x8xf32>
    %131 = math.exp %130 : vector<8x8x8xf32>
    %cst_36 = arith.constant dense<0.000000e+00> : vector<8x8xf32>
    %132 = vector.multi_reduction <add>, %131, %cst_36 [2] : vector<8x8x8xf32> to vector<8x8xf32>
    %133 = vector.shape_cast %132 : vector<8x8xf32> to vector<8x8x1xf32>
    %134 = tpu.reciprocal %133 {approx = true} : vector<8x8x1xf32> -> vector<8x8x1xf32>
    %135 = vector.broadcast %134 : vector<8x8x1xf32> to vector<8x8x8xf32>
    %136 = arith.mulf %131, %135 : vector<8x8x8xf32>
    %137 = arith.truncf %136 : vector<8x8x8xf32> to vector<8x8x8xbf16>
    "tpu.trace_start"() <{level = 10 : i32, message = "bqk,bkd->bqd"}> : () -> ()
    %cst_37 = arith.constant dense<0.000000e+00> : vector<8x8x16xf32>
    %138 = tpu.matmul %137, %125, %cst_37 {dimension_numbers = #tpu.dot_dimension_numbers<[2], [1], [1], [2], [0, 0, 0, 1, 1, 2], [0], [0]>} : vector<8x8x8xbf16>, vector<8x8x16xbf16>, vector<8x8x16xf32> -> vector<8x8x16xf32>
    "tpu.trace_stop"() : () -> ()
    %139 = vector.shape_cast %138 : vector<8x8x16xf32> to vector<64x16xf32>
    %140 = arith.truncf %139 : vector<64x16xf32> to vector<64x16xbf16>
    %141 = vector.extract_strided_slice %16 {offsets = [80, 0], sizes = [16, 128], strides = [1, 1]} : vector<128x128xbf16> to vector<16x128xbf16>
    %cst_38 = arith.constant dense<0.000000e+00> : vector<64x128xf32>
    %142 = tpu.matmul %140, %141, %cst_38 {dimension_numbers = #tpu.dot_dimension_numbers<[1], [0], [0], [1], [0, 0, 1, 1], [], []>} : vector<64x16xbf16>, vector<16x128xbf16>, vector<64x128xf32> -> vector<64x128xf32>
    %143 = arith.addf %122, %142 : vector<64x128xf32>
    %144 = vector.extract_strided_slice %11 {offsets = [0, 0, 96], sizes = [8, 8, 16], strides = [1, 1, 1]} : vector<8x8x128xbf16> to vector<8x8x16xbf16>
    %145 = vector.extract_strided_slice %13 {offsets = [0, 0, 96], sizes = [8, 8, 16], strides = [1, 1, 1]} : vector<8x8x128xbf16> to vector<8x8x16xbf16>
    %146 = vector.extract_strided_slice %15 {offsets = [0, 0, 96], sizes = [8, 8, 16], strides = [1, 1, 1]} : vector<8x8x128xbf16> to vector<8x8x16xbf16>
    "tpu.trace_start"() <{level = 10 : i32, message = "bqd,bkd->bqk"}> : () -> ()
    %cst_39 = arith.constant dense<0.000000e+00> : vector<8x8x8xf32>
    %147 = tpu.matmul %144, %145, %cst_39 {dimension_numbers = #tpu.dot_dimension_numbers<[2], [2], [1], [1], [0, 0, 0, 1, 1, 1], [0], [0]>} : vector<8x8x16xbf16>, vector<8x8x16xbf16>, vector<8x8x8xf32> -> vector<8x8x8xf32>
    "tpu.trace_stop"() : () -> ()
    %cst_40 = arith.constant dense<0xFF800000> : vector<8x8xf32>
    %148 = vector.multi_reduction <maximumf>, %147, %cst_40 [2] : vector<8x8x8xf32> to vector<8x8xf32>
    %149 = vector.shape_cast %148 : vector<8x8xf32> to vector<8x8x1xf32>
    %150 = vector.broadcast %149 : vector<8x8x1xf32> to vector<8x8x8xf32>
    %151 = arith.subf %147, %150 : vector<8x8x8xf32>
    %152 = math.exp %151 : vector<8x8x8xf32>
    %cst_41 = arith.constant dense<0.000000e+00> : vector<8x8xf32>
    %153 = vector.multi_reduction <add>, %152, %cst_41 [2] : vector<8x8x8xf32> to vector<8x8xf32>
    %154 = vector.shape_cast %153 : vector<8x8xf32> to vector<8x8x1xf32>
    %155 = tpu.reciprocal %154 {approx = true} : vector<8x8x1xf32> -> vector<8x8x1xf32>
    %156 = vector.broadcast %155 : vector<8x8x1xf32> to vector<8x8x8xf32>
    %157 = arith.mulf %152, %156 : vector<8x8x8xf32>
    %158 = arith.truncf %157 : vector<8x8x8xf32> to vector<8x8x8xbf16>
    "tpu.trace_start"() <{level = 10 : i32, message = "bqk,bkd->bqd"}> : () -> ()
    %cst_42 = arith.constant dense<0.000000e+00> : vector<8x8x16xf32>
    %159 = tpu.matmul %158, %146, %cst_42 {dimension_numbers = #tpu.dot_dimension_numbers<[2], [1], [1], [2], [0, 0, 0, 1, 1, 2], [0], [0]>} : vector<8x8x8xbf16>, vector<8x8x16xbf16>, vector<8x8x16xf32> -> vector<8x8x16xf32>
    "tpu.trace_stop"() : () -> ()
    %160 = vector.shape_cast %159 : vector<8x8x16xf32> to vector<64x16xf32>
    %161 = arith.truncf %160 : vector<64x16xf32> to vector<64x16xbf16>
    %162 = vector.extract_strided_slice %16 {offsets = [96, 0], sizes = [16, 128], strides = [1, 1]} : vector<128x128xbf16> to vector<16x128xbf16>
    %cst_43 = arith.constant dense<0.000000e+00> : vector<64x128xf32>
    %163 = tpu.matmul %161, %162, %cst_43 {dimension_numbers = #tpu.dot_dimension_numbers<[1], [0], [0], [1], [0, 0, 1, 1], [], []>} : vector<64x16xbf16>, vector<16x128xbf16>, vector<64x128xf32> -> vector<64x128xf32>
    %164 = arith.addf %143, %163 : vector<64x128xf32>
    %165 = vector.extract_strided_slice %11 {offsets = [0, 0, 112], sizes = [8, 8, 16], strides = [1, 1, 1]} : vector<8x8x128xbf16> to vector<8x8x16xbf16>
    %166 = vector.extract_strided_slice %13 {offsets = [0, 0, 112], sizes = [8, 8, 16], strides = [1, 1, 1]} : vector<8x8x128xbf16> to vector<8x8x16xbf16>
    %167 = vector.extract_strided_slice %15 {offsets = [0, 0, 112], sizes = [8, 8, 16], strides = [1, 1, 1]} : vector<8x8x128xbf16> to vector<8x8x16xbf16>
    "tpu.trace_start"() <{level = 10 : i32, message = "bqd,bkd->bqk"}> : () -> ()
    %cst_44 = arith.constant dense<0.000000e+00> : vector<8x8x8xf32>
    %168 = tpu.matmul %165, %166, %cst_44 {dimension_numbers = #tpu.dot_dimension_numbers<[2], [2], [1], [1], [0, 0, 0, 1, 1, 1], [0], [0]>} : vector<8x8x16xbf16>, vector<8x8x16xbf16>, vector<8x8x8xf32> -> vector<8x8x8xf32>
    "tpu.trace_stop"() : () -> ()
    %cst_45 = arith.constant dense<0xFF800000> : vector<8x8xf32>
    %169 = vector.multi_reduction <maximumf>, %168, %cst_45 [2] : vector<8x8x8xf32> to vector<8x8xf32>
    %170 = vector.shape_cast %169 : vector<8x8xf32> to vector<8x8x1xf32>
    %171 = vector.broadcast %170 : vector<8x8x1xf32> to vector<8x8x8xf32>
    %172 = arith.subf %168, %171 : vector<8x8x8xf32>
    %173 = math.exp %172 : vector<8x8x8xf32>
    %cst_46 = arith.constant dense<0.000000e+00> : vector<8x8xf32>
    %174 = vector.multi_reduction <add>, %173, %cst_46 [2] : vector<8x8x8xf32> to vector<8x8xf32>
    %175 = vector.shape_cast %174 : vector<8x8xf32> to vector<8x8x1xf32>
    %176 = tpu.reciprocal %175 {approx = true} : vector<8x8x1xf32> -> vector<8x8x1xf32>
    %177 = vector.broadcast %176 : vector<8x8x1xf32> to vector<8x8x8xf32>
    %178 = arith.mulf %173, %177 : vector<8x8x8xf32>
    %179 = arith.truncf %178 : vector<8x8x8xf32> to vector<8x8x8xbf16>
    "tpu.trace_start"() <{level = 10 : i32, message = "bqk,bkd->bqd"}> : () -> ()
    %cst_47 = arith.constant dense<0.000000e+00> : vector<8x8x16xf32>
    %180 = tpu.matmul %179, %167, %cst_47 {dimension_numbers = #tpu.dot_dimension_numbers<[2], [1], [1], [2], [0, 0, 0, 1, 1, 2], [0], [0]>} : vector<8x8x8xbf16>, vector<8x8x16xbf16>, vector<8x8x16xf32> -> vector<8x8x16xf32>
    "tpu.trace_stop"() : () -> ()
    %181 = vector.shape_cast %180 : vector<8x8x16xf32> to vector<64x16xf32>
    %182 = arith.truncf %181 : vector<64x16xf32> to vector<64x16xbf16>
    %183 = vector.extract_strided_slice %16 {offsets = [112, 0], sizes = [16, 128], strides = [1, 1]} : vector<128x128xbf16> to vector<16x128xbf16>
    %cst_48 = arith.constant dense<0.000000e+00> : vector<64x128xf32>
    %184 = tpu.matmul %182, %183, %cst_48 {dimension_numbers = #tpu.dot_dimension_numbers<[1], [0], [0], [1], [0, 0, 1, 1], [], []>} : vector<64x16xbf16>, vector<16x128xbf16>, vector<64x128xf32> -> vector<64x128xf32>
    %185 = arith.addf %164, %184 : vector<64x128xf32>
    %c0_49 = arith.constant 0 : index
    %c0_50 = arith.constant 0 : index
    %186 = vector.load %arg5[%c0_49, %c0_50] : memref<1x128xf32, #tpu.memory_space<vmem>>, vector<1x128xf32>
    %187 = vector.broadcast %186 : vector<1x128xf32> to vector<64x128xf32>
    %188 = arith.addf %185, %187 : vector<64x128xf32>
    %189 = vector.shape_cast %188 : vector<64x128xf32> to vector<8x8x128xf32>
    %190 = arith.truncf %189 : vector<8x8x128xf32> to vector<8x8x128xbf16>
    %c0_51 = arith.constant 0 : index
    %c0_52 = arith.constant 0 : index
    %c0_53 = arith.constant 0 : index
    %191 = vector.load %arg6[%c0_51, %c0_52, %c0_53] : memref<8x8x128xbf16, #tpu.memory_space<vmem>>, vector<8x8x128xbf16>
    tpu.vector_store %arg6[%c0_51, %c0_52, %c0_53], %190 {strides = array<i32>} : memref<8x8x128xbf16, #tpu.memory_space<vmem>>, vector<8x8x128xbf16>,
    return
  }
  func.func @transform_0(%arg0: i32) -> (i32, i32, i32) {
    %c0_i32 = arith.constant 0 : i32
    %c0_i32_0 = arith.constant 0 : i32
    %c0_i32_1 = arith.constant 0 : i32
    return %arg0, %c0_i32, %c0_i32_0 : i32, i32, i32
  }
  func.func @transform_1(%arg0: i32) -> (i32, i32) {
    %c0_i32 = arith.constant 0 : i32
    %c0_i32_0 = arith.constant 0 : i32
    %c0_i32_1 = arith.constant 0 : i32
    return %c0_i32, %c0_i32_0 : i32, i32
  }
  func.func @transform_2(%arg0: i32) -> (i32, i32) {
    %c0_i32 = arith.constant 0 : i32
    %c0_i32_0 = arith.constant 0 : i32
    %c0_i32_1 = arith.constant 0 : i32
    return %c0_i32, %c0_i32_0 : i32, i32
  }
  func.func @transform_3(%arg0: i32) -> (i32, i32) {
    %c0_i32 = arith.constant 0 : i32
    %c0_i32_0 = arith.constant 0 : i32
    %c0_i32_1 = arith.constant 0 : i32
    return %c0_i32, %c0_i32_0 : i32, i32
  }
  func.func @transform_4(%arg0: i32) -> (i32, i32) {
    %c0_i32 = arith.constant 0 : i32
    %c0_i32_0 = arith.constant 0 : i32
    %c0_i32_1 = arith.constant 0 : i32
    return %c0_i32, %c0_i32_0 : i32, i32
  }
  func.func @transform_5(%arg0: i32) -> (i32, i32, i32) {
    %c0_i32 = arith.constant 0 : i32
    %c0_i32_0 = arith.constant 0 : i32
    %c0_i32_1 = arith.constant 0 : i32
    return %arg0, %c0_i32, %c0_i32_0 : i32, i32, i32
  }
}

</mosaic_0001>

<llo_original>
// kernel: tpu_custom_call.1
$region0: #{tpu_custom_call.1}
  #allocation0 [shape = 'u32[]', space=smem, size = 0x4, offset = 0x4, fixed_abs, tag = 'smem constant byte address 0x4 - core index']
  #allocation1 [shape = 'u32[144,128]{1,0:T(1,128)}', space=vmem, size = 0x12000, scoped, tag = 'internal scratch']
  %s0 = inlined_call_operand.vmem [shape: f32[16,8,4], index: 0, kind: input, shape index: {}]
  %s1 = inlined_call_operand.vmem [shape: bf16[4,384], index: 1, kind: input, shape index: {}]
  %s2 = inlined_call_operand.vmem [shape: f32[8,384], index: 2, kind: input, shape index: {}]
  %s3 = inlined_call_operand.vmem [shape: bf16[128,128], index: 3, kind: input, shape index: {}]
  %s4 = inlined_call_operand.vmem [shape: f32[1,128], index: 4, kind: input, shape index: {}]
  %s5 = inlined_call_operand.hbm [shape: bf16[16,8,128], index: 5, kind: output, shape index: {}]
  %s6 = sld [smem:[#allocation0]]
  $region53: #{tpu_custom_call.1} parent=0
    _
  %s8 = ssub.s32 1, %s6
  %s9 = scalar_select 0, %s8, %s6
  $region1: #{tpu_custom_call.1} parent=0
    #allocation2 [shape = 'u8[32768]{0}', space=vmem, size = 0x8000, scoped, tag = 'output window, operand 0']
    #allocation3 [shape = 's32[2]{0}', space=sflag, size = 0x8, scoped, tag = 'scoped memory for tpu_custom_call.1']
    %10 = vsyncpa [#allocation3], 0
    %s11 = scalar_lea.sflag [#allocation3], 1
    %12 = vsyncpa %s11, 0
    loop: start=0, step=1, limit=4
    $region2: #{tpu_custom_call.1} parent=1 // loop_pre_header
      _
    $region3: #{tpu_custom_call.1} parent=1 // loop_header
      %s14 = sphi 0, %s18
      %p15 = scmp.ge.s32.totalorder %s14, 4
      %s24 = sphi 0, %s26
      %s27 = sphi 0, %s24
      %s28 = sphi 0, %s27
      %s44 = sphi 0, %s28
      %s48 = sphi 0, %s48
      %s50 = sphi 0, %s48
      %s51 = sphi 0, %s50
      %s65 = sphi 0, %s51
      %s69 = sphi 0, %s69
      %s71 = sphi 0, %s69
      %s72 = sphi 0, %s71
      %s86 = sphi 0, %s72
      %s90 = sphi 0, %s90
      %s92 = sphi 0, %s90
      %s93 = sphi 0, %s92
      %s107 = sphi 0, %s93
      %s111 = sphi 0, %s111
      %s113 = sphi 0, %s111
      %s114 = sphi 0, %s113
      %s128 = sphi 0, %s114
      %s134 = sphi 0, %s136
      %s137 = sphi 0, %s134
      %s138 = sphi 0, %s137
      %s154 = sphi 0, %s138
    $region4: #{tpu_custom_call.1} parent=1 // loop_header_branch
      %17 = sbr.rel (%p15) target = $region8
    $region5: #{tpu_custom_call.1} parent=1 // loop_body
      %s19 = ssub.s32 %s14, 1
      %s20 = ssub.s32 %s14, 2
      %s21 = sadd.s32 %s14, 1
      %s22 = ssub.s32 %s14, %s21
      %p23 = scmp.eq.s32.totalorder %s22, 0
      %s25 = sadd.s32 %s24, 1
      %s26 = scalar_select %p23, %s24, %s25
      %p29 = pneg %p23
      %p30 = scmp.eq.s32.totalorder %s14, 1
      %p31 = por %p29, %p30
      %p32 = scmp.ne.s32.totalorder %s24, %s27
      %p33 = scmp.eq.s32.totalorder %s14, 0
      %p34 = por %p32, %p33
      %p35 = scmp.ne.s32.totalorder %s24, %s27
      %p36 = scmp.eq.s32.totalorder %s19, 1
      %p37 = por %p35, %p36
      %p38 = scmp.ne.s32.totalorder %s27, %s28
      %p39 = scmp.eq.s32.totalorder %s19, 0
      %p40 = por %p38, %p39
      %p41 = scmp.ne.s32.totalorder %s27, %s28
      %p42 = scmp.eq.s32.totalorder %s20, 1
      %p43 = por %p41, %p42
      %p45 = scmp.ne.s32.totalorder %s28, %s44
      %p46 = scmp.eq.s32.totalorder %s20, 0
      %p47 = por %p45, %p46
      %s49 = sadd.s32 %s48, 1
      %p52 = scmp.eq.s32.totalorder %s14, 1
      %p53 = scmp.ne.s32.totalorder %s48, %s50
      %p54 = scmp.eq.s32.totalorder %s14, 0
      %p55 = por %p53, %p54
      %p56 = scmp.ne.s32.totalorder %s48, %s50
      %p57 = scmp.eq.s32.totalorder %s19, 1
      %p58 = por %p56, %p57
      %p59 = scmp.ne.s32.totalorder %s50, %s51
      %p60 = scmp.eq.s32.totalorder %s19, 0
      %p61 = por %p59, %p60
      %p62 = scmp.ne.s32.totalorder %s50, %s51
      %p63 = scmp.eq.s32.totalorder %s20, 1
      %p64 = por %p62, %p63
      %p66 = scmp.ne.s32.totalorder %s51, %s65
      %p67 = scmp.eq.s32.totalorder %s20, 0
      %p68 = por %p66, %p67
      %s70 = sadd.s32 %s69, 1
      %p73 = scmp.eq.s32.totalorder %s14, 1
      %p74 = scmp.ne.s32.totalorder %s69, %s71
      %p75 = scmp.eq.s32.totalorder %s14, 0
      %p76 = por %p74, %p75
      %p77 = scmp.ne.s32.totalorder %s69, %s71
      %p78 = scmp.eq.s32.totalorder %s19, 1
      %p79 = por %p77, %p78
      %p80 = scmp.ne.s32.totalorder %s71, %s72
      %p81 = scmp.eq.s32.totalorder %s19, 0
      %p82 = por %p80, %p81
      %p83 = scmp.ne.s32.totalorder %s71, %s72
      %p84 = scmp.eq.s32.totalorder %s20, 1
      %p85 = por %p83, %p84
      %p87 = scmp.ne.s32.totalorder %s72, %s86
      %p88 = scmp.eq.s32.totalorder %s20, 0
      %p89 = por %p87, %p88
      %s91 = sadd.s32 %s90, 1
      %p94 = scmp.eq.s32.totalorder %s14, 1
      %p95 = scmp.ne.s32.totalorder %s90, %s92
      %p96 = scmp.eq.s32.totalorder %s14, 0
      %p97 = por %p95, %p96
      %p98 = scmp.ne.s32.totalorder %s90, %s92
      %p99 = scmp.eq.s32.totalorder %s19, 1
      %p100 = por %p98, %p99
      %p101 = scmp.ne.s32.totalorder %s92, %s93
      %p102 = scmp.eq.s32.totalorder %s19, 0
      %p103 = por %p101, %p102
      %p104 = scmp.ne.s32.totalorder %s92, %s93
      %p105 = scmp.eq.s32.totalorder %s20, 1
      %p106 = por %p104, %p105
      %p108 = scmp.ne.s32.totalorder %s93, %s107
      %p109 = scmp.eq.s32.totalorder %s20, 0
      %p110 = por %p108, %p109
      %s112 = sadd.s32 %s111, 1
      %p115 = scmp.eq.s32.totalorder %s14, 1
      %p116 = scmp.ne.s32.totalorder %s111, %s113
      %p117 = scmp.eq.s32.totalorder %s14, 0
      %p118 = por %p116, %p117
      %p119 = scmp.ne.s32.totalorder %s111, %s113
      %p120 = scmp.eq.s32.totalorder %s19, 1
      %p121 = por %p119, %p120
      %p122 = scmp.ne.s32.totalorder %s113, %s114
      %p123 = scmp.eq.s32.totalorder %s19, 0
      %p124 = por %p122, %p123
      %p125 = scmp.ne.s32.totalorder %s113, %s114
      %p126 = scmp.eq.s32.totalorder %s20, 1
      %p127 = por %p125, %p126
      %p129 = scmp.ne.s32.totalorder %s114, %s128
      %p130 = scmp.eq.s32.totalorder %s20, 0
      %p131 = por %p129, %p130
      %s132 = ssub.s32 %s14, %s21
      %p133 = scmp.eq.s32.totalorder %s132, 0
      %s135 = sadd.s32 %s134, 1
      %s136 = scalar_select %p133, %s134, %s135
      %p139 = pneg %p133
      %p140 = scmp.eq.s32.totalorder %s14, 1
      %p141 = por %p139, %p140
      %p142 = scmp.ne.s32.totalorder %s134, %s137
      %p143 = scmp.eq.s32.totalorder %s14, 0
      %p144 = por %p142, %p143
      %p145 = scmp.ne.s32.totalorder %s134, %s137
      %p146 = scmp.eq.s32.totalorder %s19, 1
      %p147 = por %p145, %p146
      %p148 = scmp.ne.s32.totalorder %s137, %s138
      %p149 = scmp.eq.s32.totalorder %s19, 0
      %p150 = por %p148, %p149
      %p151 = scmp.ne.s32.totalorder %s137, %s138
      %p152 = scmp.eq.s32.totalorder %s20, 1
      %p153 = por %p151, %p152
      %p155 = scmp.ne.s32.totalorder %s138, %s154
      %p156 = scmp.eq.s32.totalorder %s20, 0
      %p157 = por %p155, %p156
      %p158 = scmp.le.s32.totalorder 1, %s14
      %p159 = scmp.lt.s32.totalorder %s14, 3
      %p160 = pnand %p158, %p159
      %p161 = pneg %p160
      // Predicated region
      $region9: #{tpu_custom_call.1} parent=5 // pred_check
        _
      $region10: #{tpu_custom_call.1} parent=5 // pred_check_branch
        %163 = sbr.rel (%p160) target = $region12
      $region11: #{tpu_custom_call.1} parent=5 // pred_region
        %s164 = ssub.s32 %s14, 1
        // Predicated region
        $region13: #{tpu_custom_call.1} parent=11 // pred_check
          %p165 = pneg %p61
        $region14: #{tpu_custom_call.1} parent=11 // pred_check_branch
          %167 = sbr.rel (%p165) target = $region16
        $region15: #{tpu_custom_call.1} parent=11 // pred_region
          _
        $region16: #{tpu_custom_call.1} parent=11 // pred_fallthru
          _
        // Predicated region
        $region17: #{tpu_custom_call.1} parent=11 // pred_check
          %p168 = pneg %p82
        $region18: #{tpu_custom_call.1} parent=11 // pred_check_branch
          %170 = sbr.rel (%p168) target = $region20
        $region19: #{tpu_custom_call.1} parent=11 // pred_region
          _
        $region20: #{tpu_custom_call.1} parent=11 // pred_fallthru
          _
        // Predicated region
        $region21: #{tpu_custom_call.1} parent=11 // pred_check
          %p171 = pneg %p103
        $region22: #{tpu_custom_call.1} parent=11 // pred_check_branch
          %173 = sbr.rel (%p171) target = $region24
        $region23: #{tpu_custom_call.1} parent=11 // pred_region
          _
        $region24: #{tpu_custom_call.1} parent=11 // pred_fallthru
          _
        // Predicated region
        $region25: #{tpu_custom_call.1} parent=11 // pred_check
          %p174 = pneg %p124
        $region26: #{tpu_custom_call.1} parent=11 // pred_check_branch
          %176 = sbr.rel (%p174) target = $region28
        $region27: #{tpu_custom_call.1} parent=11 // pred_region
          _
        $region28: #{tpu_custom_call.1} parent=11 // pred_fallthru
          _
      $region12: #{tpu_custom_call.1} parent=5 // pred_fallthru
        _
      %p177 = scmp.lt.s32.totalorder %s14, 2
      // Predicated region
      $region29: #{tpu_custom_call.1} parent=5 // pred_check
        %p178 = pneg %p177
      $region30: #{tpu_custom_call.1} parent=5 // pred_check_branch
        %180 = sbr.rel (%p178) target = $region32
      $region31: #{tpu_custom_call.1} parent=5 // pred_region
        // Predicated region
        $region33: #{tpu_custom_call.1} parent=31 // pred_check
          %p181 = pneg %p34
        $region34: #{tpu_custom_call.1} parent=31 // pred_check_branch
          %183 = sbr.rel (%p181) target = $region36
        $region35: #{tpu_custom_call.1} parent=31 // pred_region
          %s184 = smul.u32 8, %s14
          %p185 = scmp.lt.s32.totalorder %s184, 15
          %s186 = scalar_select %p185, %s184, 15
          %s187 = smul.addr %s186, 8
          %s188 = scalar_lea.vmem %s0, %s187
          %s189 = smul.u32 8, %s14
        $region36: #{tpu_custom_call.1} parent=31 // pred_fallthru
          _
      $region32: #{tpu_custom_call.1} parent=5 // pred_fallthru
        _
      %p190 = scmp.le.s32.totalorder 1, %s14
      %p191 = scmp.lt.s32.totalorder %s14, 3
      %p192 = pnand %p190, %p191
      %p193 = pneg %p192
      // Predicated region
      $region37: #{tpu_custom_call.1} parent=5 // pred_check
        _
      $region38: #{tpu_custom_call.1} parent=5 // pred_check_branch
        %195 = sbr.rel (%p192) target = $region40
      $region39: #{tpu_custom_call.1} parent=5 // pred_region
        %s196 = ssub.s32 %s14, 1
        %s197 = smul.u32 8, %s19
        %p198 = scmp.lt.s32.totalorder %s197, 15
        %s199 = scalar_select %p198, %s197, 15
        %s200 = smul.addr %s199, 8
        %s201 = scalar_lea.vmem %s0, %s200
        %p202 = pneg %p40
        %p203 = pneg %p37
        %p204 = pneg %p61
        %p205 = pneg %p58
        %p206 = pneg %p82
        %p207 = pneg %p79
        %p208 = pneg %p103
        %p209 = pneg %p100
        %p210 = pneg %p124
        %p211 = pneg %p121
        %p212 = pneg %p150
        %p213 = pneg %p147
        %s214 = sand.u32 %s137, 1
        %s215 = scalar_lea.sflag [#allocation3], %s214
        %s216 = sand.u32 %s137, 1
        %s217 = smul.addr %s216, 32
        %s218 = scalar_lea.vmem [#allocation2], %s217
        %s219 = smul.u32 8, %s19
        %p220 = scmp.lt.s32.totalorder %s219, 15
        %s221 = scalar_select %p220, %s219, 15
        %s222 = smul.addr %s221, 8
        %s223 = scalar_lea.vmem %s0, %s222
        %s224 = smul.u32 8, %s19
        %s225 = smul.u32 8, %s19
        %v227 = vld [vmem:[%s223] sm:$0xff]
        %v228 = vld [vmem:[%s223 + $0x8] sm:$0xff]
        %v229 = vld [vmem:[%s223 + $0x10] sm:$0xff]
        %v230 = vld [vmem:[%s223 + $0x18] sm:$0xff]
        %v231 = vld [vmem:[%s223 + $0x20] sm:$0xff]
        %v232 = vld [vmem:[%s223 + $0x28] sm:$0xff]
        %v233 = vld [vmem:[%s223 + $0x30] sm:$0xff]
        %v234 = vld [vmem:[%s223 + $0x38] sm:$0xff]
        %v235 = vpack.c.bf16 %v228, %v227
        %v236 = vpack.c.bf16 %v230, %v229
        %v237 = vpack.c.bf16 %v232, %v231
        %v238 = vpack.c.bf16 %v234, %v233
        %v239 = vld [vmem:[%s1] sm:$0x3f]
        %v241 = vcombine.high %v239, %v239
        %v243 = vunpack.c.l.s4 1983009808
        %v244 = vunpack.c.0.s8 %v243
        %v245 = vlaneseq
        %v246 = vshrl.u32 %v245, 7
        %v247 = vsub.s32 %v244, %v246
        %v248 = vrot.slane %v239, %v247
        %v250 = vunpack.c.l.s4 1983009808
        %v251 = vunpack.c.0.s8 %v250
        %v252 = vlaneseq
        %v253 = vshrl.u32 %v252, 7
        %v254 = vsub.s32 %v251, %v253
        %v255 = vrot.slane %v241, %v254
        %v256 = vcombine.high %v248, %v248
        %vm257 = vcmask 31744
        %v259 = vsel %vm257, %v235, 0
        %v262 = vsel %vm257, %v236, 0
        %v265 = vsel %vm257, %v237, 0
        %v268 = vsel %vm257, %v238, 0
        %vm270 = vcmask 1041408
        %v272 = vsel %vm270, %v248, 0
        %v275 = vsel %vm270, %v256, 0
        %v278 = vsel %vm270, %v255, 0
        %280 = vmatprep.subr.bf16.mxu0 %v275
        %281 = vmatpush1.bf16.msra.mxu0 %v272
        %282 = vmatprep.subr.bf16.mxu0 0
        %283 = vmatpush1.bf16.msra.mxu0 0
        %284 = vmatprep.subr.bf16.mxu0 0
        %285 = vmatpush1.bf16.msra.mxu0 0
        %286 = vmatprep.subr.bf16.mxu0 0
        %287 = vmatpush1.bf16.msra.mxu0 0
        %288 = vmatprep.subr.bf16.mxu0 0
        %289 = vmatpush1.bf16.msra.mxu0 0
        %290 = vmatprep.subr.bf16.mxu0 0
        %291 = vmatpush1.bf16.msra.mxu0 0
        %292 = vmatprep.subr.bf16.mxu0 0
        %293 = vmatpush1.bf16.msra.mxu0 0
        %294 = vmatprep.subr.bf16.mxu0 0
        %295 = vmatpush1.bf16.msra.mxu0 0
        %296 = vmatprep.subr.bf16.mxu0 0
        %297 = vmatpush1.bf16.msra.mxu0 0
        %298 = vmatprep.subr.bf16.mxu0 0
        %299 = vmatpush1.bf16.msra.mxu0 0
        %300 = vmatprep.subr.bf16.mxu0 0
        %301 = vmatpush1.bf16.msra.mxu0 0
        %302 = vmatprep.subr.bf16.mxu0 0
        %303 = vmatpush1.bf16.msra.mxu0 0
        %304 = vmatprep.subr.bf16.mxu0 0
        %305 = vmatpush1.bf16.msra.mxu0 0
        %306 = vmatprep.subr.bf16.mxu0 0
        %307 = vmatpush1.bf16.msra.mxu0 0
        %308 = vmatprep.subr.bf16.mxu0 0
        %309 = vmatpush1.bf16.msra.mxu0 0
        %310 = vmatprep.subr.bf16.mxu0 0
        %311 = vmatpush1.bf16.msra.mxu0 0
        %312 = vmatprep.mubr.bf16.mxu0 0
        %313 = vmatmul.mubr.bf16.gmra.mrb[0].mxu0 %v259
        %v314 = vpop.f32.mrb[0].mxu0
        %v315 = vadd.f32 0.0, %v314
        %v316 = vpop.f32.mrb[0].mxu0
        %v317 = vadd.f32 0.0, %v316
        %v318 = vpop.f32.mrb[0].mxu0
        %v319 = vadd.f32 0.0, %v318
        %v320 = vpop.f32.mrb[0].mxu0
        %v321 = vadd.f32 0.0, %v320
        %322 = vmatprep.mubr.bf16.mxu0 0
        %323 = vmatmul.mubr.bf16.gmra.mrb[0].mxu0 %v262
        %v324 = vpop.f32.mrb[0].mxu0
        %v325 = vadd.f32 0.0, %v324
        %v326 = vpop.f32.mrb[0].mxu0
        %v327 = vadd.f32 0.0, %v326
        %v328 = vpop.f32.mrb[0].mxu0
        %v329 = vadd.f32 0.0, %v328
        %v330 = vpop.f32.mrb[0].mxu0
        %v331 = vadd.f32 0.0, %v330
        %332 = vmatprep.mubr.bf16.mxu0 0
        %333 = vmatmul.mubr.bf16.gmra.mrb[0].mxu0 %v265
        %v334 = vpop.f32.mrb[0].mxu0
        %v335 = vadd.f32 0.0, %v334
        %v336 = vpop.f32.mrb[0].mxu0
        %v337 = vadd.f32 0.0, %v336
        %v338 = vpop.f32.mrb[0].mxu0
        %v339 = vadd.f32 0.0, %v338
        %v340 = vpop.f32.mrb[0].mxu0
        %v341 = vadd.f32 0.0, %v340
        %342 = vmatprep.mubr.bf16.mxu0 0
        %343 = vmatmul.mubr.bf16.gmra.mrb[0].mxu0 %v268
        %v344 = vpop.f32.mrb[0].mxu0
        %v345 = vadd.f32 0.0, %v344
        %v346 = vpop.f32.mrb[0].mxu0
        %v347 = vadd.f32 0.0, %v346
        %v348 = vpop.f32.mrb[0].mxu0
        %v349 = vadd.f32 0.0, %v348
        %v350 = vpop.f32.mrb[0].mxu0
        %v351 = vadd.f32 0.0, %v350
        %352 = vdwg.mxu0
        %353 = vmatprep.subr.bf16.mxu0 0
        %354 = vmatpush1.bf16.msra.mxu0 %v278
        %355 = vmatprep.subr.bf16.mxu0 0
        %356 = vmatpush1.bf16.msra.mxu0 0
        %357 = vmatprep.subr.bf16.mxu0 0
        %358 = vmatpush1.bf16.msra.mxu0 0
        %359 = vmatprep.subr.bf16.mxu0 0
        %360 = vmatpush1.bf16.msra.mxu0 0
        %361 = vmatprep.subr.bf16.mxu0 0
        %362 = vmatpush1.bf16.msra.mxu0 0
        %363 = vmatprep.subr.bf16.mxu0 0
        %364 = vmatpush1.bf16.msra.mxu0 0
        %365 = vmatprep.subr.bf16.mxu0 0
        %366 = vmatpush1.bf16.msra.mxu0 0
        %367 = vmatprep.subr.bf16.mxu0 0
        %368 = vmatpush1.bf16.msra.mxu0 0
        %369 = vmatprep.subr.bf16.mxu0 0
        %370 = vmatpush1.bf16.msra.mxu0 0
        %371 = vmatprep.subr.bf16.mxu0 0
        %372 = vmatpush1.bf16.msra.mxu0 0
        %373 = vmatprep.subr.bf16.mxu0 0
        %374 = vmatpush1.bf16.msra.mxu0 0
        %375 = vmatprep.subr.bf16.mxu0 0
        %376 = vmatpush1.bf16.msra.mxu0 0
        %377 = vmatprep.subr.bf16.mxu0 0
        %378 = vmatpush1.bf16.msra.mxu0 0
        %379 = vmatprep.subr.bf16.mxu0 0
        %380 = vmatpush1.bf16.msra.mxu0 0
        %381 = vmatprep.subr.bf16.mxu0 0
        %382 = vmatpush1.bf16.msra.mxu0 0
        %383 = vmatprep.subr.bf16.mxu0 0
        %384 = vmatpush1.bf16.msra.mxu0 0
        %385 = vmatprep.mubr.bf16.mxu0 0
        %386 = vmatmul.mubr.bf16.gmra.mrb[0].mxu0 %v259
        %v387 = vpop.f32.mrb[0].mxu0
        %v388 = vadd.f32 0.0, %v387
        %v389 = vpop.f32.mrb[0].mxu0
        %v390 = vpop.f32.mrb[0].mxu0
        %v391 = vadd.f32 0.0, %v390
        %v392 = vpop.f32.mrb[0].mxu0
        %393 = vmatprep.mubr.bf16.mxu0 0
        %394 = vmatmul.mubr.bf16.gmra.mrb[0].mxu0 %v262
        %v395 = vpop.f32.mrb[0].mxu0
        %v396 = vadd.f32 0.0, %v395
        %v397 = vpop.f32.mrb[0].mxu0
        %v398 = vpop.f32.mrb[0].mxu0
        %v399 = vadd.f32 0.0, %v398
        %v400 = vpop.f32.mrb[0].mxu0
        %401 = vmatprep.mubr.bf16.mxu0 0
        %402 = vmatmul.mubr.bf16.gmra.mrb[0].mxu0 %v265
        %v403 = vpop.f32.mrb[0].mxu0
        %v404 = vadd.f32 0.0, %v403
        %v405 = vpop.f32.mrb[0].mxu0
        %v406 = vpop.f32.mrb[0].mxu0
        %v407 = vadd.f32 0.0, %v406
        %v408 = vpop.f32.mrb[0].mxu0
        %409 = vmatprep.mubr.bf16.mxu0 0
        %410 = vmatmul.mubr.bf16.gmra.mrb[0].mxu0 %v268
        %v411 = vpop.f32.mrb[0].mxu0
        %v412 = vadd.f32 0.0, %v411
        %v413 = vpop.f32.mrb[0].mxu0
        %v414 = vpop.f32.mrb[0].mxu0
        %v415 = vadd.f32 0.0, %v414
        %v416 = vpop.f32.mrb[0].mxu0
        %417 = vdwg.mxu0
        %v418 = vld [vmem:[%s2] sm:$0xff]
        %v419 = vld [vmem:[%s2 + $0x8] sm:$0xff]
        %v420 = vld [vmem:[%s2 + $0x10] sm:$0xff]
        %v421 = vadd.f32 %v315, %v418
        %v422 = vadd.f32 %v317, %v419
        %v423 = vadd.f32 %v388, %v420
        %v424 = vadd.f32 %v319, %v418
        %v425 = vadd.f32 %v321, %v419
        %v426 = vadd.f32 %v391, %v420
        %v427 = vadd.f32 %v325, %v418
        %v428 = vadd.f32 %v327, %v419
        %v429 = vadd.f32 %v396, %v420
        %v430 = vadd.f32 %v329, %v418
        %v431 = vadd.f32 %v331, %v419
        %v432 = vadd.f32 %v399, %v420
        %v433 = vadd.f32 %v335, %v418
        %v434 = vadd.f32 %v337, %v419
        %v435 = vadd.f32 %v404, %v420
        %v436 = vadd.f32 %v339, %v418
        %v437 = vadd.f32 %v341, %v419
        %v438 = vadd.f32 %v407, %v420
        %v439 = vadd.f32 %v345, %v418
        %v440 = vadd.f32 %v347, %v419
        %v441 = vadd.f32 %v412, %v420
        %v442 = vadd.f32 %v349, %v418
        %v443 = vadd.f32 %v351, %v419
        %v444 = vadd.f32 %v415, %v420
        %v445 = vpack.c.bf16 %v421, %v421
        %v446 = vpack.c.bf16 %v424, %v424
        %v447 = vpack.c.bf16 %v427, %v427
        %v448 = vpack.c.bf16 %v430, %v430
        %v449 = vpack.c.bf16 %v433, %v433
        %v450 = vpack.c.bf16 %v436, %v436
        %v451 = vpack.c.bf16 %v439, %v439
        %v452 = vpack.c.bf16 %v442, %v442
        %v453 = vpack.c.bf16 %v422, %v422
        %v454 = vpack.c.bf16 %v425, %v425
        %v455 = vpack.c.bf16 %v428, %v428
        %v456 = vpack.c.bf16 %v431, %v431
        %v457 = vpack.c.bf16 %v434, %v434
        %v458 = vpack.c.bf16 %v437, %v437
        %v459 = vpack.c.bf16 %v440, %v440
        %v460 = vpack.c.bf16 %v443, %v443
        %v461 = vpack.c.bf16 %v423, %v423
        %v462 = vpack.c.bf16 %v426, %v426
        %v463 = vpack.c.bf16 %v429, %v429
        %v464 = vpack.c.bf16 %v432, %v432
        %v465 = vpack.c.bf16 %v435, %v435
        %v466 = vpack.c.bf16 %v438, %v438
        %v467 = vpack.c.bf16 %v441, %v441
        %v468 = vpack.c.bf16 %v444, %v444
        %v469 = vld [vmem:[%s3] sm:$0xf]
        %v470 = vld [vmem:[%s3 + $0x4] sm:$0xf]
        %v471 = vld [vmem:[%s3 + $0x8] sm:$0xf]
        %v472 = vld [vmem:[%s3 + $0xc] sm:$0xf]
        %v473 = vld [vmem:[%s3 + $0x10] sm:$0xf]
        %v474 = vld [vmem:[%s3 + $0x14] sm:$0xf]
        %v475 = vld [vmem:[%s3 + $0x18] sm:$0xf]
        %v476 = vld [vmem:[%s3 + $0x1c] sm:$0xf]
        %v477 = vld [vmem:[%s3 + $0x20] sm:$0xf]
        %v478 = vld [vmem:[%s3 + $0x24] sm:$0xf]
        %v479 = vld [vmem:[%s3 + $0x28] sm:$0xf]
        %v480 = vld [vmem:[%s3 + $0x2c] sm:$0xf]
        %v481 = vld [vmem:[%s3 + $0x30] sm:$0xf]
        %v482 = vld [vmem:[%s3 + $0x34] sm:$0xf]
        %v483 = vld [vmem:[%s3 + $0x38] sm:$0xf]
        %v484 = vld [vmem:[%s3 + $0x3c] sm:$0xf]
        %vm485 = vcmask 130048
        %v487 = vsel %vm485, %v445, 0
        %v490 = vsel %vm485, %v453, 0
        %492 = vmatprep.subr.bf16.mxu0 0
        %493 = vmatpush1.bf16.xpose.msra.mxu0 %v490
        %494 = vmatprep.subr.bf16.mxu0 0
        %495 = vmatpush1.bf16.xpose.msra.mxu0 0
        %496 = vmatprep.subr.bf16.mxu0 0
        %497 = vmatpush1.bf16.xpose.msra.mxu0 0
        %498 = vmatprep.subr.bf16.mxu0 0
        %499 = vmatpush1.bf16.xpose.msra.mxu0 0
        %500 = vmatprep.subr.bf16.mxu0 0
        %501 = vmatpush1.bf16.xpose.msra.mxu0 0
        %502 = vmatprep.subr.bf16.mxu0 0
        %503 = vmatpush1.bf16.xpose.msra.mxu0 0
        %504 = vmatprep.subr.bf16.mxu0 0
        %505 = vmatpush1.bf16.xpose.msra.mxu0 0
        %506 = vmatprep.subr.bf16.mxu0 0
        %507 = vmatpush1.bf16.xpose.msra.mxu0 0
        %508 = vmatprep.subr.bf16.mxu0 0
        %509 = vmatpush1.bf16.xpose.msra.mxu0 0
        %510 = vmatprep.subr.bf16.mxu0 0
        %511 = vmatpush1.bf16.xpose.msra.mxu0 0
        %512 = vmatprep.subr.bf16.mxu0 0
        %513 = vmatpush1.bf16.xpose.msra.mxu0 0
        %514 = vmatprep.subr.bf16.mxu0 0
        %515 = vmatpush1.bf16.xpose.msra.mxu0 0
        %516 = vmatprep.subr.bf16.mxu0 0
        %517 = vmatpush1.bf16.xpose.msra.mxu0 0
        %518 = vmatprep.subr.bf16.mxu0 0
        %519 = vmatpush1.bf16.xpose.msra.mxu0 0
        %520 = vmatprep.subr.bf16.mxu0 0
        %521 = vmatpush1.bf16.xpose.msra.mxu0 0
        %522 = vmatprep.subr.bf16.mxu0 0
        %523 = vmatpush1.bf16.xpose.msra.mxu0 0
        %524 = vmatprep.mubr.bf16.mxu0 0
        %525 = vmatmul.mubr.bf16.gmra.mrb[0].mxu0 %v487
        %v526 = vpop.f32.mrb[0].mxu0
        %v527 = vadd.f32 0.0, %v526
        %v528 = vpop.f32.mrb[0].mxu0
        %v529 = vpop.f32.mrb[0].mxu0
        %v530 = vpop.f32.mrb[0].mxu0
        %531 = vdwg.mxu0
        %v533 = vsel %vm485, %v446, 0
        %v536 = vsel %vm485, %v454, 0
        %538 = vmatprep.subr.bf16.mxu0 0
        %539 = vmatpush1.bf16.xpose.msra.mxu0 %v536
        %540 = vmatprep.subr.bf16.mxu0 0
        %541 = vmatpush1.bf16.xpose.msra.mxu0 0
        %542 = vmatprep.subr.bf16.mxu0 0
        %543 = vmatpush1.bf16.xpose.msra.mxu0 0
        %544 = vmatprep.subr.bf16.mxu0 0
        %545 = vmatpush1.bf16.xpose.msra.mxu0 0
        %546 = vmatprep.subr.bf16.mxu0 0
        %547 = vmatpush1.bf16.xpose.msra.mxu0 0
        %548 = vmatprep.subr.bf16.mxu0 0
        %549 = vmatpush1.bf16.xpose.msra.mxu0 0
        %550 = vmatprep.subr.bf16.mxu0 0
        %551 = vmatpush1.bf16.xpose.msra.mxu0 0
        %552 = vmatprep.subr.bf16.mxu0 0
        %553 = vmatpush1.bf16.xpose.msra.mxu0 0
        %554 = vmatprep.subr.bf16.mxu0 0
        %555 = vmatpush1.bf16.xpose.msra.mxu0 0
        %556 = vmatprep.subr.bf16.mxu0 0
        %557 = vmatpush1.bf16.xpose.msra.mxu0 0
        %558 = vmatprep.subr.bf16.mxu0 0
        %559 = vmatpush1.bf16.xpose.msra.mxu0 0
        %560 = vmatprep.subr.bf16.mxu0 0
        %561 = vmatpush1.bf16.xpose.msra.mxu0 0
        %562 = vmatprep.subr.bf16.mxu0 0
        %563 = vmatpush1.bf16.xpose.msra.mxu0 0
        %564 = vmatprep.subr.bf16.mxu0 0
        %565 = vmatpush1.bf16.xpose.msra.mxu0 0
        %566 = vmatprep.subr.bf16.mxu0 0
        %567 = vmatpush1.bf16.xpose.msra.mxu0 0
        %568 = vmatprep.subr.bf16.mxu0 0
        %569 = vmatpush1.bf16.xpose.msra.mxu0 0
        %570 = vmatprep.mubr.bf16.mxu0 0
        %571 = vmatmul.mubr.bf16.gmra.mrb[0].mxu0 %v533
        %v572 = vpop.f32.mrb[0].mxu0
        %v573 = vadd.f32 0.0, %v572
        %v574 = vpop.f32.mrb[0].mxu0
        %v575 = vpop.f32.mrb[0].mxu0
        %v576 = vpop.f32.mrb[0].mxu0
        %577 = vdwg.mxu0
        %v579 = vsel %vm485, %v447, 0
        %v582 = vsel %vm485, %v455, 0
        %584 = vmatprep.subr.bf16.mxu0 0
        %585 = vmatpush1.bf16.xpose.msra.mxu0 %v582
        %586 = vmatprep.subr.bf16.mxu0 0
        %587 = vmatpush1.bf16.xpose.msra.mxu0 0
        %588 = vmatprep.subr.bf16.mxu0 0
        %589 = vmatpush1.bf16.xpose.msra.mxu0 0
        %590 = vmatprep.subr.bf16.mxu0 0
        %591 = vmatpush1.bf16.xpose.msra.mxu0 0
        %592 = vmatprep.subr.bf16.mxu0 0
        %593 = vmatpush1.bf16.xpose.msra.mxu0 0
        %594 = vmatprep.subr.bf16.mxu0 0
        %595 = vmatpush1.bf16.xpose.msra.mxu0 0
        %596 = vmatprep.subr.bf16.mxu0 0
        %597 = vmatpush1.bf16.xpose.msra.mxu0 0
        %598 = vmatprep.subr.bf16.mxu0 0
        %599 = vmatpush1.bf16.xpose.msra.mxu0 0
        %600 = vmatprep.subr.bf16.mxu0 0
        %601 = vmatpush1.bf16.xpose.msra.mxu0 0
        %602 = vmatprep.subr.bf16.mxu0 0
        %603 = vmatpush1.bf16.xpose.msra.mxu0 0
        %604 = vmatprep.subr.bf16.mxu0 0
        %605 = vmatpush1.bf16.xpose.msra.mxu0 0
        %606 = vmatprep.subr.bf16.mxu0 0
        %607 = vmatpush1.bf16.xpose.msra.mxu0 0
        %608 = vmatprep.subr.bf16.mxu0 0
        %609 = vmatpush1.bf16.xpose.msra.mxu0 0
        %610 = vmatprep.subr.bf16.mxu0 0
        %611 = vmatpush1.bf16.xpose.msra.mxu0 0
        %612 = vmatprep.subr.bf16.mxu0 0
        %613 = vmatpush1.bf16.xpose.msra.mxu0 0
        %614 = vmatprep.subr.bf16.mxu0 0
        %615 = vmatpush1.bf16.xpose.msra.mxu0 0
        %616 = vmatprep.mubr.bf16.mxu0 0
        %617 = vmatmul.mubr.bf16.gmra.mrb[0].mxu0 %v579
        %v618 = vpop.f32.mrb[0].mxu0
        %v619 = vadd.f32 0.0, %v618
        %v620 = vpop.f32.mrb[0].mxu0
        %v621 = vpop.f32.mrb[0].mxu0
        %v622 = vpop.f32.mrb[0].mxu0
        %623 = vdwg.mxu0
        %v625 = vsel %vm485, %v448, 0
        %v628 = vsel %vm485, %v456, 0
        %630 = vmatprep.subr.bf16.mxu0 0
        %631 = vmatpush1.bf16.xpose.msra.mxu0 %v628
        %632 = vmatprep.subr.bf16.mxu0 0
        %633 = vmatpush1.bf16.xpose.msra.mxu0 0
        %634 = vmatprep.subr.bf16.mxu0 0
        %635 = vmatpush1.bf16.xpose.msra.mxu0 0
        %636 = vmatprep.subr.bf16.mxu0 0
        %637 = vmatpush1.bf16.xpose.msra.mxu0 0
        %638 = vmatprep.subr.bf16.mxu0 0
        %639 = vmatpush1.bf16.xpose.msra.mxu0 0
        %640 = vmatprep.subr.bf16.mxu0 0
        %641 = vmatpush1.bf16.xpose.msra.mxu0 0
        %642 = vmatprep.subr.bf16.mxu0 0
        %643 = vmatpush1.bf16.xpose.msra.mxu0 0
        %644 = vmatprep.subr.bf16.mxu0 0
        %645 = vmatpush1.bf16.xpose.msra.mxu0 0
        %646 = vmatprep.subr.bf16.mxu0 0
        %647 = vmatpush1.bf16.xpose.msra.mxu0 0
        %648 = vmatprep.subr.bf16.mxu0 0
        %649 = vmatpush1.bf16.xpose.msra.mxu0 0
        %650 = vmatprep.subr.bf16.mxu0 0
        %651 = vmatpush1.bf16.xpose.msra.mxu0 0
        %652 = vmatprep.subr.bf16.mxu0 0
        %653 = vmatpush1.bf16.xpose.msra.mxu0 0
        %654 = vmatprep.subr.bf16.mxu0 0
        %655 = vmatpush1.bf16.xpose.msra.mxu0 0
        %656 = vmatprep.subr.bf16.mxu0 0
        %657 = vmatpush1.bf16.xpose.msra.mxu0 0
        %658 = vmatprep.subr.bf16.mxu0 0
        %659 = vmatpush1.bf16.xpose.msra.mxu0 0
        %660 = vmatprep.subr.bf16.mxu0 0
        %661 = vmatpush1.bf16.xpose.msra.mxu0 0
        %662 = vmatprep.mubr.bf16.mxu0 0
        %663 = vmatmul.mubr.bf16.gmra.mrb[0].mxu0 %v625
        %v664 = vpop.f32.mrb[0].mxu0
        %v665 = vadd.f32 0.0, %v664
        %v666 = vpop.f32.mrb[0].mxu0
        %v667 = vpop.f32.mrb[0].mxu0
        %v668 = vpop.f32.mrb[0].mxu0
        %669 = vdwg.mxu0
        %v671 = vsel %vm485, %v449, 0
        %v674 = vsel %vm485, %v457, 0
        %676 = vmatprep.subr.bf16.mxu0 0
        %677 = vmatpush1.bf16.xpose.msra.mxu0 %v674
        %678 = vmatprep.subr.bf16.mxu0 0
        %679 = vmatpush1.bf16.xpose.msra.mxu0 0
        %680 = vmatprep.subr.bf16.mxu0 0
        %681 = vmatpush1.bf16.xpose.msra.mxu0 0
        %682 = vmatprep.subr.bf16.mxu0 0
        %683 = vmatpush1.bf16.xpose.msra.mxu0 0
        %684 = vmatprep.subr.bf16.mxu0 0
        %685 = vmatpush1.bf16.xpose.msra.mxu0 0
        %686 = vmatprep.subr.bf16.mxu0 0
        %687 = vmatpush1.bf16.xpose.msra.mxu0 0
        %688 = vmatprep.subr.bf16.mxu0 0
        %689 = vmatpush1.bf16.xpose.msra.mxu0 0
        %690 = vmatprep.subr.bf16.mxu0 0
        %691 = vmatpush1.bf16.xpose.msra.mxu0 0
        %692 = vmatprep.subr.bf16.mxu0 0
        %693 = vmatpush1.bf16.xpose.msra.mxu0 0
        %694 = vmatprep.subr.bf16.mxu0 0
        %695 = vmatpush1.bf16.xpose.msra.mxu0 0
        %696 = vmatprep.subr.bf16.mxu0 0
        %697 = vmatpush1.bf16.xpose.msra.mxu0 0
        %698 = vmatprep.subr.bf16.mxu0 0
        %699 = vmatpush1.bf16.xpose.msra.mxu0 0
        %700 = vmatprep.subr.bf16.mxu0 0
        %701 = vmatpush1.bf16.xpose.msra.mxu0 0
        %702 = vmatprep.subr.bf16.mxu0 0
        %703 = vmatpush1.bf16.xpose.msra.mxu0 0
        %704 = vmatprep.subr.bf16.mxu0 0
        %705 = vmatpush1.bf16.xpose.msra.mxu0 0
        %706 = vmatprep.subr.bf16.mxu0 0
        %707 = vmatpush1.bf16.xpose.msra.mxu0 0
        %708 = vmatprep.mubr.bf16.mxu0 0
        %709 = vmatmul.mubr.bf16.gmra.mrb[0].mxu0 %v671
        %v710 = vpop.f32.mrb[0].mxu0
        %v711 = vadd.f32 0.0, %v710
        %v712 = vpop.f32.mrb[0].mxu0
        %v713 = vpop.f32.mrb[0].mxu0
        %v714 = vpop.f32.mrb[0].mxu0
        %715 = vdwg.mxu0
        %v717 = vsel %vm485, %v450, 0
        %v720 = vsel %vm485, %v458, 0
        %722 = vmatprep.subr.bf16.mxu0 0
        %723 = vmatpush1.bf16.xpose.msra.mxu0 %v720
        %724 = vmatprep.subr.bf16.mxu0 0
        %725 = vmatpush1.bf16.xpose.msra.mxu0 0
        %726 = vmatprep.subr.bf16.mxu0 0
        %727 = vmatpush1.bf16.xpose.msra.mxu0 0
        %728 = vmatprep.subr.bf16.mxu0 0
        %729 = vmatpush1.bf16.xpose.msra.mxu0 0
        %730 = vmatprep.subr.bf16.mxu0 0
        %731 = vmatpush1.bf16.xpose.msra.mxu0 0
        %732 = vmatprep.subr.bf16.mxu0 0
        %733 = vmatpush1.bf16.xpose.msra.mxu0 0
        %734 = vmatprep.subr.bf16.mxu0 0
        %735 = vmatpush1.bf16.xpose.msra.mxu0 0
        %736 = vmatprep.subr.bf16.mxu0 0
        %737 = vmatpush1.bf16.xpose.msra.mxu0 0
        %738 = vmatprep.subr.bf16.mxu0 0
        %739 = vmatpush1.bf16.xpose.msra.mxu0 0
        %740 = vmatprep.subr.bf16.mxu0 0
        %741 = vmatpush1.bf16.xpose.msra.mxu0 0
        %742 = vmatprep.subr.bf16.mxu0 0
        %743 = vmatpush1.bf16.xpose.msra.mxu0 0
        %744 = vmatprep.subr.bf16.mxu0 0
        %745 = vmatpush1.bf16.xpose.msra.mxu0 0
        %746 = vmatprep.subr.bf16.mxu0 0
        %747 = vmatpush1.bf16.xpose.msra.mxu0 0
        %748 = vmatprep.subr.bf16.mxu0 0
        %749 = vmatpush1.bf16.xpose.msra.mxu0 0
        %750 = vmatprep.subr.bf16.mxu0 0
        %751 = vmatpush1.bf16.xpose.msra.mxu0 0
        %752 = vmatprep.subr.bf16.mxu0 0
        %753 = vmatpush1.bf16.xpose.msra.mxu0 0
        %754 = vmatprep.mubr.bf16.mxu0 0
        %755 = vmatmul.mubr.bf16.gmra.mrb[0].mxu0 %v717
        %v756 = vpop.f32.mrb[0].mxu0
        %v757 = vadd.f32 0.0, %v756
        %v758 = vpop.f32.mrb[0].mxu0
        %v759 = vpop.f32.mrb[0].mxu0
        %v760 = vpop.f32.mrb[0].mxu0
        %761 = vdwg.mxu0
        %v763 = vsel %vm485, %v451, 0
        %v766 = vsel %vm485, %v459, 0
        %768 = vmatprep.subr.bf16.mxu0 0
        %769 = vmatpush1.bf16.xpose.msra.mxu0 %v766
        %770 = vmatprep.subr.bf16.mxu0 0
        %771 = vmatpush1.bf16.xpose.msra.mxu0 0
        %772 = vmatprep.subr.bf16.mxu0 0
        %773 = vmatpush1.bf16.xpose.msra.mxu0 0
        %774 = vmatprep.subr.bf16.mxu0 0
        %775 = vmatpush1.bf16.xpose.msra.mxu0 0
        %776 = vmatprep.subr.bf16.mxu0 0
        %777 = vmatpush1.bf16.xpose.msra.mxu0 0
        %778 = vmatprep.subr.bf16.mxu0 0
        %779 = vmatpush1.bf16.xpose.msra.mxu0 0
        %780 = vmatprep.subr.bf16.mxu0 0
        %781 = vmatpush1.bf16.xpose.msra.mxu0 0
        %782 = vmatprep.subr.bf16.mxu0 0
        %783 = vmatpush1.bf16.xpose.msra.mxu0 0
        %784 = vmatprep.subr.bf16.mxu0 0
        %785 = vmatpush1.bf16.xpose.msra.mxu0 0
        %786 = vmatprep.subr.bf16.mxu0 0
        %787 = vmatpush1.bf16.xpose.msra.mxu0 0
        %788 = vmatprep.subr.bf16.mxu0 0
        %789 = vmatpush1.bf16.xpose.msra.mxu0 0
        %790 = vmatprep.subr.bf16.mxu0 0
        %791 = vmatpush1.bf16.xpose.msra.mxu0 0
        %792 = vmatprep.subr.bf16.mxu0 0
        %793 = vmatpush1.bf16.xpose.msra.mxu0 0
        %794 = vmatprep.subr.bf16.mxu0 0
        %795 = vmatpush1.bf16.xpose.msra.mxu0 0
        %796 = vmatprep.subr.bf16.mxu0 0
        %797 = vmatpush1.bf16.xpose.msra.mxu0 0
        %798 = vmatprep.subr.bf16.mxu0 0
        %799 = vmatpush1.bf16.xpose.msra.mxu0 0
        %800 = vmatprep.mubr.bf16.mxu0 0
        %801 = vmatmul.mubr.bf16.gmra.mrb[0].mxu0 %v763
        %v802 = vpop.f32.mrb[0].mxu0
        %v803 = vadd.f32 0.0, %v802
        %v804 = vpop.f32.mrb[0].mxu0
        %v805 = vpop.f32.mrb[0].mxu0
        %v806 = vpop.f32.mrb[0].mxu0
        %807 = vdwg.mxu0
        %v809 = vsel %vm485, %v452, 0
        %v812 = vsel %vm485, %v460, 0
        %814 = vmatprep.subr.bf16.mxu0 0
        %815 = vmatpush1.bf16.xpose.msra.mxu0 %v812
        %816 = vmatprep.subr.bf16.mxu0 0
        %817 = vmatpush1.bf16.xpose.msra.mxu0 0
        %818 = vmatprep.subr.bf16.mxu0 0
        %819 = vmatpush1.bf16.xpose.msra.mxu0 0
        %820 = vmatprep.subr.bf16.mxu0 0
        %821 = vmatpush1.bf16.xpose.msra.mxu0 0
        %822 = vmatprep.subr.bf16.mxu0 0
        %823 = vmatpush1.bf16.xpose.msra.mxu0 0
        %824 = vmatprep.subr.bf16.mxu0 0
        %825 = vmatpush1.bf16.xpose.msra.mxu0 0
        %826 = vmatprep.subr.bf16.mxu0 0
        %827 = vmatpush1.bf16.xpose.msra.mxu0 0
        %828 = vmatprep.subr.bf16.mxu0 0
        %829 = vmatpush1.bf16.xpose.msra.mxu0 0
        %830 = vmatprep.subr.bf16.mxu0 0
        %831 = vmatpush1.bf16.xpose.msra.mxu0 0
        %832 = vmatprep.subr.bf16.mxu0 0
        %833 = vmatpush1.bf16.xpose.msra.mxu0 0
        %834 = vmatprep.subr.bf16.mxu0 0
        %835 = vmatpush1.bf16.xpose.msra.mxu0 0
        %836 = vmatprep.subr.bf16.mxu0 0
        %837 = vmatpush1.bf16.xpose.msra.mxu0 0
        %838 = vmatprep.subr.bf16.mxu0 0
        %839 = vmatpush1.bf16.xpose.msra.mxu0 0
        %840 = vmatprep.subr.bf16.mxu0 0
        %841 = vmatpush1.bf16.xpose.msra.mxu0 0
        %842 = vmatprep.subr.bf16.mxu0 0
        %843 = vmatpush1.bf16.xpose.msra.mxu0 0
        %844 = vmatprep.subr.bf16.mxu0 0
        %845 = vmatpush1.bf16.xpose.msra.mxu0 0
        %846 = vmatprep.mubr.bf16.mxu0 0
        %847 = vmatmul.mubr.bf16.gmra.mrb[0].mxu0 %v809
        %v848 = vpop.f32.mrb[0].mxu0
        %v849 = vadd.f32 0.0, %v848
        %v850 = vpop.f32.mrb[0].mxu0
        %v851 = vpop.f32.mrb[0].mxu0
        %v852 = vpop.f32.mrb[0].mxu0
        %853 = vdwg.mxu0
        %vm854 = vcmask 64512
        %v855 = vsel %vm854, %v527, -inf
        %856 = vmax.xlane.f32.xlu0 %v855
        %v857 = vpop.xlane.xlu0 %856
        %v858 = vsel %vm854, %v573, -inf
        %859 = vmax.xlane.f32.xlu0 %v858
        %v860 = vpop.xlane.xlu0 %859
        %v861 = vsel %vm854, %v619, -inf
        %862 = vmax.xlane.f32.xlu0 %v861
        %v863 = vpop.xlane.xlu0 %862
        %v864 = vsel %vm854, %v665, -inf
        %865 = vmax.xlane.f32.xlu0 %v864
        %v866 = vpop.xlane.xlu0 %865
        %v867 = vsel %vm854, %v711, -inf
        %868 = vmax.xlane.f32.xlu0 %v867
        %v869 = vpop.xlane.xlu0 %868
        %v870 = vsel %vm854, %v757, -inf
        %871 = vmax.xlane.f32.xlu0 %v870
        %v872 = vpop.xlane.xlu0 %871
        %v873 = vsel %vm854, %v803, -inf
        %874 = vmax.xlane.f32.xlu0 %v873
        %v875 = vpop.xlane.xlu0 %874
        %v876 = vsel %vm854, %v849, -inf
        %877 = vmax.xlane.f32.xlu0 %v876
        %v878 = vpop.xlane.xlu0 %877
        %v879 = vsub.f32 %v527, %v857
        %v880 = vsub.f32 %v573, %v860
        %v881 = vsub.f32 %v619, %v863
        %v882 = vsub.f32 %v665, %v866
        %v883 = vsub.f32 %v711, %v869
        %v884 = vsub.f32 %v757, %v872
        %v885 = vsub.f32 %v803, %v875
        %v886 = vsub.f32 %v849, %v878
        %v887 = vmul.f32 %v879, 1.442695
        %v888 = vpow.pop %v887
        %v889 = vmul.f32 %v880, 1.442695
        %v890 = vpow.pop %v889
        %v891 = vmul.f32 %v881, 1.442695
        %v892 = vpow.pop %v891
        %v893 = vmul.f32 %v882, 1.442695
        %v894 = vpow.pop %v893
        %v895 = vmul.f32 %v883, 1.442695
        %v896 = vpow.pop %v895
        %v897 = vmul.f32 %v884, 1.442695
        %v898 = vpow.pop %v897
        %v899 = vmul.f32 %v885, 1.442695
        %v900 = vpow.pop %v899
        %v901 = vmul.f32 %v886, 1.442695
        %v902 = vpow.pop %v901
        %v903 = vsel %vm854, %v888, 0.0
        %904 = vadd.xlane.f32.xlu0 %v903
        %v905 = vpop.xlane.xlu0 %904
        %v906 = vsel %vm854, %v890, 0.0
        %907 = vadd.xlane.f32.xlu0 %v906
        %v908 = vpop.xlane.xlu0 %907
        %v909 = vsel %vm854, %v892, 0.0
        %910 = vadd.xlane.f32.xlu0 %v909
        %v911 = vpop.xlane.xlu0 %910
        %v912 = vsel %vm854, %v894, 0.0
        %913 = vadd.xlane.f32.xlu0 %v912
        %v914 = vpop.xlane.xlu0 %913
        %v915 = vsel %vm854, %v896, 0.0
        %916 = vadd.xlane.f32.xlu0 %v915
        %v917 = vpop.xlane.xlu0 %916
        %v918 = vsel %vm854, %v898, 0.0
        %919 = vadd.xlane.f32.xlu0 %v918
        %v920 = vpop.xlane.xlu0 %919
        %v921 = vsel %vm854, %v900, 0.0
        %922 = vadd.xlane.f32.xlu0 %v921
        %v923 = vpop.xlane.xlu0 %922
        %v924 = vsel %vm854, %v902, 0.0
        %925 = vadd.xlane.f32.xlu0 %v924
        %v926 = vpop.xlane.xlu0 %925
        %v927 = vrcp.pop %v905
        %v928 = vrcp.pop %v908
        %v929 = vrcp.pop %v911
        %v930 = vrcp.pop %v914
        %v931 = vrcp.pop %v917
        %v932 = vrcp.pop %v920
        %v933 = vrcp.pop %v923
        %v934 = vrcp.pop %v926
        %v935 = vmul.f32 %v888, %v927
        %v936 = vmul.f32 %v890, %v928
        %v937 = vmul.f32 %v892, %v929
        %v938 = vmul.f32 %v894, %v930
        %v939 = vmul.f32 %v896, %v931
        %v940 = vmul.f32 %v898, %v932
        %v941 = vmul.f32 %v900, %v933
        %v942 = vmul.f32 %v902, %v934
        %v943 = vpack.c.bf16 %v935, %v935
        %v944 = vpack.c.bf16 %v936, %v936
        %v945 = vpack.c.bf16 %v937, %v937
        %v946 = vpack.c.bf16 %v938, %v938
        %v947 = vpack.c.bf16 %v939, %v939
        %v948 = vpack.c.bf16 %v940, %v940
        %v949 = vpack.c.bf16 %v941, %v941
        %v950 = vpack.c.bf16 %v942, %v942
        %v952 = vsel %vm854, %v943, 0
        %vm954 = vcmask 1043456
        %v956 = vsel %vm954, %v461, 0
        %958 = vmatprep.subr.bf16.mxu0 0
        %959 = vmatpush1.bf16.msra.mxu0 %v956
        %960 = vmatprep.subr.bf16.mxu0 0
        %961 = vmatpush1.bf16.msra.mxu0 0
        %962 = vmatprep.subr.bf16.mxu0 0
        %963 = vmatpush1.bf16.msra.mxu0 0
        %964 = vmatprep.subr.bf16.mxu0 0
        %965 = vmatpush1.bf16.msra.mxu0 0
        %966 = vmatprep.subr.bf16.mxu0 0
        %967 = vmatpush1.bf16.msra.mxu0 0
        %968 = vmatprep.subr.bf16.mxu0 0
        %969 = vmatpush1.bf16.msra.mxu0 0
        %970 = vmatprep.subr.bf16.mxu0 0
        %971 = vmatpush1.bf16.msra.mxu0 0
        %972 = vmatprep.subr.bf16.mxu0 0
        %973 = vmatpush1.bf16.msra.mxu0 0
        %974 = vmatprep.subr.bf16.mxu0 0
        %975 = vmatpush1.bf16.msra.mxu0 0
        %976 = vmatprep.subr.bf16.mxu0 0
        %977 = vmatpush1.bf16.msra.mxu0 0
        %978 = vmatprep.subr.bf16.mxu0 0
        %979 = vmatpush1.bf16.msra.mxu0 0
        %980 = vmatprep.subr.bf16.mxu0 0
        %981 = vmatpush1.bf16.msra.mxu0 0
        %982 = vmatprep.subr.bf16.mxu0 0
        %983 = vmatpush1.bf16.msra.mxu0 0
        %984 = vmatprep.subr.bf16.mxu0 0
        %985 = vmatpush1.bf16.msra.mxu0 0
        %986 = vmatprep.subr.bf16.mxu0 0
        %987 = vmatpush1.bf16.msra.mxu0 0
        %988 = vmatprep.subr.bf16.mxu0 0
        %989 = vmatpush1.bf16.msra.mxu0 0
        %990 = vmatprep.mubr.bf16.mxu0 0
        %991 = vmatmul.mubr.bf16.gmra.mrb[0].mxu0 %v952
        %v992 = vpop.f32.mrb[0].mxu0
        %v993 = vadd.f32 0.0, %v992
        %v994 = vpop.f32.mrb[0].mxu0
        %v995 = vpop.f32.mrb[0].mxu0
        %v996 = vpop.f32.mrb[0].mxu0
        %997 = vdwg.mxu0
        %v999 = vsel %vm854, %v944, 0
        %v1002 = vsel %vm954, %v462, 0
        %1004 = vmatprep.subr.bf16.mxu0 0
        %1005 = vmatpush1.bf16.msra.mxu0 %v1002
        %1006 = vmatprep.subr.bf16.mxu0 0
        %1007 = vmatpush1.bf16.msra.mxu0 0
        %1008 = vmatprep.subr.bf16.mxu0 0
        %1009 = vmatpush1.bf16.msra.mxu0 0
        %1010 = vmatprep.subr.bf16.mxu0 0
        %1011 = vmatpush1.bf16.msra.mxu0 0
        %1012 = vmatprep.subr.bf16.mxu0 0
        %1013 = vmatpush1.bf16.msra.mxu0 0
        %1014 = vmatprep.subr.bf16.mxu0 0
        %1015 = vmatpush1.bf16.msra.mxu0 0
        %1016 = vmatprep.subr.bf16.mxu0 0
        %1017 = vmatpush1.bf16.msra.mxu0 0
        %1018 = vmatprep.subr.bf16.mxu0 0
        %1019 = vmatpush1.bf16.msra.mxu0 0
        %1020 = vmatprep.subr.bf16.mxu0 0
        %1021 = vmatpush1.bf16.msra.mxu0 0
        %1022 = vmatprep.subr.bf16.mxu0 0
        %1023 = vmatpush1.bf16.msra.mxu0 0
        %1024 = vmatprep.subr.bf16.mxu0 0
        %1025 = vmatpush1.bf16.msra.mxu0 0
        %1026 = vmatprep.subr.bf16.mxu0 0
        %1027 = vmatpush1.bf16.msra.mxu0 0
        %1028 = vmatprep.subr.bf16.mxu0 0
        %1029 = vmatpush1.bf16.msra.mxu0 0
        %1030 = vmatprep.subr.bf16.mxu0 0
        %1031 = vmatpush1.bf16.msra.mxu0 0
        %1032 = vmatprep.subr.bf16.mxu0 0
        %1033 = vmatpush1.bf16.msra.mxu0 0
        %1034 = vmatprep.subr.bf16.mxu0 0
        %1035 = vmatpush1.bf16.msra.mxu0 0
        %1036 = vmatprep.mubr.bf16.mxu0 0
        %1037 = vmatmul.mubr.bf16.gmra.mrb[0].mxu0 %v999
        %v1038 = vpop.f32.mrb[0].mxu0
        %v1039 = vadd.f32 0.0, %v1038
        %v1040 = vpop.f32.mrb[0].mxu0
        %v1041 = vpop.f32.mrb[0].mxu0
        %v1042 = vpop.f32.mrb[0].mxu0
        %1043 = vdwg.mxu0
        %v1045 = vsel %vm854, %v945, 0
        %v1048 = vsel %vm954, %v463, 0
        %1050 = vmatprep.subr.bf16.mxu0 0
        %1051 = vmatpush1.bf16.msra.mxu0 %v1048
        %1052 = vmatprep.subr.bf16.mxu0 0
        %1053 = vmatpush1.bf16.msra.mxu0 0
        %1054 = vmatprep.subr.bf16.mxu0 0
        %1055 = vmatpush1.bf16.msra.mxu0 0
        %1056 = vmatprep.subr.bf16.mxu0 0
        %1057 = vmatpush1.bf16.msra.mxu0 0
        %1058 = vmatprep.subr.bf16.mxu0 0
        %1059 = vmatpush1.bf16.msra.mxu0 0
        %1060 = vmatprep.subr.bf16.mxu0 0
        %1061 = vmatpush1.bf16.msra.mxu0 0
        %1062 = vmatprep.subr.bf16.mxu0 0
        %1063 = vmatpush1.bf16.msra.mxu0 0
        %1064 = vmatprep.subr.bf16.mxu0 0
        %1065 = vmatpush1.bf16.msra.mxu0 0
        %1066 = vmatprep.subr.bf16.mxu0 0
        %1067 = vmatpush1.bf16.msra.mxu0 0
        %1068 = vmatprep.subr.bf16.mxu0 0
        %1069 = vmatpush1.bf16.msra.mxu0 0
        %1070 = vmatprep.subr.bf16.mxu0 0
        %1071 = vmatpush1.bf16.msra.mxu0 0
        %1072 = vmatprep.subr.bf16.mxu0 0
        %1073 = vmatpush1.bf16.msra.mxu0 0
        %1074 = vmatprep.subr.bf16.mxu0 0
        %1075 = vmatpush1.bf16.msra.mxu0 0
        %1076 = vmatprep.subr.bf16.mxu0 0
        %1077 = vmatpush1.bf16.msra.mxu0 0
        %1078 = vmatprep.subr.bf16.mxu0 0
        %1079 = vmatpush1.bf16.msra.mxu0 0
        %1080 = vmatprep.subr.bf16.mxu0 0
        %1081 = vmatpush1.bf16.msra.mxu0 0
        %1082 = vmatprep.mubr.bf16.mxu0 0
        %1083 = vmatmul.mubr.bf16.gmra.mrb[0].mxu0 %v1045
        %v1084 = vpop.f32.mrb[0].mxu0
        %v1085 = vadd.f32 0.0, %v1084
        %v1086 = vpop.f32.mrb[0].mxu0
        %v1087 = vpop.f32.mrb[0].mxu0
        %v1088 = vpop.f32.mrb[0].mxu0
        %1089 = vdwg.mxu0
        %v1091 = vsel %vm854, %v946, 0
        %v1094 = vsel %vm954, %v464, 0
        %1096 = vmatprep.subr.bf16.mxu0 0
        %1097 = vmatpush1.bf16.msra.mxu0 %v1094
        %1098 = vmatprep.subr.bf16.mxu0 0
        %1099 = vmatpush1.bf16.msra.mxu0 0
        %1100 = vmatprep.subr.bf16.mxu0 0
        %1101 = vmatpush1.bf16.msra.mxu0 0
        %1102 = vmatprep.subr.bf16.mxu0 0
        %1103 = vmatpush1.bf16.msra.mxu0 0
        %1104 = vmatprep.subr.bf16.mxu0 0
        %1105 = vmatpush1.bf16.msra.mxu0 0
        %1106 = vmatprep.subr.bf16.mxu0 0
        %1107 = vmatpush1.bf16.msra.mxu0 0
        %1108 = vmatprep.subr.bf16.mxu0 0
        %1109 = vmatpush1.bf16.msra.mxu0 0
        %1110 = vmatprep.subr.bf16.mxu0 0
        %1111 = vmatpush1.bf16.msra.mxu0 0
        %1112 = vmatprep.subr.bf16.mxu0 0
        %1113 = vmatpush1.bf16.msra.mxu0 0
        %1114 = vmatprep.subr.bf16.mxu0 0
        %1115 = vmatpush1.bf16.msra.mxu0 0
        %1116 = vmatprep.subr.bf16.mxu0 0
        %1117 = vmatpush1.bf16.msra.mxu0 0
        %1118 = vmatprep.subr.bf16.mxu0 0
        %1119 = vmatpush1.bf16.msra.mxu0 0
        %1120 = vmatprep.subr.bf16.mxu0 0
        %1121 = vmatpush1.bf16.msra.mxu0 0
        %1122 = vmatprep.subr.bf16.mxu0 0
        %1123 = vmatpush1.bf16.msra.mxu0 0
        %1124 = vmatprep.subr.bf16.mxu0 0
        %1125 = vmatpush1.bf16.msra.mxu0 0
        %1126 = vmatprep.subr.bf16.mxu0 0
        %1127 = vmatpush1.bf16.msra.mxu0 0
        %1128 = vmatprep.mubr.bf16.mxu0 0
        %1129 = vmatmul.mubr.bf16.gmra.mrb[0].mxu0 %v1091
        %v1130 = vpop.f32.mrb[0].mxu0
        %v1131 = vadd.f32 0.0, %v1130
        %v1132 = vpop.f32.mrb[0].mxu0
        %v1133 = vpop.f32.mrb[0].mxu0
        %v1134 = vpop.f32.mrb[0].mxu0
        %1135 = vdwg.mxu0
        %v1137 = vsel %vm854, %v947, 0
        %v1140 = vsel %vm954, %v465, 0
        %1142 = vmatprep.subr.bf16.mxu0 0
        %1143 = vmatpush1.bf16.msra.mxu0 %v1140
        %1144 = vmatprep.subr.bf16.mxu0 0
        %1145 = vmatpush1.bf16.msra.mxu0 0
        %1146 = vmatprep.subr.bf16.mxu0 0
        %1147 = vmatpush1.bf16.msra.mxu0 0
        %1148 = vmatprep.subr.bf16.mxu0 0
        %1149 = vmatpush1.bf16.msra.mxu0 0
        %1150 = vmatprep.subr.bf16.mxu0 0
        %1151 = vmatpush1.bf16.msra.mxu0 0
        %1152 = vmatprep.subr.bf16.mxu0 0
        %1153 = vmatpush1.bf16.msra.mxu0 0
        %1154 = vmatprep.subr.bf16.mxu0 0
        %1155 = vmatpush1.bf16.msra.mxu0 0
        %1156 = vmatprep.subr.bf16.mxu0 0
        %1157 = vmatpush1.bf16.msra.mxu0 0
        %1158 = vmatprep.subr.bf16.mxu0 0
        %1159 = vmatpush1.bf16.msra.mxu0 0
        %1160 = vmatprep.subr.bf16.mxu0 0
        %1161 = vmatpush1.bf16.msra.mxu0 0
        %1162 = vmatprep.subr.bf16.mxu0 0
        %1163 = vmatpush1.bf16.msra.mxu0 0
        %1164 = vmatprep.subr.bf16.mxu0 0
        %1165 = vmatpush1.bf16.msra.mxu0 0
        %1166 = vmatprep.subr.bf16.mxu0 0
        %1167 = vmatpush1.bf16.msra.mxu0 0
        %1168 = vmatprep.subr.bf16.mxu0 0
        %1169 = vmatpush1.bf16.msra.mxu0 0
        %1170 = vmatprep.subr.bf16.mxu0 0
        %1171 = vmatpush1.bf16.msra.mxu0 0
        %1172 = vmatprep.subr.bf16.mxu0 0
        %1173 = vmatpush1.bf16.msra.mxu0 0
        %1174 = vmatprep.mubr.bf16.mxu0 0
        %1175 = vmatmul.mubr.bf16.gmra.mrb[0].mxu0 %v1137
        %v1176 = vpop.f32.mrb[0].mxu0
        %v1177 = vadd.f32 0.0, %v1176
        %v1178 = vpop.f32.mrb[0].mxu0
        %v1179 = vpop.f32.mrb[0].mxu0
        %v1180 = vpop.f32.mrb[0].mxu0
        %1181 = vdwg.mxu0
        %v1183 = vsel %vm854, %v948, 0
        %v1186 = vsel %vm954, %v466, 0
        %1188 = vmatprep.subr.bf16.mxu0 0
        %1189 = vmatpush1.bf16.msra.mxu0 %v1186
        %1190 = vmatprep.subr.bf16.mxu0 0
        %1191 = vmatpush1.bf16.msra.mxu0 0
        %1192 = vmatprep.subr.bf16.mxu0 0
        %1193 = vmatpush1.bf16.msra.mxu0 0
        %1194 = vmatprep.subr.bf16.mxu0 0
        %1195 = vmatpush1.bf16.msra.mxu0 0
        %1196 = vmatprep.subr.bf16.mxu0 0
        %1197 = vmatpush1.bf16.msra.mxu0 0
        %1198 = vmatprep.subr.bf16.mxu0 0
        %1199 = vmatpush1.bf16.msra.mxu0 0
        %1200 = vmatprep.subr.bf16.mxu0 0
        %1201 = vmatpush1.bf16.msra.mxu0 0
        %1202 = vmatprep.subr.bf16.mxu0 0
        %1203 = vmatpush1.bf16.msra.mxu0 0
        %1204 = vmatprep.subr.bf16.mxu0 0
        %1205 = vmatpush1.bf16.msra.mxu0 0
        %1206 = vmatprep.subr.bf16.mxu0 0
        %1207 = vmatpush1.bf16.msra.mxu0 0
        %1208 = vmatprep.subr.bf16.mxu0 0
        %1209 = vmatpush1.bf16.msra.mxu0 0
        %1210 = vmatprep.subr.bf16.mxu0 0
        %1211 = vmatpush1.bf16.msra.mxu0 0
        %1212 = vmatprep.subr.bf16.mxu0 0
        %1213 = vmatpush1.bf16.msra.mxu0 0
        %1214 = vmatprep.subr.bf16.mxu0 0
        %1215 = vmatpush1.bf16.msra.mxu0 0
        %1216 = vmatprep.subr.bf16.mxu0 0
        %1217 = vmatpush1.bf16.msra.mxu0 0
        %1218 = vmatprep.subr.bf16.mxu0 0
        %1219 = vmatpush1.bf16.msra.mxu0 0
        %1220 = vmatprep.mubr.bf16.mxu0 0
        %1221 = vmatmul.mubr.bf16.gmra.mrb[0].mxu0 %v1183
        %v1222 = vpop.f32.mrb[0].mxu0
        %v1223 = vadd.f32 0.0, %v1222
        %v1224 = vpop.f32.mrb[0].mxu0
        %v1225 = vpop.f32.mrb[0].mxu0
        %v1226 = vpop.f32.mrb[0].mxu0
        %1227 = vdwg.mxu0
        %v1229 = vsel %vm854, %v949, 0
        %v1232 = vsel %vm954, %v467, 0
        %1234 = vmatprep.subr.bf16.mxu0 0
        %1235 = vmatpush1.bf16.msra.mxu0 %v1232
        %1236 = vmatprep.subr.bf16.mxu0 0
        %1237 = vmatpush1.bf16.msra.mxu0 0
        %1238 = vmatprep.subr.bf16.mxu0 0
        %1239 = vmatpush1.bf16.msra.mxu0 0
        %1240 = vmatprep.subr.bf16.mxu0 0
        %1241 = vmatpush1.bf16.msra.mxu0 0
        %1242 = vmatprep.subr.bf16.mxu0 0
        %1243 = vmatpush1.bf16.msra.mxu0 0
        %1244 = vmatprep.subr.bf16.mxu0 0
        %1245 = vmatpush1.bf16.msra.mxu0 0
        %1246 = vmatprep.subr.bf16.mxu0 0
        %1247 = vmatpush1.bf16.msra.mxu0 0
        %1248 = vmatprep.subr.bf16.mxu0 0
        %1249 = vmatpush1.bf16.msra.mxu0 0
        %1250 = vmatprep.subr.bf16.mxu0 0
        %1251 = vmatpush1.bf16.msra.mxu0 0
        %1252 = vmatprep.subr.bf16.mxu0 0
        %1253 = vmatpush1.bf16.msra.mxu0 0
        %1254 = vmatprep.subr.bf16.mxu0 0
        %1255 = vmatpush1.bf16.msra.mxu0 0
        %1256 = vmatprep.subr.bf16.mxu0 0
        %1257 = vmatpush1.bf16.msra.mxu0 0
        %1258 = vmatprep.subr.bf16.mxu0 0
        %1259 = vmatpush1.bf16.msra.mxu0 0
        %1260 = vmatprep.subr.bf16.mxu0 0
        %1261 = vmatpush1.bf16.msra.mxu0 0
        %1262 = vmatprep.subr.bf16.mxu0 0
        %1263 = vmatpush1.bf16.msra.mxu0 0
        %1264 = vmatprep.subr.bf16.mxu0 0
        %1265 = vmatpush1.bf16.msra.mxu0 0
        %1266 = vmatprep.mubr.bf16.mxu0 0
        %1267 = vmatmul.mubr.bf16.gmra.mrb[0].mxu0 %v1229
        %v1268 = vpop.f32.mrb[0].mxu0
        %v1269 = vadd.f32 0.0, %v1268
        %v1270 = vpop.f32.mrb[0].mxu0
        %v1271 = vpop.f32.mrb[0].mxu0
        %v1272 = vpop.f32.mrb[0].mxu0
        %1273 = vdwg.mxu0
        %v1275 = vsel %vm854, %v950, 0
        %v1278 = vsel %vm954, %v468, 0
        %1280 = vmatprep.subr.bf16.mxu0 0
        %1281 = vmatpush1.bf16.msra.mxu0 %v1278
        %1282 = vmatprep.subr.bf16.mxu0 0
        %1283 = vmatpush1.bf16.msra.mxu0 0
        %1284 = vmatprep.subr.bf16.mxu0 0
        %1285 = vmatpush1.bf16.msra.mxu0 0
        %1286 = vmatprep.subr.bf16.mxu0 0
        %1287 = vmatpush1.bf16.msra.mxu0 0
        %1288 = vmatprep.subr.bf16.mxu0 0
        %1289 = vmatpush1.bf16.msra.mxu0 0
        %1290 = vmatprep.subr.bf16.mxu0 0
        %1291 = vmatpush1.bf16.msra.mxu0 0
        %1292 = vmatprep.subr.bf16.mxu0 0
        %1293 = vmatpush1.bf16.msra.mxu0 0
        %1294 = vmatprep.subr.bf16.mxu0 0
        %1295 = vmatpush1.bf16.msra.mxu0 0
        %1296 = vmatprep.subr.bf16.mxu0 0
        %1297 = vmatpush1.bf16.msra.mxu0 0
        %1298 = vmatprep.subr.bf16.mxu0 0
        %1299 = vmatpush1.bf16.msra.mxu0 0
        %1300 = vmatprep.subr.bf16.mxu0 0
        %1301 = vmatpush1.bf16.msra.mxu0 0
        %1302 = vmatprep.subr.bf16.mxu0 0
        %1303 = vmatpush1.bf16.msra.mxu0 0
        %1304 = vmatprep.subr.bf16.mxu0 0
        %1305 = vmatpush1.bf16.msra.mxu0 0
        %1306 = vmatprep.subr.bf16.mxu0 0
        %1307 = vmatpush1.bf16.msra.mxu0 0
        %1308 = vmatprep.subr.bf16.mxu0 0
        %1309 = vmatpush1.bf16.msra.mxu0 0
        %1310 = vmatprep.subr.bf16.mxu0 0
        %1311 = vmatpush1.bf16.msra.mxu0 0
        %1312 = vmatprep.mubr.bf16.mxu0 0
        %1313 = vmatmul.mubr.bf16.gmra.mrb[0].mxu0 %v1275
        %v1314 = vpop.f32.mrb[0].mxu0
        %v1315 = vadd.f32 0.0, %v1314
        %v1316 = vpop.f32.mrb[0].mxu0
        %v1317 = vpop.f32.mrb[0].mxu0
        %v1318 = vpop.f32.mrb[0].mxu0
        %1319 = vdwg.mxu0
        %v1320 = vpack.c.bf16 %v1039, %v993
        %v1321 = vpack.c.bf16 %v1131, %v1085
        %v1322 = vpack.c.bf16 %v1223, %v1177
        %v1323 = vpack.c.bf16 %v1315, %v1269
        %1325 = vrot.lane.b32.xlu0 %v445, 112
        %v1326 = vpop.permute.xlu0 %1325
        %1328 = vrot.lane.b32.xlu0 %v453, 112
        %v1329 = vpop.permute.xlu0 %1328
        %v1331 = vsel %vm485, %v1326, 0
        %v1334 = vsel %vm485, %v1329, 0
        %1336 = vmatprep.subr.bf16.mxu0 0
        %1337 = vmatpush1.bf16.xpose.msra.mxu0 %v1334
        %1338 = vmatprep.subr.bf16.mxu0 0
        %1339 = vmatpush1.bf16.xpose.msra.mxu0 0
        %1340 = vmatprep.subr.bf16.mxu0 0
        %1341 = vmatpush1.bf16.xpose.msra.mxu0 0
        %1342 = vmatprep.subr.bf16.mxu0 0
        %1343 = vmatpush1.bf16.xpose.msra.mxu0 0
        %1344 = vmatprep.subr.bf16.mxu0 0
        %1345 = vmatpush1.bf16.xpose.msra.mxu0 0
        %1346 = vmatprep.subr.bf16.mxu0 0
        %1347 = vmatpush1.bf16.xpose.msra.mxu0 0
        %1348 = vmatprep.subr.bf16.mxu0 0
        %1349 = vmatpush1.bf16.xpose.msra.mxu0 0
        %1350 = vmatprep.subr.bf16.mxu0 0
        %1351 = vmatpush1.bf16.xpose.msra.mxu0 0
        %1352 = vmatprep.subr.bf16.mxu0 0
        %1353 = vmatpush1.bf16.xpose.msra.mxu0 0
        %1354 = vmatprep.subr.bf16.mxu0 0
        %1355 = vmatpush1.bf16.xpose.msra.mxu0 0
        %1356 = vmatprep.subr.bf16.mxu0 0
        %1357 = vmatpush1.bf16.xpose.msra.mxu0 0
        %1358 = vmatprep.subr.bf16.mxu0 0
        %1359 = vmatpush1.bf16.xpose.msra.mxu0 0
        %1360 = vmatprep.subr.bf16.mxu0 0
        %1361 = vmatpush1.bf16.xpose.msra.mxu0 0
        %1362 = vmatprep.subr.bf16.mxu0 0
        %1363 = vmatpush1.bf16.xpose.msra.mxu0 0
        %1364 = vmatprep.subr.bf16.mxu0 0
        %1365 = vmatpush1.bf16.xpose.msra.mxu0 0
        %1366 = vmatprep.subr.bf16.mxu0 0
        %1367 = vmatpush1.bf16.xpose.msra.mxu0 0
        %1368 = vmatprep.mubr.bf16.mxu0 0
        %1369 = vmatmul.mubr.bf16.gmra.mrb[0].mxu0 %v1331
        %v1370 = vpop.f32.mrb[0].mxu0
        %v1371 = vadd.f32 0.0, %v1370
        %v1372 = vpop.f32.mrb[0].mxu0
        %v1373 = vpop.f32.mrb[0].mxu0
        %v1374 = vpop.f32.mrb[0].mxu0
        %1375 = vdwg.mxu0
        %1377 = vrot.lane.b32.xlu0 %v446, 112
        %v1378 = vpop.permute.xlu0 %1377
        %1380 = vrot.lane.b32.xlu0 %v454, 112
        %v1381 = vpop.permute.xlu0 %1380
        %v1383 = vsel %vm485, %v1378, 0
        %v1386 = vsel %vm485, %v1381, 0
        %1388 = vmatprep.subr.bf16.mxu0 0
        %1389 = vmatpush1.bf16.xpose.msra.mxu0 %v1386
        %1390 = vmatprep.subr.bf16.mxu0 0
        %1391 = vmatpush1.bf16.xpose.msra.mxu0 0
        %1392 = vmatprep.subr.bf16.mxu0 0
        %1393 = vmatpush1.bf16.xpose.msra.mxu0 0
        %1394 = vmatprep.subr.bf16.mxu0 0
        %1395 = vmatpush1.bf16.xpose.msra.mxu0 0
        %1396 = vmatprep.subr.bf16.mxu0 0
        %1397 = vmatpush1.bf16.xpose.msra.mxu0 0
        %1398 = vmatprep.subr.bf16.mxu0 0
        %1399 = vmatpush1.bf16.xpose.msra.mxu0 0
        %1400 = vmatprep.subr.bf16.mxu0 0
        %1401 = vmatpush1.bf16.xpose.msra.mxu0 0
        %1402 = vmatprep.subr.bf16.mxu0 0
        %1403 = vmatpush1.bf16.xpose.msra.mxu0 0
        %1404 = vmatprep.subr.bf16.mxu0 0
        %1405 = vmatpush1.bf16.xpose.msra.mxu0 0
        %1406 = vmatprep.subr.bf16.mxu0 0
        %1407 = vmatpush1.bf16.xpose.msra.mxu0 0
        %1408 = vmatprep.subr.bf16.mxu0 0
        %1409 = vmatpush1.bf16.xpose.msra.mxu0 0
        %1410 = vmatprep.subr.bf16.mxu0 0
        %1411 = vmatpush1.bf16.xpose.msra.mxu0 0
        %1412 = vmatprep.subr.bf16.mxu0 0
        %1413 = vmatpush1.bf16.xpose.msra.mxu0 0
        %1414 = vmatprep.subr.bf16.mxu0 0
        %1415 = vmatpush1.bf16.xpose.msra.mxu0 0
        %1416 = vmatprep.subr.bf16.mxu0 0
        %1417 = vmatpush1.bf16.xpose.msra.mxu0 0
        %1418 = vmatprep.subr.bf16.mxu0 0
        %1419 = vmatpush1.bf16.xpose.msra.mxu0 0
        %1420 = vmatprep.mubr.bf16.mxu0 0
        %1421 = vmatmul.mubr.bf16.gmra.mrb[0].mxu0 %v1383
        %v1422 = vpop.f32.mrb[0].mxu0
        %v1423 = vadd.f32 0.0, %v1422
        %v1424 = vpop.f32.mrb[0].mxu0
        %v1425 = vpop.f32.mrb[0].mxu0
        %v1426 = vpop.f32.mrb[0].mxu0
        %1427 = vdwg.mxu0
        %1429 = vrot.lane.b32.xlu0 %v447, 112
        %v1430 = vpop.permute.xlu0 %1429
        %1432 = vrot.lane.b32.xlu0 %v455, 112
        %v1433 = vpop.permute.xlu0 %1432
        %v1435 = vsel %vm485, %v1430, 0
        %v1438 = vsel %vm485, %v1433, 0
        %1440 = vmatprep.subr.bf16.mxu0 0
        %1441 = vmatpush1.bf16.xpose.msra.mxu0 %v1438
        %1442 = vmatprep.subr.bf16.mxu0 0
        %1443 = vmatpush1.bf16.xpose.msra.mxu0 0
        %1444 = vmatprep.subr.bf16.mxu0 0
        %1445 = vmatpush1.bf16.xpose.msra.mxu0 0
        %1446 = vmatprep.subr.bf16.mxu0 0
        %1447 = vmatpush1.bf16.xpose.msra.mxu0 0
        %1448 = vmatprep.subr.bf16.mxu0 0
        %1449 = vmatpush1.bf16.xpose.msra.mxu0 0
        %1450 = vmatprep.subr.bf16.mxu0 0
        %1451 = vmatpush1.bf16.xpose.msra.mxu0 0
        %1452 = vmatprep.subr.bf16.mxu0 0
        %1453 = vmatpush1.bf16.xpose.msra.mxu0 0
        %1454 = vmatprep.subr.bf16.mxu0 0
        %1455 = vmatpush1.bf16.xpose.msra.mxu0 0
        %1456 = vmatprep.subr.bf16.mxu0 0
        %1457 = vmatpush1.bf16.xpose.msra.mxu0 0
        %1458 = vmatprep.subr.bf16.mxu0 0
        %1459 = vmatpush1.bf16.xpose.msra.mxu0 0
        %1460 = vmatprep.subr.bf16.mxu0 0
        %1461 = vmatpush1.bf16.xpose.msra.mxu0 0
        %1462 = vmatprep.subr.bf16.mxu0 0
        %1463 = vmatpush1.bf16.xpose.msra.mxu0 0
        %1464 = vmatprep.subr.bf16.mxu0 0
        %1465 = vmatpush1.bf16.xpose.msra.mxu0 0
        %1466 = vmatprep.subr.bf16.mxu0 0
        %1467 = vmatpush1.bf16.xpose.msra.mxu0 0
        %1468 = vmatprep.subr.bf16.mxu0 0
        %1469 = vmatpush1.bf16.xpose.msra.mxu0 0
        %1470 = vmatprep.subr.bf16.mxu0 0
        %1471 = vmatpush1.bf16.xpose.msra.mxu0 0
        %1472 = vmatprep.mubr.bf16.mxu0 0
        %1473 = vmatmul.mubr.bf16.gmra.mrb[0].mxu0 %v1435
        %v1474 = vpop.f32.mrb[0].mxu0
        %v1475 = vadd.f32 0.0, %v1474
        %v1476 = vpop.f32.mrb[0].mxu0
        %v1477 = vpop.f32.mrb[0].mxu0
        %v1478 = vpop.f32.mrb[0].mxu0
        %1479 = vdwg.mxu0
        %1481 = vrot.lane.b32.xlu0 %v448, 112
        %v1482 = vpop.permute.xlu0 %1481
        %1484 = vrot.lane.b32.xlu0 %v456, 112
        %v1485 = vpop.permute.xlu0 %1484
        %v1487 = vsel %vm485, %v1482, 0
        %v1490 = vsel %vm485, %v1485, 0
        %1492 = vmatprep.subr.bf16.mxu0 0
        %1493 = vmatpush1.bf16.xpose.msra.mxu0 %v1490
        %1494 = vmatprep.subr.bf16.mxu0 0
        %1495 = vmatpush1.bf16.xpose.msra.mxu0 0
        %1496 = vmatprep.subr.bf16.mxu0 0
        %1497 = vmatpush1.bf16.xpose.msra.mxu0 0
        %1498 = vmatprep.subr.bf16.mxu0 0
        %1499 = vmatpush1.bf16.xpose.msra.mxu0 0
        %1500 = vmatprep.subr.bf16.mxu0 0
        %1501 = vmatpush1.bf16.xpose.msra.mxu0 0
        %1502 = vmatprep.subr.bf16.mxu0 0
        %1503 = vmatpush1.bf16.xpose.msra.mxu0 0
        %1504 = vmatprep.subr.bf16.mxu0 0
        %1505 = vmatpush1.bf16.xpose.msra.mxu0 0
        %1506 = vmatprep.subr.bf16.mxu0 0
        %1507 = vmatpush1.bf16.xpose.msra.mxu0 0
        %1508 = vmatprep.subr.bf16.mxu0 0
        %1509 = vmatpush1.bf16.xpose.msra.mxu0 0
        %1510 = vmatprep.subr.bf16.mxu0 0
        %1511 = vmatpush1.bf16.xpose.msra.mxu0 0
        %1512 = vmatprep.subr.bf16.mxu0 0
        %1513 = vmatpush1.bf16.xpose.msra.mxu0 0
        %1514 = vmatprep.subr.bf16.mxu0 0
        %1515 = vmatpush1.bf16.xpose.msra.mxu0 0
        %1516 = vmatprep.subr.bf16.mxu0 0
        %1517 = vmatpush1.bf16.xpose.msra.mxu0 0
        %1518 = vmatprep.subr.bf16.mxu0 0
        %1519 = vmatpush1.bf16.xpose.msra.mxu0 0
        %1520 = vmatprep.subr.bf16.mxu0 0
        %1521 = vmatpush1.bf16.xpose.msra.mxu0 0
        %1522 = vmatprep.subr.bf16.mxu0 0
        %1523 = vmatpush1.bf16.xpose.msra.mxu0 0
        %1524 = vmatprep.mubr.bf16.mxu0 0
        %1525 = vmatmul.mubr.bf16.gmra.mrb[0].mxu0 %v1487
        %v1526 = vpop.f32.mrb[0].mxu0
        %v1527 = vadd.f32 0.0, %v1526
        %v1528 = vpop.f32.mrb[0].mxu0
        %v1529 = vpop.f32.mrb[0].mxu0
        %v1530 = vpop.f32.mrb[0].mxu0
        %1531 = vdwg.mxu0
        %1533 = vrot.lane.b32.xlu0 %v449, 112
        %v1534 = vpop.permute.xlu0 %1533
        %1536 = vrot.lane.b32.xlu0 %v457, 112
        %v1537 = vpop.permute.xlu0 %1536
        %v1539 = vsel %vm485, %v1534, 0
        %v1542 = vsel %vm485, %v1537, 0
        %1544 = vmatprep.subr.bf16.mxu0 0
        %1545 = vmatpush1.bf16.xpose.msra.mxu0 %v1542
        %1546 = vmatprep.subr.bf16.mxu0 0
        %1547 = vmatpush1.bf16.xpose.msra.mxu0 0
        %1548 = vmatprep.subr.bf16.mxu0 0
        %1549 = vmatpush1.bf16.xpose.msra.mxu0 0
        %1550 = vmatprep.subr.bf16.mxu0 0
        %1551 = vmatpush1.bf16.xpose.msra.mxu0 0
        %1552 = vmatprep.subr.bf16.mxu0 0
        %1553 = vmatpush1.bf16.xpose.msra.mxu0 0
        %1554 = vmatprep.subr.bf16.mxu0 0
        %1555 = vmatpush1.bf16.xpose.msra.mxu0 0
        %1556 = vmatprep.subr.bf16.mxu0 0
        %1557 = vmatpush1.bf16.xpose.msra.mxu0 0
        %1558 = vmatprep.subr.bf16.mxu0 0
        %1559 = vmatpush1.bf16.xpose.msra.mxu0 0
        %1560 = vmatprep.subr.bf16.mxu0 0
        %1561 = vmatpush1.bf16.xpose.msra.mxu0 0
        %1562 = vmatprep.subr.bf16.mxu0 0
        %1563 = vmatpush1.bf16.xpose.msra.mxu0 0
        %1564 = vmatprep.subr.bf16.mxu0 0
        %1565 = vmatpush1.bf16.xpose.msra.mxu0 0
        %1566 = vmatprep.subr.bf16.mxu0 0
        %1567 = vmatpush1.bf16.xpose.msra.mxu0 0
        %1568 = vmatprep.subr.bf16.mxu0 0
        %1569 = vmatpush1.bf16.xpose.msra.mxu0 0
        %1570 = vmatprep.subr.bf16.mxu0 0
        %1571 = vmatpush1.bf16.xpose.msra.mxu0 0
        %1572 = vmatprep.subr.bf16.mxu0 0
        %1573 = vmatpush1.bf16.xpose.msra.mxu0 0
        %1574 = vmatprep.subr.bf16.mxu0 0
        %1575 = vmatpush1.bf16.xpose.msra.mxu0 0
        %1576 = vmatprep.mubr.bf16.mxu0 0
        %1577 = vmatmul.mubr.bf16.gmra.mrb[0].mxu0 %v1539
        %v1578 = vpop.f32.mrb[0].mxu0
        %v1579 = vadd.f32 0.0, %v1578
        %v1580 = vpop.f32.mrb[0].mxu0
        %v1581 = vpop.f32.mrb[0].mxu0
        %v1582 = vpop.f32.mrb[0].mxu0
        %1583 = vdwg.mxu0
        %1585 = vrot.lane.b32.xlu0 %v450, 112
        %v1586 = vpop.permute.xlu0 %1585
        %1588 = vrot.lane.b32.xlu0 %v458, 112
        %v1589 = vpop.permute.xlu0 %1588
        %v1591 = vsel %vm485, %v1586, 0
        %v1594 = vsel %vm485, %v1589, 0
        %1596 = vmatprep.subr.bf16.mxu0 0
        %1597 = vmatpush1.bf16.xpose.msra.mxu0 %v1594
        %1598 = vmatprep.subr.bf16.mxu0 0
        %1599 = vmatpush1.bf16.xpose.msra.mxu0 0
        %1600 = vmatprep.subr.bf16.mxu0 0
        %1601 = vmatpush1.bf16.xpose.msra.mxu0 0
        %1602 = vmatprep.subr.bf16.mxu0 0
        %1603 = vmatpush1.bf16.xpose.msra.mxu0 0
        %1604 = vmatprep.subr.bf16.mxu0 0
        %1605 = vmatpush1.bf16.xpose.msra.mxu0 0
        %1606 = vmatprep.subr.bf16.mxu0 0
        %1607 = vmatpush1.bf16.xpose.msra.mxu0 0
        %1608 = vmatprep.subr.bf16.mxu0 0
        %1609 = vmatpush1.bf16.xpose.msra.mxu0 0
        %1610 = vmatprep.subr.bf16.mxu0 0
        %1611 = vmatpush1.bf16.xpose.msra.mxu0 0
        %1612 = vmatprep.subr.bf16.mxu0 0
        %1613 = vmatpush1.bf16.xpose.msra.mxu0 0
        %1614 = vmatprep.subr.bf16.mxu0 0
        %1615 = vmatpush1.bf16.xpose.msra.mxu0 0
        %1616 = vmatprep.subr.bf16.mxu0 0
        %1617 = vmatpush1.bf16.xpose.msra.mxu0 0
        %1618 = vmatprep.subr.bf16.mxu0 0
        %1619 = vmatpush1.bf16.xpose.msra.mxu0 0
        %1620 = vmatprep.subr.bf16.mxu0 0
        %1621 = vmatpush1.bf16.xpose.msra.mxu0 0
        %1622 = vmatprep.subr.bf16.mxu0 0
        %1623 = vmatpush1.bf16.xpose.msra.mxu0 0
        %1624 = vmatprep.subr.bf16.mxu0 0
        %1625 = vmatpush1.bf16.xpose.msra.mxu0 0
        %1626 = vmatprep.subr.bf16.mxu0 0
        %1627 = vmatpush1.bf16.xpose.msra.mxu0 0
        %1628 = vmatprep.mubr.bf16.mxu0 0
        %1629 = vmatmul.mubr.bf16.gmra.mrb[0].mxu0 %v1591
        %v1630 = vpop.f32.mrb[0].mxu0
        %v1631 = vadd.f32 0.0, %v1630
        %v1632 = vpop.f32.mrb[0].mxu0
        %v1633 = vpop.f32.mrb[0].mxu0
        %v1634 = vpop.f32.mrb[0].mxu0
        %1635 = vdwg.mxu0
        %1637 = vrot.lane.b32.xlu0 %v451, 112
        %v1638 = vpop.permute.xlu0 %1637
        %1640 = vrot.lane.b32.xlu0 %v459, 112
        %v1641 = vpop.permute.xlu0 %1640
        %v1643 = vsel %vm485, %v1638, 0
        %v1646 = vsel %vm485, %v1641, 0
        %1648 = vmatprep.subr.bf16.mxu0 0
        %1649 = vmatpush1.bf16.xpose.msra.mxu0 %v1646
        %1650 = vmatprep.subr.bf16.mxu0 0
        %1651 = vmatpush1.bf16.xpose.msra.mxu0 0
        %1652 = vmatprep.subr.bf16.mxu0 0
        %1653 = vmatpush1.bf16.xpose.msra.mxu0 0
        %1654 = vmatprep.subr.bf16.mxu0 0
        %1655 = vmatpush1.bf16.xpose.msra.mxu0 0
        %1656 = vmatprep.subr.bf16.mxu0 0
        %1657 = vmatpush1.bf16.xpose.msra.mxu0 0
        %1658 = vmatprep.subr.bf16.mxu0 0
        %1659 = vmatpush1.bf16.xpose.msra.mxu0 0
        %1660 = vmatprep.subr.bf16.mxu0 0
        %1661 = vmatpush1.bf16.xpose.msra.mxu0 0
        %1662 = vmatprep.subr.bf16.mxu0 0
        %1663 = vmatpush1.bf16.xpose.msra.mxu0 0
        %1664 = vmatprep.subr.bf16.mxu0 0
        %1665 = vmatpush1.bf16.xpose.msra.mxu0 0
        %1666 = vmatprep.subr.bf16.mxu0 0
        %1667 = vmatpush1.bf16.xpose.msra.mxu0 0
        %1668 = vmatprep.subr.bf16.mxu0 0
        %1669 = vmatpush1.bf16.xpose.msra.mxu0 0
        %1670 = vmatprep.subr.bf16.mxu0 0
        %1671 = vmatpush1.bf16.xpose.msra.mxu0 0
        %1672 = vmatprep.subr.bf16.mxu0 0
        %1673 = vmatpush1.bf16.xpose.msra.mxu0 0
        %1674 = vmatprep.subr.bf16.mxu0 0
        %1675 = vmatpush1.bf16.xpose.msra.mxu0 0
        %1676 = vmatprep.subr.bf16.mxu0 0
        %1677 = vmatpush1.bf16.xpose.msra.mxu0 0
        %1678 = vmatprep.subr.bf16.mxu0 0
        %1679 = vmatpush1.bf16.xpose.msra.mxu0 0
        %1680 = vmatprep.mubr.bf16.mxu0 0
        %1681 = vmatmul.mubr.bf16.gmra.mrb[0].mxu0 %v1643
        %v1682 = vpop.f32.mrb[0].mxu0
        %v1683 = vadd.f32 0.0, %v1682
        %v1684 = vpop.f32.mrb[0].mxu0
        %v1685 = vpop.f32.mrb[0].mxu0
        %v1686 = vpop.f32.mrb[0].mxu0
        %1687 = vdwg.mxu0
        %1689 = vrot.lane.b32.xlu0 %v452, 112
        %v1690 = vpop.permute.xlu0 %1689
        %1692 = vrot.lane.b32.xlu0 %v460, 112
        %v1693 = vpop.permute.xlu0 %1692
        %v1695 = vsel %vm485, %v1690, 0
        %v1698 = vsel %vm485, %v1693, 0
        %1700 = vmatprep.subr.bf16.mxu0 0
        %1701 = vmatpush1.bf16.xpose.msra.mxu0 %v1698
        %1702 = vmatprep.subr.bf16.mxu0 0
        %1703 = vmatpush1.bf16.xpose.msra.mxu0 0
        %1704 = vmatprep.subr.bf16.mxu0 0
        %1705 = vmatpush1.bf16.xpose.msra.mxu0 0
        %1706 = vmatprep.subr.bf16.mxu0 0
        %1707 = vmatpush1.bf16.xpose.msra.mxu0 0
        %1708 = vmatprep.subr.bf16.mxu0 0
        %1709 = vmatpush1.bf16.xpose.msra.mxu0 0
        %1710 = vmatprep.subr.bf16.mxu0 0
        %1711 = vmatpush1.bf16.xpose.msra.mxu0 0
        %1712 = vmatprep.subr.bf16.mxu0 0
        %1713 = vmatpush1.bf16.xpose.msra.mxu0 0
        %1714 = vmatprep.subr.bf16.mxu0 0
        %1715 = vmatpush1.bf16.xpose.msra.mxu0 0
        %1716 = vmatprep.subr.bf16.mxu0 0
        %1717 = vmatpush1.bf16.xpose.msra.mxu0 0
        %1718 = vmatprep.subr.bf16.mxu0 0
        %1719 = vmatpush1.bf16.xpose.msra.mxu0 0
        %1720 = vmatprep.subr.bf16.mxu0 0
        %1721 = vmatpush1.bf16.xpose.msra.mxu0 0
        %1722 = vmatprep.subr.bf16.mxu0 0
        %1723 = vmatpush1.bf16.xpose.msra.mxu0 0
        %1724 = vmatprep.subr.bf16.mxu0 0
        %1725 = vmatpush1.bf16.xpose.msra.mxu0 0
        %1726 = vmatprep.subr.bf16.mxu0 0
        %1727 = vmatpush1.bf16.xpose.msra.mxu0 0
        %1728 = vmatprep.subr.bf16.mxu0 0
        %1729 = vmatpush1.bf16.xpose.msra.mxu0 0
        %1730 = vmatprep.subr.bf16.mxu0 0
        %1731 = vmatpush1.bf16.xpose.msra.mxu0 0
        %1732 = vmatprep.mubr.bf16.mxu0 0
        %1733 = vmatmul.mubr.bf16.gmra.mrb[0].mxu0 %v1695
        %v1734 = vpop.f32.mrb[0].mxu0
        %v1735 = vadd.f32 0.0, %v1734
        %v1736 = vpop.f32.mrb[0].mxu0
        %v1737 = vpop.f32.mrb[0].mxu0
        %v1738 = vpop.f32.mrb[0].mxu0
        %1739 = vdwg.mxu0
        %v1740 = vsel %vm854, %v1371, -inf
        %1741 = vmax.xlane.f32.xlu0 %v1740
        %v1742 = vpop.xlane.xlu0 %1741
        %v1743 = vsel %vm854, %v1423, -inf
        %1744 = vmax.xlane.f32.xlu0 %v1743
        %v1745 = vpop.xlane.xlu0 %1744
        %v1746 = vsel %vm854, %v1475, -inf
        %1747 = vmax.xlane.f32.xlu0 %v1746
        %v1748 = vpop.xlane.xlu0 %1747
        %v1749 = vsel %vm854, %v1527, -inf
        %1750 = vmax.xlane.f32.xlu0 %v1749
        %v1751 = vpop.xlane.xlu0 %1750
        %v1752 = vsel %vm854, %v1579, -inf
        %1753 = vmax.xlane.f32.xlu0 %v1752
        %v1754 = vpop.xlane.xlu0 %1753
        %v1755 = vsel %vm854, %v1631, -inf
        %1756 = vmax.xlane.f32.xlu0 %v1755
        %v1757 = vpop.xlane.xlu0 %1756
        %v1758 = vsel %vm854, %v1683, -inf
        %1759 = vmax.xlane.f32.xlu0 %v1758
        %v1760 = vpop.xlane.xlu0 %1759
        %v1761 = vsel %vm854, %v1735, -inf
        %1762 = vmax.xlane.f32.xlu0 %v1761
        %v1763 = vpop.xlane.xlu0 %1762
        %v1764 = vsub.f32 %v1371, %v1742
        %v1765 = vsub.f32 %v1423, %v1745
        %v1766 = vsub.f32 %v1475, %v1748
        %v1767 = vsub.f32 %v1527, %v1751
        %v1768 = vsub.f32 %v1579, %v1754
        %v1769 = vsub.f32 %v1631, %v1757
        %v1770 = vsub.f32 %v1683, %v1760
        %v1771 = vsub.f32 %v1735, %v1763
        %v1772 = vmul.f32 %v1764, 1.442695
        %v1773 = vpow.pop %v1772
        %v1774 = vmul.f32 %v1765, 1.442695
        %v1775 = vpow.pop %v1774
        %v1776 = vmul.f32 %v1766, 1.442695
        %v1777 = vpow.pop %v1776
        %v1778 = vmul.f32 %v1767, 1.442695
        %v1779 = vpow.pop %v1778
        %v1780 = vmul.f32 %v1768, 1.442695
        %v1781 = vpow.pop %v1780
        %v1782 = vmul.f32 %v1769, 1.442695
        %v1783 = vpow.pop %v1782
        %v1784 = vmul.f32 %v1770, 1.442695
        %v1785 = vpow.pop %v1784
        %v1786 = vmul.f32 %v1771, 1.442695
        %v1787 = vpow.pop %v1786
        %v1788 = vsel %vm854, %v1773, 0.0
        %1789 = vadd.xlane.f32.xlu0 %v1788
        %v1790 = vpop.xlane.xlu0 %1789
        %v1791 = vsel %vm854, %v1775, 0.0
        %1792 = vadd.xlane.f32.xlu0 %v1791
        %v1793 = vpop.xlane.xlu0 %1792
        %v1794 = vsel %vm854, %v1777, 0.0
        %1795 = vadd.xlane.f32.xlu0 %v1794
        %v1796 = vpop.xlane.xlu0 %1795
        %v1797 = vsel %vm854, %v1779, 0.0
        %1798 = vadd.xlane.f32.xlu0 %v1797
        %v1799 = vpop.xlane.xlu0 %1798
        %v1800 = vsel %vm854, %v1781, 0.0
        %1801 = vadd.xlane.f32.xlu0 %v1800
        %v1802 = vpop.xlane.xlu0 %1801
        %v1803 = vsel %vm854, %v1783, 0.0
        %1804 = vadd.xlane.f32.xlu0 %v1803
        %v1805 = vpop.xlane.xlu0 %1804
        %v1806 = vsel %vm854, %v1785, 0.0
        %1807 = vadd.xlane.f32.xlu0 %v1806
        %v1808 = vpop.xlane.xlu0 %1807
        %v1809 = vsel %vm854, %v1787, 0.0
        %1810 = vadd.xlane.f32.xlu0 %v1809
        %v1811 = vpop.xlane.xlu0 %1810
        %v1812 = vrcp.pop %v1790
        %v1813 = vrcp.pop %v1793
        %v1814 = vrcp.pop %v1796
        %v1815 = vrcp.pop %v1799
        %v1816 = vrcp.pop %v1802
        %v1817 = vrcp.pop %v1805
        %v1818 = vrcp.pop %v1808
        %v1819 = vrcp.pop %v1811
        %v1820 = vmul.f32 %v1773, %v1812
        %v1821 = vmul.f32 %v1775, %v1813
        %v1822 = vmul.f32 %v1777, %v1814
        %v1823 = vmul.f32 %v1779, %v1815
        %v1824 = vmul.f32 %v1781, %v1816
        %v1825 = vmul.f32 %v1783, %v1817
        %v1826 = vmul.f32 %v1785, %v1818
        %v1827 = vmul.f32 %v1787, %v1819
        %v1828 = vpack.c.bf16 %v1820, %v1820
        %v1829 = vpack.c.bf16 %v1821, %v1821
        %v1830 = vpack.c.bf16 %v1822, %v1822
        %v1831 = vpack.c.bf16 %v1823, %v1823
        %v1832 = vpack.c.bf16 %v1824, %v1824
        %v1833 = vpack.c.bf16 %v1825, %v1825
        %v1834 = vpack.c.bf16 %v1826, %v1826
        %v1835 = vpack.c.bf16 %v1827, %v1827
        %1837 = vrot.lane.b32.xlu0 %v461, 112
        %v1838 = vpop.permute.xlu0 %1837
        %v1840 = vsel %vm854, %v1828, 0
        %v1843 = vsel %vm954, %v1838, 0
        %1845 = vmatprep.subr.bf16.mxu0 0
        %1846 = vmatpush1.bf16.msra.mxu0 %v1843
        %1847 = vmatprep.subr.bf16.mxu0 0
        %1848 = vmatpush1.bf16.msra.mxu0 0
        %1849 = vmatprep.subr.bf16.mxu0 0
        %1850 = vmatpush1.bf16.msra.mxu0 0
        %1851 = vmatprep.subr.bf16.mxu0 0
        %1852 = vmatpush1.bf16.msra.mxu0 0
        %1853 = vmatprep.subr.bf16.mxu0 0
        %1854 = vmatpush1.bf16.msra.mxu0 0
        %1855 = vmatprep.subr.bf16.mxu0 0
        %1856 = vmatpush1.bf16.msra.mxu0 0
        %1857 = vmatprep.subr.bf16.mxu0 0
        %1858 = vmatpush1.bf16.msra.mxu0 0
        %1859 = vmatprep.subr.bf16.mxu0 0
        %1860 = vmatpush1.bf16.msra.mxu0 0
        %1861 = vmatprep.subr.bf16.mxu0 0
        %1862 = vmatpush1.bf16.msra.mxu0 0
        %1863 = vmatprep.subr.bf16.mxu0 0
        %1864 = vmatpush1.bf16.msra.mxu0 0
        %1865 = vmatprep.subr.bf16.mxu0 0
        %1866 = vmatpush1.bf16.msra.mxu0 0
        %1867 = vmatprep.subr.bf16.mxu0 0
        %1868 = vmatpush1.bf16.msra.mxu0 0
        %1869 = vmatprep.subr.bf16.mxu0 0
        %1870 = vmatpush1.bf16.msra.mxu0 0
        %1871 = vmatprep.subr.bf16.mxu0 0
        %1872 = vmatpush1.bf16.msra.mxu0 0
        %1873 = vmatprep.subr.bf16.mxu0 0
        %1874 = vmatpush1.bf16.msra.mxu0 0
        %1875 = vmatprep.subr.bf16.mxu0 0
        %1876 = vmatpush1.bf16.msra.mxu0 0
        %1877 = vmatprep.mubr.bf16.mxu0 0
        %1878 = vmatmul.mubr.bf16.gmra.mrb[0].mxu0 %v1840
        %v1879 = vpop.f32.mrb[0].mxu0
        %v1880 = vadd.f32 0.0, %v1879
        %v1881 = vpop.f32.mrb[0].mxu0
        %v1882 = vpop.f32.mrb[0].mxu0
        %v1883 = vpop.f32.mrb[0].mxu0
        %1884 = vdwg.mxu0
        %1886 = vrot.lane.b32.xlu0 %v462, 112
        %v1887 = vpop.permute.xlu0 %1886
        %v1889 = vsel %vm854, %v1829, 0
        %v1892 = vsel %vm954, %v1887, 0
        %1894 = vmatprep.subr.bf16.mxu0 0
        %1895 = vmatpush1.bf16.msra.mxu0 %v1892
        %1896 = vmatprep.subr.bf16.mxu0 0
        %1897 = vmatpush1.bf16.msra.mxu0 0
        %1898 = vmatprep.subr.bf16.mxu0 0
        %1899 = vmatpush1.bf16.msra.mxu0 0
        %1900 = vmatprep.subr.bf16.mxu0 0
        %1901 = vmatpush1.bf16.msra.mxu0 0
        %1902 = vmatprep.subr.bf16.mxu0 0
        %1903 = vmatpush1.bf16.msra.mxu0 0
        %1904 = vmatprep.subr.bf16.mxu0 0
        %1905 = vmatpush1.bf16.msra.mxu0 0
        %1906 = vmatprep.subr.bf16.mxu0 0
        %1907 = vmatpush1.bf16.msra.mxu0 0
        %1908 = vmatprep.subr.bf16.mxu0 0
        %1909 = vmatpush1.bf16.msra.mxu0 0
        %1910 = vmatprep.subr.bf16.mxu0 0
        %1911 = vmatpush1.bf16.msra.mxu0 0
        %1912 = vmatprep.subr.bf16.mxu0 0
        %1913 = vmatpush1.bf16.msra.mxu0 0
        %1914 = vmatprep.subr.bf16.mxu0 0
        %1915 = vmatpush1.bf16.msra.mxu0 0
        %1916 = vmatprep.subr.bf16.mxu0 0
        %1917 = vmatpush1.bf16.msra.mxu0 0
        %1918 = vmatprep.subr.bf16.mxu0 0
        %1919 = vmatpush1.bf16.msra.mxu0 0
        %1920 = vmatprep.subr.bf16.mxu0 0
        %1921 = vmatpush1.bf16.msra.mxu0 0
        %1922 = vmatprep.subr.bf16.mxu0 0
        %1923 = vmatpush1.bf16.msra.mxu0 0
        %1924 = vmatprep.subr.bf16.mxu0 0
        %1925 = vmatpush1.bf16.msra.mxu0 0
        %1926 = vmatprep.mubr.bf16.mxu0 0
        %1927 = vmatmul.mubr.bf16.gmra.mrb[0].mxu0 %v1889
        %v1928 = vpop.f32.mrb[0].mxu0
        %v1929 = vadd.f32 0.0, %v1928
        %v1930 = vpop.f32.mrb[0].mxu0
        %v1931 = vpop.f32.mrb[0].mxu0
        %v1932 = vpop.f32.mrb[0].mxu0
        %1933 = vdwg.mxu0
        %1935 = vrot.lane.b32.xlu0 %v463, 112
        %v1936 = vpop.permute.xlu0 %1935
        %v1938 = vsel %vm854, %v1830, 0
        %v1941 = vsel %vm954, %v1936, 0
        %1943 = vmatprep.subr.bf16.mxu0 0
        %1944 = vmatpush1.bf16.msra.mxu0 %v1941
        %1945 = vmatprep.subr.bf16.mxu0 0
        %1946 = vmatpush1.bf16.msra.mxu0 0
        %1947 = vmatprep.subr.bf16.mxu0 0
        %1948 = vmatpush1.bf16.msra.mxu0 0
        %1949 = vmatprep.subr.bf16.mxu0 0
        %1950 = vmatpush1.bf16.msra.mxu0 0
        %1951 = vmatprep.subr.bf16.mxu0 0
        %1952 = vmatpush1.bf16.msra.mxu0 0
        %1953 = vmatprep.subr.bf16.mxu0 0
        %1954 = vmatpush1.bf16.msra.mxu0 0
        %1955 = vmatprep.subr.bf16.mxu0 0
        %1956 = vmatpush1.bf16.msra.mxu0 0
        %1957 = vmatprep.subr.bf16.mxu0 0
        %1958 = vmatpush1.bf16.msra.mxu0 0
        %1959 = vmatprep.subr.bf16.mxu0 0
        %1960 = vmatpush1.bf16.msra.mxu0 0
        %1961 = vmatprep.subr.bf16.mxu0 0
        %1962 = vmatpush1.bf16.msra.mxu0 0
        %1963 = vmatprep.subr.bf16.mxu0 0
        %1964 = vmatpush1.bf16.msra.mxu0 0
        %1965 = vmatprep.subr.bf16.mxu0 0
        %1966 = vmatpush1.bf16.msra.mxu0 0
        %1967 = vmatprep.subr.bf16.mxu0 0
        %1968 = vmatpush1.bf16.msra.mxu0 0
        %1969 = vmatprep.subr.bf16.mxu0 0
        %1970 = vmatpush1.bf16.msra.mxu0 0
        %1971 = vmatprep.subr.bf16.mxu0 0
        %1972 = vmatpush1.bf16.msra.mxu0 0
        %1973 = vmatprep.subr.bf16.mxu0 0
        %1974 = vmatpush1.bf16.msra.mxu0 0
        %1975 = vmatprep.mubr.bf16.mxu0 0
        %1976 = vmatmul.mubr.bf16.gmra.mrb[0].mxu0 %v1938
        %v1977 = vpop.f32.mrb[0].mxu0
        %v1978 = vadd.f32 0.0, %v1977
        %v1979 = vpop.f32.mrb[0].mxu0
        %v1980 = vpop.f32.mrb[0].mxu0
        %v1981 = vpop.f32.mrb[0].mxu0
        %1982 = vdwg.mxu0
        %1984 = vrot.lane.b32.xlu0 %v464, 112
        %v1985 = vpop.permute.xlu0 %1984
        %v1987 = vsel %vm854, %v1831, 0
        %v1990 = vsel %vm954, %v1985, 0
        %1992 = vmatprep.subr.bf16.mxu0 0
        %1993 = vmatpush1.bf16.msra.mxu0 %v1990
        %1994 = vmatprep.subr.bf16.mxu0 0
        %1995 = vmatpush1.bf16.msra.mxu0 0
        %1996 = vmatprep.subr.bf16.mxu0 0
        %1997 = vmatpush1.bf16.msra.mxu0 0
        %1998 = vmatprep.subr.bf16.mxu0 0
        %1999 = vmatpush1.bf16.msra.mxu0 0
        %2000 = vmatprep.subr.bf16.mxu0 0
        %2001 = vmatpush1.bf16.msra.mxu0 0
        %2002 = vmatprep.subr.bf16.mxu0 0
        %2003 = vmatpush1.bf16.msra.mxu0 0
        %2004 = vmatprep.subr.bf16.mxu0 0
        %2005 = vmatpush1.bf16.msra.mxu0 0
        %2006 = vmatprep.subr.bf16.mxu0 0
        %2007 = vmatpush1.bf16.msra.mxu0 0
        %2008 = vmatprep.subr.bf16.mxu0 0
        %2009 = vmatpush1.bf16.msra.mxu0 0
        %2010 = vmatprep.subr.bf16.mxu0 0
        %2011 = vmatpush1.bf16.msra.mxu0 0
        %2012 = vmatprep.subr.bf16.mxu0 0
        %2013 = vmatpush1.bf16.msra.mxu0 0
        %2014 = vmatprep.subr.bf16.mxu0 0
        %2015 = vmatpush1.bf16.msra.mxu0 0
        %2016 = vmatprep.subr.bf16.mxu0 0
        %2017 = vmatpush1.bf16.msra.mxu0 0
        %2018 = vmatprep.subr.bf16.mxu0 0
        %2019 = vmatpush1.bf16.msra.mxu0 0
        %2020 = vmatprep.subr.bf16.mxu0 0
        %2021 = vmatpush1.bf16.msra.mxu0 0
        %2022 = vmatprep.subr.bf16.mxu0 0
        %2023 = vmatpush1.bf16.msra.mxu0 0
        %2024 = vmatprep.mubr.bf16.mxu0 0
        %2025 = vmatmul.mubr.bf16.gmra.mrb[0].mxu0 %v1987
        %v2026 = vpop.f32.mrb[0].mxu0
        %v2027 = vadd.f32 0.0, %v2026
        %v2028 = vpop.f32.mrb[0].mxu0
        %v2029 = vpop.f32.mrb[0].mxu0
        %v2030 = vpop.f32.mrb[0].mxu0
        %2031 = vdwg.mxu0
        %2033 = vrot.lane.b32.xlu0 %v465, 112
        %v2034 = vpop.permute.xlu0 %2033
        %v2036 = vsel %vm854, %v1832, 0
        %v2039 = vsel %vm954, %v2034, 0
        %2041 = vmatprep.subr.bf16.mxu0 0
        %2042 = vmatpush1.bf16.msra.mxu0 %v2039
        %2043 = vmatprep.subr.bf16.mxu0 0
        %2044 = vmatpush1.bf16.msra.mxu0 0
        %2045 = vmatprep.subr.bf16.mxu0 0
        %2046 = vmatpush1.bf16.msra.mxu0 0
        %2047 = vmatprep.subr.bf16.mxu0 0
        %2048 = vmatpush1.bf16.msra.mxu0 0
        %2049 = vmatprep.subr.bf16.mxu0 0
        %2050 = vmatpush1.bf16.msra.mxu0 0
        %2051 = vmatprep.subr.bf16.mxu0 0
        %2052 = vmatpush1.bf16.msra.mxu0 0
        %2053 = vmatprep.subr.bf16.mxu0 0
        %2054 = vmatpush1.bf16.msra.mxu0 0
        %2055 = vmatprep.subr.bf16.mxu0 0
        %2056 = vmatpush1.bf16.msra.mxu0 0
        %2057 = vmatprep.subr.bf16.mxu0 0
        %2058 = vmatpush1.bf16.msra.mxu0 0
        %2059 = vmatprep.subr.bf16.mxu0 0
        %2060 = vmatpush1.bf16.msra.mxu0 0
        %2061 = vmatprep.subr.bf16.mxu0 0
        %2062 = vmatpush1.bf16.msra.mxu0 0
        %2063 = vmatprep.subr.bf16.mxu0 0
        %2064 = vmatpush1.bf16.msra.mxu0 0
        %2065 = vmatprep.subr.bf16.mxu0 0
        %2066 = vmatpush1.bf16.msra.mxu0 0
        %2067 = vmatprep.subr.bf16.mxu0 0
        %2068 = vmatpush1.bf16.msra.mxu0 0
        %2069 = vmatprep.subr.bf16.mxu0 0
        %2070 = vmatpush1.bf16.msra.mxu0 0
        %2071 = vmatprep.subr.bf16.mxu0 0
        %2072 = vmatpush1.bf16.msra.mxu0 0
        %2073 = vmatprep.mubr.bf16.mxu0 0
        %2074 = vmatmul.mubr.bf16.gmra.mrb[0].mxu0 %v2036
        %v2075 = vpop.f32.mrb[0].mxu0
        %v2076 = vadd.f32 0.0, %v2075
        %v2077 = vpop.f32.mrb[0].mxu0
        %v2078 = vpop.f32.mrb[0].mxu0
        %v2079 = vpop.f32.mrb[0].mxu0
        %2080 = vdwg.mxu0
        %2082 = vrot.lane.b32.xlu0 %v466, 112
        %v2083 = vpop.permute.xlu0 %2082
        %v2085 = vsel %vm854, %v1833, 0
        %v2088 = vsel %vm954, %v2083, 0
        %2090 = vmatprep.subr.bf16.mxu0 0
        %2091 = vmatpush1.bf16.msra.mxu0 %v2088
        %2092 = vmatprep.subr.bf16.mxu0 0
        %2093 = vmatpush1.bf16.msra.mxu0 0
        %2094 = vmatprep.subr.bf16.mxu0 0
        %2095 = vmatpush1.bf16.msra.mxu0 0
        %2096 = vmatprep.subr.bf16.mxu0 0
        %2097 = vmatpush1.bf16.msra.mxu0 0
        %2098 = vmatprep.subr.bf16.mxu0 0
        %2099 = vmatpush1.bf16.msra.mxu0 0
        %2100 = vmatprep.subr.bf16.mxu0 0
        %2101 = vmatpush1.bf16.msra.mxu0 0
        %2102 = vmatprep.subr.bf16.mxu0 0
        %2103 = vmatpush1.bf16.msra.mxu0 0
        %2104 = vmatprep.subr.bf16.mxu0 0
        %2105 = vmatpush1.bf16.msra.mxu0 0
        %2106 = vmatprep.subr.bf16.mxu0 0
        %2107 = vmatpush1.bf16.msra.mxu0 0
        %2108 = vmatprep.subr.bf16.mxu0 0
        %2109 = vmatpush1.bf16.msra.mxu0 0
        %2110 = vmatprep.subr.bf16.mxu0 0
        %2111 = vmatpush1.bf16.msra.mxu0 0
        %2112 = vmatprep.subr.bf16.mxu0 0
        %2113 = vmatpush1.bf16.msra.mxu0 0
        %2114 = vmatprep.subr.bf16.mxu0 0
        %2115 = vmatpush1.bf16.msra.mxu0 0
        %2116 = vmatprep.subr.bf16.mxu0 0
        %2117 = vmatpush1.bf16.msra.mxu0 0
        %2118 = vmatprep.subr.bf16.mxu0 0
        %2119 = vmatpush1.bf16.msra.mxu0 0
        %2120 = vmatprep.subr.bf16.mxu0 0
        %2121 = vmatpush1.bf16.msra.mxu0 0
        %2122 = vmatprep.mubr.bf16.mxu0 0
        %2123 = vmatmul.mubr.bf16.gmra.mrb[0].mxu0 %v2085
        %v2124 = vpop.f32.mrb[0].mxu0
        %v2125 = vadd.f32 0.0, %v2124
        %v2126 = vpop.f32.mrb[0].mxu0
        %v2127 = vpop.f32.mrb[0].mxu0
        %v2128 = vpop.f32.mrb[0].mxu0
        %2129 = vdwg.mxu0
        %2131 = vrot.lane.b32.xlu0 %v467, 112
        %v2132 = vpop.permute.xlu0 %2131
        %v2134 = vsel %vm854, %v1834, 0
        %v2137 = vsel %vm954, %v2132, 0
        %2139 = vmatprep.subr.bf16.mxu0 0
        %2140 = vmatpush1.bf16.msra.mxu0 %v2137
        %2141 = vmatprep.subr.bf16.mxu0 0
        %2142 = vmatpush1.bf16.msra.mxu0 0
        %2143 = vmatprep.subr.bf16.mxu0 0
        %2144 = vmatpush1.bf16.msra.mxu0 0
        %2145 = vmatprep.subr.bf16.mxu0 0
        %2146 = vmatpush1.bf16.msra.mxu0 0
        %2147 = vmatprep.subr.bf16.mxu0 0
        %2148 = vmatpush1.bf16.msra.mxu0 0
        %2149 = vmatprep.subr.bf16.mxu0 0
        %2150 = vmatpush1.bf16.msra.mxu0 0
        %2151 = vmatprep.subr.bf16.mxu0 0
        %2152 = vmatpush1.bf16.msra.mxu0 0
        %2153 = vmatprep.subr.bf16.mxu0 0
        %2154 = vmatpush1.bf16.msra.mxu0 0
        %2155 = vmatprep.subr.bf16.mxu0 0
        %2156 = vmatpush1.bf16.msra.mxu0 0
        %2157 = vmatprep.subr.bf16.mxu0 0
        %2158 = vmatpush1.bf16.msra.mxu0 0
        %2159 = vmatprep.subr.bf16.mxu0 0
        %2160 = vmatpush1.bf16.msra.mxu0 0
        %2161 = vmatprep.subr.bf16.mxu0 0
        %2162 = vmatpush1.bf16.msra.mxu0 0
        %2163 = vmatprep.subr.bf16.mxu0 0
        %2164 = vmatpush1.bf16.msra.mxu0 0
        %2165 = vmatprep.subr.bf16.mxu0 0
        %2166 = vmatpush1.bf16.msra.mxu0 0
        %2167 = vmatprep.subr.bf16.mxu0 0
        %2168 = vmatpush1.bf16.msra.mxu0 0
        %2169 = vmatprep.subr.bf16.mxu0 0
        %2170 = vmatpush1.bf16.msra.mxu0 0
        %2171 = vmatprep.mubr.bf16.mxu0 0
        %2172 = vmatmul.mubr.bf16.gmra.mrb[0].mxu0 %v2134
        %v2173 = vpop.f32.mrb[0].mxu0
        %v2174 = vadd.f32 0.0, %v2173
        %v2175 = vpop.f32.mrb[0].mxu0
        %v2176 = vpop.f32.mrb[0].mxu0
        %v2177 = vpop.f32.mrb[0].mxu0
        %2178 = vdwg.mxu0
        %2180 = vrot.lane.b32.xlu0 %v468, 112
        %v2181 = vpop.permute.xlu0 %2180
        %v2183 = vsel %vm854, %v1835, 0
        %v2186 = vsel %vm954, %v2181, 0
        %2188 = vmatprep.subr.bf16.mxu0 0
        %2189 = vmatpush1.bf16.msra.mxu0 %v2186
        %2190 = vmatprep.subr.bf16.mxu0 0
        %2191 = vmatpush1.bf16.msra.mxu0 0
        %2192 = vmatprep.subr.bf16.mxu0 0
        %2193 = vmatpush1.bf16.msra.mxu0 0
        %2194 = vmatprep.subr.bf16.mxu0 0
        %2195 = vmatpush1.bf16.msra.mxu0 0
        %2196 = vmatprep.subr.bf16.mxu0 0
        %2197 = vmatpush1.bf16.msra.mxu0 0
        %2198 = vmatprep.subr.bf16.mxu0 0
        %2199 = vmatpush1.bf16.msra.mxu0 0
        %2200 = vmatprep.subr.bf16.mxu0 0
        %2201 = vmatpush1.bf16.msra.mxu0 0
        %2202 = vmatprep.subr.bf16.mxu0 0
        %2203 = vmatpush1.bf16.msra.mxu0 0
        %2204 = vmatprep.subr.bf16.mxu0 0
        %2205 = vmatpush1.bf16.msra.mxu0 0
        %2206 = vmatprep.subr.bf16.mxu0 0
        %2207 = vmatpush1.bf16.msra.mxu0 0
        %2208 = vmatprep.subr.bf16.mxu0 0
        %2209 = vmatpush1.bf16.msra.mxu0 0
        %2210 = vmatprep.subr.bf16.mxu0 0
        %2211 = vmatpush1.bf16.msra.mxu0 0
        %2212 = vmatprep.subr.bf16.mxu0 0
        %2213 = vmatpush1.bf16.msra.mxu0 0
        %2214 = vmatprep.subr.bf16.mxu0 0
        %2215 = vmatpush1.bf16.msra.mxu0 0
        %2216 = vmatprep.subr.bf16.mxu0 0
        %2217 = vmatpush1.bf16.msra.mxu0 0
        %2218 = vmatprep.subr.bf16.mxu0 0
        %2219 = vmatpush1.bf16.msra.mxu0 0
        %2220 = vmatprep.mubr.bf16.mxu0 0
        %2221 = vmatmul.mubr.bf16.gmra.mrb[0].mxu0 %v2183
        %v2222 = vpop.f32.mrb[0].mxu0
        %v2223 = vadd.f32 0.0, %v2222
        %v2224 = vpop.f32.mrb[0].mxu0
        %v2225 = vpop.f32.mrb[0].mxu0
        %v2226 = vpop.f32.mrb[0].mxu0
        %2227 = vdwg.mxu0
        %v2228 = vpack.c.bf16 %v1929, %v1880
        %v2229 = vpack.c.bf16 %v2027, %v1978
        %v2230 = vpack.c.bf16 %v2125, %v2076
        %v2231 = vpack.c.bf16 %v2223, %v2174
        %v2234 = vunpack.c.l.b16 %v471
        %v2235 = vunpack.c.l.b16 %v472
        %v2236 = vpack.c.b16 %v2235, %v2234
        %v2239 = vsel %vm485, %v2228, 0
        %v2242 = vsel %vm485, %v2229, 0
        %v2245 = vsel %vm485, %v2230, 0
        %v2248 = vsel %vm485, %v2231, 0
        %2250 = vmatprep.subr.bf16.mxu0 0
        %2251 = vmatpush1.bf16.msra.mxu0 %v2236
        %2252 = vmatprep.subr.bf16.mxu0 0
        %2253 = vmatpush1.bf16.msra.mxu0 0
        %2254 = vmatprep.subr.bf16.mxu0 0
        %2255 = vmatpush1.bf16.msra.mxu0 0
        %2256 = vmatprep.subr.bf16.mxu0 0
        %2257 = vmatpush1.bf16.msra.mxu0 0
        %2258 = vmatprep.subr.bf16.mxu0 0
        %2259 = vmatpush1.bf16.msra.mxu0 0
        %2260 = vmatprep.subr.bf16.mxu0 0
        %2261 = vmatpush1.bf16.msra.mxu0 0
        %2262 = vmatprep.subr.bf16.mxu0 0
        %2263 = vmatpush1.bf16.msra.mxu0 0
        %2264 = vmatprep.subr.bf16.mxu0 0
        %2265 = vmatpush1.bf16.msra.mxu0 0
        %2266 = vmatprep.subr.bf16.mxu0 0
        %2267 = vmatpush1.bf16.msra.mxu0 0
        %2268 = vmatprep.subr.bf16.mxu0 0
        %2269 = vmatpush1.bf16.msra.mxu0 0
        %2270 = vmatprep.subr.bf16.mxu0 0
        %2271 = vmatpush1.bf16.msra.mxu0 0
        %2272 = vmatprep.subr.bf16.mxu0 0
        %2273 = vmatpush1.bf16.msra.mxu0 0
        %2274 = vmatprep.subr.bf16.mxu0 0
        %2275 = vmatpush1.bf16.msra.mxu0 0
        %2276 = vmatprep.subr.bf16.mxu0 0
        %2277 = vmatpush1.bf16.msra.mxu0 0
        %2278 = vmatprep.subr.bf16.mxu0 0
        %2279 = vmatpush1.bf16.msra.mxu0 0
        %2280 = vmatprep.subr.bf16.mxu0 0
        %2281 = vmatpush1.bf16.msra.mxu0 0
        %2282 = vmatprep.mubr.bf16.mxu0 0
        %2283 = vmatmul.mubr.bf16.gmra.mrb[0].mxu0 %v2239
        %v2284 = vpop.f32.mrb[0].mxu0
        %v2285 = vadd.f32 0.0, %v2284
        %v2286 = vpop.f32.mrb[0].mxu0
        %v2287 = vpop.f32.mrb[0].mxu0
        %v2288 = vadd.f32 0.0, %v2287
        %v2289 = vpop.f32.mrb[0].mxu0
        %2290 = vmatprep.mubr.bf16.mxu0 0
        %2291 = vmatmul.mubr.bf16.gmra.mrb[0].mxu0 %v2242
        %v2292 = vpop.f32.mrb[0].mxu0
        %v2293 = vadd.f32 0.0, %v2292
        %v2294 = vpop.f32.mrb[0].mxu0
        %v2295 = vpop.f32.mrb[0].mxu0
        %v2296 = vadd.f32 0.0, %v2295
        %v2297 = vpop.f32.mrb[0].mxu0
        %2298 = vmatprep.mubr.bf16.mxu0 0
        %2299 = vmatmul.mubr.bf16.gmra.mrb[0].mxu0 %v2245
        %v2300 = vpop.f32.mrb[0].mxu0
        %v2301 = vadd.f32 0.0, %v2300
        %v2302 = vpop.f32.mrb[0].mxu0
        %v2303 = vpop.f32.mrb[0].mxu0
        %v2304 = vadd.f32 0.0, %v2303
        %v2305 = vpop.f32.mrb[0].mxu0
        %2306 = vmatprep.mubr.bf16.mxu0 0
        %2307 = vmatmul.mubr.bf16.gmra.mrb[0].mxu0 %v2248
        %v2308 = vpop.f32.mrb[0].mxu0
        %v2309 = vadd.f32 0.0, %v2308
        %v2310 = vpop.f32.mrb[0].mxu0
        %v2311 = vpop.f32.mrb[0].mxu0
        %v2312 = vadd.f32 0.0, %v2311
        %v2313 = vpop.f32.mrb[0].mxu0
        %2314 = vdwg.mxu0
        %v2317 = vunpack.c.l.b16 %v469
        %v2318 = vunpack.c.l.b16 %v470
        %v2319 = vpack.c.b16 %v2318, %v2317
        %v2322 = vsel %vm485, %v1320, 0
        %v2325 = vsel %vm485, %v1321, 0
        %v2328 = vsel %vm485, %v1322, 0
        %v2331 = vsel %vm485, %v1323, 0
        %2333 = vmatprep.subr.bf16.mxu0 0
        %2334 = vmatpush1.bf16.msra.mxu0 %v2319
        %2335 = vmatprep.subr.bf16.mxu0 0
        %2336 = vmatpush1.bf16.msra.mxu0 0
        %2337 = vmatprep.subr.bf16.mxu0 0
        %2338 = vmatpush1.bf16.msra.mxu0 0
        %2339 = vmatprep.subr.bf16.mxu0 0
        %2340 = vmatpush1.bf16.msra.mxu0 0
        %2341 = vmatprep.subr.bf16.mxu0 0
        %2342 = vmatpush1.bf16.msra.mxu0 0
        %2343 = vmatprep.subr.bf16.mxu0 0
        %2344 = vmatpush1.bf16.msra.mxu0 0
        %2345 = vmatprep.subr.bf16.mxu0 0
        %2346 = vmatpush1.bf16.msra.mxu0 0
        %2347 = vmatprep.subr.bf16.mxu0 0
        %2348 = vmatpush1.bf16.msra.mxu0 0
        %2349 = vmatprep.subr.bf16.mxu0 0
        %2350 = vmatpush1.bf16.msra.mxu0 0
        %2351 = vmatprep.subr.bf16.mxu0 0
        %2352 = vmatpush1.bf16.msra.mxu0 0
        %2353 = vmatprep.subr.bf16.mxu0 0
        %2354 = vmatpush1.bf16.msra.mxu0 0
        %2355 = vmatprep.subr.bf16.mxu0 0
        %2356 = vmatpush1.bf16.msra.mxu0 0
        %2357 = vmatprep.subr.bf16.mxu0 0
        %2358 = vmatpush1.bf16.msra.mxu0 0
        %2359 = vmatprep.subr.bf16.mxu0 0
        %2360 = vmatpush1.bf16.msra.mxu0 0
        %2361 = vmatprep.subr.bf16.mxu0 0
        %2362 = vmatpush1.bf16.msra.mxu0 0
        %2363 = vmatprep.subr.bf16.mxu0 0
        %2364 = vmatpush1.bf16.msra.mxu0 0
        %2365 = vmatprep.mubr.bf16.mxu0 0
        %2366 = vmatmul.mubr.bf16.gmra.mrb[0].mxu0 %v2322
        %v2367 = vpop.f32.mrb[0].mxu0
        %v2368 = vadd.f32 %v2285, %v2367
        %v2369 = vpop.f32.mrb[0].mxu0
        %v2370 = vpop.f32.mrb[0].mxu0
        %v2371 = vadd.f32 %v2288, %v2370
        %v2372 = vpop.f32.mrb[0].mxu0
        %2373 = vmatprep.mubr.bf16.mxu0 0
        %2374 = vmatmul.mubr.bf16.gmra.mrb[0].mxu0 %v2325
        %v2375 = vpop.f32.mrb[0].mxu0
        %v2376 = vadd.f32 %v2293, %v2375
        %v2377 = vpop.f32.mrb[0].mxu0
        %v2378 = vpop.f32.mrb[0].mxu0
        %v2379 = vadd.f32 %v2296, %v2378
        %v2380 = vpop.f32.mrb[0].mxu0
        %2381 = vmatprep.mubr.bf16.mxu0 0
        %2382 = vmatmul.mubr.bf16.gmra.mrb[0].mxu0 %v2328
        %v2383 = vpop.f32.mrb[0].mxu0
        %v2384 = vadd.f32 %v2301, %v2383
        %v2385 = vpop.f32.mrb[0].mxu0
        %v2386 = vpop.f32.mrb[0].mxu0
        %v2387 = vadd.f32 %v2304, %v2386
        %v2388 = vpop.f32.mrb[0].mxu0
        %2389 = vmatprep.mubr.bf16.mxu0 0
        %2390 = vmatmul.mubr.bf16.gmra.mrb[0].mxu0 %v2331
        %v2391 = vpop.f32.mrb[0].mxu0
        %v2392 = vadd.f32 %v2309, %v2391
        %v2393 = vpop.f32.mrb[0].mxu0
        %v2394 = vpop.f32.mrb[0].mxu0
        %v2395 = vadd.f32 %v2312, %v2394
        %v2396 = vpop.f32.mrb[0].mxu0
        %2397 = vdwg.mxu0
        %2398 = vrot.lane.b32.xlu0 %v445, 96
        %v2399 = vpop.permute.xlu0 %2398
        %2400 = vrot.lane.b32.xlu0 %v453, 96
        %v2401 = vpop.permute.xlu0 %2400
        %v2403 = vsel %vm485, %v2399, 0
        %v2406 = vsel %vm485, %v2401, 0
        %2408 = vmatprep.subr.bf16.mxu0 0
        %2409 = vmatpush1.bf16.xpose.msra.mxu0 %v2406
        %2410 = vmatprep.subr.bf16.mxu0 0
        %2411 = vmatpush1.bf16.xpose.msra.mxu0 0
        %2412 = vmatprep.subr.bf16.mxu0 0
        %2413 = vmatpush1.bf16.xpose.msra.mxu0 0
        %2414 = vmatprep.subr.bf16.mxu0 0
        %2415 = vmatpush1.bf16.xpose.msra.mxu0 0
        %2416 = vmatprep.subr.bf16.mxu0 0
        %2417 = vmatpush1.bf16.xpose.msra.mxu0 0
        %2418 = vmatprep.subr.bf16.mxu0 0
        %2419 = vmatpush1.bf16.xpose.msra.mxu0 0
        %2420 = vmatprep.subr.bf16.mxu0 0
        %2421 = vmatpush1.bf16.xpose.msra.mxu0 0
        %2422 = vmatprep.subr.bf16.mxu0 0
        %2423 = vmatpush1.bf16.xpose.msra.mxu0 0
        %2424 = vmatprep.subr.bf16.mxu0 0
        %2425 = vmatpush1.bf16.xpose.msra.mxu0 0
        %2426 = vmatprep.subr.bf16.mxu0 0
        %2427 = vmatpush1.bf16.xpose.msra.mxu0 0
        %2428 = vmatprep.subr.bf16.mxu0 0
        %2429 = vmatpush1.bf16.xpose.msra.mxu0 0
        %2430 = vmatprep.subr.bf16.mxu0 0
        %2431 = vmatpush1.bf16.xpose.msra.mxu0 0
        %2432 = vmatprep.subr.bf16.mxu0 0
        %2433 = vmatpush1.bf16.xpose.msra.mxu0 0
        %2434 = vmatprep.subr.bf16.mxu0 0
        %2435 = vmatpush1.bf16.xpose.msra.mxu0 0
        %2436 = vmatprep.subr.bf16.mxu0 0
        %2437 = vmatpush1.bf16.xpose.msra.mxu0 0
        %2438 = vmatprep.subr.bf16.mxu0 0
        %2439 = vmatpush1.bf16.xpose.msra.mxu0 0
        %2440 = vmatprep.mubr.bf16.mxu0 0
        %2441 = vmatmul.mubr.bf16.gmra.mrb[0].mxu0 %v2403
        %v2442 = vpop.f32.mrb[0].mxu0
        %v2443 = vadd.f32 0.0, %v2442
        %v2444 = vpop.f32.mrb[0].mxu0
        %v2445 = vpop.f32.mrb[0].mxu0
        %v2446 = vpop.f32.mrb[0].mxu0
        %2447 = vdwg.mxu0
        %2448 = vrot.lane.b32.xlu0 %v446, 96
        %v2449 = vpop.permute.xlu0 %2448
        %2450 = vrot.lane.b32.xlu0 %v454, 96
        %v2451 = vpop.permute.xlu0 %2450
        %v2453 = vsel %vm485, %v2449, 0
        %v2456 = vsel %vm485, %v2451, 0
        %2458 = vmatprep.subr.bf16.mxu0 0
        %2459 = vmatpush1.bf16.xpose.msra.mxu0 %v2456
        %2460 = vmatprep.subr.bf16.mxu0 0
        %2461 = vmatpush1.bf16.xpose.msra.mxu0 0
        %2462 = vmatprep.subr.bf16.mxu0 0
        %2463 = vmatpush1.bf16.xpose.msra.mxu0 0
        %2464 = vmatprep.subr.bf16.mxu0 0
        %2465 = vmatpush1.bf16.xpose.msra.mxu0 0
        %2466 = vmatprep.subr.bf16.mxu0 0
        %2467 = vmatpush1.bf16.xpose.msra.mxu0 0
        %2468 = vmatprep.subr.bf16.mxu0 0
        %2469 = vmatpush1.bf16.xpose.msra.mxu0 0
        %2470 = vmatprep.subr.bf16.mxu0 0
        %2471 = vmatpush1.bf16.xpose.msra.mxu0 0
        %2472 = vmatprep.subr.bf16.mxu0 0
        %2473 = vmatpush1.bf16.xpose.msra.mxu0 0
        %2474 = vmatprep.subr.bf16.mxu0 0
        %2475 = vmatpush1.bf16.xpose.msra.mxu0 0
        %2476 = vmatprep.subr.bf16.mxu0 0
        %2477 = vmatpush1.bf16.xpose.msra.mxu0 0
        %2478 = vmatprep.subr.bf16.mxu0 0
        %2479 = vmatpush1.bf16.xpose.msra.mxu0 0
        %2480 = vmatprep.subr.bf16.mxu0 0
        %2481 = vmatpush1.bf16.xpose.msra.mxu0 0
        %2482 = vmatprep.subr.bf16.mxu0 0
        %2483 = vmatpush1.bf16.xpose.msra.mxu0 0
        %2484 = vmatprep.subr.bf16.mxu0 0
        %2485 = vmatpush1.bf16.xpose.msra.mxu0 0
        %2486 = vmatprep.subr.bf16.mxu0 0
        %2487 = vmatpush1.bf16.xpose.msra.mxu0 0
        %2488 = vmatprep.subr.bf16.mxu0 0
        %2489 = vmatpush1.bf16.xpose.msra.mxu0 0
        %2490 = vmatprep.mubr.bf16.mxu0 0
        %2491 = vmatmul.mubr.bf16.gmra.mrb[0].mxu0 %v2453
        %v2492 = vpop.f32.mrb[0].mxu0
        %v2493 = vadd.f32 0.0, %v2492
        %v2494 = vpop.f32.mrb[0].mxu0
        %v2495 = vpop.f32.mrb[0].mxu0
        %v2496 = vpop.f32.mrb[0].mxu0
        %2497 = vdwg.mxu0
        %2498 = vrot.lane.b32.xlu0 %v447, 96
        %v2499 = vpop.permute.xlu0 %2498
        %2500 = vrot.lane.b32.xlu0 %v455, 96
        %v2501 = vpop.permute.xlu0 %2500
        %v2503 = vsel %vm485, %v2499, 0
        %v2506 = vsel %vm485, %v2501, 0
        %2508 = vmatprep.subr.bf16.mxu0 0
        %2509 = vmatpush1.bf16.xpose.msra.mxu0 %v2506
        %2510 = vmatprep.subr.bf16.mxu0 0
        %2511 = vmatpush1.bf16.xpose.msra.mxu0 0
        %2512 = vmatprep.subr.bf16.mxu0 0
        %2513 = vmatpush1.bf16.xpose.msra.mxu0 0
        %2514 = vmatprep.subr.bf16.mxu0 0
        %2515 = vmatpush1.bf16.xpose.msra.mxu0 0
        %2516 = vmatprep.subr.bf16.mxu0 0
        %2517 = vmatpush1.bf16.xpose.msra.mxu0 0
        %2518 = vmatprep.subr.bf16.mxu0 0
        %2519 = vmatpush1.bf16.xpose.msra.mxu0 0
        %2520 = vmatprep.subr.bf16.mxu0 0
        %2521 = vmatpush1.bf16.xpose.msra.mxu0 0
        %2522 = vmatprep.subr.bf16.mxu0 0
        %2523 = vmatpush1.bf16.xpose.msra.mxu0 0
        %2524 = vmatprep.subr.bf16.mxu0 0
        %2525 = vmatpush1.bf16.xpose.msra.mxu0 0
        %2526 = vmatprep.subr.bf16.mxu0 0
        %2527 = vmatpush1.bf16.xpose.msra.mxu0 0
        %2528 = vmatprep.subr.bf16.mxu0 0
        %2529 = vmatpush1.bf16.xpose.msra.mxu0 0
        %2530 = vmatprep.subr.bf16.mxu0 0
        %2531 = vmatpush1.bf16.xpose.msra.mxu0 0
        %2532 = vmatprep.subr.bf16.mxu0 0
        %2533 = vmatpush1.bf16.xpose.msra.mxu0 0
        %2534 = vmatprep.subr.bf16.mxu0 0
        %2535 = vmatpush1.bf16.xpose.msra.mxu0 0
        %2536 = vmatprep.subr.bf16.mxu0 0
        %2537 = vmatpush1.bf16.xpose.msra.mxu0 0
        %2538 = vmatprep.subr.bf16.mxu0 0
        %2539 = vmatpush1.bf16.xpose.msra.mxu0 0
        %2540 = vmatprep.mubr.bf16.mxu0 0
        %2541 = vmatmul.mubr.bf16.gmra.mrb[0].mxu0 %v2503
        %v2542 = vpop.f32.mrb[0].mxu0
        %v2543 = vadd.f32 0.0, %v2542
        %v2544 = vpop.f32.mrb[0].mxu0
        %v2545 = vpop.f32.mrb[0].mxu0
        %v2546 = vpop.f32.mrb[0].mxu0
        %2547 = vdwg.mxu0
        %2548 = vrot.lane.b32.xlu0 %v448, 96
        %v2549 = vpop.permute.xlu0 %2548
        %2550 = vrot.lane.b32.xlu0 %v456, 96
        %v2551 = vpop.permute.xlu0 %2550
        %v2553 = vsel %vm485, %v2549, 0
        %v2556 = vsel %vm485, %v2551, 0
        %2558 = vmatprep.subr.bf16.mxu0 0
        %2559 = vmatpush1.bf16.xpose.msra.mxu0 %v2556
        %2560 = vmatprep.subr.bf16.mxu0 0
        %2561 = vmatpush1.bf16.xpose.msra.mxu0 0
        %2562 = vmatprep.subr.bf16.mxu0 0
        %2563 = vmatpush1.bf16.xpose.msra.mxu0 0
        %2564 = vmatprep.subr.bf16.mxu0 0
        %2565 = vmatpush1.bf16.xpose.msra.mxu0 0
        %2566 = vmatprep.subr.bf16.mxu0 0
        %2567 = vmatpush1.bf16.xpose.msra.mxu0 0
        %2568 = vmatprep.subr.bf16.mxu0 0
        %2569 = vmatpush1.bf16.xpose.msra.mxu0 0
        %2570 = vmatprep.subr.bf16.mxu0 0
        %2571 = vmatpush1.bf16.xpose.msra.mxu0 0
        %2572 = vmatprep.subr.bf16.mxu0 0
        %2573 = vmatpush1.bf16.xpose.msra.mxu0 0
        %2574 = vmatprep.subr.bf16.mxu0 0
        %2575 = vmatpush1.bf16.xpose.msra.mxu0 0
        %2576 = vmatprep.subr.bf16.mxu0 0
        %2577 = vmatpush1.bf16.xpose.msra.mxu0 0
        %2578 = vmatprep.subr.bf16.mxu0 0
        %2579 = vmatpush1.bf16.xpose.msra.mxu0 0
        %2580 = vmatprep.subr.bf16.mxu0 0
        %2581 = vmatpush1.bf16.xpose.msra.mxu0 0
        %2582 = vmatprep.subr.bf16.mxu0 0
        %2583 = vmatpush1.bf16.xpose.msra.mxu0 0
        %2584 = vmatprep.subr.bf16.mxu0 0
        %2585 = vmatpush1.bf16.xpose.msra.mxu0 0
        %2586 = vmatprep.subr.bf16.mxu0 0
        %2587 = vmatpush1.bf16.xpose.msra.mxu0 0
        %2588 = vmatprep.subr.bf16.mxu0 0
        %2589 = vmatpush1.bf16.xpose.msra.mxu0 0
        %2590 = vmatprep.mubr.bf16.mxu0 0
        %2591 = vmatmul.mubr.bf16.gmra.mrb[0].mxu0 %v2553
        %v2592 = vpop.f32.mrb[0].mxu0
        %v2593 = vadd.f32 0.0, %v2592
        %v2594 = vpop.f32.mrb[0].mxu0
        %v2595 = vpop.f32.mrb[0].mxu0
        %v2596 = vpop.f32.mrb[0].mxu0
        %2597 = vdwg.mxu0
        %2598 = vrot.lane.b32.xlu0 %v449, 96
        %v2599 = vpop.permute.xlu0 %2598
        %2600 = vrot.lane.b32.xlu0 %v457, 96
        %v2601 = vpop.permute.xlu0 %2600
        %v2603 = vsel %vm485, %v2599, 0
        %v2606 = vsel %vm485, %v2601, 0
        %2608 = vmatprep.subr.bf16.mxu0 0
        %2609 = vmatpush1.bf16.xpose.msra.mxu0 %v2606
        %2610 = vmatprep.subr.bf16.mxu0 0
        %2611 = vmatpush1.bf16.xpose.msra.mxu0 0
        %2612 = vmatprep.subr.bf16.mxu0 0
        %2613 = vmatpush1.bf16.xpose.msra.mxu0 0
        %2614 = vmatprep.subr.bf16.mxu0 0
        %2615 = vmatpush1.bf16.xpose.msra.mxu0 0
        %2616 = vmatprep.subr.bf16.mxu0 0
        %2617 = vmatpush1.bf16.xpose.msra.mxu0 0
        %2618 = vmatprep.subr.bf16.mxu0 0
        %2619 = vmatpush1.bf16.xpose.msra.mxu0 0
        %2620 = vmatprep.subr.bf16.mxu0 0
        %2621 = vmatpush1.bf16.xpose.msra.mxu0 0
        %2622 = vmatprep.subr.bf16.mxu0 0
        %2623 = vmatpush1.bf16.xpose.msra.mxu0 0
        %2624 = vmatprep.subr.bf16.mxu0 0
        %2625 = vmatpush1.bf16.xpose.msra.mxu0 0
        %2626 = vmatprep.subr.bf16.mxu0 0
        %2627 = vmatpush1.bf16.xpose.msra.mxu0 0
        %2628 = vmatprep.subr.bf16.mxu0 0
        %2629 = vmatpush1.bf16.xpose.msra.mxu0 0
        %2630 = vmatprep.subr.bf16.mxu0 0
        %2631 = vmatpush1.bf16.xpose.msra.mxu0 0
        %2632 = vmatprep.subr.bf16.mxu0 0
        %2633 = vmatpush1.bf16.xpose.msra.mxu0 0
        %2634 = vmatprep.subr.bf16.mxu0 0
        %2635 = vmatpush1.bf16.xpose.msra.mxu0 0
        %2636 = vmatprep.subr.bf16.mxu0 0
        %2637 = vmatpush1.bf16.xpose.msra.mxu0 0
        %2638 = vmatprep.subr.bf16.mxu0 0
        %2639 = vmatpush1.bf16.xpose.msra.mxu0 0
        %2640 = vmatprep.mubr.bf16.mxu0 0
        %2641 = vmatmul.mubr.bf16.gmra.mrb[0].mxu0 %v2603
        %v2642 = vpop.f32.mrb[0].mxu0
        %v2643 = vadd.f32 0.0, %v2642
        %v2644 = vpop.f32.mrb[0].mxu0
        %v2645 = vpop.f32.mrb[0].mxu0
        %v2646 = vpop.f32.mrb[0].mxu0
        %2647 = vdwg.mxu0
        %2648 = vrot.lane.b32.xlu0 %v450, 96
        %v2649 = vpop.permute.xlu0 %2648
        %2650 = vrot.lane.b32.xlu0 %v458, 96
        %v2651 = vpop.permute.xlu0 %2650
        %v2653 = vsel %vm485, %v2649, 0
        %v2656 = vsel %vm485, %v2651, 0
        %2658 = vmatprep.subr.bf16.mxu0 0
        %2659 = vmatpush1.bf16.xpose.msra.mxu0 %v2656
        %2660 = vmatprep.subr.bf16.mxu0 0
        %2661 = vmatpush1.bf16.xpose.msra.mxu0 0
        %2662 = vmatprep.subr.bf16.mxu0 0
        %2663 = vmatpush1.bf16.xpose.msra.mxu0 0
        %2664 = vmatprep.subr.bf16.mxu0 0
        %2665 = vmatpush1.bf16.xpose.msra.mxu0 0
        %2666 = vmatprep.subr.bf16.mxu0 0
        %2667 = vmatpush1.bf16.xpose.msra.mxu0 0
        %2668 = vmatprep.subr.bf16.mxu0 0
        %2669 = vmatpush1.bf16.xpose.msra.mxu0 0
        %2670 = vmatprep.subr.bf16.mxu0 0
        %2671 = vmatpush1.bf16.xpose.msra.mxu0 0
        %2672 = vmatprep.subr.bf16.mxu0 0
        %2673 = vmatpush1.bf16.xpose.msra.mxu0 0
        %2674 = vmatprep.subr.bf16.mxu0 0
        %2675 = vmatpush1.bf16.xpose.msra.mxu0 0
        %2676 = vmatprep.subr.bf16.mxu0 0
        %2677 = vmatpush1.bf16.xpose.msra.mxu0 0
        %2678 = vmatprep.subr.bf16.mxu0 0
        %2679 = vmatpush1.bf16.xpose.msra.mxu0 0
        %2680 = vmatprep.subr.bf16.mxu0 0
        %2681 = vmatpush1.bf16.xpose.msra.mxu0 0
        %2682 = vmatprep.subr.bf16.mxu0 0
        %2683 = vmatpush1.bf16.xpose.msra.mxu0 0
        %2684 = vmatprep.subr.bf16.mxu0 0
        %2685 = vmatpush1.bf16.xpose.msra.mxu0 0
        %2686 = vmatprep.subr.bf16.mxu0 0
        %2687 = vmatpush1.bf16.xpose.msra.mxu0 0
        %2688 = vmatprep.subr.bf16.mxu0 0
        %2689 = vmatpush1.bf16.xpose.msra.mxu0 0
        %2690 = vmatprep.mubr.bf16.mxu0 0
        %2691 = vmatmul.mubr.bf16.gmra.mrb[0].mxu0 %v2653
        %v2692 = vpop.f32.mrb[0].mxu0
        %v2693 = vadd.f32 0.0, %v2692
        %v2694 = vpop.f32.mrb[0].mxu0
        %v2695 = vpop.f32.mrb[0].mxu0
        %v2696 = vpop.f32.mrb[0].mxu0
        %2697 = vdwg.mxu0
        %2698 = vrot.lane.b32.xlu0 %v451, 96
        %v2699 = vpop.permute.xlu0 %2698
        %2700 = vrot.lane.b32.xlu0 %v459, 96
        %v2701 = vpop.permute.xlu0 %2700
        %v2703 = vsel %vm485, %v2699, 0
        %v2706 = vsel %vm485, %v2701, 0
        %2708 = vmatprep.subr.bf16.mxu0 0
        %2709 = vmatpush1.bf16.xpose.msra.mxu0 %v2706
        %2710 = vmatprep.subr.bf16.mxu0 0
        %2711 = vmatpush1.bf16.xpose.msra.mxu0 0
        %2712 = vmatprep.subr.bf16.mxu0 0
        %2713 = vmatpush1.bf16.xpose.msra.mxu0 0
        %2714 = vmatprep.subr.bf16.mxu0 0
        %2715 = vmatpush1.bf16.xpose.msra.mxu0 0
        %2716 = vmatprep.subr.bf16.mxu0 0
        %2717 = vmatpush1.bf16.xpose.msra.mxu0 0
        %2718 = vmatprep.subr.bf16.mxu0 0
        %2719 = vmatpush1.bf16.xpose.msra.mxu0 0
        %2720 = vmatprep.subr.bf16.mxu0 0
        %2721 = vmatpush1.bf16.xpose.msra.mxu0 0
        %2722 = vmatprep.subr.bf16.mxu0 0
        %2723 = vmatpush1.bf16.xpose.msra.mxu0 0
        %2724 = vmatprep.subr.bf16.mxu0 0
        %2725 = vmatpush1.bf16.xpose.msra.mxu0 0
        %2726 = vmatprep.subr.bf16.mxu0 0
        %2727 = vmatpush1.bf16.xpose.msra.mxu0 0
        %2728 = vmatprep.subr.bf16.mxu0 0
        %2729 = vmatpush1.bf16.xpose.msra.mxu0 0
        %2730 = vmatprep.subr.bf16.mxu0 0
        %2731 = vmatpush1.bf16.xpose.msra.mxu0 0
        %2732 = vmatprep.subr.bf16.mxu0 0
        %2733 = vmatpush1.bf16.xpose.msra.mxu0 0
        %2734 = vmatprep.subr.bf16.mxu0 0
        %2735 = vmatpush1.bf16.xpose.msra.mxu0 0
        %2736 = vmatprep.subr.bf16.mxu0 0
        %2737 = vmatpush1.bf16.xpose.msra.mxu0 0
        %2738 = vmatprep.subr.bf16.mxu0 0
        %2739 = vmatpush1.bf16.xpose.msra.mxu0 0
        %2740 = vmatprep.mubr.bf16.mxu0 0
        %2741 = vmatmul.mubr.bf16.gmra.mrb[0].mxu0 %v2703
        %v2742 = vpop.f32.mrb[0].mxu0
        %v2743 = vadd.f32 0.0, %v2742
        %v2744 = vpop.f32.mrb[0].mxu0
        %v2745 = vpop.f32.mrb[0].mxu0
        %v2746 = vpop.f32.mrb[0].mxu0
        %2747 = vdwg.mxu0
        %2748 = vrot.lane.b32.xlu0 %v452, 96
        %v2749 = vpop.permute.xlu0 %2748
        %2750 = vrot.lane.b32.xlu0 %v460, 96
        %v2751 = vpop.permute.xlu0 %2750
        %v2753 = vsel %vm485, %v2749, 0
        %v2756 = vsel %vm485, %v2751, 0
        %2758 = vmatprep.subr.bf16.mxu0 0
        %2759 = vmatpush1.bf16.xpose.msra.mxu0 %v2756
        %2760 = vmatprep.subr.bf16.mxu0 0
        %2761 = vmatpush1.bf16.xpose.msra.mxu0 0
        %2762 = vmatprep.subr.bf16.mxu0 0
        %2763 = vmatpush1.bf16.xpose.msra.mxu0 0
        %2764 = vmatprep.subr.bf16.mxu0 0
        %2765 = vmatpush1.bf16.xpose.msra.mxu0 0
        %2766 = vmatprep.subr.bf16.mxu0 0
        %2767 = vmatpush1.bf16.xpose.msra.mxu0 0
        %2768 = vmatprep.subr.bf16.mxu0 0
        %2769 = vmatpush1.bf16.xpose.msra.mxu0 0
        %2770 = vmatprep.subr.bf16.mxu0 0
        %2771 = vmatpush1.bf16.xpose.msra.mxu0 0
        %2772 = vmatprep.subr.bf16.mxu0 0
        %2773 = vmatpush1.bf16.xpose.msra.mxu0 0
        %2774 = vmatprep.subr.bf16.mxu0 0
        %2775 = vmatpush1.bf16.xpose.msra.mxu0 0
        %2776 = vmatprep.subr.bf16.mxu0 0
        %2777 = vmatpush1.bf16.xpose.msra.mxu0 0
        %2778 = vmatprep.subr.bf16.mxu0 0
        %2779 = vmatpush1.bf16.xpose.msra.mxu0 0
        %2780 = vmatprep.subr.bf16.mxu0 0
        %2781 = vmatpush1.bf16.xpose.msra.mxu0 0
        %2782 = vmatprep.subr.bf16.mxu0 0
        %2783 = vmatpush1.bf16.xpose.msra.mxu0 0
        %2784 = vmatprep.subr.bf16.mxu0 0
        %2785 = vmatpush1.bf16.xpose.msra.mxu0 0
        %2786 = vmatprep.subr.bf16.mxu0 0
        %2787 = vmatpush1.bf16.xpose.msra.mxu0 0
        %2788 = vmatprep.subr.bf16.mxu0 0
        %2789 = vmatpush1.bf16.xpose.msra.mxu0 0
        %2790 = vmatprep.mubr.bf16.mxu0 0
        %2791 = vmatmul.mubr.bf16.gmra.mrb[0].mxu0 %v2753
        %v2792 = vpop.f32.mrb[0].mxu0
        %v2793 = vadd.f32 0.0, %v2792
        %v2794 = vpop.f32.mrb[0].mxu0
        %v2795 = vpop.f32.mrb[0].mxu0
        %v2796 = vpop.f32.mrb[0].mxu0
        %2797 = vdwg.mxu0
        %v2798 = vsel %vm854, %v2443, -inf
        %2799 = vmax.xlane.f32.xlu0 %v2798
        %v2800 = vpop.xlane.xlu0 %2799
        %v2801 = vsel %vm854, %v2493, -inf
        %2802 = vmax.xlane.f32.xlu0 %v2801
        %v2803 = vpop.xlane.xlu0 %2802
        %v2804 = vsel %vm854, %v2543, -inf
        %2805 = vmax.xlane.f32.xlu0 %v2804
        %v2806 = vpop.xlane.xlu0 %2805
        %v2807 = vsel %vm854, %v2593, -inf
        %2808 = vmax.xlane.f32.xlu0 %v2807
        %v2809 = vpop.xlane.xlu0 %2808
        %v2810 = vsel %vm854, %v2643, -inf
        %2811 = vmax.xlane.f32.xlu0 %v2810
        %v2812 = vpop.xlane.xlu0 %2811
        %v2813 = vsel %vm854, %v2693, -inf
        %2814 = vmax.xlane.f32.xlu0 %v2813
        %v2815 = vpop.xlane.xlu0 %2814
        %v2816 = vsel %vm854, %v2743, -inf
        %2817 = vmax.xlane.f32.xlu0 %v2816
        %v2818 = vpop.xlane.xlu0 %2817
        %v2819 = vsel %vm854, %v2793, -inf
        %2820 = vmax.xlane.f32.xlu0 %v2819
        %v2821 = vpop.xlane.xlu0 %2820
        %v2822 = vsub.f32 %v2443, %v2800
        %v2823 = vsub.f32 %v2493, %v2803
        %v2824 = vsub.f32 %v2543, %v2806
        %v2825 = vsub.f32 %v2593, %v2809
        %v2826 = vsub.f32 %v2643, %v2812
        %v2827 = vsub.f32 %v2693, %v2815
        %v2828 = vsub.f32 %v2743, %v2818
        %v2829 = vsub.f32 %v2793, %v2821
        %v2830 = vmul.f32 %v2822, 1.442695
        %v2831 = vpow.pop %v2830
        %v2832 = vmul.f32 %v2823, 1.442695
        %v2833 = vpow.pop %v2832
        %v2834 = vmul.f32 %v2824, 1.442695
        %v2835 = vpow.pop %v2834
        %v2836 = vmul.f32 %v2825, 1.442695
        %v2837 = vpow.pop %v2836
        %v2838 = vmul.f32 %v2826, 1.442695
        %v2839 = vpow.pop %v2838
        %v2840 = vmul.f32 %v2827, 1.442695
        %v2841 = vpow.pop %v2840
        %v2842 = vmul.f32 %v2828, 1.442695
        %v2843 = vpow.pop %v2842
        %v2844 = vmul.f32 %v2829, 1.442695
        %v2845 = vpow.pop %v2844
        %v2846 = vsel %vm854, %v2831, 0.0
        %2847 = vadd.xlane.f32.xlu0 %v2846
        %v2848 = vpop.xlane.xlu0 %2847
        %v2849 = vsel %vm854, %v2833, 0.0
        %2850 = vadd.xlane.f32.xlu0 %v2849
        %v2851 = vpop.xlane.xlu0 %2850
        %v2852 = vsel %vm854, %v2835, 0.0
        %2853 = vadd.xlane.f32.xlu0 %v2852
        %v2854 = vpop.xlane.xlu0 %2853
        %v2855 = vsel %vm854, %v2837, 0.0
        %2856 = vadd.xlane.f32.xlu0 %v2855
        %v2857 = vpop.xlane.xlu0 %2856
        %v2858 = vsel %vm854, %v2839, 0.0
        %2859 = vadd.xlane.f32.xlu0 %v2858
        %v2860 = vpop.xlane.xlu0 %2859
        %v2861 = vsel %vm854, %v2841, 0.0
        %2862 = vadd.xlane.f32.xlu0 %v2861
        %v2863 = vpop.xlane.xlu0 %2862
        %v2864 = vsel %vm854, %v2843, 0.0
        %2865 = vadd.xlane.f32.xlu0 %v2864
        %v2866 = vpop.xlane.xlu0 %2865
        %v2867 = vsel %vm854, %v2845, 0.0
        %2868 = vadd.xlane.f32.xlu0 %v2867
        %v2869 = vpop.xlane.xlu0 %2868
        %v2870 = vrcp.pop %v2848
        %v2871 = vrcp.pop %v2851
        %v2872 = vrcp.pop %v2854
        %v2873 = vrcp.pop %v2857
        %v2874 = vrcp.pop %v2860
        %v2875 = vrcp.pop %v2863
        %v2876 = vrcp.pop %v2866
        %v2877 = vrcp.pop %v2869
        %v2878 = vmul.f32 %v2831, %v2870
        %v2879 = vmul.f32 %v2833, %v2871
        %v2880 = vmul.f32 %v2835, %v2872
        %v2881 = vmul.f32 %v2837, %v2873
        %v2882 = vmul.f32 %v2839, %v2874
        %v2883 = vmul.f32 %v2841, %v2875
        %v2884 = vmul.f32 %v2843, %v2876
        %v2885 = vmul.f32 %v2845, %v2877
        %v2886 = vpack.c.bf16 %v2878, %v2878
        %v2887 = vpack.c.bf16 %v2879, %v2879
        %v2888 = vpack.c.bf16 %v2880, %v2880
        %v2889 = vpack.c.bf16 %v2881, %v2881
        %v2890 = vpack.c.bf16 %v2882, %v2882
        %v2891 = vpack.c.bf16 %v2883, %v2883
        %v2892 = vpack.c.bf16 %v2884, %v2884
        %v2893 = vpack.c.bf16 %v2885, %v2885
        %2894 = vrot.lane.b32.xlu0 %v461, 96
        %v2895 = vpop.permute.xlu0 %2894
        %v2897 = vsel %vm854, %v2886, 0
        %v2900 = vsel %vm954, %v2895, 0
        %2902 = vmatprep.subr.bf16.mxu0 0
        %2903 = vmatpush1.bf16.msra.mxu0 %v2900
        %2904 = vmatprep.subr.bf16.mxu0 0
        %2905 = vmatpush1.bf16.msra.mxu0 0
        %2906 = vmatprep.subr.bf16.mxu0 0
        %2907 = vmatpush1.bf16.msra.mxu0 0
        %2908 = vmatprep.subr.bf16.mxu0 0
        %2909 = vmatpush1.bf16.msra.mxu0 0
        %2910 = vmatprep.subr.bf16.mxu0 0
        %2911 = vmatpush1.bf16.msra.mxu0 0
        %2912 = vmatprep.subr.bf16.mxu0 0
        %2913 = vmatpush1.bf16.msra.mxu0 0
        %2914 = vmatprep.subr.bf16.mxu0 0
        %2915 = vmatpush1.bf16.msra.mxu0 0
        %2916 = vmatprep.subr.bf16.mxu0 0
        %2917 = vmatpush1.bf16.msra.mxu0 0
        %2918 = vmatprep.subr.bf16.mxu0 0
        %2919 = vmatpush1.bf16.msra.mxu0 0
        %2920 = vmatprep.subr.bf16.mxu0 0
        %2921 = vmatpush1.bf16.msra.mxu0 0
        %2922 = vmatprep.subr.bf16.mxu0 0
        %2923 = vmatpush1.bf16.msra.mxu0 0
        %2924 = vmatprep.subr.bf16.mxu0 0
        %2925 = vmatpush1.bf16.msra.mxu0 0
        %2926 = vmatprep.subr.bf16.mxu0 0
        %2927 = vmatpush1.bf16.msra.mxu0 0
        %2928 = vmatprep.subr.bf16.mxu0 0
        %2929 = vmatpush1.bf16.msra.mxu0 0
        %2930 = vmatprep.subr.bf16.mxu0 0
        %2931 = vmatpush1.bf16.msra.mxu0 0
        %2932 = vmatprep.subr.bf16.mxu0 0
        %2933 = vmatpush1.bf16.msra.mxu0 0
        %2934 = vmatprep.mubr.bf16.mxu0 0
        %2935 = vmatmul.mubr.bf16.gmra.mrb[0].mxu0 %v2897
        %v2936 = vpop.f32.mrb[0].mxu0
        %v2937 = vadd.f32 0.0, %v2936
        %v2938 = vpop.f32.mrb[0].mxu0
        %v2939 = vpop.f32.mrb[0].mxu0
        %v2940 = vpop.f32.mrb[0].mxu0
        %2941 = vdwg.mxu0
        %2942 = vrot.lane.b32.xlu0 %v462, 96
        %v2943 = vpop.permute.xlu0 %2942
        %v2945 = vsel %vm854, %v2887, 0
        %v2948 = vsel %vm954, %v2943, 0
        %2950 = vmatprep.subr.bf16.mxu0 0
        %2951 = vmatpush1.bf16.msra.mxu0 %v2948
        %2952 = vmatprep.subr.bf16.mxu0 0
        %2953 = vmatpush1.bf16.msra.mxu0 0
        %2954 = vmatprep.subr.bf16.mxu0 0
        %2955 = vmatpush1.bf16.msra.mxu0 0
        %2956 = vmatprep.subr.bf16.mxu0 0
        %2957 = vmatpush1.bf16.msra.mxu0 0
        %2958 = vmatprep.subr.bf16.mxu0 0
        %2959 = vmatpush1.bf16.msra.mxu0 0
        %2960 = vmatprep.subr.bf16.mxu0 0
        %2961 = vmatpush1.bf16.msra.mxu0 0
        %2962 = vmatprep.subr.bf16.mxu0 0
        %2963 = vmatpush1.bf16.msra.mxu0 0
        %2964 = vmatprep.subr.bf16.mxu0 0
        %2965 = vmatpush1.bf16.msra.mxu0 0
        %2966 = vmatprep.subr.bf16.mxu0 0
        %2967 = vmatpush1.bf16.msra.mxu0 0
        %2968 = vmatprep.subr.bf16.mxu0 0
        %2969 = vmatpush1.bf16.msra.mxu0 0
        %2970 = vmatprep.subr.bf16.mxu0 0
        %2971 = vmatpush1.bf16.msra.mxu0 0
        %2972 = vmatprep.subr.bf16.mxu0 0
        %2973 = vmatpush1.bf16.msra.mxu0 0
        %2974 = vmatprep.subr.bf16.mxu0 0
        %2975 = vmatpush1.bf16.msra.mxu0 0
        %2976 = vmatprep.subr.bf16.mxu0 0
        %2977 = vmatpush1.bf16.msra.mxu0 0
        %2978 = vmatprep.subr.bf16.mxu0 0
        %2979 = vmatpush1.bf16.msra.mxu0 0
        %2980 = vmatprep.subr.bf16.mxu0 0
        %2981 = vmatpush1.bf16.msra.mxu0 0
        %2982 = vmatprep.mubr.bf16.mxu0 0
        %2983 = vmatmul.mubr.bf16.gmra.mrb[0].mxu0 %v2945
        %v2984 = vpop.f32.mrb[0].mxu0
        %v2985 = vadd.f32 0.0, %v2984
        %v2986 = vpop.f32.mrb[0].mxu0
        %v2987 = vpop.f32.mrb[0].mxu0
        %v2988 = vpop.f32.mrb[0].mxu0
        %2989 = vdwg.mxu0
        %2990 = vrot.lane.b32.xlu0 %v463, 96
        %v2991 = vpop.permute.xlu0 %2990
        %v2993 = vsel %vm854, %v2888, 0
        %v2996 = vsel %vm954, %v2991, 0
        %2998 = vmatprep.subr.bf16.mxu0 0
        %2999 = vmatpush1.bf16.msra.mxu0 %v2996
        %3000 = vmatprep.subr.bf16.mxu0 0
        %3001 = vmatpush1.bf16.msra.mxu0 0
        %3002 = vmatprep.subr.bf16.mxu0 0
        %3003 = vmatpush1.bf16.msra.mxu0 0
        %3004 = vmatprep.subr.bf16.mxu0 0
        %3005 = vmatpush1.bf16.msra.mxu0 0
        %3006 = vmatprep.subr.bf16.mxu0 0
        %3007 = vmatpush1.bf16.msra.mxu0 0
        %3008 = vmatprep.subr.bf16.mxu0 0
        %3009 = vmatpush1.bf16.msra.mxu0 0
        %3010 = vmatprep.subr.bf16.mxu0 0
        %3011 = vmatpush1.bf16.msra.mxu0 0
        %3012 = vmatprep.subr.bf16.mxu0 0
        %3013 = vmatpush1.bf16.msra.mxu0 0
        %3014 = vmatprep.subr.bf16.mxu0 0
        %3015 = vmatpush1.bf16.msra.mxu0 0
        %3016 = vmatprep.subr.bf16.mxu0 0
        %3017 = vmatpush1.bf16.msra.mxu0 0
        %3018 = vmatprep.subr.bf16.mxu0 0
        %3019 = vmatpush1.bf16.msra.mxu0 0
        %3020 = vmatprep.subr.bf16.mxu0 0
        %3021 = vmatpush1.bf16.msra.mxu0 0
        %3022 = vmatprep.subr.bf16.mxu0 0
        %3023 = vmatpush1.bf16.msra.mxu0 0
        %3024 = vmatprep.subr.bf16.mxu0 0
        %3025 = vmatpush1.bf16.msra.mxu0 0
        %3026 = vmatprep.subr.bf16.mxu0 0
        %3027 = vmatpush1.bf16.msra.mxu0 0
        %3028 = vmatprep.subr.bf16.mxu0 0
        %3029 = vmatpush1.bf16.msra.mxu0 0
        %3030 = vmatprep.mubr.bf16.mxu0 0
        %3031 = vmatmul.mubr.bf16.gmra.mrb[0].mxu0 %v2993
        %v3032 = vpop.f32.mrb[0].mxu0
        %v3033 = vadd.f32 0.0, %v3032
        %v3034 = vpop.f32.mrb[0].mxu0
        %v3035 = vpop.f32.mrb[0].mxu0
        %v3036 = vpop.f32.mrb[0].mxu0
        %3037 = vdwg.mxu0
        %3038 = vrot.lane.b32.xlu0 %v464, 96
        %v3039 = vpop.permute.xlu0 %3038
        %v3041 = vsel %vm854, %v2889, 0
        %v3044 = vsel %vm954, %v3039, 0
        %3046 = vmatprep.subr.bf16.mxu0 0
        %3047 = vmatpush1.bf16.msra.mxu0 %v3044
        %3048 = vmatprep.subr.bf16.mxu0 0
        %3049 = vmatpush1.bf16.msra.mxu0 0
        %3050 = vmatprep.subr.bf16.mxu0 0
        %3051 = vmatpush1.bf16.msra.mxu0 0
        %3052 = vmatprep.subr.bf16.mxu0 0
        %3053 = vmatpush1.bf16.msra.mxu0 0
        %3054 = vmatprep.subr.bf16.mxu0 0
        %3055 = vmatpush1.bf16.msra.mxu0 0
        %3056 = vmatprep.subr.bf16.mxu0 0
        %3057 = vmatpush1.bf16.msra.mxu0 0
        %3058 = vmatprep.subr.bf16.mxu0 0
        %3059 = vmatpush1.bf16.msra.mxu0 0
        %3060 = vmatprep.subr.bf16.mxu0 0
        %3061 = vmatpush1.bf16.msra.mxu0 0
        %3062 = vmatprep.subr.bf16.mxu0 0
        %3063 = vmatpush1.bf16.msra.mxu0 0
        %3064 = vmatprep.subr.bf16.mxu0 0
        %3065 = vmatpush1.bf16.msra.mxu0 0
        %3066 = vmatprep.subr.bf16.mxu0 0
        %3067 = vmatpush1.bf16.msra.mxu0 0
        %3068 = vmatprep.subr.bf16.mxu0 0
        %3069 = vmatpush1.bf16.msra.mxu0 0
        %3070 = vmatprep.subr.bf16.mxu0 0
        %3071 = vmatpush1.bf16.msra.mxu0 0
        %3072 = vmatprep.subr.bf16.mxu0 0
        %3073 = vmatpush1.bf16.msra.mxu0 0
        %3074 = vmatprep.subr.bf16.mxu0 0
        %3075 = vmatpush1.bf16.msra.mxu0 0
        %3076 = vmatprep.subr.bf16.mxu0 0
        %3077 = vmatpush1.bf16.msra.mxu0 0
        %3078 = vmatprep.mubr.bf16.mxu0 0
        %3079 = vmatmul.mubr.bf16.gmra.mrb[0].mxu0 %v3041
        %v3080 = vpop.f32.mrb[0].mxu0
        %v3081 = vadd.f32 0.0, %v3080
        %v3082 = vpop.f32.mrb[0].mxu0
        %v3083 = vpop.f32.mrb[0].mxu0
        %v3084 = vpop.f32.mrb[0].mxu0
        %3085 = vdwg.mxu0
        %3086 = vrot.lane.b32.xlu0 %v465, 96
        %v3087 = vpop.permute.xlu0 %3086
        %v3089 = vsel %vm854, %v2890, 0
        %v3092 = vsel %vm954, %v3087, 0
        %3094 = vmatprep.subr.bf16.mxu0 0
        %3095 = vmatpush1.bf16.msra.mxu0 %v3092
        %3096 = vmatprep.subr.bf16.mxu0 0
        %3097 = vmatpush1.bf16.msra.mxu0 0
        %3098 = vmatprep.subr.bf16.mxu0 0
        %3099 = vmatpush1.bf16.msra.mxu0 0
        %3100 = vmatprep.subr.bf16.mxu0 0
        %3101 = vmatpush1.bf16.msra.mxu0 0
        %3102 = vmatprep.subr.bf16.mxu0 0
        %3103 = vmatpush1.bf16.msra.mxu0 0
        %3104 = vmatprep.subr.bf16.mxu0 0
        %3105 = vmatpush1.bf16.msra.mxu0 0
        %3106 = vmatprep.subr.bf16.mxu0 0
        %3107 = vmatpush1.bf16.msra.mxu0 0
        %3108 = vmatprep.subr.bf16.mxu0 0
        %3109 = vmatpush1.bf16.msra.mxu0 0
        %3110 = vmatprep.subr.bf16.mxu0 0
        %3111 = vmatpush1.bf16.msra.mxu0 0
        %3112 = vmatprep.subr.bf16.mxu0 0
        %3113 = vmatpush1.bf16.msra.mxu0 0
        %3114 = vmatprep.subr.bf16.mxu0 0
        %3115 = vmatpush1.bf16.msra.mxu0 0
        %3116 = vmatprep.subr.bf16.mxu0 0
        %3117 = vmatpush1.bf16.msra.mxu0 0
        %3118 = vmatprep.subr.bf16.mxu0 0
        %3119 = vmatpush1.bf16.msra.mxu0 0
        %3120 = vmatprep.subr.bf16.mxu0 0
        %3121 = vmatpush1.bf16.msra.mxu0 0
        %3122 = vmatprep.subr.bf16.mxu0 0
        %3123 = vmatpush1.bf16.msra.mxu0 0
        %3124 = vmatprep.subr.bf16.mxu0 0
        %3125 = vmatpush1.bf16.msra.mxu0 0
        %3126 = vmatprep.mubr.bf16.mxu0 0
        %3127 = vmatmul.mubr.bf16.gmra.mrb[0].mxu0 %v3089
        %v3128 = vpop.f32.mrb[0].mxu0
        %v3129 = vadd.f32 0.0, %v3128
        %v3130 = vpop.f32.mrb[0].mxu0
        %v3131 = vpop.f32.mrb[0].mxu0
        %v3132 = vpop.f32.mrb[0].mxu0
        %3133 = vdwg.mxu0
        %3134 = vrot.lane.b32.xlu0 %v466, 96
        %v3135 = vpop.permute.xlu0 %3134
        %v3137 = vsel %vm854, %v2891, 0
        %v3140 = vsel %vm954, %v3135, 0
        %3142 = vmatprep.subr.bf16.mxu0 0
        %3143 = vmatpush1.bf16.msra.mxu0 %v3140
        %3144 = vmatprep.subr.bf16.mxu0 0
        %3145 = vmatpush1.bf16.msra.mxu0 0
        %3146 = vmatprep.subr.bf16.mxu0 0
        %3147 = vmatpush1.bf16.msra.mxu0 0
        %3148 = vmatprep.subr.bf16.mxu0 0
        %3149 = vmatpush1.bf16.msra.mxu0 0
        %3150 = vmatprep.subr.bf16.mxu0 0
        %3151 = vmatpush1.bf16.msra.mxu0 0
        %3152 = vmatprep.subr.bf16.mxu0 0
        %3153 = vmatpush1.bf16.msra.mxu0 0
        %3154 = vmatprep.subr.bf16.mxu0 0
        %3155 = vmatpush1.bf16.msra.mxu0 0
        %3156 = vmatprep.subr.bf16.mxu0 0
        %3157 = vmatpush1.bf16.msra.mxu0 0
        %3158 = vmatprep.subr.bf16.mxu0 0
        %3159 = vmatpush1.bf16.msra.mxu0 0
        %3160 = vmatprep.subr.bf16.mxu0 0
        %3161 = vmatpush1.bf16.msra.mxu0 0
        %3162 = vmatprep.subr.bf16.mxu0 0
        %3163 = vmatpush1.bf16.msra.mxu0 0
        %3164 = vmatprep.subr.bf16.mxu0 0
        %3165 = vmatpush1.bf16.msra.mxu0 0
        %3166 = vmatprep.subr.bf16.mxu0 0
        %3167 = vmatpush1.bf16.msra.mxu0 0
        %3168 = vmatprep.subr.bf16.mxu0 0
        %3169 = vmatpush1.bf16.msra.mxu0 0
        %3170 = vmatprep.subr.bf16.mxu0 0
        %3171 = vmatpush1.bf16.msra.mxu0 0
        %3172 = vmatprep.subr.bf16.mxu0 0
        %3173 = vmatpush1.bf16.msra.mxu0 0
        %3174 = vmatprep.mubr.bf16.mxu0 0
        %3175 = vmatmul.mubr.bf16.gmra.mrb[0].mxu0 %v3137
        %v3176 = vpop.f32.mrb[0].mxu0
        %v3177 = vadd.f32 0.0, %v3176
        %v3178 = vpop.f32.mrb[0].mxu0
        %v3179 = vpop.f32.mrb[0].mxu0
        %v3180 = vpop.f32.mrb[0].mxu0
        %3181 = vdwg.mxu0
        %3182 = vrot.lane.b32.xlu0 %v467, 96
        %v3183 = vpop.permute.xlu0 %3182
        %v3185 = vsel %vm854, %v2892, 0
        %v3188 = vsel %vm954, %v3183, 0
        %3190 = vmatprep.subr.bf16.mxu0 0
        %3191 = vmatpush1.bf16.msra.mxu0 %v3188
        %3192 = vmatprep.subr.bf16.mxu0 0
        %3193 = vmatpush1.bf16.msra.mxu0 0
        %3194 = vmatprep.subr.bf16.mxu0 0
        %3195 = vmatpush1.bf16.msra.mxu0 0
        %3196 = vmatprep.subr.bf16.mxu0 0
        %3197 = vmatpush1.bf16.msra.mxu0 0
        %3198 = vmatprep.subr.bf16.mxu0 0
        %3199 = vmatpush1.bf16.msra.mxu0 0
        %3200 = vmatprep.subr.bf16.mxu0 0
        %3201 = vmatpush1.bf16.msra.mxu0 0
        %3202 = vmatprep.subr.bf16.mxu0 0
        %3203 = vmatpush1.bf16.msra.mxu0 0
        %3204 = vmatprep.subr.bf16.mxu0 0
        %3205 = vmatpush1.bf16.msra.mxu0 0
        %3206 = vmatprep.subr.bf16.mxu0 0
        %3207 = vmatpush1.bf16.msra.mxu0 0
        %3208 = vmatprep.subr.bf16.mxu0 0
        %3209 = vmatpush1.bf16.msra.mxu0 0
        %3210 = vmatprep.subr.bf16.mxu0 0
        %3211 = vmatpush1.bf16.msra.mxu0 0
        %3212 = vmatprep.subr.bf16.mxu0 0
        %3213 = vmatpush1.bf16.msra.mxu0 0
        %3214 = vmatprep.subr.bf16.mxu0 0
        %3215 = vmatpush1.bf16.msra.mxu0 0
        %3216 = vmatprep.subr.bf16.mxu0 0
        %3217 = vmatpush1.bf16.msra.mxu0 0
        %3218 = vmatprep.subr.bf16.mxu0 0
        %3219 = vmatpush1.bf16.msra.mxu0 0
        %3220 = vmatprep.subr.bf16.mxu0 0
        %3221 = vmatpush1.bf16.msra.mxu0 0
        %3222 = vmatprep.mubr.bf16.mxu0 0
        %3223 = vmatmul.mubr.bf16.gmra.mrb[0].mxu0 %v3185
        %v3224 = vpop.f32.mrb[0].mxu0
        %v3225 = vadd.f32 0.0, %v3224
        %v3226 = vpop.f32.mrb[0].mxu0
        %v3227 = vpop.f32.mrb[0].mxu0
        %v3228 = vpop.f32.mrb[0].mxu0
        %3229 = vdwg.mxu0
        %3230 = vrot.lane.b32.xlu0 %v468, 96
        %v3231 = vpop.permute.xlu0 %3230
        %v3233 = vsel %vm854, %v2893, 0
        %v3236 = vsel %vm954, %v3231, 0
        %3238 = vmatprep.subr.bf16.mxu0 0
        %3239 = vmatpush1.bf16.msra.mxu0 %v3236
        %3240 = vmatprep.subr.bf16.mxu0 0
        %3241 = vmatpush1.bf16.msra.mxu0 0
        %3242 = vmatprep.subr.bf16.mxu0 0
        %3243 = vmatpush1.bf16.msra.mxu0 0
        %3244 = vmatprep.subr.bf16.mxu0 0
        %3245 = vmatpush1.bf16.msra.mxu0 0
        %3246 = vmatprep.subr.bf16.mxu0 0
        %3247 = vmatpush1.bf16.msra.mxu0 0
        %3248 = vmatprep.subr.bf16.mxu0 0
        %3249 = vmatpush1.bf16.msra.mxu0 0
        %3250 = vmatprep.subr.bf16.mxu0 0
        %3251 = vmatpush1.bf16.msra.mxu0 0
        %3252 = vmatprep.subr.bf16.mxu0 0
        %3253 = vmatpush1.bf16.msra.mxu0 0
        %3254 = vmatprep.subr.bf16.mxu0 0
        %3255 = vmatpush1.bf16.msra.mxu0 0
        %3256 = vmatprep.subr.bf16.mxu0 0
        %3257 = vmatpush1.bf16.msra.mxu0 0
        %3258 = vmatprep.subr.bf16.mxu0 0
        %3259 = vmatpush1.bf16.msra.mxu0 0
        %3260 = vmatprep.subr.bf16.mxu0 0
        %3261 = vmatpush1.bf16.msra.mxu0 0
        %3262 = vmatprep.subr.bf16.mxu0 0
        %3263 = vmatpush1.bf16.msra.mxu0 0
        %3264 = vmatprep.subr.bf16.mxu0 0
        %3265 = vmatpush1.bf16.msra.mxu0 0
        %3266 = vmatprep.subr.bf16.mxu0 0
        %3267 = vmatpush1.bf16.msra.mxu0 0
        %3268 = vmatprep.subr.bf16.mxu0 0
        %3269 = vmatpush1.bf16.msra.mxu0 0
        %3270 = vmatprep.mubr.bf16.mxu0 0
        %3271 = vmatmul.mubr.bf16.gmra.mrb[0].mxu0 %v3233
        %v3272 = vpop.f32.mrb[0].mxu0
        %v3273 = vadd.f32 0.0, %v3272
        %v3274 = vpop.f32.mrb[0].mxu0
        %v3275 = vpop.f32.mrb[0].mxu0
        %v3276 = vpop.f32.mrb[0].mxu0
        %3277 = vdwg.mxu0
        %v3278 = vpack.c.bf16 %v2985, %v2937
        %v3279 = vpack.c.bf16 %v3081, %v3033
        %v3280 = vpack.c.bf16 %v3177, %v3129
        %v3281 = vpack.c.bf16 %v3273, %v3225
        %v3284 = vunpack.c.l.b16 %v473
        %v3285 = vunpack.c.l.b16 %v474
        %v3286 = vpack.c.b16 %v3285, %v3284
        %v3289 = vsel %vm485, %v3278, 0
        %v3292 = vsel %vm485, %v3279, 0
        %v3295 = vsel %vm485, %v3280, 0
        %v3298 = vsel %vm485, %v3281, 0
        %3300 = vmatprep.subr.bf16.mxu0 0
        %3301 = vmatpush1.bf16.msra.mxu0 %v3286
        %3302 = vmatprep.subr.bf16.mxu0 0
        %3303 = vmatpush1.bf16.msra.mxu0 0
        %3304 = vmatprep.subr.bf16.mxu0 0
        %3305 = vmatpush1.bf16.msra.mxu0 0
        %3306 = vmatprep.subr.bf16.mxu0 0
        %3307 = vmatpush1.bf16.msra.mxu0 0
        %3308 = vmatprep.subr.bf16.mxu0 0
        %3309 = vmatpush1.bf16.msra.mxu0 0
        %3310 = vmatprep.subr.bf16.mxu0 0
        %3311 = vmatpush1.bf16.msra.mxu0 0
        %3312 = vmatprep.subr.bf16.mxu0 0
        %3313 = vmatpush1.bf16.msra.mxu0 0
        %3314 = vmatprep.subr.bf16.mxu0 0
        %3315 = vmatpush1.bf16.msra.mxu0 0
        %3316 = vmatprep.subr.bf16.mxu0 0
        %3317 = vmatpush1.bf16.msra.mxu0 0
        %3318 = vmatprep.subr.bf16.mxu0 0
        %3319 = vmatpush1.bf16.msra.mxu0 0
        %3320 = vmatprep.subr.bf16.mxu0 0
        %3321 = vmatpush1.bf16.msra.mxu0 0
        %3322 = vmatprep.subr.bf16.mxu0 0
        %3323 = vmatpush1.bf16.msra.mxu0 0
        %3324 = vmatprep.subr.bf16.mxu0 0
        %3325 = vmatpush1.bf16.msra.mxu0 0
        %3326 = vmatprep.subr.bf16.mxu0 0
        %3327 = vmatpush1.bf16.msra.mxu0 0
        %3328 = vmatprep.subr.bf16.mxu0 0
        %3329 = vmatpush1.bf16.msra.mxu0 0
        %3330 = vmatprep.subr.bf16.mxu0 0
        %3331 = vmatpush1.bf16.msra.mxu0 0
        %3332 = vmatprep.mubr.bf16.mxu0 0
        %3333 = vmatmul.mubr.bf16.gmra.mrb[0].mxu0 %v3289
        %v3334 = vpop.f32.mrb[0].mxu0
        %v3335 = vadd.f32 0.0, %v3334
        %v3336 = vpop.f32.mrb[0].mxu0
        %v3337 = vpop.f32.mrb[0].mxu0
        %v3338 = vadd.f32 0.0, %v3337
        %v3339 = vpop.f32.mrb[0].mxu0
        %3340 = vmatprep.mubr.bf16.mxu0 0
        %3341 = vmatmul.mubr.bf16.gmra.mrb[0].mxu0 %v3292
        %v3342 = vpop.f32.mrb[0].mxu0
        %v3343 = vadd.f32 0.0, %v3342
        %v3344 = vpop.f32.mrb[0].mxu0
        %v3345 = vpop.f32.mrb[0].mxu0
        %v3346 = vadd.f32 0.0, %v3345
        %v3347 = vpop.f32.mrb[0].mxu0
        %3348 = vmatprep.mubr.bf16.mxu0 0
        %3349 = vmatmul.mubr.bf16.gmra.mrb[0].mxu0 %v3295
        %v3350 = vpop.f32.mrb[0].mxu0
        %v3351 = vadd.f32 0.0, %v3350
        %v3352 = vpop.f32.mrb[0].mxu0
        %v3353 = vpop.f32.mrb[0].mxu0
        %v3354 = vadd.f32 0.0, %v3353
        %v3355 = vpop.f32.mrb[0].mxu0
        %3356 = vmatprep.mubr.bf16.mxu0 0
        %3357 = vmatmul.mubr.bf16.gmra.mrb[0].mxu0 %v3298
        %v3358 = vpop.f32.mrb[0].mxu0
        %v3359 = vadd.f32 0.0, %v3358
        %v3360 = vpop.f32.mrb[0].mxu0
        %v3361 = vpop.f32.mrb[0].mxu0
        %v3362 = vadd.f32 0.0, %v3361
        %v3363 = vpop.f32.mrb[0].mxu0
        %3364 = vdwg.mxu0
        %v3365 = vadd.f32 %v2368, %v3335
        %v3366 = vadd.f32 %v2371, %v3338
        %v3367 = vadd.f32 %v2376, %v3343
        %v3368 = vadd.f32 %v2379, %v3346
        %v3369 = vadd.f32 %v2384, %v3351
        %v3370 = vadd.f32 %v2387, %v3354
        %v3371 = vadd.f32 %v2392, %v3359
        %v3372 = vadd.f32 %v2395, %v3362
        %3373 = vrot.lane.b32.xlu0 %v445, 80
        %v3374 = vpop.permute.xlu0 %3373
        %3375 = vrot.lane.b32.xlu0 %v453, 80
        %v3376 = vpop.permute.xlu0 %3375
        %v3378 = vsel %vm485, %v3374, 0
        %v3381 = vsel %vm485, %v3376, 0
        %3383 = vmatprep.subr.bf16.mxu0 0
        %3384 = vmatpush1.bf16.xpose.msra.mxu0 %v3381
        %3385 = vmatprep.subr.bf16.mxu0 0
        %3386 = vmatpush1.bf16.xpose.msra.mxu0 0
        %3387 = vmatprep.subr.bf16.mxu0 0
        %3388 = vmatpush1.bf16.xpose.msra.mxu0 0
        %3389 = vmatprep.subr.bf16.mxu0 0
        %3390 = vmatpush1.bf16.xpose.msra.mxu0 0
        %3391 = vmatprep.subr.bf16.mxu0 0
        %3392 = vmatpush1.bf16.xpose.msra.mxu0 0
        %3393 = vmatprep.subr.bf16.mxu0 0
        %3394 = vmatpush1.bf16.xpose.msra.mxu0 0
        %3395 = vmatprep.subr.bf16.mxu0 0
        %3396 = vmatpush1.bf16.xpose.msra.mxu0 0
        %3397 = vmatprep.subr.bf16.mxu0 0
        %3398 = vmatpush1.bf16.xpose.msra.mxu0 0
        %3399 = vmatprep.subr.bf16.mxu0 0
        %3400 = vmatpush1.bf16.xpose.msra.mxu0 0
        %3401 = vmatprep.subr.bf16.mxu0 0
        %3402 = vmatpush1.bf16.xpose.msra.mxu0 0
        %3403 = vmatprep.subr.bf16.mxu0 0
        %3404 = vmatpush1.bf16.xpose.msra.mxu0 0
        %3405 = vmatprep.subr.bf16.mxu0 0
        %3406 = vmatpush1.bf16.xpose.msra.mxu0 0
        %3407 = vmatprep.subr.bf16.mxu0 0
        %3408 = vmatpush1.bf16.xpose.msra.mxu0 0
        %3409 = vmatprep.subr.bf16.mxu0 0
        %3410 = vmatpush1.bf16.xpose.msra.mxu0 0
        %3411 = vmatprep.subr.bf16.mxu0 0
        %3412 = vmatpush1.bf16.xpose.msra.mxu0 0
        %3413 = vmatprep.subr.bf16.mxu0 0
        %3414 = vmatpush1.bf16.xpose.msra.mxu0 0
        %3415 = vmatprep.mubr.bf16.mxu0 0
        %3416 = vmatmul.mubr.bf16.gmra.mrb[0].mxu0 %v3378
        %v3417 = vpop.f32.mrb[0].mxu0
        %v3418 = vadd.f32 0.0, %v3417
        %v3419 = vpop.f32.mrb[0].mxu0
        %v3420 = vpop.f32.mrb[0].mxu0
        %v3421 = vpop.f32.mrb[0].mxu0
        %3422 = vdwg.mxu0
        %3423 = vrot.lane.b32.xlu0 %v446, 80
        %v3424 = vpop.permute.xlu0 %3423
        %3425 = vrot.lane.b32.xlu0 %v454, 80
        %v3426 = vpop.permute.xlu0 %3425
        %v3428 = vsel %vm485, %v3424, 0
        %v3431 = vsel %vm485, %v3426, 0
        %3433 = vmatprep.subr.bf16.mxu0 0
        %3434 = vmatpush1.bf16.xpose.msra.mxu0 %v3431
        %3435 = vmatprep.subr.bf16.mxu0 0
        %3436 = vmatpush1.bf16.xpose.msra.mxu0 0
        %3437 = vmatprep.subr.bf16.mxu0 0
        %3438 = vmatpush1.bf16.xpose.msra.mxu0 0
        %3439 = vmatprep.subr.bf16.mxu0 0
        %3440 = vmatpush1.bf16.xpose.msra.mxu0 0
        %3441 = vmatprep.subr.bf16.mxu0 0
        %3442 = vmatpush1.bf16.xpose.msra.mxu0 0
        %3443 = vmatprep.subr.bf16.mxu0 0
        %3444 = vmatpush1.bf16.xpose.msra.mxu0 0
        %3445 = vmatprep.subr.bf16.mxu0 0
        %3446 = vmatpush1.bf16.xpose.msra.mxu0 0
        %3447 = vmatprep.subr.bf16.mxu0 0
        %3448 = vmatpush1.bf16.xpose.msra.mxu0 0
        %3449 = vmatprep.subr.bf16.mxu0 0
        %3450 = vmatpush1.bf16.xpose.msra.mxu0 0
        %3451 = vmatprep.subr.bf16.mxu0 0
        %3452 = vmatpush1.bf16.xpose.msra.mxu0 0
        %3453 = vmatprep.subr.bf16.mxu0 0
        %3454 = vmatpush1.bf16.xpose.msra.mxu0 0
        %3455 = vmatprep.subr.bf16.mxu0 0
        %3456 = vmatpush1.bf16.xpose.msra.mxu0 0
        %3457 = vmatprep.subr.bf16.mxu0 0
        %3458 = vmatpush1.bf16.xpose.msra.mxu0 0
        %3459 = vmatprep.subr.bf16.mxu0 0
        %3460 = vmatpush1.bf16.xpose.msra.mxu0 0
        %3461 = vmatprep.subr.bf16.mxu0 0
        %3462 = vmatpush1.bf16.xpose.msra.mxu0 0
        %3463 = vmatprep.subr.bf16.mxu0 0
        %3464 = vmatpush1.bf16.xpose.msra.mxu0 0
        %3465 = vmatprep.mubr.bf16.mxu0 0
        %3466 = vmatmul.mubr.bf16.gmra.mrb[0].mxu0 %v3428
        %v3467 = vpop.f32.mrb[0].mxu0
        %v3468 = vadd.f32 0.0, %v3467
        %v3469 = vpop.f32.mrb[0].mxu0
        %v3470 = vpop.f32.mrb[0].mxu0
        %v3471 = vpop.f32.mrb[0].mxu0
        %3472 = vdwg.mxu0
        %3473 = vrot.lane.b32.xlu0 %v447, 80
        %v3474 = vpop.permute.xlu0 %3473
        %3475 = vrot.lane.b32.xlu0 %v455, 80
        %v3476 = vpop.permute.xlu0 %3475
        %v3478 = vsel %vm485, %v3474, 0
        %v3481 = vsel %vm485, %v3476, 0
        %3483 = vmatprep.subr.bf16.mxu0 0
        %3484 = vmatpush1.bf16.xpose.msra.mxu0 %v3481
        %3485 = vmatprep.subr.bf16.mxu0 0
        %3486 = vmatpush1.bf16.xpose.msra.mxu0 0
        %3487 = vmatprep.subr.bf16.mxu0 0
        %3488 = vmatpush1.bf16.xpose.msra.mxu0 0
        %3489 = vmatprep.subr.bf16.mxu0 0
        %3490 = vmatpush1.bf16.xpose.msra.mxu0 0
        %3491 = vmatprep.subr.bf16.mxu0 0
        %3492 = vmatpush1.bf16.xpose.msra.mxu0 0
        %3493 = vmatprep.subr.bf16.mxu0 0
        %3494 = vmatpush1.bf16.xpose.msra.mxu0 0
        %3495 = vmatprep.subr.bf16.mxu0 0
        %3496 = vmatpush1.bf16.xpose.msra.mxu0 0
        %3497 = vmatprep.subr.bf16.mxu0 0
        %3498 = vmatpush1.bf16.xpose.msra.mxu0 0
        %3499 = vmatprep.subr.bf16.mxu0 0
        %3500 = vmatpush1.bf16.xpose.msra.mxu0 0
        %3501 = vmatprep.subr.bf16.mxu0 0
        %3502 = vmatpush1.bf16.xpose.msra.mxu0 0
        %3503 = vmatprep.subr.bf16.mxu0 0
        %3504 = vmatpush1.bf16.xpose.msra.mxu0 0
        %3505 = vmatprep.subr.bf16.mxu0 0
        %3506 = vmatpush1.bf16.xpose.msra.mxu0 0
        %3507 = vmatprep.subr.bf16.mxu0 0
        %3508 = vmatpush1.bf16.xpose.msra.mxu0 0
        %3509 = vmatprep.subr.bf16.mxu0 0
        %3510 = vmatpush1.bf16.xpose.msra.mxu0 0
        %3511 = vmatprep.subr.bf16.mxu0 0
        %3512 = vmatpush1.bf16.xpose.msra.mxu0 0
        %3513 = vmatprep.subr.bf16.mxu0 0
        %3514 = vmatpush1.bf16.xpose.msra.mxu0 0
        %3515 = vmatprep.mubr.bf16.mxu0 0
        %3516 = vmatmul.mubr.bf16.gmra.mrb[0].mxu0 %v3478
        %v3517 = vpop.f32.mrb[0].mxu0
        %v3518 = vadd.f32 0.0, %v3517
        %v3519 = vpop.f32.mrb[0].mxu0
        %v3520 = vpop.f32.mrb[0].mxu0
        %v3521 = vpop.f32.mrb[0].mxu0
        %3522 = vdwg.mxu0
        %3523 = vrot.lane.b32.xlu0 %v448, 80
        %v3524 = vpop.permute.xlu0 %3523
        %3525 = vrot.lane.b32.xlu0 %v456, 80
        %v3526 = vpop.permute.xlu0 %3525
        %v3528 = vsel %vm485, %v3524, 0
        %v3531 = vsel %vm485, %v3526, 0
        %3533 = vmatprep.subr.bf16.mxu0 0
        %3534 = vmatpush1.bf16.xpose.msra.mxu0 %v3531
        %3535 = vmatprep.subr.bf16.mxu0 0
        %3536 = vmatpush1.bf16.xpose.msra.mxu0 0
        %3537 = vmatprep.subr.bf16.mxu0 0
        %3538 = vmatpush1.bf16.xpose.msra.mxu0 0
        %3539 = vmatprep.subr.bf16.mxu0 0
        %3540 = vmatpush1.bf16.xpose.msra.mxu0 0
        %3541 = vmatprep.subr.bf16.mxu0 0
        %3542 = vmatpush1.bf16.xpose.msra.mxu0 0
        %3543 = vmatprep.subr.bf16.mxu0 0
        %3544 = vmatpush1.bf16.xpose.msra.mxu0 0
        %3545 = vmatprep.subr.bf16.mxu0 0
        %3546 = vmatpush1.bf16.xpose.msra.mxu0 0
        %3547 = vmatprep.subr.bf16.mxu0 0
        %3548 = vmatpush1.bf16.xpose.msra.mxu0 0
        %3549 = vmatprep.subr.bf16.mxu0 0
        %3550 = vmatpush1.bf16.xpose.msra.mxu0 0
        %3551 = vmatprep.subr.bf16.mxu0 0
        %3552 = vmatpush1.bf16.xpose.msra.mxu0 0
        %3553 = vmatprep.subr.bf16.mxu0 0
        %3554 = vmatpush1.bf16.xpose.msra.mxu0 0
        %3555 = vmatprep.subr.bf16.mxu0 0
        %3556 = vmatpush1.bf16.xpose.msra.mxu0 0
        %3557 = vmatprep.subr.bf16.mxu0 0
        %3558 = vmatpush1.bf16.xpose.msra.mxu0 0
        %3559 = vmatprep.subr.bf16.mxu0 0
        %3560 = vmatpush1.bf16.xpose.msra.mxu0 0
        %3561 = vmatprep.subr.bf16.mxu0 0
        %3562 = vmatpush1.bf16.xpose.msra.mxu0 0
        %3563 = vmatprep.subr.bf16.mxu0 0
        %3564 = vmatpush1.bf16.xpose.msra.mxu0 0
        %3565 = vmatprep.mubr.bf16.mxu0 0
        %3566 = vmatmul.mubr.bf16.gmra.mrb[0].mxu0 %v3528
        %v3567 = vpop.f32.mrb[0].mxu0
        %v3568 = vadd.f32 0.0, %v3567
        %v3569 = vpop.f32.mrb[0].mxu0
        %v3570 = vpop.f32.mrb[0].mxu0
        %v3571 = vpop.f32.mrb[0].mxu0
        %3572 = vdwg.mxu0
        %3573 = vrot.lane.b32.xlu0 %v449, 80
        %v3574 = vpop.permute.xlu0 %3573
        %3575 = vrot.lane.b32.xlu0 %v457, 80
        %v3576 = vpop.permute.xlu0 %3575
        %v3578 = vsel %vm485, %v3574, 0
        %v3581 = vsel %vm485, %v3576, 0
        %3583 = vmatprep.subr.bf16.mxu0 0
        %3584 = vmatpush1.bf16.xpose.msra.mxu0 %v3581
        %3585 = vmatprep.subr.bf16.mxu0 0
        %3586 = vmatpush1.bf16.xpose.msra.mxu0 0
        %3587 = vmatprep.subr.bf16.mxu0 0
        %3588 = vmatpush1.bf16.xpose.msra.mxu0 0
        %3589 = vmatprep.subr.bf16.mxu0 0
        %3590 = vmatpush1.bf16.xpose.msra.mxu0 0
        %3591 = vmatprep.subr.bf16.mxu0 0
        %3592 = vmatpush1.bf16.xpose.msra.mxu0 0
        %3593 = vmatprep.subr.bf16.mxu0 0
        %3594 = vmatpush1.bf16.xpose.msra.mxu0 0
        %3595 = vmatprep.subr.bf16.mxu0 0
        %3596 = vmatpush1.bf16.xpose.msra.mxu0 0
        %3597 = vmatprep.subr.bf16.mxu0 0
        %3598 = vmatpush1.bf16.xpose.msra.mxu0 0
        %3599 = vmatprep.subr.bf16.mxu0 0
        %3600 = vmatpush1.bf16.xpose.msra.mxu0 0
        %3601 = vmatprep.subr.bf16.mxu0 0
        %3602 = vmatpush1.bf16.xpose.msra.mxu0 0
        %3603 = vmatprep.subr.bf16.mxu0 0
        %3604 = vmatpush1.bf16.xpose.msra.mxu0 0
        %3605 = vmatprep.subr.bf16.mxu0 0
        %3606 = vmatpush1.bf16.xpose.msra.mxu0 0
        %3607 = vmatprep.subr.bf16.mxu0 0
        %3608 = vmatpush1.bf16.xpose.msra.mxu0 0
        %3609 = vmatprep.subr.bf16.mxu0 0
        %3610 = vmatpush1.bf16.xpose.msra.mxu0 0
        %3611 = vmatprep.subr.bf16.mxu0 0
        %3612 = vmatpush1.bf16.xpose.msra.mxu0 0
        %3613 = vmatprep.subr.bf16.mxu0 0
        %3614 = vmatpush1.bf16.xpose.msra.mxu0 0
        %3615 = vmatprep.mubr.bf16.mxu0 0
        %3616 = vmatmul.mubr.bf16.gmra.mrb[0].mxu0 %v3578
        %v3617 = vpop.f32.mrb[0].mxu0
        %v3618 = vadd.f32 0.0, %v3617
        %v3619 = vpop.f32.mrb[0].mxu0
        %v3620 = vpop.f32.mrb[0].mxu0
        %v3621 = vpop.f32.mrb[0].mxu0
        %3622 = vdwg.mxu0
        %3623 = vrot.lane.b32.xlu0 %v450, 80
        %v3624 = vpop.permute.xlu0 %3623
        %3625 = vrot.lane.b32.xlu0 %v458, 80
        %v3626 = vpop.permute.xlu0 %3625
        %v3628 = vsel %vm485, %v3624, 0
        %v3631 = vsel %vm485, %v3626, 0
        %3633 = vmatprep.subr.bf16.mxu0 0
        %3634 = vmatpush1.bf16.xpose.msra.mxu0 %v3631
        %3635 = vmatprep.subr.bf16.mxu0 0
        %3636 = vmatpush1.bf16.xpose.msra.mxu0 0
        %3637 = vmatprep.subr.bf16.mxu0 0
        %3638 = vmatpush1.bf16.xpose.msra.mxu0 0
        %3639 = vmatprep.subr.bf16.mxu0 0
        %3640 = vmatpush1.bf16.xpose.msra.mxu0 0
        %3641 = vmatprep.subr.bf16.mxu0 0
        %3642 = vmatpush1.bf16.xpose.msra.mxu0 0
        %3643 = vmatprep.subr.bf16.mxu0 0
        %3644 = vmatpush1.bf16.xpose.msra.mxu0 0
        %3645 = vmatprep.subr.bf16.mxu0 0
        %3646 = vmatpush1.bf16.xpose.msra.mxu0 0
        %3647 = vmatprep.subr.bf16.mxu0 0
        %3648 = vmatpush1.bf16.xpose.msra.mxu0 0
        %3649 = vmatprep.subr.bf16.mxu0 0
        %3650 = vmatpush1.bf16.xpose.msra.mxu0 0
        %3651 = vmatprep.subr.bf16.mxu0 0
        %3652 = vmatpush1.bf16.xpose.msra.mxu0 0
        %3653 = vmatprep.subr.bf16.mxu0 0
        %3654 = vmatpush1.bf16.xpose.msra.mxu0 0
        %3655 = vmatprep.subr.bf16.mxu0 0
        %3656 = vmatpush1.bf16.xpose.msra.mxu0 0
        %3657 = vmatprep.subr.bf16.mxu0 0
        %3658 = vmatpush1.bf16.xpose.msra.mxu0 0
        %3659 = vmatprep.subr.bf16.mxu0 0
        %3660 = vmatpush1.bf16.xpose.msra.mxu0 0
        %3661 = vmatprep.subr.bf16.mxu0 0
        %3662 = vmatpush1.bf16.xpose.msra.mxu0 0
        %3663 = vmatprep.subr.bf16.mxu0 0
        %3664 = vmatpush1.bf16.xpose.msra.mxu0 0
        %3665 = vmatprep.mubr.bf16.mxu0 0
        %3666 = vmatmul.mubr.bf16.gmra.mrb[0].mxu0 %v3628
        %v3667 = vpop.f32.mrb[0].mxu0
        %v3668 = vadd.f32 0.0, %v3667
        %v3669 = vpop.f32.mrb[0].mxu0
        %v3670 = vpop.f32.mrb[0].mxu0
        %v3671 = vpop.f32.mrb[0].mxu0
        %3672 = vdwg.mxu0
        %3673 = vrot.lane.b32.xlu0 %v451, 80
        %v3674 = vpop.permute.xlu0 %3673
        %3675 = vrot.lane.b32.xlu0 %v459, 80
        %v3676 = vpop.permute.xlu0 %3675
        %v3678 = vsel %vm485, %v3674, 0
        %v3681 = vsel %vm485, %v3676, 0
        %3683 = vmatprep.subr.bf16.mxu0 0
        %3684 = vmatpush1.bf16.xpose.msra.mxu0 %v3681
        %3685 = vmatprep.subr.bf16.mxu0 0
        %3686 = vmatpush1.bf16.xpose.msra.mxu0 0
        %3687 = vmatprep.subr.bf16.mxu0 0
        %3688 = vmatpush1.bf16.xpose.msra.mxu0 0
        %3689 = vmatprep.subr.bf16.mxu0 0
        %3690 = vmatpush1.bf16.xpose.msra.mxu0 0
        %3691 = vmatprep.subr.bf16.mxu0 0
        %3692 = vmatpush1.bf16.xpose.msra.mxu0 0
        %3693 = vmatprep.subr.bf16.mxu0 0
        %3694 = vmatpush1.bf16.xpose.msra.mxu0 0
        %3695 = vmatprep.subr.bf16.mxu0 0
        %3696 = vmatpush1.bf16.xpose.msra.mxu0 0
        %3697 = vmatprep.subr.bf16.mxu0 0
        %3698 = vmatpush1.bf16.xpose.msra.mxu0 0
        %3699 = vmatprep.subr.bf16.mxu0 0
        %3700 = vmatpush1.bf16.xpose.msra.mxu0 0
        %3701 = vmatprep.subr.bf16.mxu0 0
        %3702 = vmatpush1.bf16.xpose.msra.mxu0 0
        %3703 = vmatprep.subr.bf16.mxu0 0
        %3704 = vmatpush1.bf16.xpose.msra.mxu0 0
        %3705 = vmatprep.subr.bf16.mxu0 0
        %3706 = vmatpush1.bf16.xpose.msra.mxu0 0
        %3707 = vmatprep.subr.bf16.mxu0 0
        %3708 = vmatpush1.bf16.xpose.msra.mxu0 0
        %3709 = vmatprep.subr.bf16.mxu0 0
        %3710 = vmatpush1.bf16.xpose.msra.mxu0 0
        %3711 = vmatprep.subr.bf16.mxu0 0
        %3712 = vmatpush1.bf16.xpose.msra.mxu0 0
        %3713 = vmatprep.subr.bf16.mxu0 0
        %3714 = vmatpush1.bf16.xpose.msra.mxu0 0
        %3715 = vmatprep.mubr.bf16.mxu0 0
        %3716 = vmatmul.mubr.bf16.gmra.mrb[0].mxu0 %v3678
        %v3717 = vpop.f32.mrb[0].mxu0
        %v3718 = vadd.f32 0.0, %v3717
        %v3719 = vpop.f32.mrb[0].mxu0
        %v3720 = vpop.f32.mrb[0].mxu0
        %v3721 = vpop.f32.mrb[0].mxu0
        %3722 = vdwg.mxu0
        %3723 = vrot.lane.b32.xlu0 %v452, 80
        %v3724 = vpop.permute.xlu0 %3723
        %3725 = vrot.lane.b32.xlu0 %v460, 80
        %v3726 = vpop.permute.xlu0 %3725
        %v3728 = vsel %vm485, %v3724, 0
        %v3731 = vsel %vm485, %v3726, 0
        %3733 = vmatprep.subr.bf16.mxu0 0
        %3734 = vmatpush1.bf16.xpose.msra.mxu0 %v3731
        %3735 = vmatprep.subr.bf16.mxu0 0
        %3736 = vmatpush1.bf16.xpose.msra.mxu0 0
        %3737 = vmatprep.subr.bf16.mxu0 0
        %3738 = vmatpush1.bf16.xpose.msra.mxu0 0
        %3739 = vmatprep.subr.bf16.mxu0 0
        %3740 = vmatpush1.bf16.xpose.msra.mxu0 0
        %3741 = vmatprep.subr.bf16.mxu0 0
        %3742 = vmatpush1.bf16.xpose.msra.mxu0 0
        %3743 = vmatprep.subr.bf16.mxu0 0
        %3744 = vmatpush1.bf16.xpose.msra.mxu0 0
        %3745 = vmatprep.subr.bf16.mxu0 0
        %3746 = vmatpush1.bf16.xpose.msra.mxu0 0
        %3747 = vmatprep.subr.bf16.mxu0 0
        %3748 = vmatpush1.bf16.xpose.msra.mxu0 0
        %3749 = vmatprep.subr.bf16.mxu0 0
        %3750 = vmatpush1.bf16.xpose.msra.mxu0 0
        %3751 = vmatprep.subr.bf16.mxu0 0
        %3752 = vmatpush1.bf16.xpose.msra.mxu0 0
        %3753 = vmatprep.subr.bf16.mxu0 0
        %3754 = vmatpush1.bf16.xpose.msra.mxu0 0
        %3755 = vmatprep.subr.bf16.mxu0 0
        %3756 = vmatpush1.bf16.xpose.msra.mxu0 0
        %3757 = vmatprep.subr.bf16.mxu0 0
        %3758 = vmatpush1.bf16.xpose.msra.mxu0 0
        %3759 = vmatprep.subr.bf16.mxu0 0
        %3760 = vmatpush1.bf16.xpose.msra.mxu0 0
        %3761 = vmatprep.subr.bf16.mxu0 0
        %3762 = vmatpush1.bf16.xpose.msra.mxu0 0
        %3763 = vmatprep.subr.bf16.mxu0 0
        %3764 = vmatpush1.bf16.xpose.msra.mxu0 0
        %3765 = vmatprep.mubr.bf16.mxu0 0
        %3766 = vmatmul.mubr.bf16.gmra.mrb[0].mxu0 %v3728
        %v3767 = vpop.f32.mrb[0].mxu0
        %v3768 = vadd.f32 0.0, %v3767
        %v3769 = vpop.f32.mrb[0].mxu0
        %v3770 = vpop.f32.mrb[0].mxu0
        %v3771 = vpop.f32.mrb[0].mxu0
        %3772 = vdwg.mxu0
        %v3773 = vsel %vm854, %v3418, -inf
        %3774 = vmax.xlane.f32.xlu0 %v3773
        %v3775 = vpop.xlane.xlu0 %3774
        %v3776 = vsel %vm854, %v3468, -inf
        %3777 = vmax.xlane.f32.xlu0 %v3776
        %v3778 = vpop.xlane.xlu0 %3777
        %v3779 = vsel %vm854, %v3518, -inf
        %3780 = vmax.xlane.f32.xlu0 %v3779
        %v3781 = vpop.xlane.xlu0 %3780
        %v3782 = vsel %vm854, %v3568, -inf
        %3783 = vmax.xlane.f32.xlu0 %v3782
        %v3784 = vpop.xlane.xlu0 %3783
        %v3785 = vsel %vm854, %v3618, -inf
        %3786 = vmax.xlane.f32.xlu0 %v3785
        %v3787 = vpop.xlane.xlu0 %3786
        %v3788 = vsel %vm854, %v3668, -inf
        %3789 = vmax.xlane.f32.xlu0 %v3788
        %v3790 = vpop.xlane.xlu0 %3789
        %v3791 = vsel %vm854, %v3718, -inf
        %3792 = vmax.xlane.f32.xlu0 %v3791
        %v3793 = vpop.xlane.xlu0 %3792
        %v3794 = vsel %vm854, %v3768, -inf
        %3795 = vmax.xlane.f32.xlu0 %v3794
        %v3796 = vpop.xlane.xlu0 %3795
        %v3797 = vsub.f32 %v3418, %v3775
        %v3798 = vsub.f32 %v3468, %v3778
        %v3799 = vsub.f32 %v3518, %v3781
        %v3800 = vsub.f32 %v3568, %v3784
        %v3801 = vsub.f32 %v3618, %v3787
        %v3802 = vsub.f32 %v3668, %v3790
        %v3803 = vsub.f32 %v3718, %v3793
        %v3804 = vsub.f32 %v3768, %v3796
        %v3805 = vmul.f32 %v3797, 1.442695
        %v3806 = vpow.pop %v3805
        %v3807 = vmul.f32 %v3798, 1.442695
        %v3808 = vpow.pop %v3807
        %v3809 = vmul.f32 %v3799, 1.442695
        %v3810 = vpow.pop %v3809
        %v3811 = vmul.f32 %v3800, 1.442695
        %v3812 = vpow.pop %v3811
        %v3813 = vmul.f32 %v3801, 1.442695
        %v3814 = vpow.pop %v3813
        %v3815 = vmul.f32 %v3802, 1.442695
        %v3816 = vpow.pop %v3815
        %v3817 = vmul.f32 %v3803, 1.442695
        %v3818 = vpow.pop %v3817
        %v3819 = vmul.f32 %v3804, 1.442695
        %v3820 = vpow.pop %v3819
        %v3821 = vsel %vm854, %v3806, 0.0
        %3822 = vadd.xlane.f32.xlu0 %v3821
        %v3823 = vpop.xlane.xlu0 %3822
        %v3824 = vsel %vm854, %v3808, 0.0
        %3825 = vadd.xlane.f32.xlu0 %v3824
        %v3826 = vpop.xlane.xlu0 %3825
        %v3827 = vsel %vm854, %v3810, 0.0
        %3828 = vadd.xlane.f32.xlu0 %v3827
        %v3829 = vpop.xlane.xlu0 %3828
        %v3830 = vsel %vm854, %v3812, 0.0
        %3831 = vadd.xlane.f32.xlu0 %v3830
        %v3832 = vpop.xlane.xlu0 %3831
        %v3833 = vsel %vm854, %v3814, 0.0
        %3834 = vadd.xlane.f32.xlu0 %v3833
        %v3835 = vpop.xlane.xlu0 %3834
        %v3836 = vsel %vm854, %v3816, 0.0
        %3837 = vadd.xlane.f32.xlu0 %v3836
        %v3838 = vpop.xlane.xlu0 %3837
        %v3839 = vsel %vm854, %v3818, 0.0
        %3840 = vadd.xlane.f32.xlu0 %v3839
        %v3841 = vpop.xlane.xlu0 %3840
        %v3842 = vsel %vm854, %v3820, 0.0
        %3843 = vadd.xlane.f32.xlu0 %v3842
        %v3844 = vpop.xlane.xlu0 %3843
        %v3845 = vrcp.pop %v3823
        %v3846 = vrcp.pop %v3826
        %v3847 = vrcp.pop %v3829
        %v3848 = vrcp.pop %v3832
        %v3849 = vrcp.pop %v3835
        %v3850 = vrcp.pop %v3838
        %v3851 = vrcp.pop %v3841
        %v3852 = vrcp.pop %v3844
        %v3853 = vmul.f32 %v3806, %v3845
        %v3854 = vmul.f32 %v3808, %v3846
        %v3855 = vmul.f32 %v3810, %v3847
        %v3856 = vmul.f32 %v3812, %v3848
        %v3857 = vmul.f32 %v3814, %v3849
        %v3858 = vmul.f32 %v3816, %v3850
        %v3859 = vmul.f32 %v3818, %v3851
        %v3860 = vmul.f32 %v3820, %v3852
        %v3861 = vpack.c.bf16 %v3853, %v3853
        %v3862 = vpack.c.bf16 %v3854, %v3854
        %v3863 = vpack.c.bf16 %v3855, %v3855
        %v3864 = vpack.c.bf16 %v3856, %v3856
        %v3865 = vpack.c.bf16 %v3857, %v3857
        %v3866 = vpack.c.bf16 %v3858, %v3858
        %v3867 = vpack.c.bf16 %v3859, %v3859
        %v3868 = vpack.c.bf16 %v3860, %v3860
        %3869 = vrot.lane.b32.xlu0 %v461, 80
        %v3870 = vpop.permute.xlu0 %3869
        %v3872 = vsel %vm854, %v3861, 0
        %v3875 = vsel %vm954, %v3870, 0
        %3877 = vmatprep.subr.bf16.mxu0 0
        %3878 = vmatpush1.bf16.msra.mxu0 %v3875
        %3879 = vmatprep.subr.bf16.mxu0 0
        %3880 = vmatpush1.bf16.msra.mxu0 0
        %3881 = vmatprep.subr.bf16.mxu0 0
        %3882 = vmatpush1.bf16.msra.mxu0 0
        %3883 = vmatprep.subr.bf16.mxu0 0
        %3884 = vmatpush1.bf16.msra.mxu0 0
        %3885 = vmatprep.subr.bf16.mxu0 0
        %3886 = vmatpush1.bf16.msra.mxu0 0
        %3887 = vmatprep.subr.bf16.mxu0 0
        %3888 = vmatpush1.bf16.msra.mxu0 0
        %3889 = vmatprep.subr.bf16.mxu0 0
        %3890 = vmatpush1.bf16.msra.mxu0 0
        %3891 = vmatprep.subr.bf16.mxu0 0
        %3892 = vmatpush1.bf16.msra.mxu0 0
        %3893 = vmatprep.subr.bf16.mxu0 0
        %3894 = vmatpush1.bf16.msra.mxu0 0
        %3895 = vmatprep.subr.bf16.mxu0 0
        %3896 = vmatpush1.bf16.msra.mxu0 0
        %3897 = vmatprep.subr.bf16.mxu0 0
        %3898 = vmatpush1.bf16.msra.mxu0 0
        %3899 = vmatprep.subr.bf16.mxu0 0
        %3900 = vmatpush1.bf16.msra.mxu0 0
        %3901 = vmatprep.subr.bf16.mxu0 0
        %3902 = vmatpush1.bf16.msra.mxu0 0
        %3903 = vmatprep.subr.bf16.mxu0 0
        %3904 = vmatpush1.bf16.msra.mxu0 0
        %3905 = vmatprep.subr.bf16.mxu0 0
        %3906 = vmatpush1.bf16.msra.mxu0 0
        %3907 = vmatprep.subr.bf16.mxu0 0
        %3908 = vmatpush1.bf16.msra.mxu0 0
        %3909 = vmatprep.mubr.bf16.mxu0 0
        %3910 = vmatmul.mubr.bf16.gmra.mrb[0].mxu0 %v3872
        %v3911 = vpop.f32.mrb[0].mxu0
        %v3912 = vadd.f32 0.0, %v3911
        %v3913 = vpop.f32.mrb[0].mxu0
        %v3914 = vpop.f32.mrb[0].mxu0
        %v3915 = vpop.f32.mrb[0].mxu0
        %3916 = vdwg.mxu0
        %3917 = vrot.lane.b32.xlu0 %v462, 80
        %v3918 = vpop.permute.xlu0 %3917
        %v3920 = vsel %vm854, %v3862, 0
        %v3923 = vsel %vm954, %v3918, 0
        %3925 = vmatprep.subr.bf16.mxu0 0
        %3926 = vmatpush1.bf16.msra.mxu0 %v3923
        %3927 = vmatprep.subr.bf16.mxu0 0
        %3928 = vmatpush1.bf16.msra.mxu0 0
        %3929 = vmatprep.subr.bf16.mxu0 0
        %3930 = vmatpush1.bf16.msra.mxu0 0
        %3931 = vmatprep.subr.bf16.mxu0 0
        %3932 = vmatpush1.bf16.msra.mxu0 0
        %3933 = vmatprep.subr.bf16.mxu0 0
        %3934 = vmatpush1.bf16.msra.mxu0 0
        %3935 = vmatprep.subr.bf16.mxu0 0
        %3936 = vmatpush1.bf16.msra.mxu0 0
        %3937 = vmatprep.subr.bf16.mxu0 0
        %3938 = vmatpush1.bf16.msra.mxu0 0
        %3939 = vmatprep.subr.bf16.mxu0 0
        %3940 = vmatpush1.bf16.msra.mxu0 0
        %3941 = vmatprep.subr.bf16.mxu0 0
        %3942 = vmatpush1.bf16.msra.mxu0 0
        %3943 = vmatprep.subr.bf16.mxu0 0
        %3944 = vmatpush1.bf16.msra.mxu0 0
        %3945 = vmatprep.subr.bf16.mxu0 0
        %3946 = vmatpush1.bf16.msra.mxu0 0
        %3947 = vmatprep.subr.bf16.mxu0 0
        %3948 = vmatpush1.bf16.msra.mxu0 0
        %3949 = vmatprep.subr.bf16.mxu0 0
        %3950 = vmatpush1.bf16.msra.mxu0 0
        %3951 = vmatprep.subr.bf16.mxu0 0
        %3952 = vmatpush1.bf16.msra.mxu0 0
        %3953 = vmatprep.subr.bf16.mxu0 0
        %3954 = vmatpush1.bf16.msra.mxu0 0
        %3955 = vmatprep.subr.bf16.mxu0 0
        %3956 = vmatpush1.bf16.msra.mxu0 0
        %3957 = vmatprep.mubr.bf16.mxu0 0
        %3958 = vmatmul.mubr.bf16.gmra.mrb[0].mxu0 %v3920
        %v3959 = vpop.f32.mrb[0].mxu0
        %v3960 = vadd.f32 0.0, %v3959
        %v3961 = vpop.f32.mrb[0].mxu0
        %v3962 = vpop.f32.mrb[0].mxu0
        %v3963 = vpop.f32.mrb[0].mxu0
        %3964 = vdwg.mxu0
        %3965 = vrot.lane.b32.xlu0 %v463, 80
        %v3966 = vpop.permute.xlu0 %3965
        %v3968 = vsel %vm854, %v3863, 0
        %v3971 = vsel %vm954, %v3966, 0
        %3973 = vmatprep.subr.bf16.mxu0 0
        %3974 = vmatpush1.bf16.msra.mxu0 %v3971
        %3975 = vmatprep.subr.bf16.mxu0 0
        %3976 = vmatpush1.bf16.msra.mxu0 0
        %3977 = vmatprep.subr.bf16.mxu0 0
        %3978 = vmatpush1.bf16.msra.mxu0 0
        %3979 = vmatprep.subr.bf16.mxu0 0
        %3980 = vmatpush1.bf16.msra.mxu0 0
        %3981 = vmatprep.subr.bf16.mxu0 0
        %3982 = vmatpush1.bf16.msra.mxu0 0
        %3983 = vmatprep.subr.bf16.mxu0 0
        %3984 = vmatpush1.bf16.msra.mxu0 0
        %3985 = vmatprep.subr.bf16.mxu0 0
        %3986 = vmatpush1.bf16.msra.mxu0 0
        %3987 = vmatprep.subr.bf16.mxu0 0
        %3988 = vmatpush1.bf16.msra.mxu0 0
        %3989 = vmatprep.subr.bf16.mxu0 0
        %3990 = vmatpush1.bf16.msra.mxu0 0
        %3991 = vmatprep.subr.bf16.mxu0 0
        %3992 = vmatpush1.bf16.msra.mxu0 0
        %3993 = vmatprep.subr.bf16.mxu0 0
        %3994 = vmatpush1.bf16.msra.mxu0 0
        %3995 = vmatprep.subr.bf16.mxu0 0
        %3996 = vmatpush1.bf16.msra.mxu0 0
        %3997 = vmatprep.subr.bf16.mxu0 0
        %3998 = vmatpush1.bf16.msra.mxu0 0
        %3999 = vmatprep.subr.bf16.mxu0 0
        %4000 = vmatpush1.bf16.msra.mxu0 0
        %4001 = vmatprep.subr.bf16.mxu0 0
        %4002 = vmatpush1.bf16.msra.mxu0 0
        %4003 = vmatprep.subr.bf16.mxu0 0
        %4004 = vmatpush1.bf16.msra.mxu0 0
        %4005 = vmatprep.mubr.bf16.mxu0 0
        %4006 = vmatmul.mubr.bf16.gmra.mrb[0].mxu0 %v3968
        %v4007 = vpop.f32.mrb[0].mxu0
        %v4008 = vadd.f32 0.0, %v4007
        %v4009 = vpop.f32.mrb[0].mxu0
        %v4010 = vpop.f32.mrb[0].mxu0
        %v4011 = vpop.f32.mrb[0].mxu0
        %4012 = vdwg.mxu0
        %4013 = vrot.lane.b32.xlu0 %v464, 80
        %v4014 = vpop.permute.xlu0 %4013
        %v4016 = vsel %vm854, %v3864, 0
        %v4019 = vsel %vm954, %v4014, 0
        %4021 = vmatprep.subr.bf16.mxu0 0
        %4022 = vmatpush1.bf16.msra.mxu0 %v4019
        %4023 = vmatprep.subr.bf16.mxu0 0
        %4024 = vmatpush1.bf16.msra.mxu0 0
        %4025 = vmatprep.subr.bf16.mxu0 0
        %4026 = vmatpush1.bf16.msra.mxu0 0
        %4027 = vmatprep.subr.bf16.mxu0 0
        %4028 = vmatpush1.bf16.msra.mxu0 0
        %4029 = vmatprep.subr.bf16.mxu0 0
        %4030 = vmatpush1.bf16.msra.mxu0 0
        %4031 = vmatprep.subr.bf16.mxu0 0
        %4032 = vmatpush1.bf16.msra.mxu0 0
        %4033 = vmatprep.subr.bf16.mxu0 0
        %4034 = vmatpush1.bf16.msra.mxu0 0
        %4035 = vmatprep.subr.bf16.mxu0 0
        %4036 = vmatpush1.bf16.msra.mxu0 0
        %4037 = vmatprep.subr.bf16.mxu0 0
        %4038 = vmatpush1.bf16.msra.mxu0 0
        %4039 = vmatprep.subr.bf16.mxu0 0
        %4040 = vmatpush1.bf16.msra.mxu0 0
        %4041 = vmatprep.subr.bf16.mxu0 0
        %4042 = vmatpush1.bf16.msra.mxu0 0
        %4043 = vmatprep.subr.bf16.mxu0 0
        %4044 = vmatpush1.bf16.msra.mxu0 0
        %4045 = vmatprep.subr.bf16.mxu0 0
        %4046 = vmatpush1.bf16.msra.mxu0 0
        %4047 = vmatprep.subr.bf16.mxu0 0
        %4048 = vmatpush1.bf16.msra.mxu0 0
        %4049 = vmatprep.subr.bf16.mxu0 0
        %4050 = vmatpush1.bf16.msra.mxu0 0
        %4051 = vmatprep.subr.bf16.mxu0 0
        %4052 = vmatpush1.bf16.msra.mxu0 0
        %4053 = vmatprep.mubr.bf16.mxu0 0
        %4054 = vmatmul.mubr.bf16.gmra.mrb[0].mxu0 %v4016
        %v4055 = vpop.f32.mrb[0].mxu0
        %v4056 = vadd.f32 0.0, %v4055
        %v4057 = vpop.f32.mrb[0].mxu0
        %v4058 = vpop.f32.mrb[0].mxu0
        %v4059 = vpop.f32.mrb[0].mxu0
        %4060 = vdwg.mxu0
        %4061 = vrot.lane.b32.xlu0 %v465, 80
        %v4062 = vpop.permute.xlu0 %4061
        %v4064 = vsel %vm854, %v3865, 0
        %v4067 = vsel %vm954, %v4062, 0
        %4069 = vmatprep.subr.bf16.mxu0 0
        %4070 = vmatpush1.bf16.msra.mxu0 %v4067
        %4071 = vmatprep.subr.bf16.mxu0 0
        %4072 = vmatpush1.bf16.msra.mxu0 0
        %4073 = vmatprep.subr.bf16.mxu0 0
        %4074 = vmatpush1.bf16.msra.mxu0 0
        %4075 = vmatprep.subr.bf16.mxu0 0
        %4076 = vmatpush1.bf16.msra.mxu0 0
        %4077 = vmatprep.subr.bf16.mxu0 0
        %4078 = vmatpush1.bf16.msra.mxu0 0
        %4079 = vmatprep.subr.bf16.mxu0 0
        %4080 = vmatpush1.bf16.msra.mxu0 0
        %4081 = vmatprep.subr.bf16.mxu0 0
        %4082 = vmatpush1.bf16.msra.mxu0 0
        %4083 = vmatprep.subr.bf16.mxu0 0
        %4084 = vmatpush1.bf16.msra.mxu0 0
        %4085 = vmatprep.subr.bf16.mxu0 0
        %4086 = vmatpush1.bf16.msra.mxu0 0
        %4087 = vmatprep.subr.bf16.mxu0 0
        %4088 = vmatpush1.bf16.msra.mxu0 0
        %4089 = vmatprep.subr.bf16.mxu0 0
        %4090 = vmatpush1.bf16.msra.mxu0 0
        %4091 = vmatprep.subr.bf16.mxu0 0
        %4092 = vmatpush1.bf16.msra.mxu0 0
        %4093 = vmatprep.subr.bf16.mxu0 0
        %4094 = vmatpush1.bf16.msra.mxu0 0
        %4095 = vmatprep.subr.bf16.mxu0 0
        %4096 = vmatpush1.bf16.msra.mxu0 0
        %4097 = vmatprep.subr.bf16.mxu0 0
        %4098 = vmatpush1.bf16.msra.mxu0 0
        %4099 = vmatprep.subr.bf16.mxu0 0
        %4100 = vmatpush1.bf16.msra.mxu0 0
        %4101 = vmatprep.mubr.bf16.mxu0 0
        %4102 = vmatmul.mubr.bf16.gmra.mrb[0].mxu0 %v4064
        %v4103 = vpop.f32.mrb[0].mxu0
        %v4104 = vadd.f32 0.0, %v4103
        %v4105 = vpop.f32.mrb[0].mxu0
        %v4106 = vpop.f32.mrb[0].mxu0
        %v4107 = vpop.f32.mrb[0].mxu0
        %4108 = vdwg.mxu0
        %4109 = vrot.lane.b32.xlu0 %v466, 80
        %v4110 = vpop.permute.xlu0 %4109
        %v4112 = vsel %vm854, %v3866, 0
        %v4115 = vsel %vm954, %v4110, 0
        %4117 = vmatprep.subr.bf16.mxu0 0
        %4118 = vmatpush1.bf16.msra.mxu0 %v4115
        %4119 = vmatprep.subr.bf16.mxu0 0
        %4120 = vmatpush1.bf16.msra.mxu0 0
        %4121 = vmatprep.subr.bf16.mxu0 0
        %4122 = vmatpush1.bf16.msra.mxu0 0
        %4123 = vmatprep.subr.bf16.mxu0 0
        %4124 = vmatpush1.bf16.msra.mxu0 0
        %4125 = vmatprep.subr.bf16.mxu0 0
        %4126 = vmatpush1.bf16.msra.mxu0 0
        %4127 = vmatprep.subr.bf16.mxu0 0
        %4128 = vmatpush1.bf16.msra.mxu0 0
        %4129 = vmatprep.subr.bf16.mxu0 0
        %4130 = vmatpush1.bf16.msra.mxu0 0
        %4131 = vmatprep.subr.bf16.mxu0 0
        %4132 = vmatpush1.bf16.msra.mxu0 0
        %4133 = vmatprep.subr.bf16.mxu0 0
        %4134 = vmatpush1.bf16.msra.mxu0 0
        %4135 = vmatprep.subr.bf16.mxu0 0
        %4136 = vmatpush1.bf16.msra.mxu0 0
        %4137 = vmatprep.subr.bf16.mxu0 0
        %4138 = vmatpush1.bf16.msra.mxu0 0
        %4139 = vmatprep.subr.bf16.mxu0 0
        %4140 = vmatpush1.bf16.msra.mxu0 0
        %4141 = vmatprep.subr.bf16.mxu0 0
        %4142 = vmatpush1.bf16.msra.mxu0 0
        %4143 = vmatprep.subr.bf16.mxu0 0
        %4144 = vmatpush1.bf16.msra.mxu0 0
        %4145 = vmatprep.subr.bf16.mxu0 0
        %4146 = vmatpush1.bf16.msra.mxu0 0
        %4147 = vmatprep.subr.bf16.mxu0 0
        %4148 = vmatpush1.bf16.msra.mxu0 0
        %4149 = vmatprep.mubr.bf16.mxu0 0
        %4150 = vmatmul.mubr.bf16.gmra.mrb[0].mxu0 %v4112
        %v4151 = vpop.f32.mrb[0].mxu0
        %v4152 = vadd.f32 0.0, %v4151
        %v4153 = vpop.f32.mrb[0].mxu0
        %v4154 = vpop.f32.mrb[0].mxu0
        %v4155 = vpop.f32.mrb[0].mxu0
        %4156 = vdwg.mxu0
        %4157 = vrot.lane.b32.xlu0 %v467, 80
        %v4158 = vpop.permute.xlu0 %4157
        %v4160 = vsel %vm854, %v3867, 0
        %v4163 = vsel %vm954, %v4158, 0
        %4165 = vmatprep.subr.bf16.mxu0 0
        %4166 = vmatpush1.bf16.msra.mxu0 %v4163
        %4167 = vmatprep.subr.bf16.mxu0 0
        %4168 = vmatpush1.bf16.msra.mxu0 0
        %4169 = vmatprep.subr.bf16.mxu0 0
        %4170 = vmatpush1.bf16.msra.mxu0 0
        %4171 = vmatprep.subr.bf16.mxu0 0
        %4172 = vmatpush1.bf16.msra.mxu0 0
        %4173 = vmatprep.subr.bf16.mxu0 0
        %4174 = vmatpush1.bf16.msra.mxu0 0
        %4175 = vmatprep.subr.bf16.mxu0 0
        %4176 = vmatpush1.bf16.msra.mxu0 0
        %4177 = vmatprep.subr.bf16.mxu0 0
        %4178 = vmatpush1.bf16.msra.mxu0 0
        %4179 = vmatprep.subr.bf16.mxu0 0
        %4180 = vmatpush1.bf16.msra.mxu0 0
        %4181 = vmatprep.subr.bf16.mxu0 0
        %4182 = vmatpush1.bf16.msra.mxu0 0
        %4183 = vmatprep.subr.bf16.mxu0 0
        %4184 = vmatpush1.bf16.msra.mxu0 0
        %4185 = vmatprep.subr.bf16.mxu0 0
        %4186 = vmatpush1.bf16.msra.mxu0 0
        %4187 = vmatprep.subr.bf16.mxu0 0
        %4188 = vmatpush1.bf16.msra.mxu0 0
        %4189 = vmatprep.subr.bf16.mxu0 0
        %4190 = vmatpush1.bf16.msra.mxu0 0
        %4191 = vmatprep.subr.bf16.mxu0 0
        %4192 = vmatpush1.bf16.msra.mxu0 0
        %4193 = vmatprep.subr.bf16.mxu0 0
        %4194 = vmatpush1.bf16.msra.mxu0 0
        %4195 = vmatprep.subr.bf16.mxu0 0
        %4196 = vmatpush1.bf16.msra.mxu0 0
        %4197 = vmatprep.mubr.bf16.mxu0 0
        %4198 = vmatmul.mubr.bf16.gmra.mrb[0].mxu0 %v4160
        %v4199 = vpop.f32.mrb[0].mxu0
        %v4200 = vadd.f32 0.0, %v4199
        %v4201 = vpop.f32.mrb[0].mxu0
        %v4202 = vpop.f32.mrb[0].mxu0
        %v4203 = vpop.f32.mrb[0].mxu0
        %4204 = vdwg.mxu0
        %4205 = vrot.lane.b32.xlu0 %v468, 80
        %v4206 = vpop.permute.xlu0 %4205
        %v4208 = vsel %vm854, %v3868, 0
        %v4211 = vsel %vm954, %v4206, 0
        %4213 = vmatprep.subr.bf16.mxu0 0
        %4214 = vmatpush1.bf16.msra.mxu0 %v4211
        %4215 = vmatprep.subr.bf16.mxu0 0
        %4216 = vmatpush1.bf16.msra.mxu0 0
        %4217 = vmatprep.subr.bf16.mxu0 0
        %4218 = vmatpush1.bf16.msra.mxu0 0
        %4219 = vmatprep.subr.bf16.mxu0 0
        %4220 = vmatpush1.bf16.msra.mxu0 0
        %4221 = vmatprep.subr.bf16.mxu0 0
        %4222 = vmatpush1.bf16.msra.mxu0 0
        %4223 = vmatprep.subr.bf16.mxu0 0
        %4224 = vmatpush1.bf16.msra.mxu0 0
        %4225 = vmatprep.subr.bf16.mxu0 0
        %4226 = vmatpush1.bf16.msra.mxu0 0
        %4227 = vmatprep.subr.bf16.mxu0 0
        %4228 = vmatpush1.bf16.msra.mxu0 0
        %4229 = vmatprep.subr.bf16.mxu0 0
        %4230 = vmatpush1.bf16.msra.mxu0 0
        %4231 = vmatprep.subr.bf16.mxu0 0
        %4232 = vmatpush1.bf16.msra.mxu0 0
        %4233 = vmatprep.subr.bf16.mxu0 0
        %4234 = vmatpush1.bf16.msra.mxu0 0
        %4235 = vmatprep.subr.bf16.mxu0 0
        %4236 = vmatpush1.bf16.msra.mxu0 0
        %4237 = vmatprep.subr.bf16.mxu0 0
        %4238 = vmatpush1.bf16.msra.mxu0 0
        %4239 = vmatprep.subr.bf16.mxu0 0
        %4240 = vmatpush1.bf16.msra.mxu0 0
        %4241 = vmatprep.subr.bf16.mxu0 0
        %4242 = vmatpush1.bf16.msra.mxu0 0
        %4243 = vmatprep.subr.bf16.mxu0 0
        %4244 = vmatpush1.bf16.msra.mxu0 0
        %4245 = vmatprep.mubr.bf16.mxu0 0
        %4246 = vmatmul.mubr.bf16.gmra.mrb[0].mxu0 %v4208
        %v4247 = vpop.f32.mrb[0].mxu0
        %v4248 = vadd.f32 0.0, %v4247
        %v4249 = vpop.f32.mrb[0].mxu0
        %v4250 = vpop.f32.mrb[0].mxu0
        %v4251 = vpop.f32.mrb[0].mxu0
        %4252 = vdwg.mxu0
        %v4253 = vpack.c.bf16 %v3960, %v3912
        %v4254 = vpack.c.bf16 %v4056, %v4008
        %v4255 = vpack.c.bf16 %v4152, %v4104
        %v4256 = vpack.c.bf16 %v4248, %v4200
        %v4259 = vunpack.c.l.b16 %v475
        %v4260 = vunpack.c.l.b16 %v476
        %v4261 = vpack.c.b16 %v4260, %v4259
        %v4264 = vsel %vm485, %v4253, 0
        %v4267 = vsel %vm485, %v4254, 0
        %v4270 = vsel %vm485, %v4255, 0
        %v4273 = vsel %vm485, %v4256, 0
        %4275 = vmatprep.subr.bf16.mxu0 0
        %4276 = vmatpush1.bf16.msra.mxu0 %v4261
        %4277 = vmatprep.subr.bf16.mxu0 0
        %4278 = vmatpush1.bf16.msra.mxu0 0
        %4279 = vmatprep.subr.bf16.mxu0 0
        %4280 = vmatpush1.bf16.msra.mxu0 0
        %4281 = vmatprep.subr.bf16.mxu0 0
        %4282 = vmatpush1.bf16.msra.mxu0 0
        %4283 = vmatprep.subr.bf16.mxu0 0
        %4284 = vmatpush1.bf16.msra.mxu0 0
        %4285 = vmatprep.subr.bf16.mxu0 0
        %4286 = vmatpush1.bf16.msra.mxu0 0
        %4287 = vmatprep.subr.bf16.mxu0 0
        %4288 = vmatpush1.bf16.msra.mxu0 0
        %4289 = vmatprep.subr.bf16.mxu0 0
        %4290 = vmatpush1.bf16.msra.mxu0 0
        %4291 = vmatprep.subr.bf16.mxu0 0
        %4292 = vmatpush1.bf16.msra.mxu0 0
        %4293 = vmatprep.subr.bf16.mxu0 0
        %4294 = vmatpush1.bf16.msra.mxu0 0
        %4295 = vmatprep.subr.bf16.mxu0 0
        %4296 = vmatpush1.bf16.msra.mxu0 0
        %4297 = vmatprep.subr.bf16.mxu0 0
        %4298 = vmatpush1.bf16.msra.mxu0 0
        %4299 = vmatprep.subr.bf16.mxu0 0
        %4300 = vmatpush1.bf16.msra.mxu0 0
        %4301 = vmatprep.subr.bf16.mxu0 0
        %4302 = vmatpush1.bf16.msra.mxu0 0
        %4303 = vmatprep.subr.bf16.mxu0 0
        %4304 = vmatpush1.bf16.msra.mxu0 0
        %4305 = vmatprep.subr.bf16.mxu0 0
        %4306 = vmatpush1.bf16.msra.mxu0 0
        %4307 = vmatprep.mubr.bf16.mxu0 0
        %4308 = vmatmul.mubr.bf16.gmra.mrb[0].mxu0 %v4264
        %v4309 = vpop.f32.mrb[0].mxu0
        %v4310 = vadd.f32 0.0, %v4309
        %v4311 = vpop.f32.mrb[0].mxu0
        %v4312 = vpop.f32.mrb[0].mxu0
        %v4313 = vadd.f32 0.0, %v4312
        %v4314 = vpop.f32.mrb[0].mxu0
        %4315 = vmatprep.mubr.bf16.mxu0 0
        %4316 = vmatmul.mubr.bf16.gmra.mrb[0].mxu0 %v4267
        %v4317 = vpop.f32.mrb[0].mxu0
        %v4318 = vadd.f32 0.0, %v4317
        %v4319 = vpop.f32.mrb[0].mxu0
        %v4320 = vpop.f32.mrb[0].mxu0
        %v4321 = vadd.f32 0.0, %v4320
        %v4322 = vpop.f32.mrb[0].mxu0
        %4323 = vmatprep.mubr.bf16.mxu0 0
        %4324 = vmatmul.mubr.bf16.gmra.mrb[0].mxu0 %v4270
        %v4325 = vpop.f32.mrb[0].mxu0
        %v4326 = vadd.f32 0.0, %v4325
        %v4327 = vpop.f32.mrb[0].mxu0
        %v4328 = vpop.f32.mrb[0].mxu0
        %v4329 = vadd.f32 0.0, %v4328
        %v4330 = vpop.f32.mrb[0].mxu0
        %4331 = vmatprep.mubr.bf16.mxu0 0
        %4332 = vmatmul.mubr.bf16.gmra.mrb[0].mxu0 %v4273
        %v4333 = vpop.f32.mrb[0].mxu0
        %v4334 = vadd.f32 0.0, %v4333
        %v4335 = vpop.f32.mrb[0].mxu0
        %v4336 = vpop.f32.mrb[0].mxu0
        %v4337 = vadd.f32 0.0, %v4336
        %v4338 = vpop.f32.mrb[0].mxu0
        %4339 = vdwg.mxu0
        %v4340 = vadd.f32 %v3365, %v4310
        %v4341 = vadd.f32 %v3366, %v4313
        %v4342 = vadd.f32 %v3367, %v4318
        %v4343 = vadd.f32 %v3368, %v4321
        %v4344 = vadd.f32 %v3369, %v4326
        %v4345 = vadd.f32 %v3370, %v4329
        %v4346 = vadd.f32 %v3371, %v4334
        %v4347 = vadd.f32 %v3372, %v4337
        %4348 = vrot.lane.b32.xlu0 %v445, 64
        %v4349 = vpop.permute.xlu0 %4348
        %4350 = vrot.lane.b32.xlu0 %v453, 64
        %v4351 = vpop.permute.xlu0 %4350
        %v4353 = vsel %vm485, %v4349, 0
        %v4356 = vsel %vm485, %v4351, 0
        %4358 = vmatprep.subr.bf16.mxu0 0
        %4359 = vmatpush1.bf16.xpose.msra.mxu0 %v4356
        %4360 = vmatprep.subr.bf16.mxu0 0
        %4361 = vmatpush1.bf16.xpose.msra.mxu0 0
        %4362 = vmatprep.subr.bf16.mxu0 0
        %4363 = vmatpush1.bf16.xpose.msra.mxu0 0
        %4364 = vmatprep.subr.bf16.mxu0 0
        %4365 = vmatpush1.bf16.xpose.msra.mxu0 0
        %4366 = vmatprep.subr.bf16.mxu0 0
        %4367 = vmatpush1.bf16.xpose.msra.mxu0 0
        %4368 = vmatprep.subr.bf16.mxu0 0
        %4369 = vmatpush1.bf16.xpose.msra.mxu0 0
        %4370 = vmatprep.subr.bf16.mxu0 0
        %4371 = vmatpush1.bf16.xpose.msra.mxu0 0
        %4372 = vmatprep.subr.bf16.mxu0 0
        %4373 = vmatpush1.bf16.xpose.msra.mxu0 0
        %4374 = vmatprep.subr.bf16.mxu0 0
        %4375 = vmatpush1.bf16.xpose.msra.mxu0 0
        %4376 = vmatprep.subr.bf16.mxu0 0
        %4377 = vmatpush1.bf16.xpose.msra.mxu0 0
        %4378 = vmatprep.subr.bf16.mxu0 0
        %4379 = vmatpush1.bf16.xpose.msra.mxu0 0
        %4380 = vmatprep.subr.bf16.mxu0 0
        %4381 = vmatpush1.bf16.xpose.msra.mxu0 0
        %4382 = vmatprep.subr.bf16.mxu0 0
        %4383 = vmatpush1.bf16.xpose.msra.mxu0 0
        %4384 = vmatprep.subr.bf16.mxu0 0
        %4385 = vmatpush1.bf16.xpose.msra.mxu0 0
        %4386 = vmatprep.subr.bf16.mxu0 0
        %4387 = vmatpush1.bf16.xpose.msra.mxu0 0
        %4388 = vmatprep.subr.bf16.mxu0 0
        %4389 = vmatpush1.bf16.xpose.msra.mxu0 0
        %4390 = vmatprep.mubr.bf16.mxu0 0
        %4391 = vmatmul.mubr.bf16.gmra.mrb[0].mxu0 %v4353
        %v4392 = vpop.f32.mrb[0].mxu0
        %v4393 = vadd.f32 0.0, %v4392
        %v4394 = vpop.f32.mrb[0].mxu0
        %v4395 = vpop.f32.mrb[0].mxu0
        %v4396 = vpop.f32.mrb[0].mxu0
        %4397 = vdwg.mxu0
        %4398 = vrot.lane.b32.xlu0 %v446, 64
        %v4399 = vpop.permute.xlu0 %4398
        %4400 = vrot.lane.b32.xlu0 %v454, 64
        %v4401 = vpop.permute.xlu0 %4400
        %v4403 = vsel %vm485, %v4399, 0
        %v4406 = vsel %vm485, %v4401, 0
        %4408 = vmatprep.subr.bf16.mxu0 0
        %4409 = vmatpush1.bf16.xpose.msra.mxu0 %v4406
        %4410 = vmatprep.subr.bf16.mxu0 0
        %4411 = vmatpush1.bf16.xpose.msra.mxu0 0
        %4412 = vmatprep.subr.bf16.mxu0 0
        %4413 = vmatpush1.bf16.xpose.msra.mxu0 0
        %4414 = vmatprep.subr.bf16.mxu0 0
        %4415 = vmatpush1.bf16.xpose.msra.mxu0 0
        %4416 = vmatprep.subr.bf16.mxu0 0
        %4417 = vmatpush1.bf16.xpose.msra.mxu0 0
        %4418 = vmatprep.subr.bf16.mxu0 0
        %4419 = vmatpush1.bf16.xpose.msra.mxu0 0
        %4420 = vmatprep.subr.bf16.mxu0 0
        %4421 = vmatpush1.bf16.xpose.msra.mxu0 0
        %4422 = vmatprep.subr.bf16.mxu0 0
        %4423 = vmatpush1.bf16.xpose.msra.mxu0 0
        %4424 = vmatprep.subr.bf16.mxu0 0
        %4425 = vmatpush1.bf16.xpose.msra.mxu0 0
        %4426 = vmatprep.subr.bf16.mxu0 0
        %4427 = vmatpush1.bf16.xpose.msra.mxu0 0
        %4428 = vmatprep.subr.bf16.mxu0 0
        %4429 = vmatpush1.bf16.xpose.msra.mxu0 0
        %4430 = vmatprep.subr.bf16.mxu0 0
        %4431 = vmatpush1.bf16.xpose.msra.mxu0 0
        %4432 = vmatprep.subr.bf16.mxu0 0
        %4433 = vmatpush1.bf16.xpose.msra.mxu0 0
        %4434 = vmatprep.subr.bf16.mxu0 0
        %4435 = vmatpush1.bf16.xpose.msra.mxu0 0
        %4436 = vmatprep.subr.bf16.mxu0 0
        %4437 = vmatpush1.bf16.xpose.msra.mxu0 0
        %4438 = vmatprep.subr.bf16.mxu0 0
        %4439 = vmatpush1.bf16.xpose.msra.mxu0 0
        %4440 = vmatprep.mubr.bf16.mxu0 0
        %4441 = vmatmul.mubr.bf16.gmra.mrb[0].mxu0 %v4403
        %v4442 = vpop.f32.mrb[0].mxu0
        %v4443 = vadd.f32 0.0, %v4442
        %v4444 = vpop.f32.mrb[0].mxu0
        %v4445 = vpop.f32.mrb[0].mxu0
        %v4446 = vpop.f32.mrb[0].mxu0
        %4447 = vdwg.mxu0
        %4448 = vrot.lane.b32.xlu0 %v447, 64
        %v4449 = vpop.permute.xlu0 %4448
        %4450 = vrot.lane.b32.xlu0 %v455, 64
        %v4451 = vpop.permute.xlu0 %4450
        %v4453 = vsel %vm485, %v4449, 0
        %v4456 = vsel %vm485, %v4451, 0
        %4458 = vmatprep.subr.bf16.mxu0 0
        %4459 = vmatpush1.bf16.xpose.msra.mxu0 %v4456
        %4460 = vmatprep.subr.bf16.mxu0 0
        %4461 = vmatpush1.bf16.xpose.msra.mxu0 0
        %4462 = vmatprep.subr.bf16.mxu0 0
        %4463 = vmatpush1.bf16.xpose.msra.mxu0 0
        %4464 = vmatprep.subr.bf16.mxu0 0
        %4465 = vmatpush1.bf16.xpose.msra.mxu0 0
        %4466 = vmatprep.subr.bf16.mxu0 0
        %4467 = vmatpush1.bf16.xpose.msra.mxu0 0
        %4468 = vmatprep.subr.bf16.mxu0 0
        %4469 = vmatpush1.bf16.xpose.msra.mxu0 0
        %4470 = vmatprep.subr.bf16.mxu0 0
        %4471 = vmatpush1.bf16.xpose.msra.mxu0 0
        %4472 = vmatprep.subr.bf16.mxu0 0
        %4473 = vmatpush1.bf16.xpose.msra.mxu0 0
        %4474 = vmatprep.subr.bf16.mxu0 0
        %4475 = vmatpush1.bf16.xpose.msra.mxu0 0
        %4476 = vmatprep.subr.bf16.mxu0 0
        %4477 = vmatpush1.bf16.xpose.msra.mxu0 0
        %4478 = vmatprep.subr.bf16.mxu0 0
        %4479 = vmatpush1.bf16.xpose.msra.mxu0 0
        %4480 = vmatprep.subr.bf16.mxu0 0
        %4481 = vmatpush1.bf16.xpose.msra.mxu0 0
        %4482 = vmatprep.subr.bf16.mxu0 0
        %4483 = vmatpush1.bf16.xpose.msra.mxu0 0
        %4484 = vmatprep.subr.bf16.mxu0 0
        %4485 = vmatpush1.bf16.xpose.msra.mxu0 0
        %4486 = vmatprep.subr.bf16.mxu0 0
        %4487 = vmatpush1.bf16.xpose.msra.mxu0 0
        %4488 = vmatprep.subr.bf16.mxu0 0
        %4489 = vmatpush1.bf16.xpose.msra.mxu0 0
        %4490 = vmatprep.mubr.bf16.mxu0 0
        %4491 = vmatmul.mubr.bf16.gmra.mrb[0].mxu0 %v4453
        %v4492 = vpop.f32.mrb[0].mxu0
        %v4493 = vadd.f32 0.0, %v4492
        %v4494 = vpop.f32.mrb[0].mxu0
        %v4495 = vpop.f32.mrb[0].mxu0
        %v4496 = vpop.f32.mrb[0].mxu0
        %4497 = vdwg.mxu0
        %4498 = vrot.lane.b32.xlu0 %v448, 64
        %v4499 = vpop.permute.xlu0 %4498
        %4500 = vrot.lane.b32.xlu0 %v456, 64
        %v4501 = vpop.permute.xlu0 %4500
        %v4503 = vsel %vm485, %v4499, 0
        %v4506 = vsel %vm485, %v4501, 0
        %4508 = vmatprep.subr.bf16.mxu0 0
        %4509 = vmatpush1.bf16.xpose.msra.mxu0 %v4506
        %4510 = vmatprep.subr.bf16.mxu0 0
        %4511 = vmatpush1.bf16.xpose.msra.mxu0 0
        %4512 = vmatprep.subr.bf16.mxu0 0
        %4513 = vmatpush1.bf16.xpose.msra.mxu0 0
        %4514 = vmatprep.subr.bf16.mxu0 0
        %4515 = vmatpush1.bf16.xpose.msra.mxu0 0
        %4516 = vmatprep.subr.bf16.mxu0 0
        %4517 = vmatpush1.bf16.xpose.msra.mxu0 0
        %4518 = vmatprep.subr.bf16.mxu0 0
        %4519 = vmatpush1.bf16.xpose.msra.mxu0 0
        %4520 = vmatprep.subr.bf16.mxu0 0
        %4521 = vmatpush1.bf16.xpose.msra.mxu0 0
        %4522 = vmatprep.subr.bf16.mxu0 0
        %4523 = vmatpush1.bf16.xpose.msra.mxu0 0
        %4524 = vmatprep.subr.bf16.mxu0 0
        %4525 = vmatpush1.bf16.xpose.msra.mxu0 0
        %4526 = vmatprep.subr.bf16.mxu0 0
        %4527 = vmatpush1.bf16.xpose.msra.mxu0 0
        %4528 = vmatprep.subr.bf16.mxu0 0
        %4529 = vmatpush1.bf16.xpose.msra.mxu0 0
        %4530 = vmatprep.subr.bf16.mxu0 0
        %4531 = vmatpush1.bf16.xpose.msra.mxu0 0
        %4532 = vmatprep.subr.bf16.mxu0 0
        %4533 = vmatpush1.bf16.xpose.msra.mxu0 0
        %4534 = vmatprep.subr.bf16.mxu0 0
        %4535 = vmatpush1.bf16.xpose.msra.mxu0 0
        %4536 = vmatprep.subr.bf16.mxu0 0
        %4537 = vmatpush1.bf16.xpose.msra.mxu0 0
        %4538 = vmatprep.subr.bf16.mxu0 0
        %4539 = vmatpush1.bf16.xpose.msra.mxu0 0
        %4540 = vmatprep.mubr.bf16.mxu0 0
        %4541 = vmatmul.mubr.bf16.gmra.mrb[0].mxu0 %v4503
        %v4542 = vpop.f32.mrb[0].mxu0
        %v4543 = vadd.f32 0.0, %v4542
        %v4544 = vpop.f32.mrb[0].mxu0
        %v4545 = vpop.f32.mrb[0].mxu0
        %v4546 = vpop.f32.mrb[0].mxu0
        %4547 = vdwg.mxu0
        %4548 = vrot.lane.b32.xlu0 %v449, 64
        %v4549 = vpop.permute.xlu0 %4548
        %4550 = vrot.lane.b32.xlu0 %v457, 64
        %v4551 = vpop.permute.xlu0 %4550
        %v4553 = vsel %vm485, %v4549, 0
        %v4556 = vsel %vm485, %v4551, 0
        %4558 = vmatprep.subr.bf16.mxu0 0
        %4559 = vmatpush1.bf16.xpose.msra.mxu0 %v4556
        %4560 = vmatprep.subr.bf16.mxu0 0
        %4561 = vmatpush1.bf16.xpose.msra.mxu0 0
        %4562 = vmatprep.subr.bf16.mxu0 0
        %4563 = vmatpush1.bf16.xpose.msra.mxu0 0
        %4564 = vmatprep.subr.bf16.mxu0 0
        %4565 = vmatpush1.bf16.xpose.msra.mxu0 0
        %4566 = vmatprep.subr.bf16.mxu0 0
        %4567 = vmatpush1.bf16.xpose.msra.mxu0 0
        %4568 = vmatprep.subr.bf16.mxu0 0
        %4569 = vmatpush1.bf16.xpose.msra.mxu0 0
        %4570 = vmatprep.subr.bf16.mxu0 0
        %4571 = vmatpush1.bf16.xpose.msra.mxu0 0
        %4572 = vmatprep.subr.bf16.mxu0 0
        %4573 = vmatpush1.bf16.xpose.msra.mxu0 0
        %4574 = vmatprep.subr.bf16.mxu0 0
        %4575 = vmatpush1.bf16.xpose.msra.mxu0 0
        %4576 = vmatprep.subr.bf16.mxu0 0
        %4577 = vmatpush1.bf16.xpose.msra.mxu0 0
        %4578 = vmatprep.subr.bf16.mxu0 0
        %4579 = vmatpush1.bf16.xpose.msra.mxu0 0
        %4580 = vmatprep.subr.bf16.mxu0 0
        %4581 = vmatpush1.bf16.xpose.msra.mxu0 0
        %4582 = vmatprep.subr.bf16.mxu0 0
        %4583 = vmatpush1.bf16.xpose.msra.mxu0 0
        %4584 = vmatprep.subr.bf16.mxu0 0
        %4585 = vmatpush1.bf16.xpose.msra.mxu0 0
        %4586 = vmatprep.subr.bf16.mxu0 0
        %4587 = vmatpush1.bf16.xpose.msra.mxu0 0
        %4588 = vmatprep.subr.bf16.mxu0 0
        %4589 = vmatpush1.bf16.xpose.msra.mxu0 0
        %4590 = vmatprep.mubr.bf16.mxu0 0
        %4591 = vmatmul.mubr.bf16.gmra.mrb[0].mxu0 %v4553
        %v4592 = vpop.f32.mrb[0].mxu0
        %v4593 = vadd.f32 0.0, %v4592
        %v4594 = vpop.f32.mrb[0].mxu0
        %v4595 = vpop.f32.mrb[0].mxu0
        %v4596 = vpop.f32.mrb[0].mxu0
        %4597 = vdwg.mxu0
        %4598 = vrot.lane.b32.xlu0 %v450, 64
        %v4599 = vpop.permute.xlu0 %4598
        %4600 = vrot.lane.b32.xlu0 %v458, 64
        %v4601 = vpop.permute.xlu0 %4600
        %v4603 = vsel %vm485, %v4599, 0
        %v4606 = vsel %vm485, %v4601, 0
        %4608 = vmatprep.subr.bf16.mxu0 0
        %4609 = vmatpush1.bf16.xpose.msra.mxu0 %v4606
        %4610 = vmatprep.subr.bf16.mxu0 0
        %4611 = vmatpush1.bf16.xpose.msra.mxu0 0
        %4612 = vmatprep.subr.bf16.mxu0 0
        %4613 = vmatpush1.bf16.xpose.msra.mxu0 0
        %4614 = vmatprep.subr.bf16.mxu0 0
        %4615 = vmatpush1.bf16.xpose.msra.mxu0 0
        %4616 = vmatprep.subr.bf16.mxu0 0
        %4617 = vmatpush1.bf16.xpose.msra.mxu0 0
        %4618 = vmatprep.subr.bf16.mxu0 0
        %4619 = vmatpush1.bf16.xpose.msra.mxu0 0
        %4620 = vmatprep.subr.bf16.mxu0 0
        %4621 = vmatpush1.bf16.xpose.msra.mxu0 0
        %4622 = vmatprep.subr.bf16.mxu0 0
        %4623 = vmatpush1.bf16.xpose.msra.mxu0 0
        %4624 = vmatprep.subr.bf16.mxu0 0
        %4625 = vmatpush1.bf16.xpose.msra.mxu0 0
        %4626 = vmatprep.subr.bf16.mxu0 0
        %4627 = vmatpush1.bf16.xpose.msra.mxu0 0
        %4628 = vmatprep.subr.bf16.mxu0 0
        %4629 = vmatpush1.bf16.xpose.msra.mxu0 0
        %4630 = vmatprep.subr.bf16.mxu0 0
        %4631 = vmatpush1.bf16.xpose.msra.mxu0 0
        %4632 = vmatprep.subr.bf16.mxu0 0
        %4633 = vmatpush1.bf16.xpose.msra.mxu0 0
        %4634 = vmatprep.subr.bf16.mxu0 0
        %4635 = vmatpush1.bf16.xpose.msra.mxu0 0
        %4636 = vmatprep.subr.bf16.mxu0 0
        %4637 = vmatpush1.bf16.xpose.msra.mxu0 0
        %4638 = vmatprep.subr.bf16.mxu0 0
        %4639 = vmatpush1.bf16.xpose.msra.mxu0 0
        %4640 = vmatprep.mubr.bf16.mxu0 0
        %4641 = vmatmul.mubr.bf16.gmra.mrb[0].mxu0 %v4603
        %v4642 = vpop.f32.mrb[0].mxu0
        %v4643 = vadd.f32 0.0, %v4642
        %v4644 = vpop.f32.mrb[0].mxu0
        %v4645 = vpop.f32.mrb[0].mxu0
        %v4646 = vpop.f32.mrb[0].mxu0
        %4647 = vdwg.mxu0
        %4648 = vrot.lane.b32.xlu0 %v451, 64
        %v4649 = vpop.permute.xlu0 %4648
        %4650 = vrot.lane.b32.xlu0 %v459, 64
        %v4651 = vpop.permute.xlu0 %4650
        %v4653 = vsel %vm485, %v4649, 0
        %v4656 = vsel %vm485, %v4651, 0
        %4658 = vmatprep.subr.bf16.mxu0 0
        %4659 = vmatpush1.bf16.xpose.msra.mxu0 %v4656
        %4660 = vmatprep.subr.bf16.mxu0 0
        %4661 = vmatpush1.bf16.xpose.msra.mxu0 0
        %4662 = vmatprep.subr.bf16.mxu0 0
        %4663 = vmatpush1.bf16.xpose.msra.mxu0 0
        %4664 = vmatprep.subr.bf16.mxu0 0
        %4665 = vmatpush1.bf16.xpose.msra.mxu0 0
        %4666 = vmatprep.subr.bf16.mxu0 0
        %4667 = vmatpush1.bf16.xpose.msra.mxu0 0
        %4668 = vmatprep.subr.bf16.mxu0 0
        %4669 = vmatpush1.bf16.xpose.msra.mxu0 0
        %4670 = vmatprep.subr.bf16.mxu0 0
        %4671 = vmatpush1.bf16.xpose.msra.mxu0 0
        %4672 = vmatprep.subr.bf16.mxu0 0
        %4673 = vmatpush1.bf16.xpose.msra.mxu0 0
        %4674 = vmatprep.subr.bf16.mxu0 0
        %4675 = vmatpush1.bf16.xpose.msra.mxu0 0
        %4676 = vmatprep.subr.bf16.mxu0 0
        %4677 = vmatpush1.bf16.xpose.msra.mxu0 0
        %4678 = vmatprep.subr.bf16.mxu0 0
        %4679 = vmatpush1.bf16.xpose.msra.mxu0 0
        %4680 = vmatprep.subr.bf16.mxu0 0
        %4681 = vmatpush1.bf16.xpose.msra.mxu0 0
        %4682 = vmatprep.subr.bf16.mxu0 0
        %4683 = vmatpush1.bf16.xpose.msra.mxu0 0
        %4684 = vmatprep.subr.bf16.mxu0 0
        %4685 = vmatpush1.bf16.xpose.msra.mxu0 0
        %4686 = vmatprep.subr.bf16.mxu0 0
        %4687 = vmatpush1.bf16.xpose.msra.mxu0 0
        %4688 = vmatprep.subr.bf16.mxu0 0
        %4689 = vmatpush1.bf16.xpose.msra.mxu0 0
        %4690 = vmatprep.mubr.bf16.mxu0 0
        %4691 = vmatmul.mubr.bf16.gmra.mrb[0].mxu0 %v4653
        %v4692 = vpop.f32.mrb[0].mxu0
        %v4693 = vadd.f32 0.0, %v4692
        %v4694 = vpop.f32.mrb[0].mxu0
        %v4695 = vpop.f32.mrb[0].mxu0
        %v4696 = vpop.f32.mrb[0].mxu0
        %4697 = vdwg.mxu0
        %4698 = vrot.lane.b32.xlu0 %v452, 64
        %v4699 = vpop.permute.xlu0 %4698
        %4700 = vrot.lane.b32.xlu0 %v460, 64
        %v4701 = vpop.permute.xlu0 %4700
        %v4703 = vsel %vm485, %v4699, 0
        %v4706 = vsel %vm485, %v4701, 0
        %4708 = vmatprep.subr.bf16.mxu0 0
        %4709 = vmatpush1.bf16.xpose.msra.mxu0 %v4706
        %4710 = vmatprep.subr.bf16.mxu0 0
        %4711 = vmatpush1.bf16.xpose.msra.mxu0 0
        %4712 = vmatprep.subr.bf16.mxu0 0
        %4713 = vmatpush1.bf16.xpose.msra.mxu0 0
        %4714 = vmatprep.subr.bf16.mxu0 0
        %4715 = vmatpush1.bf16.xpose.msra.mxu0 0
        %4716 = vmatprep.subr.bf16.mxu0 0
        %4717 = vmatpush1.bf16.xpose.msra.mxu0 0
        %4718 = vmatprep.subr.bf16.mxu0 0
        %4719 = vmatpush1.bf16.xpose.msra.mxu0 0
        %4720 = vmatprep.subr.bf16.mxu0 0
        %4721 = vmatpush1.bf16.xpose.msra.mxu0 0
        %4722 = vmatprep.subr.bf16.mxu0 0
        %4723 = vmatpush1.bf16.xpose.msra.mxu0 0
        %4724 = vmatprep.subr.bf16.mxu0 0
        %4725 = vmatpush1.bf16.xpose.msra.mxu0 0
        %4726 = vmatprep.subr.bf16.mxu0 0
        %4727 = vmatpush1.bf16.xpose.msra.mxu0 0
        %4728 = vmatprep.subr.bf16.mxu0 0
        %4729 = vmatpush1.bf16.xpose.msra.mxu0 0
        %4730 = vmatprep.subr.bf16.mxu0 0
        %4731 = vmatpush1.bf16.xpose.msra.mxu0 0
        %4732 = vmatprep.subr.bf16.mxu0 0
        %4733 = vmatpush1.bf16.xpose.msra.mxu0 0
        %4734 = vmatprep.subr.bf16.mxu0 0
        %4735 = vmatpush1.bf16.xpose.msra.mxu0 0
        %4736 = vmatprep.subr.bf16.mxu0 0
        %4737 = vmatpush1.bf16.xpose.msra.mxu0 0
        %4738 = vmatprep.subr.bf16.mxu0 0
        %4739 = vmatpush1.bf16.xpose.msra.mxu0 0
        %4740 = vmatprep.mubr.bf16.mxu0 0
        %4741 = vmatmul.mubr.bf16.gmra.mrb[0].mxu0 %v4703
        %v4742 = vpop.f32.mrb[0].mxu0
        %v4743 = vadd.f32 0.0, %v4742
        %v4744 = vpop.f32.mrb[0].mxu0
        %v4745 = vpop.f32.mrb[0].mxu0
        %v4746 = vpop.f32.mrb[0].mxu0
        %4747 = vdwg.mxu0
        %v4748 = vsel %vm854, %v4393, -inf
        %4749 = vmax.xlane.f32.xlu0 %v4748
        %v4750 = vpop.xlane.xlu0 %4749
        %v4751 = vsel %vm854, %v4443, -inf
        %4752 = vmax.xlane.f32.xlu0 %v4751
        %v4753 = vpop.xlane.xlu0 %4752
        %v4754 = vsel %vm854, %v4493, -inf
        %4755 = vmax.xlane.f32.xlu0 %v4754
        %v4756 = vpop.xlane.xlu0 %4755
        %v4757 = vsel %vm854, %v4543, -inf
        %4758 = vmax.xlane.f32.xlu0 %v4757
        %v4759 = vpop.xlane.xlu0 %4758
        %v4760 = vsel %vm854, %v4593, -inf
        %4761 = vmax.xlane.f32.xlu0 %v4760
        %v4762 = vpop.xlane.xlu0 %4761
        %v4763 = vsel %vm854, %v4643, -inf
        %4764 = vmax.xlane.f32.xlu0 %v4763
        %v4765 = vpop.xlane.xlu0 %4764
        %v4766 = vsel %vm854, %v4693, -inf
        %4767 = vmax.xlane.f32.xlu0 %v4766
        %v4768 = vpop.xlane.xlu0 %4767
        %v4769 = vsel %vm854, %v4743, -inf
        %4770 = vmax.xlane.f32.xlu0 %v4769
        %v4771 = vpop.xlane.xlu0 %4770
        %v4772 = vsub.f32 %v4393, %v4750
        %v4773 = vsub.f32 %v4443, %v4753
        %v4774 = vsub.f32 %v4493, %v4756
        %v4775 = vsub.f32 %v4543, %v4759
        %v4776 = vsub.f32 %v4593, %v4762
        %v4777 = vsub.f32 %v4643, %v4765
        %v4778 = vsub.f32 %v4693, %v4768
        %v4779 = vsub.f32 %v4743, %v4771
        %v4780 = vmul.f32 %v4772, 1.442695
        %v4781 = vpow.pop %v4780
        %v4782 = vmul.f32 %v4773, 1.442695
        %v4783 = vpow.pop %v4782
        %v4784 = vmul.f32 %v4774, 1.442695
        %v4785 = vpow.pop %v4784
        %v4786 = vmul.f32 %v4775, 1.442695
        %v4787 = vpow.pop %v4786
        %v4788 = vmul.f32 %v4776, 1.442695
        %v4789 = vpow.pop %v4788
        %v4790 = vmul.f32 %v4777, 1.442695
        %v4791 = vpow.pop %v4790
        %v4792 = vmul.f32 %v4778, 1.442695
        %v4793 = vpow.pop %v4792
        %v4794 = vmul.f32 %v4779, 1.442695
        %v4795 = vpow.pop %v4794
        %v4796 = vsel %vm854, %v4781, 0.0
        %4797 = vadd.xlane.f32.xlu0 %v4796
        %v4798 = vpop.xlane.xlu0 %4797
        %v4799 = vsel %vm854, %v4783, 0.0
        %4800 = vadd.xlane.f32.xlu0 %v4799
        %v4801 = vpop.xlane.xlu0 %4800
        %v4802 = vsel %vm854, %v4785, 0.0
        %4803 = vadd.xlane.f32.xlu0 %v4802
        %v4804 = vpop.xlane.xlu0 %4803
        %v4805 = vsel %vm854, %v4787, 0.0
        %4806 = vadd.xlane.f32.xlu0 %v4805
        %v4807 = vpop.xlane.xlu0 %4806
        %v4808 = vsel %vm854, %v4789, 0.0
        %4809 = vadd.xlane.f32.xlu0 %v4808
        %v4810 = vpop.xlane.xlu0 %4809
        %v4811 = vsel %vm854, %v4791, 0.0
        %4812 = vadd.xlane.f32.xlu0 %v4811
        %v4813 = vpop.xlane.xlu0 %4812
        %v4814 = vsel %vm854, %v4793, 0.0
        %4815 = vadd.xlane.f32.xlu0 %v4814
        %v4816 = vpop.xlane.xlu0 %4815
        %v4817 = vsel %vm854, %v4795, 0.0
        %4818 = vadd.xlane.f32.xlu0 %v4817
        %v4819 = vpop.xlane.xlu0 %4818
        %v4820 = vrcp.pop %v4798
        %v4821 = vrcp.pop %v4801
        %v4822 = vrcp.pop %v4804
        %v4823 = vrcp.pop %v4807
        %v4824 = vrcp.pop %v4810
        %v4825 = vrcp.pop %v4813
        %v4826 = vrcp.pop %v4816
        %v4827 = vrcp.pop %v4819
        %v4828 = vmul.f32 %v4781, %v4820
        %v4829 = vmul.f32 %v4783, %v4821
        %v4830 = vmul.f32 %v4785, %v4822
        %v4831 = vmul.f32 %v4787, %v4823
        %v4832 = vmul.f32 %v4789, %v4824
        %v4833 = vmul.f32 %v4791, %v4825
        %v4834 = vmul.f32 %v4793, %v4826
        %v4835 = vmul.f32 %v4795, %v4827
        %v4836 = vpack.c.bf16 %v4828, %v4828
        %v4837 = vpack.c.bf16 %v4829, %v4829
        %v4838 = vpack.c.bf16 %v4830, %v4830
        %v4839 = vpack.c.bf16 %v4831, %v4831
        %v4840 = vpack.c.bf16 %v4832, %v4832
        %v4841 = vpack.c.bf16 %v4833, %v4833
        %v4842 = vpack.c.bf16 %v4834, %v4834
        %v4843 = vpack.c.bf16 %v4835, %v4835
        %4844 = vrot.lane.b32.xlu0 %v461, 64
        %v4845 = vpop.permute.xlu0 %4844
        %v4847 = vsel %vm854, %v4836, 0
        %v4850 = vsel %vm954, %v4845, 0
        %4852 = vmatprep.subr.bf16.mxu0 0
        %4853 = vmatpush1.bf16.msra.mxu0 %v4850
        %4854 = vmatprep.subr.bf16.mxu0 0
        %4855 = vmatpush1.bf16.msra.mxu0 0
        %4856 = vmatprep.subr.bf16.mxu0 0
        %4857 = vmatpush1.bf16.msra.mxu0 0
        %4858 = vmatprep.subr.bf16.mxu0 0
        %4859 = vmatpush1.bf16.msra.mxu0 0
        %4860 = vmatprep.subr.bf16.mxu0 0
        %4861 = vmatpush1.bf16.msra.mxu0 0
        %4862 = vmatprep.subr.bf16.mxu0 0
        %4863 = vmatpush1.bf16.msra.mxu0 0
        %4864 = vmatprep.subr.bf16.mxu0 0
        %4865 = vmatpush1.bf16.msra.mxu0 0
        %4866 = vmatprep.subr.bf16.mxu0 0
        %4867 = vmatpush1.bf16.msra.mxu0 0
        %4868 = vmatprep.subr.bf16.mxu0 0
        %4869 = vmatpush1.bf16.msra.mxu0 0
        %4870 = vmatprep.subr.bf16.mxu0 0
        %4871 = vmatpush1.bf16.msra.mxu0 0
        %4872 = vmatprep.subr.bf16.mxu0 0
        %4873 = vmatpush1.bf16.msra.mxu0 0
        %4874 = vmatprep.subr.bf16.mxu0 0
        %4875 = vmatpush1.bf16.msra.mxu0 0
        %4876 = vmatprep.subr.bf16.mxu0 0
        %4877 = vmatpush1.bf16.msra.mxu0 0
        %4878 = vmatprep.subr.bf16.mxu0 0
        %4879 = vmatpush1.bf16.msra.mxu0 0
        %4880 = vmatprep.subr.bf16.mxu0 0
        %4881 = vmatpush1.bf16.msra.mxu0 0
        %4882 = vmatprep.subr.bf16.mxu0 0
        %4883 = vmatpush1.bf16.msra.mxu0 0
        %4884 = vmatprep.mubr.bf16.mxu0 0
        %4885 = vmatmul.mubr.bf16.gmra.mrb[0].mxu0 %v4847
        %v4886 = vpop.f32.mrb[0].mxu0
        %v4887 = vadd.f32 0.0, %v4886
        %v4888 = vpop.f32.mrb[0].mxu0
        %v4889 = vpop.f32.mrb[0].mxu0
        %v4890 = vpop.f32.mrb[0].mxu0
        %4891 = vdwg.mxu0
        %4892 = vrot.lane.b32.xlu0 %v462, 64
        %v4893 = vpop.permute.xlu0 %4892
        %v4895 = vsel %vm854, %v4837, 0
        %v4898 = vsel %vm954, %v4893, 0
        %4900 = vmatprep.subr.bf16.mxu0 0
        %4901 = vmatpush1.bf16.msra.mxu0 %v4898
        %4902 = vmatprep.subr.bf16.mxu0 0
        %4903 = vmatpush1.bf16.msra.mxu0 0
        %4904 = vmatprep.subr.bf16.mxu0 0
        %4905 = vmatpush1.bf16.msra.mxu0 0
        %4906 = vmatprep.subr.bf16.mxu0 0
        %4907 = vmatpush1.bf16.msra.mxu0 0
        %4908 = vmatprep.subr.bf16.mxu0 0
        %4909 = vmatpush1.bf16.msra.mxu0 0
        %4910 = vmatprep.subr.bf16.mxu0 0
        %4911 = vmatpush1.bf16.msra.mxu0 0
        %4912 = vmatprep.subr.bf16.mxu0 0
        %4913 = vmatpush1.bf16.msra.mxu0 0
        %4914 = vmatprep.subr.bf16.mxu0 0
        %4915 = vmatpush1.bf16.msra.mxu0 0
        %4916 = vmatprep.subr.bf16.mxu0 0
        %4917 = vmatpush1.bf16.msra.mxu0 0
        %4918 = vmatprep.subr.bf16.mxu0 0
        %4919 = vmatpush1.bf16.msra.mxu0 0
        %4920 = vmatprep.subr.bf16.mxu0 0
        %4921 = vmatpush1.bf16.msra.mxu0 0
        %4922 = vmatprep.subr.bf16.mxu0 0
        %4923 = vmatpush1.bf16.msra.mxu0 0
        %4924 = vmatprep.subr.bf16.mxu0 0
        %4925 = vmatpush1.bf16.msra.mxu0 0
        %4926 = vmatprep.subr.bf16.mxu0 0
        %4927 = vmatpush1.bf16.msra.mxu0 0
        %4928 = vmatprep.subr.bf16.mxu0 0
        %4929 = vmatpush1.bf16.msra.mxu0 0
        %4930 = vmatprep.subr.bf16.mxu0 0
        %4931 = vmatpush1.bf16.msra.mxu0 0
        %4932 = vmatprep.mubr.bf16.mxu0 0
        %4933 = vmatmul.mubr.bf16.gmra.mrb[0].mxu0 %v4895
        %v4934 = vpop.f32.mrb[0].mxu0
        %v4935 = vadd.f32 0.0, %v4934
        %v4936 = vpop.f32.mrb[0].mxu0
        %v4937 = vpop.f32.mrb[0].mxu0
        %v4938 = vpop.f32.mrb[0].mxu0
        %4939 = vdwg.mxu0
        %4940 = vrot.lane.b32.xlu0 %v463, 64
        %v4941 = vpop.permute.xlu0 %4940
        %v4943 = vsel %vm854, %v4838, 0
        %v4946 = vsel %vm954, %v4941, 0
        %4948 = vmatprep.subr.bf16.mxu0 0
        %4949 = vmatpush1.bf16.msra.mxu0 %v4946
        %4950 = vmatprep.subr.bf16.mxu0 0
        %4951 = vmatpush1.bf16.msra.mxu0 0
        %4952 = vmatprep.subr.bf16.mxu0 0
        %4953 = vmatpush1.bf16.msra.mxu0 0
        %4954 = vmatprep.subr.bf16.mxu0 0
        %4955 = vmatpush1.bf16.msra.mxu0 0
        %4956 = vmatprep.subr.bf16.mxu0 0
        %4957 = vmatpush1.bf16.msra.mxu0 0
        %4958 = vmatprep.subr.bf16.mxu0 0
        %4959 = vmatpush1.bf16.msra.mxu0 0
        %4960 = vmatprep.subr.bf16.mxu0 0
        %4961 = vmatpush1.bf16.msra.mxu0 0
        %4962 = vmatprep.subr.bf16.mxu0 0
        %4963 = vmatpush1.bf16.msra.mxu0 0
        %4964 = vmatprep.subr.bf16.mxu0 0
        %4965 = vmatpush1.bf16.msra.mxu0 0
        %4966 = vmatprep.subr.bf16.mxu0 0
        %4967 = vmatpush1.bf16.msra.mxu0 0
        %4968 = vmatprep.subr.bf16.mxu0 0
        %4969 = vmatpush1.bf16.msra.mxu0 0
        %4970 = vmatprep.subr.bf16.mxu0 0
        %4971 = vmatpush1.bf16.msra.mxu0 0
        %4972 = vmatprep.subr.bf16.mxu0 0
        %4973 = vmatpush1.bf16.msra.mxu0 0
        %4974 = vmatprep.subr.bf16.mxu0 0
        %4975 = vmatpush1.bf16.msra.mxu0 0
        %4976 = vmatprep.subr.bf16.mxu0 0
        %4977 = vmatpush1.bf16.msra.mxu0 0
        %4978 = vmatprep.subr.bf16.mxu0 0
        %4979 = vmatpush1.bf16.msra.mxu0 0
        %4980 = vmatprep.mubr.bf16.mxu0 0
        %4981 = vmatmul.mubr.bf16.gmra.mrb[0].mxu0 %v4943
        %v4982 = vpop.f32.mrb[0].mxu0
        %v4983 = vadd.f32 0.0, %v4982
        %v4984 = vpop.f32.mrb[0].mxu0
        %v4985 = vpop.f32.mrb[0].mxu0
        %v4986 = vpop.f32.mrb[0].mxu0
        %4987 = vdwg.mxu0
        %4988 = vrot.lane.b32.xlu0 %v464, 64
        %v4989 = vpop.permute.xlu0 %4988
        %v4991 = vsel %vm854, %v4839, 0
        %v4994 = vsel %vm954, %v4989, 0
        %4996 = vmatprep.subr.bf16.mxu0 0
        %4997 = vmatpush1.bf16.msra.mxu0 %v4994
        %4998 = vmatprep.subr.bf16.mxu0 0
        %4999 = vmatpush1.bf16.msra.mxu0 0
        %5000 = vmatprep.subr.bf16.mxu0 0
        %5001 = vmatpush1.bf16.msra.mxu0 0
        %5002 = vmatprep.subr.bf16.mxu0 0
        %5003 = vmatpush1.bf16.msra.mxu0 0
        %5004 = vmatprep.subr.bf16.mxu0 0
        %5005 = vmatpush1.bf16.msra.mxu0 0
        %5006 = vmatprep.subr.bf16.mxu0 0
        %5007 = vmatpush1.bf16.msra.mxu0 0
        %5008 = vmatprep.subr.bf16.mxu0 0
        %5009 = vmatpush1.bf16.msra.mxu0 0
        %5010 = vmatprep.subr.bf16.mxu0 0
        %5011 = vmatpush1.bf16.msra.mxu0 0
        %5012 = vmatprep.subr.bf16.mxu0 0
        %5013 = vmatpush1.bf16.msra.mxu0 0
        %5014 = vmatprep.subr.bf16.mxu0 0
        %5015 = vmatpush1.bf16.msra.mxu0 0
        %5016 = vmatprep.subr.bf16.mxu0 0
        %5017 = vmatpush1.bf16.msra.mxu0 0
        %5018 = vmatprep.subr.bf16.mxu0 0
        %5019 = vmatpush1.bf16.msra.mxu0 0
        %5020 = vmatprep.subr.bf16.mxu0 0
        %5021 = vmatpush1.bf16.msra.mxu0 0
        %5022 = vmatprep.subr.bf16.mxu0 0
        %5023 = vmatpush1.bf16.msra.mxu0 0
        %5024 = vmatprep.subr.bf16.mxu0 0
        %5025 = vmatpush1.bf16.msra.mxu0 0
        %5026 = vmatprep.subr.bf16.mxu0 0
        %5027 = vmatpush1.bf16.msra.mxu0 0
        %5028 = vmatprep.mubr.bf16.mxu0 0
        %5029 = vmatmul.mubr.bf16.gmra.mrb[0].mxu0 %v4991
        %v5030 = vpop.f32.mrb[0].mxu0
        %v5031 = vadd.f32 0.0, %v5030
        %v5032 = vpop.f32.mrb[0].mxu0
        %v5033 = vpop.f32.mrb[0].mxu0
        %v5034 = vpop.f32.mrb[0].mxu0
        %5035 = vdwg.mxu0
        %5036 = vrot.lane.b32.xlu0 %v465, 64
        %v5037 = vpop.permute.xlu0 %5036
        %v5039 = vsel %vm854, %v4840, 0
        %v5042 = vsel %vm954, %v5037, 0
        %5044 = vmatprep.subr.bf16.mxu0 0
        %5045 = vmatpush1.bf16.msra.mxu0 %v5042
        %5046 = vmatprep.subr.bf16.mxu0 0
        %5047 = vmatpush1.bf16.msra.mxu0 0
        %5048 = vmatprep.subr.bf16.mxu0 0
        %5049 = vmatpush1.bf16.msra.mxu0 0
        %5050 = vmatprep.subr.bf16.mxu0 0
        %5051 = vmatpush1.bf16.msra.mxu0 0
        %5052 = vmatprep.subr.bf16.mxu0 0
        %5053 = vmatpush1.bf16.msra.mxu0 0
        %5054 = vmatprep.subr.bf16.mxu0 0
        %5055 = vmatpush1.bf16.msra.mxu0 0
        %5056 = vmatprep.subr.bf16.mxu0 0
        %5057 = vmatpush1.bf16.msra.mxu0 0
        %5058 = vmatprep.subr.bf16.mxu0 0
        %5059 = vmatpush1.bf16.msra.mxu0 0
        %5060 = vmatprep.subr.bf16.mxu0 0
        %5061 = vmatpush1.bf16.msra.mxu0 0
        %5062 = vmatprep.subr.bf16.mxu0 0
        %5063 = vmatpush1.bf16.msra.mxu0 0
        %5064 = vmatprep.subr.bf16.mxu0 0
        %5065 = vmatpush1.bf16.msra.mxu0 0
        %5066 = vmatprep.subr.bf16.mxu0 0
        %5067 = vmatpush1.bf16.msra.mxu0 0
        %5068 = vmatprep.subr.bf16.mxu0 0
        %5069 = vmatpush1.bf16.msra.mxu0 0
        %5070 = vmatprep.subr.bf16.mxu0 0
        %5071 = vmatpush1.bf16.msra.mxu0 0
        %5072 = vmatprep.subr.bf16.mxu0 0
        %5073 = vmatpush1.bf16.msra.mxu0 0
        %5074 = vmatprep.subr.bf16.mxu0 0
        %5075 = vmatpush1.bf16.msra.mxu0 0
        %5076 = vmatprep.mubr.bf16.mxu0 0
        %5077 = vmatmul.mubr.bf16.gmra.mrb[0].mxu0 %v5039
        %v5078 = vpop.f32.mrb[0].mxu0
        %v5079 = vadd.f32 0.0, %v5078
        %v5080 = vpop.f32.mrb[0].mxu0
        %v5081 = vpop.f32.mrb[0].mxu0
        %v5082 = vpop.f32.mrb[0].mxu0
        %5083 = vdwg.mxu0
        %5084 = vrot.lane.b32.xlu0 %v466, 64
        %v5085 = vpop.permute.xlu0 %5084
        %v5087 = vsel %vm854, %v4841, 0
        %v5090 = vsel %vm954, %v5085, 0
        %5092 = vmatprep.subr.bf16.mxu0 0
        %5093 = vmatpush1.bf16.msra.mxu0 %v5090
        %5094 = vmatprep.subr.bf16.mxu0 0
        %5095 = vmatpush1.bf16.msra.mxu0 0
        %5096 = vmatprep.subr.bf16.mxu0 0
        %5097 = vmatpush1.bf16.msra.mxu0 0
        %5098 = vmatprep.subr.bf16.mxu0 0
        %5099 = vmatpush1.bf16.msra.mxu0 0
        %5100 = vmatprep.subr.bf16.mxu0 0
        %5101 = vmatpush1.bf16.msra.mxu0 0
        %5102 = vmatprep.subr.bf16.mxu0 0
        %5103 = vmatpush1.bf16.msra.mxu0 0
        %5104 = vmatprep.subr.bf16.mxu0 0
        %5105 = vmatpush1.bf16.msra.mxu0 0
        %5106 = vmatprep.subr.bf16.mxu0 0
        %5107 = vmatpush1.bf16.msra.mxu0 0
        %5108 = vmatprep.subr.bf16.mxu0 0
        %5109 = vmatpush1.bf16.msra.mxu0 0
        %5110 = vmatprep.subr.bf16.mxu0 0
        %5111 = vmatpush1.bf16.msra.mxu0 0
        %5112 = vmatprep.subr.bf16.mxu0 0
        %5113 = vmatpush1.bf16.msra.mxu0 0
        %5114 = vmatprep.subr.bf16.mxu0 0
        %5115 = vmatpush1.bf16.msra.mxu0 0
        %5116 = vmatprep.subr.bf16.mxu0 0
        %5117 = vmatpush1.bf16.msra.mxu0 0
        %5118 = vmatprep.subr.bf16.mxu0 0
        %5119 = vmatpush1.bf16.msra.mxu0 0
        %5120 = vmatprep.subr.bf16.mxu0 0
        %5121 = vmatpush1.bf16.msra.mxu0 0
        %5122 = vmatprep.subr.bf16.mxu0 0
        %5123 = vmatpush1.bf16.msra.mxu0 0
        %5124 = vmatprep.mubr.bf16.mxu0 0
        %5125 = vmatmul.mubr.bf16.gmra.mrb[0].mxu0 %v5087
        %v5126 = vpop.f32.mrb[0].mxu0
        %v5127 = vadd.f32 0.0, %v5126
        %v5128 = vpop.f32.mrb[0].mxu0
        %v5129 = vpop.f32.mrb[0].mxu0
        %v5130 = vpop.f32.mrb[0].mxu0
        %5131 = vdwg.mxu0
        %5132 = vrot.lane.b32.xlu0 %v467, 64
        %v5133 = vpop.permute.xlu0 %5132
        %v5135 = vsel %vm854, %v4842, 0
        %v5138 = vsel %vm954, %v5133, 0
        %5140 = vmatprep.subr.bf16.mxu0 0
        %5141 = vmatpush1.bf16.msra.mxu0 %v5138
        %5142 = vmatprep.subr.bf16.mxu0 0
        %5143 = vmatpush1.bf16.msra.mxu0 0
        %5144 = vmatprep.subr.bf16.mxu0 0
        %5145 = vmatpush1.bf16.msra.mxu0 0
        %5146 = vmatprep.subr.bf16.mxu0 0
        %5147 = vmatpush1.bf16.msra.mxu0 0
        %5148 = vmatprep.subr.bf16.mxu0 0
        %5149 = vmatpush1.bf16.msra.mxu0 0
        %5150 = vmatprep.subr.bf16.mxu0 0
        %5151 = vmatpush1.bf16.msra.mxu0 0
        %5152 = vmatprep.subr.bf16.mxu0 0
        %5153 = vmatpush1.bf16.msra.mxu0 0
        %5154 = vmatprep.subr.bf16.mxu0 0
        %5155 = vmatpush1.bf16.msra.mxu0 0
        %5156 = vmatprep.subr.bf16.mxu0 0
        %5157 = vmatpush1.bf16.msra.mxu0 0
        %5158 = vmatprep.subr.bf16.mxu0 0
        %5159 = vmatpush1.bf16.msra.mxu0 0
        %5160 = vmatprep.subr.bf16.mxu0 0
        %5161 = vmatpush1.bf16.msra.mxu0 0
        %5162 = vmatprep.subr.bf16.mxu0 0
        %5163 = vmatpush1.bf16.msra.mxu0 0
        %5164 = vmatprep.subr.bf16.mxu0 0
        %5165 = vmatpush1.bf16.msra.mxu0 0
        %5166 = vmatprep.subr.bf16.mxu0 0
        %5167 = vmatpush1.bf16.msra.mxu0 0
        %5168 = vmatprep.subr.bf16.mxu0 0
        %5169 = vmatpush1.bf16.msra.mxu0 0
        %5170 = vmatprep.subr.bf16.mxu0 0
        %5171 = vmatpush1.bf16.msra.mxu0 0
        %5172 = vmatprep.mubr.bf16.mxu0 0
        %5173 = vmatmul.mubr.bf16.gmra.mrb[0].mxu0 %v5135
        %v5174 = vpop.f32.mrb[0].mxu0
        %v5175 = vadd.f32 0.0, %v5174
        %v5176 = vpop.f32.mrb[0].mxu0
        %v5177 = vpop.f32.mrb[0].mxu0
        %v5178 = vpop.f32.mrb[0].mxu0
        %5179 = vdwg.mxu0
        %5180 = vrot.lane.b32.xlu0 %v468, 64
        %v5181 = vpop.permute.xlu0 %5180
        %v5183 = vsel %vm854, %v4843, 0
        %v5186 = vsel %vm954, %v5181, 0
        %5188 = vmatprep.subr.bf16.mxu0 0
        %5189 = vmatpush1.bf16.msra.mxu0 %v5186
        %5190 = vmatprep.subr.bf16.mxu0 0
        %5191 = vmatpush1.bf16.msra.mxu0 0
        %5192 = vmatprep.subr.bf16.mxu0 0
        %5193 = vmatpush1.bf16.msra.mxu0 0
        %5194 = vmatprep.subr.bf16.mxu0 0
        %5195 = vmatpush1.bf16.msra.mxu0 0
        %5196 = vmatprep.subr.bf16.mxu0 0
        %5197 = vmatpush1.bf16.msra.mxu0 0
        %5198 = vmatprep.subr.bf16.mxu0 0
        %5199 = vmatpush1.bf16.msra.mxu0 0
        %5200 = vmatprep.subr.bf16.mxu0 0
        %5201 = vmatpush1.bf16.msra.mxu0 0
        %5202 = vmatprep.subr.bf16.mxu0 0
        %5203 = vmatpush1.bf16.msra.mxu0 0
        %5204 = vmatprep.subr.bf16.mxu0 0
        %5205 = vmatpush1.bf16.msra.mxu0 0
        %5206 = vmatprep.subr.bf16.mxu0 0
        %5207 = vmatpush1.bf16.msra.mxu0 0
        %5208 = vmatprep.subr.bf16.mxu0 0
        %5209 = vmatpush1.bf16.msra.mxu0 0
        %5210 = vmatprep.subr.bf16.mxu0 0
        %5211 = vmatpush1.bf16.msra.mxu0 0
        %5212 = vmatprep.subr.bf16.mxu0 0
        %5213 = vmatpush1.bf16.msra.mxu0 0
        %5214 = vmatprep.subr.bf16.mxu0 0
        %5215 = vmatpush1.bf16.msra.mxu0 0
        %5216 = vmatprep.subr.bf16.mxu0 0
        %5217 = vmatpush1.bf16.msra.mxu0 0
        %5218 = vmatprep.subr.bf16.mxu0 0
        %5219 = vmatpush1.bf16.msra.mxu0 0
        %5220 = vmatprep.mubr.bf16.mxu0 0
        %5221 = vmatmul.mubr.bf16.gmra.mrb[0].mxu0 %v5183
        %v5222 = vpop.f32.mrb[0].mxu0
        %v5223 = vadd.f32 0.0, %v5222
        %v5224 = vpop.f32.mrb[0].mxu0
        %v5225 = vpop.f32.mrb[0].mxu0
        %v5226 = vpop.f32.mrb[0].mxu0
        %5227 = vdwg.mxu0
        %v5228 = vpack.c.bf16 %v4935, %v4887
        %v5229 = vpack.c.bf16 %v5031, %v4983
        %v5230 = vpack.c.bf16 %v5127, %v5079
        %v5231 = vpack.c.bf16 %v5223, %v5175
        %v5234 = vunpack.c.l.b16 %v477
        %v5235 = vunpack.c.l.b16 %v478
        %v5236 = vpack.c.b16 %v5235, %v5234
        %v5239 = vsel %vm485, %v5228, 0
        %v5242 = vsel %vm485, %v5229, 0
        %v5245 = vsel %vm485, %v5230, 0
        %v5248 = vsel %vm485, %v5231, 0
        %5250 = vmatprep.subr.bf16.mxu0 0
        %5251 = vmatpush1.bf16.msra.mxu0 %v5236
        %5252 = vmatprep.subr.bf16.mxu0 0
        %5253 = vmatpush1.bf16.msra.mxu0 0
        %5254 = vmatprep.subr.bf16.mxu0 0
        %5255 = vmatpush1.bf16.msra.mxu0 0
        %5256 = vmatprep.subr.bf16.mxu0 0
        %5257 = vmatpush1.bf16.msra.mxu0 0
        %5258 = vmatprep.subr.bf16.mxu0 0
        %5259 = vmatpush1.bf16.msra.mxu0 0
        %5260 = vmatprep.subr.bf16.mxu0 0
        %5261 = vmatpush1.bf16.msra.mxu0 0
        %5262 = vmatprep.subr.bf16.mxu0 0
        %5263 = vmatpush1.bf16.msra.mxu0 0
        %5264 = vmatprep.subr.bf16.mxu0 0
        %5265 = vmatpush1.bf16.msra.mxu0 0
        %5266 = vmatprep.subr.bf16.mxu0 0
        %5267 = vmatpush1.bf16.msra.mxu0 0
        %5268 = vmatprep.subr.bf16.mxu0 0
        %5269 = vmatpush1.bf16.msra.mxu0 0
        %5270 = vmatprep.subr.bf16.mxu0 0
        %5271 = vmatpush1.bf16.msra.mxu0 0
        %5272 = vmatprep.subr.bf16.mxu0 0
        %5273 = vmatpush1.bf16.msra.mxu0 0
        %5274 = vmatprep.subr.bf16.mxu0 0
        %5275 = vmatpush1.bf16.msra.mxu0 0
        %5276 = vmatprep.subr.bf16.mxu0 0
        %5277 = vmatpush1.bf16.msra.mxu0 0
        %5278 = vmatprep.subr.bf16.mxu0 0
        %5279 = vmatpush1.bf16.msra.mxu0 0
        %5280 = vmatprep.subr.bf16.mxu0 0
        %5281 = vmatpush1.bf16.msra.mxu0 0
        %5282 = vmatprep.mubr.bf16.mxu0 0
        %5283 = vmatmul.mubr.bf16.gmra.mrb[0].mxu0 %v5239
        %v5284 = vpop.f32.mrb[0].mxu0
        %v5285 = vadd.f32 0.0, %v5284
        %v5286 = vpop.f32.mrb[0].mxu0
        %v5287 = vpop.f32.mrb[0].mxu0
        %v5288 = vadd.f32 0.0, %v5287
        %v5289 = vpop.f32.mrb[0].mxu0
        %5290 = vmatprep.mubr.bf16.mxu0 0
        %5291 = vmatmul.mubr.bf16.gmra.mrb[0].mxu0 %v5242
        %v5292 = vpop.f32.mrb[0].mxu0
        %v5293 = vadd.f32 0.0, %v5292
        %v5294 = vpop.f32.mrb[0].mxu0
        %v5295 = vpop.f32.mrb[0].mxu0
        %v5296 = vadd.f32 0.0, %v5295
        %v5297 = vpop.f32.mrb[0].mxu0
        %5298 = vmatprep.mubr.bf16.mxu0 0
        %5299 = vmatmul.mubr.bf16.gmra.mrb[0].mxu0 %v5245
        %v5300 = vpop.f32.mrb[0].mxu0
        %v5301 = vadd.f32 0.0, %v5300
        %v5302 = vpop.f32.mrb[0].mxu0
        %v5303 = vpop.f32.mrb[0].mxu0
        %v5304 = vadd.f32 0.0, %v5303
        %v5305 = vpop.f32.mrb[0].mxu0
        %5306 = vmatprep.mubr.bf16.mxu0 0
        %5307 = vmatmul.mubr.bf16.gmra.mrb[0].mxu0 %v5248
        %v5308 = vpop.f32.mrb[0].mxu0
        %v5309 = vadd.f32 0.0, %v5308
        %v5310 = vpop.f32.mrb[0].mxu0
        %v5311 = vpop.f32.mrb[0].mxu0
        %v5312 = vadd.f32 0.0, %v5311
        %v5313 = vpop.f32.mrb[0].mxu0
        %5314 = vdwg.mxu0
        %v5315 = vadd.f32 %v4340, %v5285
        %v5316 = vadd.f32 %v4341, %v5288
        %v5317 = vadd.f32 %v4342, %v5293
        %v5318 = vadd.f32 %v4343, %v5296
        %v5319 = vadd.f32 %v4344, %v5301
        %v5320 = vadd.f32 %v4345, %v5304
        %v5321 = vadd.f32 %v4346, %v5309
        %v5322 = vadd.f32 %v4347, %v5312
        %5323 = vrot.lane.b32.xlu0 %v445, 48
        %v5324 = vpop.permute.xlu0 %5323
        %5325 = vrot.lane.b32.xlu0 %v453, 48
        %v5326 = vpop.permute.xlu0 %5325
        %v5328 = vsel %vm485, %v5324, 0
        %v5331 = vsel %vm485, %v5326, 0
        %5333 = vmatprep.subr.bf16.mxu0 0
        %5334 = vmatpush1.bf16.xpose.msra.mxu0 %v5331
        %5335 = vmatprep.subr.bf16.mxu0 0
        %5336 = vmatpush1.bf16.xpose.msra.mxu0 0
        %5337 = vmatprep.subr.bf16.mxu0 0
        %5338 = vmatpush1.bf16.xpose.msra.mxu0 0
        %5339 = vmatprep.subr.bf16.mxu0 0
        %5340 = vmatpush1.bf16.xpose.msra.mxu0 0
        %5341 = vmatprep.subr.bf16.mxu0 0
        %5342 = vmatpush1.bf16.xpose.msra.mxu0 0
        %5343 = vmatprep.subr.bf16.mxu0 0
        %5344 = vmatpush1.bf16.xpose.msra.mxu0 0
        %5345 = vmatprep.subr.bf16.mxu0 0
        %5346 = vmatpush1.bf16.xpose.msra.mxu0 0
        %5347 = vmatprep.subr.bf16.mxu0 0
        %5348 = vmatpush1.bf16.xpose.msra.mxu0 0
        %5349 = vmatprep.subr.bf16.mxu0 0
        %5350 = vmatpush1.bf16.xpose.msra.mxu0 0
        %5351 = vmatprep.subr.bf16.mxu0 0
        %5352 = vmatpush1.bf16.xpose.msra.mxu0 0
        %5353 = vmatprep.subr.bf16.mxu0 0
        %5354 = vmatpush1.bf16.xpose.msra.mxu0 0
        %5355 = vmatprep.subr.bf16.mxu0 0
        %5356 = vmatpush1.bf16.xpose.msra.mxu0 0
        %5357 = vmatprep.subr.bf16.mxu0 0
        %5358 = vmatpush1.bf16.xpose.msra.mxu0 0
        %5359 = vmatprep.subr.bf16.mxu0 0
        %5360 = vmatpush1.bf16.xpose.msra.mxu0 0
        %5361 = vmatprep.subr.bf16.mxu0 0
        %5362 = vmatpush1.bf16.xpose.msra.mxu0 0
        %5363 = vmatprep.subr.bf16.mxu0 0
        %5364 = vmatpush1.bf16.xpose.msra.mxu0 0
        %5365 = vmatprep.mubr.bf16.mxu0 0
        %5366 = vmatmul.mubr.bf16.gmra.mrb[0].mxu0 %v5328
        %v5367 = vpop.f32.mrb[0].mxu0
        %v5368 = vadd.f32 0.0, %v5367
        %v5369 = vpop.f32.mrb[0].mxu0
        %v5370 = vpop.f32.mrb[0].mxu0
        %v5371 = vpop.f32.mrb[0].mxu0
        %5372 = vdwg.mxu0
        %5373 = vrot.lane.b32.xlu0 %v446, 48
        %v5374 = vpop.permute.xlu0 %5373
        %5375 = vrot.lane.b32.xlu0 %v454, 48
        %v5376 = vpop.permute.xlu0 %5375
        %v5378 = vsel %vm485, %v5374, 0
        %v5381 = vsel %vm485, %v5376, 0
        %5383 = vmatprep.subr.bf16.mxu0 0
        %5384 = vmatpush1.bf16.xpose.msra.mxu0 %v5381
        %5385 = vmatprep.subr.bf16.mxu0 0
        %5386 = vmatpush1.bf16.xpose.msra.mxu0 0
        %5387 = vmatprep.subr.bf16.mxu0 0
        %5388 = vmatpush1.bf16.xpose.msra.mxu0 0
        %5389 = vmatprep.subr.bf16.mxu0 0
        %5390 = vmatpush1.bf16.xpose.msra.mxu0 0
        %5391 = vmatprep.subr.bf16.mxu0 0
        %5392 = vmatpush1.bf16.xpose.msra.mxu0 0
        %5393 = vmatprep.subr.bf16.mxu0 0
        %5394 = vmatpush1.bf16.xpose.msra.mxu0 0
        %5395 = vmatprep.subr.bf16.mxu0 0
        %5396 = vmatpush1.bf16.xpose.msra.mxu0 0
        %5397 = vmatprep.subr.bf16.mxu0 0
        %5398 = vmatpush1.bf16.xpose.msra.mxu0 0
        %5399 = vmatprep.subr.bf16.mxu0 0
        %5400 = vmatpush1.bf16.xpose.msra.mxu0 0
        %5401 = vmatprep.subr.bf16.mxu0 0
        %5402 = vmatpush1.bf16.xpose.msra.mxu0 0
        %5403 = vmatprep.subr.bf16.mxu0 0
        %5404 = vmatpush1.bf16.xpose.msra.mxu0 0
        %5405 = vmatprep.subr.bf16.mxu0 0
        %5406 = vmatpush1.bf16.xpose.msra.mxu0 0
        %5407 = vmatprep.subr.bf16.mxu0 0
        %5408 = vmatpush1.bf16.xpose.msra.mxu0 0
        %5409 = vmatprep.subr.bf16.mxu0 0
        %5410 = vmatpush1.bf16.xpose.msra.mxu0 0
        %5411 = vmatprep.subr.bf16.mxu0 0
        %5412 = vmatpush1.bf16.xpose.msra.mxu0 0
        %5413 = vmatprep.subr.bf16.mxu0 0
        %5414 = vmatpush1.bf16.xpose.msra.mxu0 0
        %5415 = vmatprep.mubr.bf16.mxu0 0
        %5416 = vmatmul.mubr.bf16.gmra.mrb[0].mxu0 %v5378
        %v5417 = vpop.f32.mrb[0].mxu0
        %v5418 = vadd.f32 0.0, %v5417
        %v5419 = vpop.f32.mrb[0].mxu0
        %v5420 = vpop.f32.mrb[0].mxu0
        %v5421 = vpop.f32.mrb[0].mxu0
        %5422 = vdwg.mxu0
        %5423 = vrot.lane.b32.xlu0 %v447, 48
        %v5424 = vpop.permute.xlu0 %5423
        %5425 = vrot.lane.b32.xlu0 %v455, 48
        %v5426 = vpop.permute.xlu0 %5425
        %v5428 = vsel %vm485, %v5424, 0
        %v5431 = vsel %vm485, %v5426, 0
        %5433 = vmatprep.subr.bf16.mxu0 0
        %5434 = vmatpush1.bf16.xpose.msra.mxu0 %v5431
        %5435 = vmatprep.subr.bf16.mxu0 0
        %5436 = vmatpush1.bf16.xpose.msra.mxu0 0
        %5437 = vmatprep.subr.bf16.mxu0 0
        %5438 = vmatpush1.bf16.xpose.msra.mxu0 0
        %5439 = vmatprep.subr.bf16.mxu0 0
        %5440 = vmatpush1.bf16.xpose.msra.mxu0 0
        %5441 = vmatprep.subr.bf16.mxu0 0
        %5442 = vmatpush1.bf16.xpose.msra.mxu0 0
        %5443 = vmatprep.subr.bf16.mxu0 0
        %5444 = vmatpush1.bf16.xpose.msra.mxu0 0
        %5445 = vmatprep.subr.bf16.mxu0 0
        %5446 = vmatpush1.bf16.xpose.msra.mxu0 0
        %5447 = vmatprep.subr.bf16.mxu0 0
        %5448 = vmatpush1.bf16.xpose.msra.mxu0 0
        %5449 = vmatprep.subr.bf16.mxu0 0
        %5450 = vmatpush1.bf16.xpose.msra.mxu0 0
        %5451 = vmatprep.subr.bf16.mxu0 0
        %5452 = vmatpush1.bf16.xpose.msra.mxu0 0
        %5453 = vmatprep.subr.bf16.mxu0 0
        %5454 = vmatpush1.bf16.xpose.msra.mxu0 0
        %5455 = vmatprep.subr.bf16.mxu0 0
        %5456 = vmatpush1.bf16.xpose.msra.mxu0 0
        %5457 = vmatprep.subr.bf16.mxu0 0
        %5458 = vmatpush1.bf16.xpose.msra.mxu0 0
        %5459 = vmatprep.subr.bf16.mxu0 0
        %5460 = vmatpush1.bf16.xpose.msra.mxu0 0
        %5461 = vmatprep.subr.bf16.mxu0 0
        %5462 = vmatpush1.bf16.xpose.msra.mxu0 0
        %5463 = vmatprep.subr.bf16.mxu0 0
        %5464 = vmatpush1.bf16.xpose.msra.mxu0 0
        %5465 = vmatprep.mubr.bf16.mxu0 0
        %5466 = vmatmul.mubr.bf16.gmra.mrb[0].mxu0 %v5428
        %v5467 = vpop.f32.mrb[0].mxu0
        %v5468 = vadd.f32 0.0, %v5467
        %v5469 = vpop.f32.mrb[0].mxu0
        %v5470 = vpop.f32.mrb[0].mxu0
        %v5471 = vpop.f32.mrb[0].mxu0
        %5472 = vdwg.mxu0
        %5473 = vrot.lane.b32.xlu0 %v448, 48
        %v5474 = vpop.permute.xlu0 %5473
        %5475 = vrot.lane.b32.xlu0 %v456, 48
        %v5476 = vpop.permute.xlu0 %5475
        %v5478 = vsel %vm485, %v5474, 0
        %v5481 = vsel %vm485, %v5476, 0
        %5483 = vmatprep.subr.bf16.mxu0 0
        %5484 = vmatpush1.bf16.xpose.msra.mxu0 %v5481
        %5485 = vmatprep.subr.bf16.mxu0 0
        %5486 = vmatpush1.bf16.xpose.msra.mxu0 0
        %5487 = vmatprep.subr.bf16.mxu0 0
        %5488 = vmatpush1.bf16.xpose.msra.mxu0 0
        %5489 = vmatprep.subr.bf16.mxu0 0
        %5490 = vmatpush1.bf16.xpose.msra.mxu0 0
        %5491 = vmatprep.subr.bf16.mxu0 0
        %5492 = vmatpush1.bf16.xpose.msra.mxu0 0
        %5493 = vmatprep.subr.bf16.mxu0 0
        %5494 = vmatpush1.bf16.xpose.msra.mxu0 0
        %5495 = vmatprep.subr.bf16.mxu0 0
        %5496 = vmatpush1.bf16.xpose.msra.mxu0 0
        %5497 = vmatprep.subr.bf16.mxu0 0
        %5498 = vmatpush1.bf16.xpose.msra.mxu0 0
        %5499 = vmatprep.subr.bf16.mxu0 0
        %5500 = vmatpush1.bf16.xpose.msra.mxu0 0
        %5501 = vmatprep.subr.bf16.mxu0 0
        %5502 = vmatpush1.bf16.xpose.msra.mxu0 0
        %5503 = vmatprep.subr.bf16.mxu0 0
        %5504 = vmatpush1.bf16.xpose.msra.mxu0 0
        %5505 = vmatprep.subr.bf16.mxu0 0
        %5506 = vmatpush1.bf16.xpose.msra.mxu0 0
        %5507 = vmatprep.subr.bf16.mxu0 0
        %5508 = vmatpush1.bf16.xpose.msra.mxu0 0
        %5509 = vmatprep.subr.bf16.mxu0 0
        %5510 = vmatpush1.bf16.xpose.msra.mxu0 0
        %5511 = vmatprep.subr.bf16.mxu0 0
        %5512 = vmatpush1.bf16.xpose.msra.mxu0 0
        %5513 = vmatprep.subr.bf16.mxu0 0
        %5514 = vmatpush1.bf16.xpose.msra.mxu0 0
        %5515 = vmatprep.mubr.bf16.mxu0 0
        %5516 = vmatmul.mubr.bf16.gmra.mrb[0].mxu0 %v5478
        %v5517 = vpop.f32.mrb[0].mxu0
        %v5518 = vadd.f32 0.0, %v5517
        %v5519 = vpop.f32.mrb[0].mxu0
        %v5520 = vpop.f32.mrb[0].mxu0
        %v5521 = vpop.f32.mrb[0].mxu0
        %5522 = vdwg.mxu0
        %5523 = vrot.lane.b32.xlu0 %v449, 48
        %v5524 = vpop.permute.xlu0 %5523
        %5525 = vrot.lane.b32.xlu0 %v457, 48
        %v5526 = vpop.permute.xlu0 %5525
        %v5528 = vsel %vm485, %v5524, 0
        %v5531 = vsel %vm485, %v5526, 0
        %5533 = vmatprep.subr.bf16.mxu0 0
        %5534 = vmatpush1.bf16.xpose.msra.mxu0 %v5531
        %5535 = vmatprep.subr.bf16.mxu0 0
        %5536 = vmatpush1.bf16.xpose.msra.mxu0 0
        %5537 = vmatprep.subr.bf16.mxu0 0
        %5538 = vmatpush1.bf16.xpose.msra.mxu0 0
        %5539 = vmatprep.subr.bf16.mxu0 0
        %5540 = vmatpush1.bf16.xpose.msra.mxu0 0
        %5541 = vmatprep.subr.bf16.mxu0 0
        %5542 = vmatpush1.bf16.xpose.msra.mxu0 0
        %5543 = vmatprep.subr.bf16.mxu0 0
        %5544 = vmatpush1.bf16.xpose.msra.mxu0 0
        %5545 = vmatprep.subr.bf16.mxu0 0
        %5546 = vmatpush1.bf16.xpose.msra.mxu0 0
        %5547 = vmatprep.subr.bf16.mxu0 0
        %5548 = vmatpush1.bf16.xpose.msra.mxu0 0
        %5549 = vmatprep.subr.bf16.mxu0 0
        %5550 = vmatpush1.bf16.xpose.msra.mxu0 0
        %5551 = vmatprep.subr.bf16.mxu0 0
        %5552 = vmatpush1.bf16.xpose.msra.mxu0 0
        %5553 = vmatprep.subr.bf16.mxu0 0
        %5554 = vmatpush1.bf16.xpose.msra.mxu0 0
        %5555 = vmatprep.subr.bf16.mxu0 0
        %5556 = vmatpush1.bf16.xpose.msra.mxu0 0
        %5557 = vmatprep.subr.bf16.mxu0 0
        %5558 = vmatpush1.bf16.xpose.msra.mxu0 0
        %5559 = vmatprep.subr.bf16.mxu0 0
        %5560 = vmatpush1.bf16.xpose.msra.mxu0 0
        %5561 = vmatprep.subr.bf16.mxu0 0
        %5562 = vmatpush1.bf16.xpose.msra.mxu0 0
        %5563 = vmatprep.subr.bf16.mxu0 0
        %5564 = vmatpush1.bf16.xpose.msra.mxu0 0
        %5565 = vmatprep.mubr.bf16.mxu0 0
        %5566 = vmatmul.mubr.bf16.gmra.mrb[0].mxu0 %v5528
        %v5567 = vpop.f32.mrb[0].mxu0
        %v5568 = vadd.f32 0.0, %v5567
        %v5569 = vpop.f32.mrb[0].mxu0
        %v5570 = vpop.f32.mrb[0].mxu0
        %v5571 = vpop.f32.mrb[0].mxu0
        %5572 = vdwg.mxu0
        %5573 = vrot.lane.b32.xlu0 %v450, 48
        %v5574 = vpop.permute.xlu0 %5573
        %5575 = vrot.lane.b32.xlu0 %v458, 48
        %v5576 = vpop.permute.xlu0 %5575
        %v5578 = vsel %vm485, %v5574, 0
        %v5581 = vsel %vm485, %v5576, 0
        %5583 = vmatprep.subr.bf16.mxu0 0
        %5584 = vmatpush1.bf16.xpose.msra.mxu0 %v5581
        %5585 = vmatprep.subr.bf16.mxu0 0
        %5586 = vmatpush1.bf16.xpose.msra.mxu0 0
        %5587 = vmatprep.subr.bf16.mxu0 0
        %5588 = vmatpush1.bf16.xpose.msra.mxu0 0
        %5589 = vmatprep.subr.bf16.mxu0 0
        %5590 = vmatpush1.bf16.xpose.msra.mxu0 0
        %5591 = vmatprep.subr.bf16.mxu0 0
        %5592 = vmatpush1.bf16.xpose.msra.mxu0 0
        %5593 = vmatprep.subr.bf16.mxu0 0
        %5594 = vmatpush1.bf16.xpose.msra.mxu0 0
        %5595 = vmatprep.subr.bf16.mxu0 0
        %5596 = vmatpush1.bf16.xpose.msra.mxu0 0
        %5597 = vmatprep.subr.bf16.mxu0 0
        %5598 = vmatpush1.bf16.xpose.msra.mxu0 0
        %5599 = vmatprep.subr.bf16.mxu0 0
        %5600 = vmatpush1.bf16.xpose.msra.mxu0 0
        %5601 = vmatprep.subr.bf16.mxu0 0
        %5602 = vmatpush1.bf16.xpose.msra.mxu0 0
        %5603 = vmatprep.subr.bf16.mxu0 0
        %5604 = vmatpush1.bf16.xpose.msra.mxu0 0
        %5605 = vmatprep.subr.bf16.mxu0 0
        %5606 = vmatpush1.bf16.xpose.msra.mxu0 0
        %5607 = vmatprep.subr.bf16.mxu0 0
        %5608 = vmatpush1.bf16.xpose.msra.mxu0 0
        %5609 = vmatprep.subr.bf16.mxu0 0
        %5610 = vmatpush1.bf16.xpose.msra.mxu0 0
        %5611 = vmatprep.subr.bf16.mxu0 0
        %5612 = vmatpush1.bf16.xpose.msra.mxu0 0
        %5613 = vmatprep.subr.bf16.mxu0 0
        %5614 = vmatpush1.bf16.xpose.msra.mxu0 0
        %5615 = vmatprep.mubr.bf16.mxu0 0
        %5616 = vmatmul.mubr.bf16.gmra.mrb[0].mxu0 %v5578
        %v5617 = vpop.f32.mrb[0].mxu0
        %v5618 = vadd.f32 0.0, %v5617
        %v5619 = vpop.f32.mrb[0].mxu0
        %v5620 = vpop.f32.mrb[0].mxu0
        %v5621 = vpop.f32.mrb[0].mxu0
        %5622 = vdwg.mxu0
        %5623 = vrot.lane.b32.xlu0 %v451, 48
        %v5624 = vpop.permute.xlu0 %5623
        %5625 = vrot.lane.b32.xlu0 %v459, 48
        %v5626 = vpop.permute.xlu0 %5625
        %v5628 = vsel %vm485, %v5624, 0
        %v5631 = vsel %vm485, %v5626, 0
        %5633 = vmatprep.subr.bf16.mxu0 0
        %5634 = vmatpush1.bf16.xpose.msra.mxu0 %v5631
        %5635 = vmatprep.subr.bf16.mxu0 0
        %5636 = vmatpush1.bf16.xpose.msra.mxu0 0
        %5637 = vmatprep.subr.bf16.mxu0 0
        %5638 = vmatpush1.bf16.xpose.msra.mxu0 0
        %5639 = vmatprep.subr.bf16.mxu0 0
        %5640 = vmatpush1.bf16.xpose.msra.mxu0 0
        %5641 = vmatprep.subr.bf16.mxu0 0
        %5642 = vmatpush1.bf16.xpose.msra.mxu0 0
        %5643 = vmatprep.subr.bf16.mxu0 0
        %5644 = vmatpush1.bf16.xpose.msra.mxu0 0
        %5645 = vmatprep.subr.bf16.mxu0 0
        %5646 = vmatpush1.bf16.xpose.msra.mxu0 0
        %5647 = vmatprep.subr.bf16.mxu0 0
        %5648 = vmatpush1.bf16.xpose.msra.mxu0 0
        %5649 = vmatprep.subr.bf16.mxu0 0
        %5650 = vmatpush1.bf16.xpose.msra.mxu0 0
        %5651 = vmatprep.subr.bf16.mxu0 0
        %5652 = vmatpush1.bf16.xpose.msra.mxu0 0
        %5653 = vmatprep.subr.bf16.mxu0 0
        %5654 = vmatpush1.bf16.xpose.msra.mxu0 0
        %5655 = vmatprep.subr.bf16.mxu0 0
        %5656 = vmatpush1.bf16.xpose.msra.mxu0 0
        %5657 = vmatprep.subr.bf16.mxu0 0
        %5658 = vmatpush1.bf16.xpose.msra.mxu0 0
        %5659 = vmatprep.subr.bf16.mxu0 0
        %5660 = vmatpush1.bf16.xpose.msra.mxu0 0
        %5661 = vmatprep.subr.bf16.mxu0 0
        %5662 = vmatpush1.bf16.xpose.msra.mxu0 0
        %5663 = vmatprep.subr.bf16.mxu0 0
        %5664 = vmatpush1.bf16.xpose.msra.mxu0 0
        %5665 = vmatprep.mubr.bf16.mxu0 0
        %5666 = vmatmul.mubr.bf16.gmra.mrb[0].mxu0 %v5628
        %v5667 = vpop.f32.mrb[0].mxu0
        %v5668 = vadd.f32 0.0, %v5667
        %v5669 = vpop.f32.mrb[0].mxu0
        %v5670 = vpop.f32.mrb[0].mxu0
        %v5671 = vpop.f32.mrb[0].mxu0
        %5672 = vdwg.mxu0
        %5673 = vrot.lane.b32.xlu0 %v452, 48
        %v5674 = vpop.permute.xlu0 %5673
        %5675 = vrot.lane.b32.xlu0 %v460, 48
        %v5676 = vpop.permute.xlu0 %5675
        %v5678 = vsel %vm485, %v5674, 0
        %v5681 = vsel %vm485, %v5676, 0
        %5683 = vmatprep.subr.bf16.mxu0 0
        %5684 = vmatpush1.bf16.xpose.msra.mxu0 %v5681
        %5685 = vmatprep.subr.bf16.mxu0 0
        %5686 = vmatpush1.bf16.xpose.msra.mxu0 0
        %5687 = vmatprep.subr.bf16.mxu0 0
        %5688 = vmatpush1.bf16.xpose.msra.mxu0 0
        %5689 = vmatprep.subr.bf16.mxu0 0
        %5690 = vmatpush1.bf16.xpose.msra.mxu0 0
        %5691 = vmatprep.subr.bf16.mxu0 0
        %5692 = vmatpush1.bf16.xpose.msra.mxu0 0
        %5693 = vmatprep.subr.bf16.mxu0 0
        %5694 = vmatpush1.bf16.xpose.msra.mxu0 0
        %5695 = vmatprep.subr.bf16.mxu0 0
        %5696 = vmatpush1.bf16.xpose.msra.mxu0 0
        %5697 = vmatprep.subr.bf16.mxu0 0
        %5698 = vmatpush1.bf16.xpose.msra.mxu0 0
        %5699 = vmatprep.subr.bf16.mxu0 0
        %5700 = vmatpush1.bf16.xpose.msra.mxu0 0
        %5701 = vmatprep.subr.bf16.mxu0 0
        %5702 = vmatpush1.bf16.xpose.msra.mxu0 0
        %5703 = vmatprep.subr.bf16.mxu0 0
        %5704 = vmatpush1.bf16.xpose.msra.mxu0 0
        %5705 = vmatprep.subr.bf16.mxu0 0
        %5706 = vmatpush1.bf16.xpose.msra.mxu0 0
        %5707 = vmatprep.subr.bf16.mxu0 0
        %5708 = vmatpush1.bf16.xpose.msra.mxu0 0
        %5709 = vmatprep.subr.bf16.mxu0 0
        %5710 = vmatpush1.bf16.xpose.msra.mxu0 0
        %5711 = vmatprep.subr.bf16.mxu0 0
        %5712 = vmatpush1.bf16.xpose.msra.mxu0 0
        %5713 = vmatprep.subr.bf16.mxu0 0
        %5714 = vmatpush1.bf16.xpose.msra.mxu0 0
        %5715 = vmatprep.mubr.bf16.mxu0 0
        %5716 = vmatmul.mubr.bf16.gmra.mrb[0].mxu0 %v5678
        %v5717 = vpop.f32.mrb[0].mxu0
        %v5718 = vadd.f32 0.0, %v5717
        %v5719 = vpop.f32.mrb[0].mxu0
        %v5720 = vpop.f32.mrb[0].mxu0
        %v5721 = vpop.f32.mrb[0].mxu0
        %5722 = vdwg.mxu0
        %v5723 = vsel %vm854, %v5368, -inf
        %5724 = vmax.xlane.f32.xlu0 %v5723
        %v5725 = vpop.xlane.xlu0 %5724
        %v5726 = vsel %vm854, %v5418, -inf
        %5727 = vmax.xlane.f32.xlu0 %v5726
        %v5728 = vpop.xlane.xlu0 %5727
        %v5729 = vsel %vm854, %v5468, -inf
        %5730 = vmax.xlane.f32.xlu0 %v5729
        %v5731 = vpop.xlane.xlu0 %5730
        %v5732 = vsel %vm854, %v5518, -inf
        %5733 = vmax.xlane.f32.xlu0 %v5732
        %v5734 = vpop.xlane.xlu0 %5733
        %v5735 = vsel %vm854, %v5568, -inf
        %5736 = vmax.xlane.f32.xlu0 %v5735
        %v5737 = vpop.xlane.xlu0 %5736
        %v5738 = vsel %vm854, %v5618, -inf
        %5739 = vmax.xlane.f32.xlu0 %v5738
        %v5740 = vpop.xlane.xlu0 %5739
        %v5741 = vsel %vm854, %v5668, -inf
        %5742 = vmax.xlane.f32.xlu0 %v5741
        %v5743 = vpop.xlane.xlu0 %5742
        %v5744 = vsel %vm854, %v5718, -inf
        %5745 = vmax.xlane.f32.xlu0 %v5744
        %v5746 = vpop.xlane.xlu0 %5745
        %v5747 = vsub.f32 %v5368, %v5725
        %v5748 = vsub.f32 %v5418, %v5728
        %v5749 = vsub.f32 %v5468, %v5731
        %v5750 = vsub.f32 %v5518, %v5734
        %v5751 = vsub.f32 %v5568, %v5737
        %v5752 = vsub.f32 %v5618, %v5740
        %v5753 = vsub.f32 %v5668, %v5743
        %v5754 = vsub.f32 %v5718, %v5746
        %v5755 = vmul.f32 %v5747, 1.442695
        %v5756 = vpow.pop %v5755
        %v5757 = vmul.f32 %v5748, 1.442695
        %v5758 = vpow.pop %v5757
        %v5759 = vmul.f32 %v5749, 1.442695
        %v5760 = vpow.pop %v5759
        %v5761 = vmul.f32 %v5750, 1.442695
        %v5762 = vpow.pop %v5761
        %v5763 = vmul.f32 %v5751, 1.442695
        %v5764 = vpow.pop %v5763
        %v5765 = vmul.f32 %v5752, 1.442695
        %v5766 = vpow.pop %v5765
        %v5767 = vmul.f32 %v5753, 1.442695
        %v5768 = vpow.pop %v5767
        %v5769 = vmul.f32 %v5754, 1.442695
        %v5770 = vpow.pop %v5769
        %v5771 = vsel %vm854, %v5756, 0.0
        %5772 = vadd.xlane.f32.xlu0 %v5771
        %v5773 = vpop.xlane.xlu0 %5772
        %v5774 = vsel %vm854, %v5758, 0.0
        %5775 = vadd.xlane.f32.xlu0 %v5774
        %v5776 = vpop.xlane.xlu0 %5775
        %v5777 = vsel %vm854, %v5760, 0.0
        %5778 = vadd.xlane.f32.xlu0 %v5777
        %v5779 = vpop.xlane.xlu0 %5778
        %v5780 = vsel %vm854, %v5762, 0.0
        %5781 = vadd.xlane.f32.xlu0 %v5780
        %v5782 = vpop.xlane.xlu0 %5781
        %v5783 = vsel %vm854, %v5764, 0.0
        %5784 = vadd.xlane.f32.xlu0 %v5783
        %v5785 = vpop.xlane.xlu0 %5784
        %v5786 = vsel %vm854, %v5766, 0.0
        %5787 = vadd.xlane.f32.xlu0 %v5786
        %v5788 = vpop.xlane.xlu0 %5787
        %v5789 = vsel %vm854, %v5768, 0.0
        %5790 = vadd.xlane.f32.xlu0 %v5789
        %v5791 = vpop.xlane.xlu0 %5790
        %v5792 = vsel %vm854, %v5770, 0.0
        %5793 = vadd.xlane.f32.xlu0 %v5792
        %v5794 = vpop.xlane.xlu0 %5793
        %v5795 = vrcp.pop %v5773
        %v5796 = vrcp.pop %v5776
        %v5797 = vrcp.pop %v5779
        %v5798 = vrcp.pop %v5782
        %v5799 = vrcp.pop %v5785
        %v5800 = vrcp.pop %v5788
        %v5801 = vrcp.pop %v5791
        %v5802 = vrcp.pop %v5794
        %v5803 = vmul.f32 %v5756, %v5795
        %v5804 = vmul.f32 %v5758, %v5796
        %v5805 = vmul.f32 %v5760, %v5797
        %v5806 = vmul.f32 %v5762, %v5798
        %v5807 = vmul.f32 %v5764, %v5799
        %v5808 = vmul.f32 %v5766, %v5800
        %v5809 = vmul.f32 %v5768, %v5801
        %v5810 = vmul.f32 %v5770, %v5802
        %v5811 = vpack.c.bf16 %v5803, %v5803
        %v5812 = vpack.c.bf16 %v5804, %v5804
        %v5813 = vpack.c.bf16 %v5805, %v5805
        %v5814 = vpack.c.bf16 %v5806, %v5806
        %v5815 = vpack.c.bf16 %v5807, %v5807
        %v5816 = vpack.c.bf16 %v5808, %v5808
        %v5817 = vpack.c.bf16 %v5809, %v5809
        %v5818 = vpack.c.bf16 %v5810, %v5810
        %5819 = vrot.lane.b32.xlu0 %v461, 48
        %v5820 = vpop.permute.xlu0 %5819
        %v5822 = vsel %vm854, %v5811, 0
        %v5825 = vsel %vm954, %v5820, 0
        %5827 = vmatprep.subr.bf16.mxu0 0
        %5828 = vmatpush1.bf16.msra.mxu0 %v5825
        %5829 = vmatprep.subr.bf16.mxu0 0
        %5830 = vmatpush1.bf16.msra.mxu0 0
        %5831 = vmatprep.subr.bf16.mxu0 0
        %5832 = vmatpush1.bf16.msra.mxu0 0
        %5833 = vmatprep.subr.bf16.mxu0 0
        %5834 = vmatpush1.bf16.msra.mxu0 0
        %5835 = vmatprep.subr.bf16.mxu0 0
        %5836 = vmatpush1.bf16.msra.mxu0 0
        %5837 = vmatprep.subr.bf16.mxu0 0
        %5838 = vmatpush1.bf16.msra.mxu0 0
        %5839 = vmatprep.subr.bf16.mxu0 0
        %5840 = vmatpush1.bf16.msra.mxu0 0
        %5841 = vmatprep.subr.bf16.mxu0 0
        %5842 = vmatpush1.bf16.msra.mxu0 0
        %5843 = vmatprep.subr.bf16.mxu0 0
        %5844 = vmatpush1.bf16.msra.mxu0 0
        %5845 = vmatprep.subr.bf16.mxu0 0
        %5846 = vmatpush1.bf16.msra.mxu0 0
        %5847 = vmatprep.subr.bf16.mxu0 0
        %5848 = vmatpush1.bf16.msra.mxu0 0
        %5849 = vmatprep.subr.bf16.mxu0 0
        %5850 = vmatpush1.bf16.msra.mxu0 0
        %5851 = vmatprep.subr.bf16.mxu0 0
        %5852 = vmatpush1.bf16.msra.mxu0 0
        %5853 = vmatprep.subr.bf16.mxu0 0
        %5854 = vmatpush1.bf16.msra.mxu0 0
        %5855 = vmatprep.subr.bf16.mxu0 0
        %5856 = vmatpush1.bf16.msra.mxu0 0
        %5857 = vmatprep.subr.bf16.mxu0 0
        %5858 = vmatpush1.bf16.msra.mxu0 0
        %5859 = vmatprep.mubr.bf16.mxu0 0
        %5860 = vmatmul.mubr.bf16.gmra.mrb[0].mxu0 %v5822
        %v5861 = vpop.f32.mrb[0].mxu0
        %v5862 = vadd.f32 0.0, %v5861
        %v5863 = vpop.f32.mrb[0].mxu0
        %v5864 = vpop.f32.mrb[0].mxu0
        %v5865 = vpop.f32.mrb[0].mxu0
        %5866 = vdwg.mxu0
        %5867 = vrot.lane.b32.xlu0 %v462, 48
        %v5868 = vpop.permute.xlu0 %5867
        %v5870 = vsel %vm854, %v5812, 0
        %v5873 = vsel %vm954, %v5868, 0
        %5875 = vmatprep.subr.bf16.mxu0 0
        %5876 = vmatpush1.bf16.msra.mxu0 %v5873
        %5877 = vmatprep.subr.bf16.mxu0 0
        %5878 = vmatpush1.bf16.msra.mxu0 0
        %5879 = vmatprep.subr.bf16.mxu0 0
        %5880 = vmatpush1.bf16.msra.mxu0 0
        %5881 = vmatprep.subr.bf16.mxu0 0
        %5882 = vmatpush1.bf16.msra.mxu0 0
        %5883 = vmatprep.subr.bf16.mxu0 0
        %5884 = vmatpush1.bf16.msra.mxu0 0
        %5885 = vmatprep.subr.bf16.mxu0 0
        %5886 = vmatpush1.bf16.msra.mxu0 0
        %5887 = vmatprep.subr.bf16.mxu0 0
        %5888 = vmatpush1.bf16.msra.mxu0 0
        %5889 = vmatprep.subr.bf16.mxu0 0
        %5890 = vmatpush1.bf16.msra.mxu0 0
        %5891 = vmatprep.subr.bf16.mxu0 0
        %5892 = vmatpush1.bf16.msra.mxu0 0
        %5893 = vmatprep.subr.bf16.mxu0 0
        %5894 = vmatpush1.bf16.msra.mxu0 0
        %5895 = vmatprep.subr.bf16.mxu0 0
        %5896 = vmatpush1.bf16.msra.mxu0 0
        %5897 = vmatprep.subr.bf16.mxu0 0
        %5898 = vmatpush1.bf16.msra.mxu0 0
        %5899 = vmatprep.subr.bf16.mxu0 0
        %5900 = vmatpush1.bf16.msra.mxu0 0
        %5901 = vmatprep.subr.bf16.mxu0 0
        %5902 = vmatpush1.bf16.msra.mxu0 0
        %5903 = vmatprep.subr.bf16.mxu0 0
        %5904 = vmatpush1.bf16.msra.mxu0 0
        %5905 = vmatprep.subr.bf16.mxu0 0
        %5906 = vmatpush1.bf16.msra.mxu0 0
        %5907 = vmatprep.mubr.bf16.mxu0 0
        %5908 = vmatmul.mubr.bf16.gmra.mrb[0].mxu0 %v5870
        %v5909 = vpop.f32.mrb[0].mxu0
        %v5910 = vadd.f32 0.0, %v5909
        %v5911 = vpop.f32.mrb[0].mxu0
        %v5912 = vpop.f32.mrb[0].mxu0
        %v5913 = vpop.f32.mrb[0].mxu0
        %5914 = vdwg.mxu0
        %5915 = vrot.lane.b32.xlu0 %v463, 48
        %v5916 = vpop.permute.xlu0 %5915
        %v5918 = vsel %vm854, %v5813, 0
        %v5921 = vsel %vm954, %v5916, 0
        %5923 = vmatprep.subr.bf16.mxu0 0
        %5924 = vmatpush1.bf16.msra.mxu0 %v5921
        %5925 = vmatprep.subr.bf16.mxu0 0
        %5926 = vmatpush1.bf16.msra.mxu0 0
        %5927 = vmatprep.subr.bf16.mxu0 0
        %5928 = vmatpush1.bf16.msra.mxu0 0
        %5929 = vmatprep.subr.bf16.mxu0 0
        %5930 = vmatpush1.bf16.msra.mxu0 0
        %5931 = vmatprep.subr.bf16.mxu0 0
        %5932 = vmatpush1.bf16.msra.mxu0 0
        %5933 = vmatprep.subr.bf16.mxu0 0
        %5934 = vmatpush1.bf16.msra.mxu0 0
        %5935 = vmatprep.subr.bf16.mxu0 0
        %5936 = vmatpush1.bf16.msra.mxu0 0
        %5937 = vmatprep.subr.bf16.mxu0 0
        %5938 = vmatpush1.bf16.msra.mxu0 0
        %5939 = vmatprep.subr.bf16.mxu0 0
        %5940 = vmatpush1.bf16.msra.mxu0 0
        %5941 = vmatprep.subr.bf16.mxu0 0
        %5942 = vmatpush1.bf16.msra.mxu0 0
        %5943 = vmatprep.subr.bf16.mxu0 0
        %5944 = vmatpush1.bf16.msra.mxu0 0
        %5945 = vmatprep.subr.bf16.mxu0 0
        %5946 = vmatpush1.bf16.msra.mxu0 0
        %5947 = vmatprep.subr.bf16.mxu0 0
        %5948 = vmatpush1.bf16.msra.mxu0 0
        %5949 = vmatprep.subr.bf16.mxu0 0
        %5950 = vmatpush1.bf16.msra.mxu0 0
        %5951 = vmatprep.subr.bf16.mxu0 0
        %5952 = vmatpush1.bf16.msra.mxu0 0
        %5953 = vmatprep.subr.bf16.mxu0 0
        %5954 = vmatpush1.bf16.msra.mxu0 0
        %5955 = vmatprep.mubr.bf16.mxu0 0
        %5956 = vmatmul.mubr.bf16.gmra.mrb[0].mxu0 %v5918
        %v5957 = vpop.f32.mrb[0].mxu0
        %v5958 = vadd.f32 0.0, %v5957
        %v5959 = vpop.f32.mrb[0].mxu0
        %v5960 = vpop.f32.mrb[0].mxu0
        %v5961 = vpop.f32.mrb[0].mxu0
        %5962 = vdwg.mxu0
        %5963 = vrot.lane.b32.xlu0 %v464, 48
        %v5964 = vpop.permute.xlu0 %5963
        %v5966 = vsel %vm854, %v5814, 0
        %v5969 = vsel %vm954, %v5964, 0
        %5971 = vmatprep.subr.bf16.mxu0 0
        %5972 = vmatpush1.bf16.msra.mxu0 %v5969
        %5973 = vmatprep.subr.bf16.mxu0 0
        %5974 = vmatpush1.bf16.msra.mxu0 0
        %5975 = vmatprep.subr.bf16.mxu0 0
        %5976 = vmatpush1.bf16.msra.mxu0 0
        %5977 = vmatprep.subr.bf16.mxu0 0
        %5978 = vmatpush1.bf16.msra.mxu0 0
        %5979 = vmatprep.subr.bf16.mxu0 0
        %5980 = vmatpush1.bf16.msra.mxu0 0
        %5981 = vmatprep.subr.bf16.mxu0 0
        %5982 = vmatpush1.bf16.msra.mxu0 0
        %5983 = vmatprep.subr.bf16.mxu0 0
        %5984 = vmatpush1.bf16.msra.mxu0 0
        %5985 = vmatprep.subr.bf16.mxu0 0
        %5986 = vmatpush1.bf16.msra.mxu0 0
        %5987 = vmatprep.subr.bf16.mxu0 0
        %5988 = vmatpush1.bf16.msra.mxu0 0
        %5989 = vmatprep.subr.bf16.mxu0 0
        %5990 = vmatpush1.bf16.msra.mxu0 0
        %5991 = vmatprep.subr.bf16.mxu0 0
        %5992 = vmatpush1.bf16.msra.mxu0 0
        %5993 = vmatprep.subr.bf16.mxu0 0
        %5994 = vmatpush1.bf16.msra.mxu0 0
        %5995 = vmatprep.subr.bf16.mxu0 0
        %5996 = vmatpush1.bf16.msra.mxu0 0
        %5997 = vmatprep.subr.bf16.mxu0 0
        %5998 = vmatpush1.bf16.msra.mxu0 0
        %5999 = vmatprep.subr.bf16.mxu0 0
        %6000 = vmatpush1.bf16.msra.mxu0 0
        %6001 = vmatprep.subr.bf16.mxu0 0
        %6002 = vmatpush1.bf16.msra.mxu0 0
        %6003 = vmatprep.mubr.bf16.mxu0 0
        %6004 = vmatmul.mubr.bf16.gmra.mrb[0].mxu0 %v5966
        %v6005 = vpop.f32.mrb[0].mxu0
        %v6006 = vadd.f32 0.0, %v6005
        %v6007 = vpop.f32.mrb[0].mxu0
        %v6008 = vpop.f32.mrb[0].mxu0
        %v6009 = vpop.f32.mrb[0].mxu0
        %6010 = vdwg.mxu0
        %6011 = vrot.lane.b32.xlu0 %v465, 48
        %v6012 = vpop.permute.xlu0 %6011
        %v6014 = vsel %vm854, %v5815, 0
        %v6017 = vsel %vm954, %v6012, 0
        %6019 = vmatprep.subr.bf16.mxu0 0
        %6020 = vmatpush1.bf16.msra.mxu0 %v6017
        %6021 = vmatprep.subr.bf16.mxu0 0
        %6022 = vmatpush1.bf16.msra.mxu0 0
        %6023 = vmatprep.subr.bf16.mxu0 0
        %6024 = vmatpush1.bf16.msra.mxu0 0
        %6025 = vmatprep.subr.bf16.mxu0 0
        %6026 = vmatpush1.bf16.msra.mxu0 0
        %6027 = vmatprep.subr.bf16.mxu0 0
        %6028 = vmatpush1.bf16.msra.mxu0 0
        %6029 = vmatprep.subr.bf16.mxu0 0
        %6030 = vmatpush1.bf16.msra.mxu0 0
        %6031 = vmatprep.subr.bf16.mxu0 0
        %6032 = vmatpush1.bf16.msra.mxu0 0
        %6033 = vmatprep.subr.bf16.mxu0 0
        %6034 = vmatpush1.bf16.msra.mxu0 0
        %6035 = vmatprep.subr.bf16.mxu0 0
        %6036 = vmatpush1.bf16.msra.mxu0 0
        %6037 = vmatprep.subr.bf16.mxu0 0
        %6038 = vmatpush1.bf16.msra.mxu0 0
        %6039 = vmatprep.subr.bf16.mxu0 0
        %6040 = vmatpush1.bf16.msra.mxu0 0
        %6041 = vmatprep.subr.bf16.mxu0 0
        %6042 = vmatpush1.bf16.msra.mxu0 0
        %6043 = vmatprep.subr.bf16.mxu0 0
        %6044 = vmatpush1.bf16.msra.mxu0 0
        %6045 = vmatprep.subr.bf16.mxu0 0
        %6046 = vmatpush1.bf16.msra.mxu0 0
        %6047 = vmatprep.subr.bf16.mxu0 0
        %6048 = vmatpush1.bf16.msra.mxu0 0
        %6049 = vmatprep.subr.bf16.mxu0 0
        %6050 = vmatpush1.bf16.msra.mxu0 0
        %6051 = vmatprep.mubr.bf16.mxu0 0
        %6052 = vmatmul.mubr.bf16.gmra.mrb[0].mxu0 %v6014
        %v6053 = vpop.f32.mrb[0].mxu0
        %v6054 = vadd.f32 0.0, %v6053
        %v6055 = vpop.f32.mrb[0].mxu0
        %v6056 = vpop.f32.mrb[0].mxu0
        %v6057 = vpop.f32.mrb[0].mxu0
        %6058 = vdwg.mxu0
        %6059 = vrot.lane.b32.xlu0 %v466, 48
        %v6060 = vpop.permute.xlu0 %6059
        %v6062 = vsel %vm854, %v5816, 0
        %v6065 = vsel %vm954, %v6060, 0
        %6067 = vmatprep.subr.bf16.mxu0 0
        %6068 = vmatpush1.bf16.msra.mxu0 %v6065
        %6069 = vmatprep.subr.bf16.mxu0 0
        %6070 = vmatpush1.bf16.msra.mxu0 0
        %6071 = vmatprep.subr.bf16.mxu0 0
        %6072 = vmatpush1.bf16.msra.mxu0 0
        %6073 = vmatprep.subr.bf16.mxu0 0
        %6074 = vmatpush1.bf16.msra.mxu0 0
        %6075 = vmatprep.subr.bf16.mxu0 0
        %6076 = vmatpush1.bf16.msra.mxu0 0
        %6077 = vmatprep.subr.bf16.mxu0 0
        %6078 = vmatpush1.bf16.msra.mxu0 0
        %6079 = vmatprep.subr.bf16.mxu0 0
        %6080 = vmatpush1.bf16.msra.mxu0 0
        %6081 = vmatprep.subr.bf16.mxu0 0
        %6082 = vmatpush1.bf16.msra.mxu0 0
        %6083 = vmatprep.subr.bf16.mxu0 0
        %6084 = vmatpush1.bf16.msra.mxu0 0
        %6085 = vmatprep.subr.bf16.mxu0 0
        %6086 = vmatpush1.bf16.msra.mxu0 0
        %6087 = vmatprep.subr.bf16.mxu0 0
        %6088 = vmatpush1.bf16.msra.mxu0 0
        %6089 = vmatprep.subr.bf16.mxu0 0
        %6090 = vmatpush1.bf16.msra.mxu0 0
        %6091 = vmatprep.subr.bf16.mxu0 0
        %6092 = vmatpush1.bf16.msra.mxu0 0
        %6093 = vmatprep.subr.bf16.mxu0 0
        %6094 = vmatpush1.bf16.msra.mxu0 0
        %6095 = vmatprep.subr.bf16.mxu0 0
        %6096 = vmatpush1.bf16.msra.mxu0 0
        %6097 = vmatprep.subr.bf16.mxu0 0
        %6098 = vmatpush1.bf16.msra.mxu0 0
        %6099 = vmatprep.mubr.bf16.mxu0 0
        %6100 = vmatmul.mubr.bf16.gmra.mrb[0].mxu0 %v6062
        %v6101 = vpop.f32.mrb[0].mxu0
        %v6102 = vadd.f32 0.0, %v6101
        %v6103 = vpop.f32.mrb[0].mxu0
        %v6104 = vpop.f32.mrb[0].mxu0
        %v6105 = vpop.f32.mrb[0].mxu0
        %6106 = vdwg.mxu0
        %6107 = vrot.lane.b32.xlu0 %v467, 48
        %v6108 = vpop.permute.xlu0 %6107
        %v6110 = vsel %vm854, %v5817, 0
        %v6113 = vsel %vm954, %v6108, 0
        %6115 = vmatprep.subr.bf16.mxu0 0
        %6116 = vmatpush1.bf16.msra.mxu0 %v6113
        %6117 = vmatprep.subr.bf16.mxu0 0
        %6118 = vmatpush1.bf16.msra.mxu0 0
        %6119 = vmatprep.subr.bf16.mxu0 0
        %6120 = vmatpush1.bf16.msra.mxu0 0
        %6121 = vmatprep.subr.bf16.mxu0 0
        %6122 = vmatpush1.bf16.msra.mxu0 0
        %6123 = vmatprep.subr.bf16.mxu0 0
        %6124 = vmatpush1.bf16.msra.mxu0 0
        %6125 = vmatprep.subr.bf16.mxu0 0
        %6126 = vmatpush1.bf16.msra.mxu0 0
        %6127 = vmatprep.subr.bf16.mxu0 0
        %6128 = vmatpush1.bf16.msra.mxu0 0
        %6129 = vmatprep.subr.bf16.mxu0 0
        %6130 = vmatpush1.bf16.msra.mxu0 0
        %6131 = vmatprep.subr.bf16.mxu0 0
        %6132 = vmatpush1.bf16.msra.mxu0 0
        %6133 = vmatprep.subr.bf16.mxu0 0
        %6134 = vmatpush1.bf16.msra.mxu0 0
        %6135 = vmatprep.subr.bf16.mxu0 0
        %6136 = vmatpush1.bf16.msra.mxu0 0
        %6137 = vmatprep.subr.bf16.mxu0 0
        %6138 = vmatpush1.bf16.msra.mxu0 0
        %6139 = vmatprep.subr.bf16.mxu0 0
        %6140 = vmatpush1.bf16.msra.mxu0 0
        %6141 = vmatprep.subr.bf16.mxu0 0
        %6142 = vmatpush1.bf16.msra.mxu0 0
        %6143 = vmatprep.subr.bf16.mxu0 0
        %6144 = vmatpush1.bf16.msra.mxu0 0
        %6145 = vmatprep.subr.bf16.mxu0 0
        %6146 = vmatpush1.bf16.msra.mxu0 0
        %6147 = vmatprep.mubr.bf16.mxu0 0
        %6148 = vmatmul.mubr.bf16.gmra.mrb[0].mxu0 %v6110
        %v6149 = vpop.f32.mrb[0].mxu0
        %v6150 = vadd.f32 0.0, %v6149
        %v6151 = vpop.f32.mrb[0].mxu0
        %v6152 = vpop.f32.mrb[0].mxu0
        %v6153 = vpop.f32.mrb[0].mxu0
        %6154 = vdwg.mxu0
        %6155 = vrot.lane.b32.xlu0 %v468, 48
        %v6156 = vpop.permute.xlu0 %6155
        %v6158 = vsel %vm854, %v5818, 0
        %v6161 = vsel %vm954, %v6156, 0
        %6163 = vmatprep.subr.bf16.mxu0 0
        %6164 = vmatpush1.bf16.msra.mxu0 %v6161
        %6165 = vmatprep.subr.bf16.mxu0 0
        %6166 = vmatpush1.bf16.msra.mxu0 0
        %6167 = vmatprep.subr.bf16.mxu0 0
        %6168 = vmatpush1.bf16.msra.mxu0 0
        %6169 = vmatprep.subr.bf16.mxu0 0
        %6170 = vmatpush1.bf16.msra.mxu0 0
        %6171 = vmatprep.subr.bf16.mxu0 0
        %6172 = vmatpush1.bf16.msra.mxu0 0
        %6173 = vmatprep.subr.bf16.mxu0 0
        %6174 = vmatpush1.bf16.msra.mxu0 0
        %6175 = vmatprep.subr.bf16.mxu0 0
        %6176 = vmatpush1.bf16.msra.mxu0 0
        %6177 = vmatprep.subr.bf16.mxu0 0
        %6178 = vmatpush1.bf16.msra.mxu0 0
        %6179 = vmatprep.subr.bf16.mxu0 0
        %6180 = vmatpush1.bf16.msra.mxu0 0
        %6181 = vmatprep.subr.bf16.mxu0 0
        %6182 = vmatpush1.bf16.msra.mxu0 0
        %6183 = vmatprep.subr.bf16.mxu0 0
        %6184 = vmatpush1.bf16.msra.mxu0 0
        %6185 = vmatprep.subr.bf16.mxu0 0
        %6186 = vmatpush1.bf16.msra.mxu0 0
        %6187 = vmatprep.subr.bf16.mxu0 0
        %6188 = vmatpush1.bf16.msra.mxu0 0
        %6189 = vmatprep.subr.bf16.mxu0 0
        %6190 = vmatpush1.bf16.msra.mxu0 0
        %6191 = vmatprep.subr.bf16.mxu0 0
        %6192 = vmatpush1.bf16.msra.mxu0 0
        %6193 = vmatprep.subr.bf16.mxu0 0
        %6194 = vmatpush1.bf16.msra.mxu0 0
        %6195 = vmatprep.mubr.bf16.mxu0 0
        %6196 = vmatmul.mubr.bf16.gmra.mrb[0].mxu0 %v6158
        %v6197 = vpop.f32.mrb[0].mxu0
        %v6198 = vadd.f32 0.0, %v6197
        %v6199 = vpop.f32.mrb[0].mxu0
        %v6200 = vpop.f32.mrb[0].mxu0
        %v6201 = vpop.f32.mrb[0].mxu0
        %6202 = vdwg.mxu0
        %v6203 = vpack.c.bf16 %v5910, %v5862
        %v6204 = vpack.c.bf16 %v6006, %v5958
        %v6205 = vpack.c.bf16 %v6102, %v6054
        %v6206 = vpack.c.bf16 %v6198, %v6150
        %v6209 = vunpack.c.l.b16 %v479
        %v6210 = vunpack.c.l.b16 %v480
        %v6211 = vpack.c.b16 %v6210, %v6209
        %v6214 = vsel %vm485, %v6203, 0
        %v6217 = vsel %vm485, %v6204, 0
        %v6220 = vsel %vm485, %v6205, 0
        %v6223 = vsel %vm485, %v6206, 0
        %6225 = vmatprep.subr.bf16.mxu0 0
        %6226 = vmatpush1.bf16.msra.mxu0 %v6211
        %6227 = vmatprep.subr.bf16.mxu0 0
        %6228 = vmatpush1.bf16.msra.mxu0 0
        %6229 = vmatprep.subr.bf16.mxu0 0
        %6230 = vmatpush1.bf16.msra.mxu0 0
        %6231 = vmatprep.subr.bf16.mxu0 0
        %6232 = vmatpush1.bf16.msra.mxu0 0
        %6233 = vmatprep.subr.bf16.mxu0 0
        %6234 = vmatpush1.bf16.msra.mxu0 0
        %6235 = vmatprep.subr.bf16.mxu0 0
        %6236 = vmatpush1.bf16.msra.mxu0 0
        %6237 = vmatprep.subr.bf16.mxu0 0
        %6238 = vmatpush1.bf16.msra.mxu0 0
        %6239 = vmatprep.subr.bf16.mxu0 0
        %6240 = vmatpush1.bf16.msra.mxu0 0
        %6241 = vmatprep.subr.bf16.mxu0 0
        %6242 = vmatpush1.bf16.msra.mxu0 0
        %6243 = vmatprep.subr.bf16.mxu0 0
        %6244 = vmatpush1.bf16.msra.mxu0 0
        %6245 = vmatprep.subr.bf16.mxu0 0
        %6246 = vmatpush1.bf16.msra.mxu0 0
        %6247 = vmatprep.subr.bf16.mxu0 0
        %6248 = vmatpush1.bf16.msra.mxu0 0
        %6249 = vmatprep.subr.bf16.mxu0 0
        %6250 = vmatpush1.bf16.msra.mxu0 0
        %6251 = vmatprep.subr.bf16.mxu0 0
        %6252 = vmatpush1.bf16.msra.mxu0 0
        %6253 = vmatprep.subr.bf16.mxu0 0
        %6254 = vmatpush1.bf16.msra.mxu0 0
        %6255 = vmatprep.subr.bf16.mxu0 0
        %6256 = vmatpush1.bf16.msra.mxu0 0
        %6257 = vmatprep.mubr.bf16.mxu0 0
        %6258 = vmatmul.mubr.bf16.gmra.mrb[0].mxu0 %v6214
        %v6259 = vpop.f32.mrb[0].mxu0
        %v6260 = vadd.f32 0.0, %v6259
        %v6261 = vpop.f32.mrb[0].mxu0
        %v6262 = vpop.f32.mrb[0].mxu0
        %v6263 = vadd.f32 0.0, %v6262
        %v6264 = vpop.f32.mrb[0].mxu0
        %6265 = vmatprep.mubr.bf16.mxu0 0
        %6266 = vmatmul.mubr.bf16.gmra.mrb[0].mxu0 %v6217
        %v6267 = vpop.f32.mrb[0].mxu0
        %v6268 = vadd.f32 0.0, %v6267
        %v6269 = vpop.f32.mrb[0].mxu0
        %v6270 = vpop.f32.mrb[0].mxu0
        %v6271 = vadd.f32 0.0, %v6270
        %v6272 = vpop.f32.mrb[0].mxu0
        %6273 = vmatprep.mubr.bf16.mxu0 0
        %6274 = vmatmul.mubr.bf16.gmra.mrb[0].mxu0 %v6220
        %v6275 = vpop.f32.mrb[0].mxu0
        %v6276 = vadd.f32 0.0, %v6275
        %v6277 = vpop.f32.mrb[0].mxu0
        %v6278 = vpop.f32.mrb[0].mxu0
        %v6279 = vadd.f32 0.0, %v6278
        %v6280 = vpop.f32.mrb[0].mxu0
        %6281 = vmatprep.mubr.bf16.mxu0 0
        %6282 = vmatmul.mubr.bf16.gmra.mrb[0].mxu0 %v6223
        %v6283 = vpop.f32.mrb[0].mxu0
        %v6284 = vadd.f32 0.0, %v6283
        %v6285 = vpop.f32.mrb[0].mxu0
        %v6286 = vpop.f32.mrb[0].mxu0
        %v6287 = vadd.f32 0.0, %v6286
        %v6288 = vpop.f32.mrb[0].mxu0
        %6289 = vdwg.mxu0
        %v6290 = vadd.f32 %v5315, %v6260
        %v6291 = vadd.f32 %v5316, %v6263
        %v6292 = vadd.f32 %v5317, %v6268
        %v6293 = vadd.f32 %v5318, %v6271
        %v6294 = vadd.f32 %v5319, %v6276
        %v6295 = vadd.f32 %v5320, %v6279
        %v6296 = vadd.f32 %v5321, %v6284
        %v6297 = vadd.f32 %v5322, %v6287
        %6298 = vrot.lane.b32.xlu0 %v445, 32
        %v6299 = vpop.permute.xlu0 %6298
        %6300 = vrot.lane.b32.xlu0 %v453, 32
        %v6301 = vpop.permute.xlu0 %6300
        %v6303 = vsel %vm485, %v6299, 0
        %v6306 = vsel %vm485, %v6301, 0
        %6308 = vmatprep.subr.bf16.mxu0 0
        %6309 = vmatpush1.bf16.xpose.msra.mxu0 %v6306
        %6310 = vmatprep.subr.bf16.mxu0 0
        %6311 = vmatpush1.bf16.xpose.msra.mxu0 0
        %6312 = vmatprep.subr.bf16.mxu0 0
        %6313 = vmatpush1.bf16.xpose.msra.mxu0 0
        %6314 = vmatprep.subr.bf16.mxu0 0
        %6315 = vmatpush1.bf16.xpose.msra.mxu0 0
        %6316 = vmatprep.subr.bf16.mxu0 0
        %6317 = vmatpush1.bf16.xpose.msra.mxu0 0
        %6318 = vmatprep.subr.bf16.mxu0 0
        %6319 = vmatpush1.bf16.xpose.msra.mxu0 0
        %6320 = vmatprep.subr.bf16.mxu0 0
        %6321 = vmatpush1.bf16.xpose.msra.mxu0 0
        %6322 = vmatprep.subr.bf16.mxu0 0
        %6323 = vmatpush1.bf16.xpose.msra.mxu0 0
        %6324 = vmatprep.subr.bf16.mxu0 0
        %6325 = vmatpush1.bf16.xpose.msra.mxu0 0
        %6326 = vmatprep.subr.bf16.mxu0 0
        %6327 = vmatpush1.bf16.xpose.msra.mxu0 0
        %6328 = vmatprep.subr.bf16.mxu0 0
        %6329 = vmatpush1.bf16.xpose.msra.mxu0 0
        %6330 = vmatprep.subr.bf16.mxu0 0
        %6331 = vmatpush1.bf16.xpose.msra.mxu0 0
        %6332 = vmatprep.subr.bf16.mxu0 0
        %6333 = vmatpush1.bf16.xpose.msra.mxu0 0
        %6334 = vmatprep.subr.bf16.mxu0 0
        %6335 = vmatpush1.bf16.xpose.msra.mxu0 0
        %6336 = vmatprep.subr.bf16.mxu0 0
        %6337 = vmatpush1.bf16.xpose.msra.mxu0 0
        %6338 = vmatprep.subr.bf16.mxu0 0
        %6339 = vmatpush1.bf16.xpose.msra.mxu0 0
        %6340 = vmatprep.mubr.bf16.mxu0 0
        %6341 = vmatmul.mubr.bf16.gmra.mrb[0].mxu0 %v6303
        %v6342 = vpop.f32.mrb[0].mxu0
        %v6343 = vadd.f32 0.0, %v6342
        %v6344 = vpop.f32.mrb[0].mxu0
        %v6345 = vpop.f32.mrb[0].mxu0
        %v6346 = vpop.f32.mrb[0].mxu0
        %6347 = vdwg.mxu0
        %6348 = vrot.lane.b32.xlu0 %v446, 32
        %v6349 = vpop.permute.xlu0 %6348
        %6350 = vrot.lane.b32.xlu0 %v454, 32
        %v6351 = vpop.permute.xlu0 %6350
        %v6353 = vsel %vm485, %v6349, 0
        %v6356 = vsel %vm485, %v6351, 0
        %6358 = vmatprep.subr.bf16.mxu0 0
        %6359 = vmatpush1.bf16.xpose.msra.mxu0 %v6356
        %6360 = vmatprep.subr.bf16.mxu0 0
        %6361 = vmatpush1.bf16.xpose.msra.mxu0 0
        %6362 = vmatprep.subr.bf16.mxu0 0
        %6363 = vmatpush1.bf16.xpose.msra.mxu0 0
        %6364 = vmatprep.subr.bf16.mxu0 0
        %6365 = vmatpush1.bf16.xpose.msra.mxu0 0
        %6366 = vmatprep.subr.bf16.mxu0 0
        %6367 = vmatpush1.bf16.xpose.msra.mxu0 0
        %6368 = vmatprep.subr.bf16.mxu0 0
        %6369 = vmatpush1.bf16.xpose.msra.mxu0 0
        %6370 = vmatprep.subr.bf16.mxu0 0
        %6371 = vmatpush1.bf16.xpose.msra.mxu0 0
        %6372 = vmatprep.subr.bf16.mxu0 0
        %6373 = vmatpush1.bf16.xpose.msra.mxu0 0
        %6374 = vmatprep.subr.bf16.mxu0 0
        %6375 = vmatpush1.bf16.xpose.msra.mxu0 0
        %6376 = vmatprep.subr.bf16.mxu0 0
        %6377 = vmatpush1.bf16.xpose.msra.mxu0 0
        %6378 = vmatprep.subr.bf16.mxu0 0
        %6379 = vmatpush1.bf16.xpose.msra.mxu0 0
        %6380 = vmatprep.subr.bf16.mxu0 0
        %6381 = vmatpush1.bf16.xpose.msra.mxu0 0
        %6382 = vmatprep.subr.bf16.mxu0 0
        %6383 = vmatpush1.bf16.xpose.msra.mxu0 0
        %6384 = vmatprep.subr.bf16.mxu0 0
        %6385 = vmatpush1.bf16.xpose.msra.mxu0 0
        %6386 = vmatprep.subr.bf16.mxu0 0
        %6387 = vmatpush1.bf16.xpose.msra.mxu0 0
        %6388 = vmatprep.subr.bf16.mxu0 0
        %6389 = vmatpush1.bf16.xpose.msra.mxu0 0
        %6390 = vmatprep.mubr.bf16.mxu0 0
        %6391 = vmatmul.mubr.bf16.gmra.mrb[0].mxu0 %v6353
        %v6392 = vpop.f32.mrb[0].mxu0
        %v6393 = vadd.f32 0.0, %v6392
        %v6394 = vpop.f32.mrb[0].mxu0
        %v6395 = vpop.f32.mrb[0].mxu0
        %v6396 = vpop.f32.mrb[0].mxu0
        %6397 = vdwg.mxu0
        %6398 = vrot.lane.b32.xlu0 %v447, 32
        %v6399 = vpop.permute.xlu0 %6398
        %6400 = vrot.lane.b32.xlu0 %v455, 32
        %v6401 = vpop.permute.xlu0 %6400
        %v6403 = vsel %vm485, %v6399, 0
        %v6406 = vsel %vm485, %v6401, 0
        %6408 = vmatprep.subr.bf16.mxu0 0
        %6409 = vmatpush1.bf16.xpose.msra.mxu0 %v6406
        %6410 = vmatprep.subr.bf16.mxu0 0
        %6411 = vmatpush1.bf16.xpose.msra.mxu0 0
        %6412 = vmatprep.subr.bf16.mxu0 0
        %6413 = vmatpush1.bf16.xpose.msra.mxu0 0
        %6414 = vmatprep.subr.bf16.mxu0 0
        %6415 = vmatpush1.bf16.xpose.msra.mxu0 0
        %6416 = vmatprep.subr.bf16.mxu0 0
        %6417 = vmatpush1.bf16.xpose.msra.mxu0 0
        %6418 = vmatprep.subr.bf16.mxu0 0
        %6419 = vmatpush1.bf16.xpose.msra.mxu0 0
        %6420 = vmatprep.subr.bf16.mxu0 0
        %6421 = vmatpush1.bf16.xpose.msra.mxu0 0
        %6422 = vmatprep.subr.bf16.mxu0 0
        %6423 = vmatpush1.bf16.xpose.msra.mxu0 0
        %6424 = vmatprep.subr.bf16.mxu0 0
        %6425 = vmatpush1.bf16.xpose.msra.mxu0 0
        %6426 = vmatprep.subr.bf16.mxu0 0
        %6427 = vmatpush1.bf16.xpose.msra.mxu0 0
        %6428 = vmatprep.subr.bf16.mxu0 0
        %6429 = vmatpush1.bf16.xpose.msra.mxu0 0
        %6430 = vmatprep.subr.bf16.mxu0 0
        %6431 = vmatpush1.bf16.xpose.msra.mxu0 0
        %6432 = vmatprep.subr.bf16.mxu0 0
        %6433 = vmatpush1.bf16.xpose.msra.mxu0 0
        %6434 = vmatprep.subr.bf16.mxu0 0
        %6435 = vmatpush1.bf16.xpose.msra.mxu0 0
        %6436 = vmatprep.subr.bf16.mxu0 0
        %6437 = vmatpush1.bf16.xpose.msra.mxu0 0
        %6438 = vmatprep.subr.bf16.mxu0 0
        %6439 = vmatpush1.bf16.xpose.msra.mxu0 0
        %6440 = vmatprep.mubr.bf16.mxu0 0
        %6441 = vmatmul.mubr.bf16.gmra.mrb[0].mxu0 %v6403
        %v6442 = vpop.f32.mrb[0].mxu0
        %v6443 = vadd.f32 0.0, %v6442
        %v6444 = vpop.f32.mrb[0].mxu0
        %v6445 = vpop.f32.mrb[0].mxu0
        %v6446 = vpop.f32.mrb[0].mxu0
        %6447 = vdwg.mxu0
        %6448 = vrot.lane.b32.xlu0 %v448, 32
        %v6449 = vpop.permute.xlu0 %6448
        %6450 = vrot.lane.b32.xlu0 %v456, 32
        %v6451 = vpop.permute.xlu0 %6450
        %v6453 = vsel %vm485, %v6449, 0
        %v6456 = vsel %vm485, %v6451, 0
        %6458 = vmatprep.subr.bf16.mxu0 0
        %6459 = vmatpush1.bf16.xpose.msra.mxu0 %v6456
        %6460 = vmatprep.subr.bf16.mxu0 0
        %6461 = vmatpush1.bf16.xpose.msra.mxu0 0
        %6462 = vmatprep.subr.bf16.mxu0 0
        %6463 = vmatpush1.bf16.xpose.msra.mxu0 0
        %6464 = vmatprep.subr.bf16.mxu0 0
        %6465 = vmatpush1.bf16.xpose.msra.mxu0 0
        %6466 = vmatprep.subr.bf16.mxu0 0
        %6467 = vmatpush1.bf16.xpose.msra.mxu0 0
        %6468 = vmatprep.subr.bf16.mxu0 0
        %6469 = vmatpush1.bf16.xpose.msra.mxu0 0
        %6470 = vmatprep.subr.bf16.mxu0 0
        %6471 = vmatpush1.bf16.xpose.msra.mxu0 0
        %6472 = vmatprep.subr.bf16.mxu0 0
        %6473 = vmatpush1.bf16.xpose.msra.mxu0 0
        %6474 = vmatprep.subr.bf16.mxu0 0
        %6475 = vmatpush1.bf16.xpose.msra.mxu0 0
        %6476 = vmatprep.subr.bf16.mxu0 0
        %6477 = vmatpush1.bf16.xpose.msra.mxu0 0
        %6478 = vmatprep.subr.bf16.mxu0 0
        %6479 = vmatpush1.bf16.xpose.msra.mxu0 0
        %6480 = vmatprep.subr.bf16.mxu0 0
        %6481 = vmatpush1.bf16.xpose.msra.mxu0 0
        %6482 = vmatprep.subr.bf16.mxu0 0
        %6483 = vmatpush1.bf16.xpose.msra.mxu0 0
        %6484 = vmatprep.subr.bf16.mxu0 0
        %6485 = vmatpush1.bf16.xpose.msra.mxu0 0
        %6486 = vmatprep.subr.bf16.mxu0 0
        %6487 = vmatpush1.bf16.xpose.msra.mxu0 0
        %6488 = vmatprep.subr.bf16.mxu0 0
        %6489 = vmatpush1.bf16.xpose.msra.mxu0 0
        %6490 = vmatprep.mubr.bf16.mxu0 0
        %6491 = vmatmul.mubr.bf16.gmra.mrb[0].mxu0 %v6453
        %v6492 = vpop.f32.mrb[0].mxu0
        %v6493 = vadd.f32 0.0, %v6492
        %v6494 = vpop.f32.mrb[0].mxu0
        %v6495 = vpop.f32.mrb[0].mxu0
        %v6496 = vpop.f32.mrb[0].mxu0
        %6497 = vdwg.mxu0
        %6498 = vrot.lane.b32.xlu0 %v449, 32
        %v6499 = vpop.permute.xlu0 %6498
        %6500 = vrot.lane.b32.xlu0 %v457, 32
        %v6501 = vpop.permute.xlu0 %6500
        %v6503 = vsel %vm485, %v6499, 0
        %v6506 = vsel %vm485, %v6501, 0
        %6508 = vmatprep.subr.bf16.mxu0 0
        %6509 = vmatpush1.bf16.xpose.msra.mxu0 %v6506
        %6510 = vmatprep.subr.bf16.mxu0 0
        %6511 = vmatpush1.bf16.xpose.msra.mxu0 0
        %6512 = vmatprep.subr.bf16.mxu0 0
        %6513 = vmatpush1.bf16.xpose.msra.mxu0 0
        %6514 = vmatprep.subr.bf16.mxu0 0
        %6515 = vmatpush1.bf16.xpose.msra.mxu0 0
        %6516 = vmatprep.subr.bf16.mxu0 0
        %6517 = vmatpush1.bf16.xpose.msra.mxu0 0
        %6518 = vmatprep.subr.bf16.mxu0 0
        %6519 = vmatpush1.bf16.xpose.msra.mxu0 0
        %6520 = vmatprep.subr.bf16.mxu0 0
        %6521 = vmatpush1.bf16.xpose.msra.mxu0 0
        %6522 = vmatprep.subr.bf16.mxu0 0
        %6523 = vmatpush1.bf16.xpose.msra.mxu0 0
        %6524 = vmatprep.subr.bf16.mxu0 0
        %6525 = vmatpush1.bf16.xpose.msra.mxu0 0
        %6526 = vmatprep.subr.bf16.mxu0 0
        %6527 = vmatpush1.bf16.xpose.msra.mxu0 0
        %6528 = vmatprep.subr.bf16.mxu0 0
        %6529 = vmatpush1.bf16.xpose.msra.mxu0 0
        %6530 = vmatprep.subr.bf16.mxu0 0
        %6531 = vmatpush1.bf16.xpose.msra.mxu0 0
        %6532 = vmatprep.subr.bf16.mxu0 0
        %6533 = vmatpush1.bf16.xpose.msra.mxu0 0
        %6534 = vmatprep.subr.bf16.mxu0 0
        %6535 = vmatpush1.bf16.xpose.msra.mxu0 0
        %6536 = vmatprep.subr.bf16.mxu0 0
        %6537 = vmatpush1.bf16.xpose.msra.mxu0 0
        %6538 = vmatprep.subr.bf16.mxu0 0
        %6539 = vmatpush1.bf16.xpose.msra.mxu0 0
        %6540 = vmatprep.mubr.bf16.mxu0 0
        %6541 = vmatmul.mubr.bf16.gmra.mrb[0].mxu0 %v6503
        %v6542 = vpop.f32.mrb[0].mxu0
        %v6543 = vadd.f32 0.0, %v6542
        %v6544 = vpop.f32.mrb[0].mxu0
        %v6545 = vpop.f32.mrb[0].mxu0
        %v6546 = vpop.f32.mrb[0].mxu0
        %6547 = vdwg.mxu0
        %6548 = vrot.lane.b32.xlu0 %v450, 32
        %v6549 = vpop.permute.xlu0 %6548
        %6550 = vrot.lane.b32.xlu0 %v458, 32
        %v6551 = vpop.permute.xlu0 %6550
        %v6553 = vsel %vm485, %v6549, 0
        %v6556 = vsel %vm485, %v6551, 0
        %6558 = vmatprep.subr.bf16.mxu0 0
        %6559 = vmatpush1.bf16.xpose.msra.mxu0 %v6556
        %6560 = vmatprep.subr.bf16.mxu0 0
        %6561 = vmatpush1.bf16.xpose.msra.mxu0 0
        %6562 = vmatprep.subr.bf16.mxu0 0
        %6563 = vmatpush1.bf16.xpose.msra.mxu0 0
        %6564 = vmatprep.subr.bf16.mxu0 0
        %6565 = vmatpush1.bf16.xpose.msra.mxu0 0
        %6566 = vmatprep.subr.bf16.mxu0 0
        %6567 = vmatpush1.bf16.xpose.msra.mxu0 0
        %6568 = vmatprep.subr.bf16.mxu0 0
        %6569 = vmatpush1.bf16.xpose.msra.mxu0 0
        %6570 = vmatprep.subr.bf16.mxu0 0
        %6571 = vmatpush1.bf16.xpose.msra.mxu0 0
        %6572 = vmatprep.subr.bf16.mxu0 0
        %6573 = vmatpush1.bf16.xpose.msra.mxu0 0
        %6574 = vmatprep.subr.bf16.mxu0 0
        %6575 = vmatpush1.bf16.xpose.msra.mxu0 0
        %6576 = vmatprep.subr.bf16.mxu0 0
        %6577 = vmatpush1.bf16.xpose.msra.mxu0 0
        %6578 = vmatprep.subr.bf16.mxu0 0
        %6579 = vmatpush1.bf16.xpose.msra.mxu0 0
        %6580 = vmatprep.subr.bf16.mxu0 0
        %6581 = vmatpush1.bf16.xpose.msra.mxu0 0
        %6582 = vmatprep.subr.bf16.mxu0 0
        %6583 = vmatpush1.bf16.xpose.msra.mxu0 0
        %6584 = vmatprep.subr.bf16.mxu0 0
        %6585 = vmatpush1.bf16.xpose.msra.mxu0 0
        %6586 = vmatprep.subr.bf16.mxu0 0
        %6587 = vmatpush1.bf16.xpose.msra.mxu0 0
        %6588 = vmatprep.subr.bf16.mxu0 0
        %6589 = vmatpush1.bf16.xpose.msra.mxu0 0
        %6590 = vmatprep.mubr.bf16.mxu0 0
        %6591 = vmatmul.mubr.bf16.gmra.mrb[0].mxu0 %v6553
        %v6592 = vpop.f32.mrb[0].mxu0
        %v6593 = vadd.f32 0.0, %v6592
        %v6594 = vpop.f32.mrb[0].mxu0
        %v6595 = vpop.f32.mrb[0].mxu0
        %v6596 = vpop.f32.mrb[0].mxu0
        %6597 = vdwg.mxu0
        %6598 = vrot.lane.b32.xlu0 %v451, 32
        %v6599 = vpop.permute.xlu0 %6598
        %6600 = vrot.lane.b32.xlu0 %v459, 32
        %v6601 = vpop.permute.xlu0 %6600
        %v6603 = vsel %vm485, %v6599, 0
        %v6606 = vsel %vm485, %v6601, 0
        %6608 = vmatprep.subr.bf16.mxu0 0
        %6609 = vmatpush1.bf16.xpose.msra.mxu0 %v6606
        %6610 = vmatprep.subr.bf16.mxu0 0
        %6611 = vmatpush1.bf16.xpose.msra.mxu0 0
        %6612 = vmatprep.subr.bf16.mxu0 0
        %6613 = vmatpush1.bf16.xpose.msra.mxu0 0
        %6614 = vmatprep.subr.bf16.mxu0 0
        %6615 = vmatpush1.bf16.xpose.msra.mxu0 0
        %6616 = vmatprep.subr.bf16.mxu0 0
        %6617 = vmatpush1.bf16.xpose.msra.mxu0 0
        %6618 = vmatprep.subr.bf16.mxu0 0
        %6619 = vmatpush1.bf16.xpose.msra.mxu0 0
        %6620 = vmatprep.subr.bf16.mxu0 0
        %6621 = vmatpush1.bf16.xpose.msra.mxu0 0
        %6622 = vmatprep.subr.bf16.mxu0 0
        %6623 = vmatpush1.bf16.xpose.msra.mxu0 0
        %6624 = vmatprep.subr.bf16.mxu0 0
        %6625 = vmatpush1.bf16.xpose.msra.mxu0 0
        %6626 = vmatprep.subr.bf16.mxu0 0
        %6627 = vmatpush1.bf16.xpose.msra.mxu0 0
        %6628 = vmatprep.subr.bf16.mxu0 0
        %6629 = vmatpush1.bf16.xpose.msra.mxu0 0
        %6630 = vmatprep.subr.bf16.mxu0 0
        %6631 = vmatpush1.bf16.xpose.msra.mxu0 0
        %6632 = vmatprep.subr.bf16.mxu0 0
        %6633 = vmatpush1.bf16.xpose.msra.mxu0 0
        %6634 = vmatprep.subr.bf16.mxu0 0
        %6635 = vmatpush1.bf16.xpose.msra.mxu0 0
        %6636 = vmatprep.subr.bf16.mxu0 0
        %6637 = vmatpush1.bf16.xpose.msra.mxu0 0
        %6638 = vmatprep.subr.bf16.mxu0 0
        %6639 = vmatpush1.bf16.xpose.msra.mxu0 0
        %6640 = vmatprep.mubr.bf16.mxu0 0
        %6641 = vmatmul.mubr.bf16.gmra.mrb[0].mxu0 %v6603
        %v6642 = vpop.f32.mrb[0].mxu0
        %v6643 = vadd.f32 0.0, %v6642
        %v6644 = vpop.f32.mrb[0].mxu0
        %v6645 = vpop.f32.mrb[0].mxu0
        %v6646 = vpop.f32.mrb[0].mxu0
        %6647 = vdwg.mxu0
        %6648 = vrot.lane.b32.xlu0 %v452, 32
        %v6649 = vpop.permute.xlu0 %6648
        %6650 = vrot.lane.b32.xlu0 %v460, 32
        %v6651 = vpop.permute.xlu0 %6650
        %v6653 = vsel %vm485, %v6649, 0
        %v6656 = vsel %vm485, %v6651, 0
        %6658 = vmatprep.subr.bf16.mxu0 0
        %6659 = vmatpush1.bf16.xpose.msra.mxu0 %v6656
        %6660 = vmatprep.subr.bf16.mxu0 0
        %6661 = vmatpush1.bf16.xpose.msra.mxu0 0
        %6662 = vmatprep.subr.bf16.mxu0 0
        %6663 = vmatpush1.bf16.xpose.msra.mxu0 0
        %6664 = vmatprep.subr.bf16.mxu0 0
        %6665 = vmatpush1.bf16.xpose.msra.mxu0 0
        %6666 = vmatprep.subr.bf16.mxu0 0
        %6667 = vmatpush1.bf16.xpose.msra.mxu0 0
        %6668 = vmatprep.subr.bf16.mxu0 0
        %6669 = vmatpush1.bf16.xpose.msra.mxu0 0
        %6670 = vmatprep.subr.bf16.mxu0 0
        %6671 = vmatpush1.bf16.xpose.msra.mxu0 0
        %6672 = vmatprep.subr.bf16.mxu0 0
        %6673 = vmatpush1.bf16.xpose.msra.mxu0 0
        %6674 = vmatprep.subr.bf16.mxu0 0
        %6675 = vmatpush1.bf16.xpose.msra.mxu0 0
        %6676 = vmatprep.subr.bf16.mxu0 0
        %6677 = vmatpush1.bf16.xpose.msra.mxu0 0
        %6678 = vmatprep.subr.bf16.mxu0 0
        %6679 = vmatpush1.bf16.xpose.msra.mxu0 0
        %6680 = vmatprep.subr.bf16.mxu0 0
        %6681 = vmatpush1.bf16.xpose.msra.mxu0 0
        %6682 = vmatprep.subr.bf16.mxu0 0
        %6683 = vmatpush1.bf16.xpose.msra.mxu0 0
        %6684 = vmatprep.subr.bf16.mxu0 0
        %6685 = vmatpush1.bf16.xpose.msra.mxu0 0
        %6686 = vmatprep.subr.bf16.mxu0 0
        %6687 = vmatpush1.bf16.xpose.msra.mxu0 0
        %6688 = vmatprep.subr.bf16.mxu0 0
        %6689 = vmatpush1.bf16.xpose.msra.mxu0 0
        %6690 = vmatprep.mubr.bf16.mxu0 0
        %6691 = vmatmul.mubr.bf16.gmra.mrb[0].mxu0 %v6653
        %v6692 = vpop.f32.mrb[0].mxu0
        %v6693 = vadd.f32 0.0, %v6692
        %v6694 = vpop.f32.mrb[0].mxu0
        %v6695 = vpop.f32.mrb[0].mxu0
        %v6696 = vpop.f32.mrb[0].mxu0
        %6697 = vdwg.mxu0
        %v6698 = vsel %vm854, %v6343, -inf
        %6699 = vmax.xlane.f32.xlu0 %v6698
        %v6700 = vpop.xlane.xlu0 %6699
        %v6701 = vsel %vm854, %v6393, -inf
        %6702 = vmax.xlane.f32.xlu0 %v6701
        %v6703 = vpop.xlane.xlu0 %6702
        %v6704 = vsel %vm854, %v6443, -inf
        %6705 = vmax.xlane.f32.xlu0 %v6704
        %v6706 = vpop.xlane.xlu0 %6705
        %v6707 = vsel %vm854, %v6493, -inf
        %6708 = vmax.xlane.f32.xlu0 %v6707
        %v6709 = vpop.xlane.xlu0 %6708
        %v6710 = vsel %vm854, %v6543, -inf
        %6711 = vmax.xlane.f32.xlu0 %v6710
        %v6712 = vpop.xlane.xlu0 %6711
        %v6713 = vsel %vm854, %v6593, -inf
        %6714 = vmax.xlane.f32.xlu0 %v6713
        %v6715 = vpop.xlane.xlu0 %6714
        %v6716 = vsel %vm854, %v6643, -inf
        %6717 = vmax.xlane.f32.xlu0 %v6716
        %v6718 = vpop.xlane.xlu0 %6717
        %v6719 = vsel %vm854, %v6693, -inf
        %6720 = vmax.xlane.f32.xlu0 %v6719
        %v6721 = vpop.xlane.xlu0 %6720
        %v6722 = vsub.f32 %v6343, %v6700
        %v6723 = vsub.f32 %v6393, %v6703
        %v6724 = vsub.f32 %v6443, %v6706
        %v6725 = vsub.f32 %v6493, %v6709
        %v6726 = vsub.f32 %v6543, %v6712
        %v6727 = vsub.f32 %v6593, %v6715
        %v6728 = vsub.f32 %v6643, %v6718
        %v6729 = vsub.f32 %v6693, %v6721
        %v6730 = vmul.f32 %v6722, 1.442695
        %v6731 = vpow.pop %v6730
        %v6732 = vmul.f32 %v6723, 1.442695
        %v6733 = vpow.pop %v6732
        %v6734 = vmul.f32 %v6724, 1.442695
        %v6735 = vpow.pop %v6734
        %v6736 = vmul.f32 %v6725, 1.442695
        %v6737 = vpow.pop %v6736
        %v6738 = vmul.f32 %v6726, 1.442695
        %v6739 = vpow.pop %v6738
        %v6740 = vmul.f32 %v6727, 1.442695
        %v6741 = vpow.pop %v6740
        %v6742 = vmul.f32 %v6728, 1.442695
        %v6743 = vpow.pop %v6742
        %v6744 = vmul.f32 %v6729, 1.442695
        %v6745 = vpow.pop %v6744
        %v6746 = vsel %vm854, %v6731, 0.0
        %6747 = vadd.xlane.f32.xlu0 %v6746
        %v6748 = vpop.xlane.xlu0 %6747
        %v6749 = vsel %vm854, %v6733, 0.0
        %6750 = vadd.xlane.f32.xlu0 %v6749
        %v6751 = vpop.xlane.xlu0 %6750
        %v6752 = vsel %vm854, %v6735, 0.0
        %6753 = vadd.xlane.f32.xlu0 %v6752
        %v6754 = vpop.xlane.xlu0 %6753
        %v6755 = vsel %vm854, %v6737, 0.0
        %6756 = vadd.xlane.f32.xlu0 %v6755
        %v6757 = vpop.xlane.xlu0 %6756
        %v6758 = vsel %vm854, %v6739, 0.0
        %6759 = vadd.xlane.f32.xlu0 %v6758
        %v6760 = vpop.xlane.xlu0 %6759
        %v6761 = vsel %vm854, %v6741, 0.0
        %6762 = vadd.xlane.f32.xlu0 %v6761
        %v6763 = vpop.xlane.xlu0 %6762
        %v6764 = vsel %vm854, %v6743, 0.0
        %6765 = vadd.xlane.f32.xlu0 %v6764
        %v6766 = vpop.xlane.xlu0 %6765
        %v6767 = vsel %vm854, %v6745, 0.0
        %6768 = vadd.xlane.f32.xlu0 %v6767
        %v6769 = vpop.xlane.xlu0 %6768
        %v6770 = vrcp.pop %v6748
        %v6771 = vrcp.pop %v6751
        %v6772 = vrcp.pop %v6754
        %v6773 = vrcp.pop %v6757
        %v6774 = vrcp.pop %v6760
        %v6775 = vrcp.pop %v6763
        %v6776 = vrcp.pop %v6766
        %v6777 = vrcp.pop %v6769
        %v6778 = vmul.f32 %v6731, %v6770
        %v6779 = vmul.f32 %v6733, %v6771
        %v6780 = vmul.f32 %v6735, %v6772
        %v6781 = vmul.f32 %v6737, %v6773
        %v6782 = vmul.f32 %v6739, %v6774
        %v6783 = vmul.f32 %v6741, %v6775
        %v6784 = vmul.f32 %v6743, %v6776
        %v6785 = vmul.f32 %v6745, %v6777
        %v6786 = vpack.c.bf16 %v6778, %v6778
        %v6787 = vpack.c.bf16 %v6779, %v6779
        %v6788 = vpack.c.bf16 %v6780, %v6780
        %v6789 = vpack.c.bf16 %v6781, %v6781
        %v6790 = vpack.c.bf16 %v6782, %v6782
        %v6791 = vpack.c.bf16 %v6783, %v6783
        %v6792 = vpack.c.bf16 %v6784, %v6784
        %v6793 = vpack.c.bf16 %v6785, %v6785
        %6794 = vrot.lane.b32.xlu0 %v461, 32
        %v6795 = vpop.permute.xlu0 %6794
        %v6797 = vsel %vm854, %v6786, 0
        %v6800 = vsel %vm954, %v6795, 0
        %6802 = vmatprep.subr.bf16.mxu0 0
        %6803 = vmatpush1.bf16.msra.mxu0 %v6800
        %6804 = vmatprep.subr.bf16.mxu0 0
        %6805 = vmatpush1.bf16.msra.mxu0 0
        %6806 = vmatprep.subr.bf16.mxu0 0
        %6807 = vmatpush1.bf16.msra.mxu0 0
        %6808 = vmatprep.subr.bf16.mxu0 0
        %6809 = vmatpush1.bf16.msra.mxu0 0
        %6810 = vmatprep.subr.bf16.mxu0 0
        %6811 = vmatpush1.bf16.msra.mxu0 0
        %6812 = vmatprep.subr.bf16.mxu0 0
        %6813 = vmatpush1.bf16.msra.mxu0 0
        %6814 = vmatprep.subr.bf16.mxu0 0
        %6815 = vmatpush1.bf16.msra.mxu0 0
        %6816 = vmatprep.subr.bf16.mxu0 0
        %6817 = vmatpush1.bf16.msra.mxu0 0
        %6818 = vmatprep.subr.bf16.mxu0 0
        %6819 = vmatpush1.bf16.msra.mxu0 0
        %6820 = vmatprep.subr.bf16.mxu0 0
        %6821 = vmatpush1.bf16.msra.mxu0 0
        %6822 = vmatprep.subr.bf16.mxu0 0
        %6823 = vmatpush1.bf16.msra.mxu0 0
        %6824 = vmatprep.subr.bf16.mxu0 0
        %6825 = vmatpush1.bf16.msra.mxu0 0
        %6826 = vmatprep.subr.bf16.mxu0 0
        %6827 = vmatpush1.bf16.msra.mxu0 0
        %6828 = vmatprep.subr.bf16.mxu0 0
        %6829 = vmatpush1.bf16.msra.mxu0 0
        %6830 = vmatprep.subr.bf16.mxu0 0
        %6831 = vmatpush1.bf16.msra.mxu0 0
        %6832 = vmatprep.subr.bf16.mxu0 0
        %6833 = vmatpush1.bf16.msra.mxu0 0
        %6834 = vmatprep.mubr.bf16.mxu0 0
        %6835 = vmatmul.mubr.bf16.gmra.mrb[0].mxu0 %v6797
        %v6836 = vpop.f32.mrb[0].mxu0
        %v6837 = vadd.f32 0.0, %v6836
        %v6838 = vpop.f32.mrb[0].mxu0
        %v6839 = vpop.f32.mrb[0].mxu0
        %v6840 = vpop.f32.mrb[0].mxu0
        %6841 = vdwg.mxu0
        %6842 = vrot.lane.b32.xlu0 %v462, 32
        %v6843 = vpop.permute.xlu0 %6842
        %v6845 = vsel %vm854, %v6787, 0
        %v6848 = vsel %vm954, %v6843, 0
        %6850 = vmatprep.subr.bf16.mxu0 0
        %6851 = vmatpush1.bf16.msra.mxu0 %v6848
        %6852 = vmatprep.subr.bf16.mxu0 0
        %6853 = vmatpush1.bf16.msra.mxu0 0
        %6854 = vmatprep.subr.bf16.mxu0 0
        %6855 = vmatpush1.bf16.msra.mxu0 0
        %6856 = vmatprep.subr.bf16.mxu0 0
        %6857 = vmatpush1.bf16.msra.mxu0 0
        %6858 = vmatprep.subr.bf16.mxu0 0
        %6859 = vmatpush1.bf16.msra.mxu0 0
        %6860 = vmatprep.subr.bf16.mxu0 0
        %6861 = vmatpush1.bf16.msra.mxu0 0
        %6862 = vmatprep.subr.bf16.mxu0 0
        %6863 = vmatpush1.bf16.msra.mxu0 0
        %6864 = vmatprep.subr.bf16.mxu0 0
        %6865 = vmatpush1.bf16.msra.mxu0 0
        %6866 = vmatprep.subr.bf16.mxu0 0
        %6867 = vmatpush1.bf16.msra.mxu0 0
        %6868 = vmatprep.subr.bf16.mxu0 0
        %6869 = vmatpush1.bf16.msra.mxu0 0
        %6870 = vmatprep.subr.bf16.mxu0 0
        %6871 = vmatpush1.bf16.msra.mxu0 0
        %6872 = vmatprep.subr.bf16.mxu0 0
        %6873 = vmatpush1.bf16.msra.mxu0 0
        %6874 = vmatprep.subr.bf16.mxu0 0
        %6875 = vmatpush1.bf16.msra.mxu0 0
        %6876 = vmatprep.subr.bf16.mxu0 0
        %6877 = vmatpush1.bf16.msra.mxu0 0
        %6878 = vmatprep.subr.bf16.mxu0 0
        %6879 = vmatpush1.bf16.msra.mxu0 0
        %6880 = vmatprep.subr.bf16.mxu0 0
        %6881 = vmatpush1.bf16.msra.mxu0 0
        %6882 = vmatprep.mubr.bf16.mxu0 0
        %6883 = vmatmul.mubr.bf16.gmra.mrb[0].mxu0 %v6845
        %v6884 = vpop.f32.mrb[0].mxu0
        %v6885 = vadd.f32 0.0, %v6884
        %v6886 = vpop.f32.mrb[0].mxu0
        %v6887 = vpop.f32.mrb[0].mxu0
        %v6888 = vpop.f32.mrb[0].mxu0
        %6889 = vdwg.mxu0
        %6890 = vrot.lane.b32.xlu0 %v463, 32
        %v6891 = vpop.permute.xlu0 %6890
        %v6893 = vsel %vm854, %v6788, 0
        %v6896 = vsel %vm954, %v6891, 0
        %6898 = vmatprep.subr.bf16.mxu0 0
        %6899 = vmatpush1.bf16.msra.mxu0 %v6896
        %6900 = vmatprep.subr.bf16.mxu0 0
        %6901 = vmatpush1.bf16.msra.mxu0 0
        %6902 = vmatprep.subr.bf16.mxu0 0
        %6903 = vmatpush1.bf16.msra.mxu0 0
        %6904 = vmatprep.subr.bf16.mxu0 0
        %6905 = vmatpush1.bf16.msra.mxu0 0
        %6906 = vmatprep.subr.bf16.mxu0 0
        %6907 = vmatpush1.bf16.msra.mxu0 0
        %6908 = vmatprep.subr.bf16.mxu0 0
        %6909 = vmatpush1.bf16.msra.mxu0 0
        %6910 = vmatprep.subr.bf16.mxu0 0
        %6911 = vmatpush1.bf16.msra.mxu0 0
        %6912 = vmatprep.subr.bf16.mxu0 0
        %6913 = vmatpush1.bf16.msra.mxu0 0
        %6914 = vmatprep.subr.bf16.mxu0 0
        %6915 = vmatpush1.bf16.msra.mxu0 0
        %6916 = vmatprep.subr.bf16.mxu0 0
        %6917 = vmatpush1.bf16.msra.mxu0 0
        %6918 = vmatprep.subr.bf16.mxu0 0
        %6919 = vmatpush1.bf16.msra.mxu0 0
        %6920 = vmatprep.subr.bf16.mxu0 0
        %6921 = vmatpush1.bf16.msra.mxu0 0
        %6922 = vmatprep.subr.bf16.mxu0 0
        %6923 = vmatpush1.bf16.msra.mxu0 0
        %6924 = vmatprep.subr.bf16.mxu0 0
        %6925 = vmatpush1.bf16.msra.mxu0 0
        %6926 = vmatprep.subr.bf16.mxu0 0
        %6927 = vmatpush1.bf16.msra.mxu0 0
        %6928 = vmatprep.subr.bf16.mxu0 0
        %6929 = vmatpush1.bf16.msra.mxu0 0
        %6930 = vmatprep.mubr.bf16.mxu0 0
        %6931 = vmatmul.mubr.bf16.gmra.mrb[0].mxu0 %v6893
        %v6932 = vpop.f32.mrb[0].mxu0
        %v6933 = vadd.f32 0.0, %v6932
        %v6934 = vpop.f32.mrb[0].mxu0
        %v6935 = vpop.f32.mrb[0].mxu0
        %v6936 = vpop.f32.mrb[0].mxu0
        %6937 = vdwg.mxu0
        %6938 = vrot.lane.b32.xlu0 %v464, 32
        %v6939 = vpop.permute.xlu0 %6938
        %v6941 = vsel %vm854, %v6789, 0
        %v6944 = vsel %vm954, %v6939, 0
        %6946 = vmatprep.subr.bf16.mxu0 0
        %6947 = vmatpush1.bf16.msra.mxu0 %v6944
        %6948 = vmatprep.subr.bf16.mxu0 0
        %6949 = vmatpush1.bf16.msra.mxu0 0
        %6950 = vmatprep.subr.bf16.mxu0 0
        %6951 = vmatpush1.bf16.msra.mxu0 0
        %6952 = vmatprep.subr.bf16.mxu0 0
        %6953 = vmatpush1.bf16.msra.mxu0 0
        %6954 = vmatprep.subr.bf16.mxu0 0
        %6955 = vmatpush1.bf16.msra.mxu0 0
        %6956 = vmatprep.subr.bf16.mxu0 0
        %6957 = vmatpush1.bf16.msra.mxu0 0
        %6958 = vmatprep.subr.bf16.mxu0 0
        %6959 = vmatpush1.bf16.msra.mxu0 0
        %6960 = vmatprep.subr.bf16.mxu0 0
        %6961 = vmatpush1.bf16.msra.mxu0 0
        %6962 = vmatprep.subr.bf16.mxu0 0
        %6963 = vmatpush1.bf16.msra.mxu0 0
        %6964 = vmatprep.subr.bf16.mxu0 0
        %6965 = vmatpush1.bf16.msra.mxu0 0
        %6966 = vmatprep.subr.bf16.mxu0 0
        %6967 = vmatpush1.bf16.msra.mxu0 0
        %6968 = vmatprep.subr.bf16.mxu0 0
        %6969 = vmatpush1.bf16.msra.mxu0 0
        %6970 = vmatprep.subr.bf16.mxu0 0
        %6971 = vmatpush1.bf16.msra.mxu0 0
        %6972 = vmatprep.subr.bf16.mxu0 0
        %6973 = vmatpush1.bf16.msra.mxu0 0
        %6974 = vmatprep.subr.bf16.mxu0 0
        %6975 = vmatpush1.bf16.msra.mxu0 0
        %6976 = vmatprep.subr.bf16.mxu0 0
        %6977 = vmatpush1.bf16.msra.mxu0 0
        %6978 = vmatprep.mubr.bf16.mxu0 0
        %6979 = vmatmul.mubr.bf16.gmra.mrb[0].mxu0 %v6941
        %v6980 = vpop.f32.mrb[0].mxu0
        %v6981 = vadd.f32 0.0, %v6980
        %v6982 = vpop.f32.mrb[0].mxu0
        %v6983 = vpop.f32.mrb[0].mxu0
        %v6984 = vpop.f32.mrb[0].mxu0
        %6985 = vdwg.mxu0
        %6986 = vrot.lane.b32.xlu0 %v465, 32
        %v6987 = vpop.permute.xlu0 %6986
        %v6989 = vsel %vm854, %v6790, 0
        %v6992 = vsel %vm954, %v6987, 0
        %6994 = vmatprep.subr.bf16.mxu0 0
        %6995 = vmatpush1.bf16.msra.mxu0 %v6992
        %6996 = vmatprep.subr.bf16.mxu0 0
        %6997 = vmatpush1.bf16.msra.mxu0 0
        %6998 = vmatprep.subr.bf16.mxu0 0
        %6999 = vmatpush1.bf16.msra.mxu0 0
        %7000 = vmatprep.subr.bf16.mxu0 0
        %7001 = vmatpush1.bf16.msra.mxu0 0
        %7002 = vmatprep.subr.bf16.mxu0 0
        %7003 = vmatpush1.bf16.msra.mxu0 0
        %7004 = vmatprep.subr.bf16.mxu0 0
        %7005 = vmatpush1.bf16.msra.mxu0 0
        %7006 = vmatprep.subr.bf16.mxu0 0
        %7007 = vmatpush1.bf16.msra.mxu0 0
        %7008 = vmatprep.subr.bf16.mxu0 0
        %7009 = vmatpush1.bf16.msra.mxu0 0
        %7010 = vmatprep.subr.bf16.mxu0 0
        %7011 = vmatpush1.bf16.msra.mxu0 0
        %7012 = vmatprep.subr.bf16.mxu0 0
        %7013 = vmatpush1.bf16.msra.mxu0 0
        %7014 = vmatprep.subr.bf16.mxu0 0
        %7015 = vmatpush1.bf16.msra.mxu0 0
        %7016 = vmatprep.subr.bf16.mxu0 0
        %7017 = vmatpush1.bf16.msra.mxu0 0
        %7018 = vmatprep.subr.bf16.mxu0 0
        %7019 = vmatpush1.bf16.msra.mxu0 0
        %7020 = vmatprep.subr.bf16.mxu0 0
        %7021 = vmatpush1.bf16.msra.mxu0 0
        %7022 = vmatprep.subr.bf16.mxu0 0
        %7023 = vmatpush1.bf16.msra.mxu0 0
        %7024 = vmatprep.subr.bf16.mxu0 0
        %7025 = vmatpush1.bf16.msra.mxu0 0
        %7026 = vmatprep.mubr.bf16.mxu0 0
        %7027 = vmatmul.mubr.bf16.gmra.mrb[0].mxu0 %v6989
        %v7028 = vpop.f32.mrb[0].mxu0
        %v7029 = vadd.f32 0.0, %v7028
        %v7030 = vpop.f32.mrb[0].mxu0
        %v7031 = vpop.f32.mrb[0].mxu0
        %v7032 = vpop.f32.mrb[0].mxu0
        %7033 = vdwg.mxu0
        %7034 = vrot.lane.b32.xlu0 %v466, 32
        %v7035 = vpop.permute.xlu0 %7034
        %v7037 = vsel %vm854, %v6791, 0
        %v7040 = vsel %vm954, %v7035, 0
        %7042 = vmatprep.subr.bf16.mxu0 0
        %7043 = vmatpush1.bf16.msra.mxu0 %v7040
        %7044 = vmatprep.subr.bf16.mxu0 0
        %7045 = vmatpush1.bf16.msra.mxu0 0
        %7046 = vmatprep.subr.bf16.mxu0 0
        %7047 = vmatpush1.bf16.msra.mxu0 0
        %7048 = vmatprep.subr.bf16.mxu0 0
        %7049 = vmatpush1.bf16.msra.mxu0 0
        %7050 = vmatprep.subr.bf16.mxu0 0
        %7051 = vmatpush1.bf16.msra.mxu0 0
        %7052 = vmatprep.subr.bf16.mxu0 0
        %7053 = vmatpush1.bf16.msra.mxu0 0
        %7054 = vmatprep.subr.bf16.mxu0 0
        %7055 = vmatpush1.bf16.msra.mxu0 0
        %7056 = vmatprep.subr.bf16.mxu0 0
        %7057 = vmatpush1.bf16.msra.mxu0 0
        %7058 = vmatprep.subr.bf16.mxu0 0
        %7059 = vmatpush1.bf16.msra.mxu0 0
        %7060 = vmatprep.subr.bf16.mxu0 0
        %7061 = vmatpush1.bf16.msra.mxu0 0
        %7062 = vmatprep.subr.bf16.mxu0 0
        %7063 = vmatpush1.bf16.msra.mxu0 0
        %7064 = vmatprep.subr.bf16.mxu0 0
        %7065 = vmatpush1.bf16.msra.mxu0 0
        %7066 = vmatprep.subr.bf16.mxu0 0
        %7067 = vmatpush1.bf16.msra.mxu0 0
        %7068 = vmatprep.subr.bf16.mxu0 0
        %7069 = vmatpush1.bf16.msra.mxu0 0
        %7070 = vmatprep.subr.bf16.mxu0 0
        %7071 = vmatpush1.bf16.msra.mxu0 0
        %7072 = vmatprep.subr.bf16.mxu0 0
        %7073 = vmatpush1.bf16.msra.mxu0 0
        %7074 = vmatprep.mubr.bf16.mxu0 0
        %7075 = vmatmul.mubr.bf16.gmra.mrb[0].mxu0 %v7037
        %v7076 = vpop.f32.mrb[0].mxu0
        %v7077 = vadd.f32 0.0, %v7076
        %v7078 = vpop.f32.mrb[0].mxu0
        %v7079 = vpop.f32.mrb[0].mxu0
        %v7080 = vpop.f32.mrb[0].mxu0
        %7081 = vdwg.mxu0
        %7082 = vrot.lane.b32.xlu0 %v467, 32
        %v7083 = vpop.permute.xlu0 %7082
        %v7085 = vsel %vm854, %v6792, 0
        %v7088 = vsel %vm954, %v7083, 0
        %7090 = vmatprep.subr.bf16.mxu0 0
        %7091 = vmatpush1.bf16.msra.mxu0 %v7088
        %7092 = vmatprep.subr.bf16.mxu0 0
        %7093 = vmatpush1.bf16.msra.mxu0 0
        %7094 = vmatprep.subr.bf16.mxu0 0
        %7095 = vmatpush1.bf16.msra.mxu0 0
        %7096 = vmatprep.subr.bf16.mxu0 0
        %7097 = vmatpush1.bf16.msra.mxu0 0
        %7098 = vmatprep.subr.bf16.mxu0 0
        %7099 = vmatpush1.bf16.msra.mxu0 0
        %7100 = vmatprep.subr.bf16.mxu0 0
        %7101 = vmatpush1.bf16.msra.mxu0 0
        %7102 = vmatprep.subr.bf16.mxu0 0
        %7103 = vmatpush1.bf16.msra.mxu0 0
        %7104 = vmatprep.subr.bf16.mxu0 0
        %7105 = vmatpush1.bf16.msra.mxu0 0
        %7106 = vmatprep.subr.bf16.mxu0 0
        %7107 = vmatpush1.bf16.msra.mxu0 0
        %7108 = vmatprep.subr.bf16.mxu0 0
        %7109 = vmatpush1.bf16.msra.mxu0 0
        %7110 = vmatprep.subr.bf16.mxu0 0
        %7111 = vmatpush1.bf16.msra.mxu0 0
        %7112 = vmatprep.subr.bf16.mxu0 0
        %7113 = vmatpush1.bf16.msra.mxu0 0
        %7114 = vmatprep.subr.bf16.mxu0 0
        %7115 = vmatpush1.bf16.msra.mxu0 0
        %7116 = vmatprep.subr.bf16.mxu0 0
        %7117 = vmatpush1.bf16.msra.mxu0 0
        %7118 = vmatprep.subr.bf16.mxu0 0
        %7119 = vmatpush1.bf16.msra.mxu0 0
        %7120 = vmatprep.subr.bf16.mxu0 0
        %7121 = vmatpush1.bf16.msra.mxu0 0
        %7122 = vmatprep.mubr.bf16.mxu0 0
        %7123 = vmatmul.mubr.bf16.gmra.mrb[0].mxu0 %v7085
        %v7124 = vpop.f32.mrb[0].mxu0
        %v7125 = vadd.f32 0.0, %v7124
        %v7126 = vpop.f32.mrb[0].mxu0
        %v7127 = vpop.f32.mrb[0].mxu0
        %v7128 = vpop.f32.mrb[0].mxu0
        %7129 = vdwg.mxu0
        %7130 = vrot.lane.b32.xlu0 %v468, 32
        %v7131 = vpop.permute.xlu0 %7130
        %v7133 = vsel %vm854, %v6793, 0
        %v7136 = vsel %vm954, %v7131, 0
        %7138 = vmatprep.subr.bf16.mxu0 0
        %7139 = vmatpush1.bf16.msra.mxu0 %v7136
        %7140 = vmatprep.subr.bf16.mxu0 0
        %7141 = vmatpush1.bf16.msra.mxu0 0
        %7142 = vmatprep.subr.bf16.mxu0 0
        %7143 = vmatpush1.bf16.msra.mxu0 0
        %7144 = vmatprep.subr.bf16.mxu0 0
        %7145 = vmatpush1.bf16.msra.mxu0 0
        %7146 = vmatprep.subr.bf16.mxu0 0
        %7147 = vmatpush1.bf16.msra.mxu0 0
        %7148 = vmatprep.subr.bf16.mxu0 0
        %7149 = vmatpush1.bf16.msra.mxu0 0
        %7150 = vmatprep.subr.bf16.mxu0 0
        %7151 = vmatpush1.bf16.msra.mxu0 0
        %7152 = vmatprep.subr.bf16.mxu0 0
        %7153 = vmatpush1.bf16.msra.mxu0 0
        %7154 = vmatprep.subr.bf16.mxu0 0
        %7155 = vmatpush1.bf16.msra.mxu0 0
        %7156 = vmatprep.subr.bf16.mxu0 0
        %7157 = vmatpush1.bf16.msra.mxu0 0
        %7158 = vmatprep.subr.bf16.mxu0 0
        %7159 = vmatpush1.bf16.msra.mxu0 0
        %7160 = vmatprep.subr.bf16.mxu0 0
        %7161 = vmatpush1.bf16.msra.mxu0 0
        %7162 = vmatprep.subr.bf16.mxu0 0
        %7163 = vmatpush1.bf16.msra.mxu0 0
        %7164 = vmatprep.subr.bf16.mxu0 0
        %7165 = vmatpush1.bf16.msra.mxu0 0
        %7166 = vmatprep.subr.bf16.mxu0 0
        %7167 = vmatpush1.bf16.msra.mxu0 0
        %7168 = vmatprep.subr.bf16.mxu0 0
        %7169 = vmatpush1.bf16.msra.mxu0 0
        %7170 = vmatprep.mubr.bf16.mxu0 0
        %7171 = vmatmul.mubr.bf16.gmra.mrb[0].mxu0 %v7133
        %v7172 = vpop.f32.mrb[0].mxu0
        %v7173 = vadd.f32 0.0, %v7172
        %v7174 = vpop.f32.mrb[0].mxu0
        %v7175 = vpop.f32.mrb[0].mxu0
        %v7176 = vpop.f32.mrb[0].mxu0
        %7177 = vdwg.mxu0
        %v7178 = vpack.c.bf16 %v6885, %v6837
        %v7179 = vpack.c.bf16 %v6981, %v6933
        %v7180 = vpack.c.bf16 %v7077, %v7029
        %v7181 = vpack.c.bf16 %v7173, %v7125
        %v7184 = vunpack.c.l.b16 %v481
        %v7185 = vunpack.c.l.b16 %v482
        %v7186 = vpack.c.b16 %v7185, %v7184
        %v7189 = vsel %vm485, %v7178, 0
        %v7192 = vsel %vm485, %v7179, 0
        %v7195 = vsel %vm485, %v7180, 0
        %v7198 = vsel %vm485, %v7181, 0
        %7200 = vmatprep.subr.bf16.mxu0 0
        %7201 = vmatpush1.bf16.msra.mxu0 %v7186
        %7202 = vmatprep.subr.bf16.mxu0 0
        %7203 = vmatpush1.bf16.msra.mxu0 0
        %7204 = vmatprep.subr.bf16.mxu0 0
        %7205 = vmatpush1.bf16.msra.mxu0 0
        %7206 = vmatprep.subr.bf16.mxu0 0
        %7207 = vmatpush1.bf16.msra.mxu0 0
        %7208 = vmatprep.subr.bf16.mxu0 0
        %7209 = vmatpush1.bf16.msra.mxu0 0
        %7210 = vmatprep.subr.bf16.mxu0 0
        %7211 = vmatpush1.bf16.msra.mxu0 0
        %7212 = vmatprep.subr.bf16.mxu0 0
        %7213 = vmatpush1.bf16.msra.mxu0 0
        %7214 = vmatprep.subr.bf16.mxu0 0
        %7215 = vmatpush1.bf16.msra.mxu0 0
        %7216 = vmatprep.subr.bf16.mxu0 0
        %7217 = vmatpush1.bf16.msra.mxu0 0
        %7218 = vmatprep.subr.bf16.mxu0 0
        %7219 = vmatpush1.bf16.msra.mxu0 0
        %7220 = vmatprep.subr.bf16.mxu0 0
        %7221 = vmatpush1.bf16.msra.mxu0 0
        %7222 = vmatprep.subr.bf16.mxu0 0
        %7223 = vmatpush1.bf16.msra.mxu0 0
        %7224 = vmatprep.subr.bf16.mxu0 0
        %7225 = vmatpush1.bf16.msra.mxu0 0
        %7226 = vmatprep.subr.bf16.mxu0 0
        %7227 = vmatpush1.bf16.msra.mxu0 0
        %7228 = vmatprep.subr.bf16.mxu0 0
        %7229 = vmatpush1.bf16.msra.mxu0 0
        %7230 = vmatprep.subr.bf16.mxu0 0
        %7231 = vmatpush1.bf16.msra.mxu0 0
        %7232 = vmatprep.mubr.bf16.mxu0 0
        %7233 = vmatmul.mubr.bf16.gmra.mrb[0].mxu0 %v7189
        %v7234 = vpop.f32.mrb[0].mxu0
        %v7235 = vadd.f32 0.0, %v7234
        %v7236 = vpop.f32.mrb[0].mxu0
        %v7237 = vpop.f32.mrb[0].mxu0
        %v7238 = vadd.f32 0.0, %v7237
        %v7239 = vpop.f32.mrb[0].mxu0
        %7240 = vmatprep.mubr.bf16.mxu0 0
        %7241 = vmatmul.mubr.bf16.gmra.mrb[0].mxu0 %v7192
        %v7242 = vpop.f32.mrb[0].mxu0
        %v7243 = vadd.f32 0.0, %v7242
        %v7244 = vpop.f32.mrb[0].mxu0
        %v7245 = vpop.f32.mrb[0].mxu0
        %v7246 = vadd.f32 0.0, %v7245
        %v7247 = vpop.f32.mrb[0].mxu0
        %7248 = vmatprep.mubr.bf16.mxu0 0
        %7249 = vmatmul.mubr.bf16.gmra.mrb[0].mxu0 %v7195
        %v7250 = vpop.f32.mrb[0].mxu0
        %v7251 = vadd.f32 0.0, %v7250
        %v7252 = vpop.f32.mrb[0].mxu0
        %v7253 = vpop.f32.mrb[0].mxu0
        %v7254 = vadd.f32 0.0, %v7253
        %v7255 = vpop.f32.mrb[0].mxu0
        %7256 = vmatprep.mubr.bf16.mxu0 0
        %7257 = vmatmul.mubr.bf16.gmra.mrb[0].mxu0 %v7198
        %v7258 = vpop.f32.mrb[0].mxu0
        %v7259 = vadd.f32 0.0, %v7258
        %v7260 = vpop.f32.mrb[0].mxu0
        %v7261 = vpop.f32.mrb[0].mxu0
        %v7262 = vadd.f32 0.0, %v7261
        %v7263 = vpop.f32.mrb[0].mxu0
        %7264 = vdwg.mxu0
        %v7265 = vadd.f32 %v6290, %v7235
        %v7266 = vadd.f32 %v6291, %v7238
        %v7267 = vadd.f32 %v6292, %v7243
        %v7268 = vadd.f32 %v6293, %v7246
        %v7269 = vadd.f32 %v6294, %v7251
        %v7270 = vadd.f32 %v6295, %v7254
        %v7271 = vadd.f32 %v6296, %v7259
        %v7272 = vadd.f32 %v6297, %v7262
        %7273 = vrot.lane.b32.xlu0 %v445, 16
        %v7274 = vpop.permute.xlu0 %7273
        %7275 = vrot.lane.b32.xlu0 %v453, 16
        %v7276 = vpop.permute.xlu0 %7275
        %v7278 = vsel %vm485, %v7274, 0
        %v7281 = vsel %vm485, %v7276, 0
        %7283 = vmatprep.subr.bf16.mxu0 0
        %7284 = vmatpush1.bf16.xpose.msra.mxu0 %v7281
        %7285 = vmatprep.subr.bf16.mxu0 0
        %7286 = vmatpush1.bf16.xpose.msra.mxu0 0
        %7287 = vmatprep.subr.bf16.mxu0 0
        %7288 = vmatpush1.bf16.xpose.msra.mxu0 0
        %7289 = vmatprep.subr.bf16.mxu0 0
        %7290 = vmatpush1.bf16.xpose.msra.mxu0 0
        %7291 = vmatprep.subr.bf16.mxu0 0
        %7292 = vmatpush1.bf16.xpose.msra.mxu0 0
        %7293 = vmatprep.subr.bf16.mxu0 0
        %7294 = vmatpush1.bf16.xpose.msra.mxu0 0
        %7295 = vmatprep.subr.bf16.mxu0 0
        %7296 = vmatpush1.bf16.xpose.msra.mxu0 0
        %7297 = vmatprep.subr.bf16.mxu0 0
        %7298 = vmatpush1.bf16.xpose.msra.mxu0 0
        %7299 = vmatprep.subr.bf16.mxu0 0
        %7300 = vmatpush1.bf16.xpose.msra.mxu0 0
        %7301 = vmatprep.subr.bf16.mxu0 0
        %7302 = vmatpush1.bf16.xpose.msra.mxu0 0
        %7303 = vmatprep.subr.bf16.mxu0 0
        %7304 = vmatpush1.bf16.xpose.msra.mxu0 0
        %7305 = vmatprep.subr.bf16.mxu0 0
        %7306 = vmatpush1.bf16.xpose.msra.mxu0 0
        %7307 = vmatprep.subr.bf16.mxu0 0
        %7308 = vmatpush1.bf16.xpose.msra.mxu0 0
        %7309 = vmatprep.subr.bf16.mxu0 0
        %7310 = vmatpush1.bf16.xpose.msra.mxu0 0
        %7311 = vmatprep.subr.bf16.mxu0 0
        %7312 = vmatpush1.bf16.xpose.msra.mxu0 0
        %7313 = vmatprep.subr.bf16.mxu0 0
        %7314 = vmatpush1.bf16.xpose.msra.mxu0 0
        %7315 = vmatprep.mubr.bf16.mxu0 0
        %7316 = vmatmul.mubr.bf16.gmra.mrb[0].mxu0 %v7278
        %v7317 = vpop.f32.mrb[0].mxu0
        %v7318 = vadd.f32 0.0, %v7317
        %v7319 = vpop.f32.mrb[0].mxu0
        %v7320 = vpop.f32.mrb[0].mxu0
        %v7321 = vpop.f32.mrb[0].mxu0
        %7322 = vdwg.mxu0
        %7323 = vrot.lane.b32.xlu0 %v446, 16
        %v7324 = vpop.permute.xlu0 %7323
        %7325 = vrot.lane.b32.xlu0 %v454, 16
        %v7326 = vpop.permute.xlu0 %7325
        %v7328 = vsel %vm485, %v7324, 0
        %v7331 = vsel %vm485, %v7326, 0
        %7333 = vmatprep.subr.bf16.mxu0 0
        %7334 = vmatpush1.bf16.xpose.msra.mxu0 %v7331
        %7335 = vmatprep.subr.bf16.mxu0 0
        %7336 = vmatpush1.bf16.xpose.msra.mxu0 0
        %7337 = vmatprep.subr.bf16.mxu0 0
        %7338 = vmatpush1.bf16.xpose.msra.mxu0 0
        %7339 = vmatprep.subr.bf16.mxu0 0
        %7340 = vmatpush1.bf16.xpose.msra.mxu0 0
        %7341 = vmatprep.subr.bf16.mxu0 0
        %7342 = vmatpush1.bf16.xpose.msra.mxu0 0
        %7343 = vmatprep.subr.bf16.mxu0 0
        %7344 = vmatpush1.bf16.xpose.msra.mxu0 0
        %7345 = vmatprep.subr.bf16.mxu0 0
        %7346 = vmatpush1.bf16.xpose.msra.mxu0 0
        %7347 = vmatprep.subr.bf16.mxu0 0
        %7348 = vmatpush1.bf16.xpose.msra.mxu0 0
        %7349 = vmatprep.subr.bf16.mxu0 0
        %7350 = vmatpush1.bf16.xpose.msra.mxu0 0
        %7351 = vmatprep.subr.bf16.mxu0 0
        %7352 = vmatpush1.bf16.xpose.msra.mxu0 0
        %7353 = vmatprep.subr.bf16.mxu0 0
        %7354 = vmatpush1.bf16.xpose.msra.mxu0 0
        %7355 = vmatprep.subr.bf16.mxu0 0
        %7356 = vmatpush1.bf16.xpose.msra.mxu0 0
        %7357 = vmatprep.subr.bf16.mxu0 0
        %7358 = vmatpush1.bf16.xpose.msra.mxu0 0
        %7359 = vmatprep.subr.bf16.mxu0 0
        %7360 = vmatpush1.bf16.xpose.msra.mxu0 0
        %7361 = vmatprep.subr.bf16.mxu0 0
        %7362 = vmatpush1.bf16.xpose.msra.mxu0 0
        %7363 = vmatprep.subr.bf16.mxu0 0
        %7364 = vmatpush1.bf16.xpose.msra.mxu0 0
        %7365 = vmatprep.mubr.bf16.mxu0 0
        %7366 = vmatmul.mubr.bf16.gmra.mrb[0].mxu0 %v7328
        %v7367 = vpop.f32.mrb[0].mxu0
        %v7368 = vadd.f32 0.0, %v7367
        %v7369 = vpop.f32.mrb[0].mxu0
        %v7370 = vpop.f32.mrb[0].mxu0
        %v7371 = vpop.f32.mrb[0].mxu0
        %7372 = vdwg.mxu0
        %7373 = vrot.lane.b32.xlu0 %v447, 16
        %v7374 = vpop.permute.xlu0 %7373
        %7375 = vrot.lane.b32.xlu0 %v455, 16
        %v7376 = vpop.permute.xlu0 %7375
        %v7378 = vsel %vm485, %v7374, 0
        %v7381 = vsel %vm485, %v7376, 0
        %7383 = vmatprep.subr.bf16.mxu0 0
        %7384 = vmatpush1.bf16.xpose.msra.mxu0 %v7381
        %7385 = vmatprep.subr.bf16.mxu0 0
        %7386 = vmatpush1.bf16.xpose.msra.mxu0 0
        %7387 = vmatprep.subr.bf16.mxu0 0
        %7388 = vmatpush1.bf16.xpose.msra.mxu0 0
        %7389 = vmatprep.subr.bf16.mxu0 0
        %7390 = vmatpush1.bf16.xpose.msra.mxu0 0
        %7391 = vmatprep.subr.bf16.mxu0 0
        %7392 = vmatpush1.bf16.xpose.msra.mxu0 0
        %7393 = vmatprep.subr.bf16.mxu0 0
        %7394 = vmatpush1.bf16.xpose.msra.mxu0 0
        %7395 = vmatprep.subr.bf16.mxu0 0
        %7396 = vmatpush1.bf16.xpose.msra.mxu0 0
        %7397 = vmatprep.subr.bf16.mxu0 0
        %7398 = vmatpush1.bf16.xpose.msra.mxu0 0
        %7399 = vmatprep.subr.bf16.mxu0 0
        %7400 = vmatpush1.bf16.xpose.msra.mxu0 0
        %7401 = vmatprep.subr.bf16.mxu0 0
        %7402 = vmatpush1.bf16.xpose.msra.mxu0 0
        %7403 = vmatprep.subr.bf16.mxu0 0
        %7404 = vmatpush1.bf16.xpose.msra.mxu0 0
        %7405 = vmatprep.subr.bf16.mxu0 0
        %7406 = vmatpush1.bf16.xpose.msra.mxu0 0
        %7407 = vmatprep.subr.bf16.mxu0 0
        %7408 = vmatpush1.bf16.xpose.msra.mxu0 0
        %7409 = vmatprep.subr.bf16.mxu0 0
        %7410 = vmatpush1.bf16.xpose.msra.mxu0 0
        %7411 = vmatprep.subr.bf16.mxu0 0
        %7412 = vmatpush1.bf16.xpose.msra.mxu0 0
        %7413 = vmatprep.subr.bf16.mxu0 0
        %7414 = vmatpush1.bf16.xpose.msra.mxu0 0
        %7415 = vmatprep.mubr.bf16.mxu0 0
        %7416 = vmatmul.mubr.bf16.gmra.mrb[0].mxu0 %v7378
        %v7417 = vpop.f32.mrb[0].mxu0
        %v7418 = vadd.f32 0.0, %v7417
        %v7419 = vpop.f32.mrb[0].mxu0
        %v7420 = vpop.f32.mrb[0].mxu0
        %v7421 = vpop.f32.mrb[0].mxu0
        %7422 = vdwg.mxu0
        %7423 = vrot.lane.b32.xlu0 %v448, 16
        %v7424 = vpop.permute.xlu0 %7423
        %7425 = vrot.lane.b32.xlu0 %v456, 16
        %v7426 = vpop.permute.xlu0 %7425
        %v7428 = vsel %vm485, %v7424, 0
        %v7431 = vsel %vm485, %v7426, 0
        %7433 = vmatprep.subr.bf16.mxu0 0
        %7434 = vmatpush1.bf16.xpose.msra.mxu0 %v7431
        %7435 = vmatprep.subr.bf16.mxu0 0
        %7436 = vmatpush1.bf16.xpose.msra.mxu0 0
        %7437 = vmatprep.subr.bf16.mxu0 0
        %7438 = vmatpush1.bf16.xpose.msra.mxu0 0
        %7439 = vmatprep.subr.bf16.mxu0 0
        %7440 = vmatpush1.bf16.xpose.msra.mxu0 0
        %7441 = vmatprep.subr.bf16.mxu0 0
        %7442 = vmatpush1.bf16.xpose.msra.mxu0 0
        %7443 = vmatprep.subr.bf16.mxu0 0
        %7444 = vmatpush1.bf16.xpose.msra.mxu0 0
        %7445 = vmatprep.subr.bf16.mxu0 0
        %7446 = vmatpush1.bf16.xpose.msra.mxu0 0
        %7447 = vmatprep.subr.bf16.mxu0 0
        %7448 = vmatpush1.bf16.xpose.msra.mxu0 0
        %7449 = vmatprep.subr.bf16.mxu0 0
        %7450 = vmatpush1.bf16.xpose.msra.mxu0 0
        %7451 = vmatprep.subr.bf16.mxu0 0
        %7452 = vmatpush1.bf16.xpose.msra.mxu0 0
        %7453 = vmatprep.subr.bf16.mxu0 0
        %7454 = vmatpush1.bf16.xpose.msra.mxu0 0
        %7455 = vmatprep.subr.bf16.mxu0 0
        %7456 = vmatpush1.bf16.xpose.msra.mxu0 0
        %7457 = vmatprep.subr.bf16.mxu0 0
        %7458 = vmatpush1.bf16.xpose.msra.mxu0 0
        %7459 = vmatprep.subr.bf16.mxu0 0
        %7460 = vmatpush1.bf16.xpose.msra.mxu0 0
        %7461 = vmatprep.subr.bf16.mxu0 0
        %7462 = vmatpush1.bf16.xpose.msra.mxu0 0
        %7463 = vmatprep.subr.bf16.mxu0 0
        %7464 = vmatpush1.bf16.xpose.msra.mxu0 0
        %7465 = vmatprep.mubr.bf16.mxu0 0
        %7466 = vmatmul.mubr.bf16.gmra.mrb[0].mxu0 %v7428
        %v7467 = vpop.f32.mrb[0].mxu0
        %v7468 = vadd.f32 0.0, %v7467
        %v7469 = vpop.f32.mrb[0].mxu0
        %v7470 = vpop.f32.mrb[0].mxu0
        %v7471 = vpop.f32.mrb[0].mxu0
        %7472 = vdwg.mxu0
        %7473 = vrot.lane.b32.xlu0 %v449, 16
        %v7474 = vpop.permute.xlu0 %7473
        %7475 = vrot.lane.b32.xlu0 %v457, 16
        %v7476 = vpop.permute.xlu0 %7475
        %v7478 = vsel %vm485, %v7474, 0
        %v7481 = vsel %vm485, %v7476, 0
        %7483 = vmatprep.subr.bf16.mxu0 0
        %7484 = vmatpush1.bf16.xpose.msra.mxu0 %v7481
        %7485 = vmatprep.subr.bf16.mxu0 0
        %7486 = vmatpush1.bf16.xpose.msra.mxu0 0
        %7487 = vmatprep.subr.bf16.mxu0 0
        %7488 = vmatpush1.bf16.xpose.msra.mxu0 0
        %7489 = vmatprep.subr.bf16.mxu0 0
        %7490 = vmatpush1.bf16.xpose.msra.mxu0 0
        %7491 = vmatprep.subr.bf16.mxu0 0
        %7492 = vmatpush1.bf16.xpose.msra.mxu0 0
        %7493 = vmatprep.subr.bf16.mxu0 0
        %7494 = vmatpush1.bf16.xpose.msra.mxu0 0
        %7495 = vmatprep.subr.bf16.mxu0 0
        %7496 = vmatpush1.bf16.xpose.msra.mxu0 0
        %7497 = vmatprep.subr.bf16.mxu0 0
        %7498 = vmatpush1.bf16.xpose.msra.mxu0 0
        %7499 = vmatprep.subr.bf16.mxu0 0
        %7500 = vmatpush1.bf16.xpose.msra.mxu0 0
        %7501 = vmatprep.subr.bf16.mxu0 0
        %7502 = vmatpush1.bf16.xpose.msra.mxu0 0
        %7503 = vmatprep.subr.bf16.mxu0 0
        %7504 = vmatpush1.bf16.xpose.msra.mxu0 0
        %7505 = vmatprep.subr.bf16.mxu0 0
        %7506 = vmatpush1.bf16.xpose.msra.mxu0 0
        %7507 = vmatprep.subr.bf16.mxu0 0
        %7508 = vmatpush1.bf16.xpose.msra.mxu0 0
        %7509 = vmatprep.subr.bf16.mxu0 0
        %7510 = vmatpush1.bf16.xpose.msra.mxu0 0
        %7511 = vmatprep.subr.bf16.mxu0 0
        %7512 = vmatpush1.bf16.xpose.msra.mxu0 0
        %7513 = vmatprep.subr.bf16.mxu0 0
        %7514 = vmatpush1.bf16.xpose.msra.mxu0 0
        %7515 = vmatprep.mubr.bf16.mxu0 0
        %7516 = vmatmul.mubr.bf16.gmra.mrb[0].mxu0 %v7478
        %v7517 = vpop.f32.mrb[0].mxu0
        %v7518 = vadd.f32 0.0, %v7517
        %v7519 = vpop.f32.mrb[0].mxu0
        %v7520 = vpop.f32.mrb[0].mxu0
        %v7521 = vpop.f32.mrb[0].mxu0
        %7522 = vdwg.mxu0
        %7523 = vrot.lane.b32.xlu0 %v450, 16
        %v7524 = vpop.permute.xlu0 %7523
        %7525 = vrot.lane.b32.xlu0 %v458, 16
        %v7526 = vpop.permute.xlu0 %7525
        %v7528 = vsel %vm485, %v7524, 0
        %v7531 = vsel %vm485, %v7526, 0
        %7533 = vmatprep.subr.bf16.mxu0 0
        %7534 = vmatpush1.bf16.xpose.msra.mxu0 %v7531
        %7535 = vmatprep.subr.bf16.mxu0 0
        %7536 = vmatpush1.bf16.xpose.msra.mxu0 0
        %7537 = vmatprep.subr.bf16.mxu0 0
        %7538 = vmatpush1.bf16.xpose.msra.mxu0 0
        %7539 = vmatprep.subr.bf16.mxu0 0
        %7540 = vmatpush1.bf16.xpose.msra.mxu0 0
        %7541 = vmatprep.subr.bf16.mxu0 0
        %7542 = vmatpush1.bf16.xpose.msra.mxu0 0
        %7543 = vmatprep.subr.bf16.mxu0 0
        %7544 = vmatpush1.bf16.xpose.msra.mxu0 0
        %7545 = vmatprep.subr.bf16.mxu0 0
        %7546 = vmatpush1.bf16.xpose.msra.mxu0 0
        %7547 = vmatprep.subr.bf16.mxu0 0
        %7548 = vmatpush1.bf16.xpose.msra.mxu0 0
        %7549 = vmatprep.subr.bf16.mxu0 0
        %7550 = vmatpush1.bf16.xpose.msra.mxu0 0
        %7551 = vmatprep.subr.bf16.mxu0 0
        %7552 = vmatpush1.bf16.xpose.msra.mxu0 0
        %7553 = vmatprep.subr.bf16.mxu0 0
        %7554 = vmatpush1.bf16.xpose.msra.mxu0 0
        %7555 = vmatprep.subr.bf16.mxu0 0
        %7556 = vmatpush1.bf16.xpose.msra.mxu0 0
        %7557 = vmatprep.subr.bf16.mxu0 0
        %7558 = vmatpush1.bf16.xpose.msra.mxu0 0
        %7559 = vmatprep.subr.bf16.mxu0 0
        %7560 = vmatpush1.bf16.xpose.msra.mxu0 0
        %7561 = vmatprep.subr.bf16.mxu0 0
        %7562 = vmatpush1.bf16.xpose.msra.mxu0 0
        %7563 = vmatprep.subr.bf16.mxu0 0
        %7564 = vmatpush1.bf16.xpose.msra.mxu0 0
        %7565 = vmatprep.mubr.bf16.mxu0 0
        %7566 = vmatmul.mubr.bf16.gmra.mrb[0].mxu0 %v7528
        %v7567 = vpop.f32.mrb[0].mxu0
        %v7568 = vadd.f32 0.0, %v7567
        %v7569 = vpop.f32.mrb[0].mxu0
        %v7570 = vpop.f32.mrb[0].mxu0
        %v7571 = vpop.f32.mrb[0].mxu0
        %7572 = vdwg.mxu0
        %7573 = vrot.lane.b32.xlu0 %v451, 16
        %v7574 = vpop.permute.xlu0 %7573
        %7575 = vrot.lane.b32.xlu0 %v459, 16
        %v7576 = vpop.permute.xlu0 %7575
        %v7578 = vsel %vm485, %v7574, 0
        %v7581 = vsel %vm485, %v7576, 0
        %7583 = vmatprep.subr.bf16.mxu0 0
        %7584 = vmatpush1.bf16.xpose.msra.mxu0 %v7581
        %7585 = vmatprep.subr.bf16.mxu0 0
        %7586 = vmatpush1.bf16.xpose.msra.mxu0 0
        %7587 = vmatprep.subr.bf16.mxu0 0
        %7588 = vmatpush1.bf16.xpose.msra.mxu0 0
        %7589 = vmatprep.subr.bf16.mxu0 0
        %7590 = vmatpush1.bf16.xpose.msra.mxu0 0
        %7591 = vmatprep.subr.bf16.mxu0 0
        %7592 = vmatpush1.bf16.xpose.msra.mxu0 0
        %7593 = vmatprep.subr.bf16.mxu0 0
        %7594 = vmatpush1.bf16.xpose.msra.mxu0 0
        %7595 = vmatprep.subr.bf16.mxu0 0
        %7596 = vmatpush1.bf16.xpose.msra.mxu0 0
        %7597 = vmatprep.subr.bf16.mxu0 0
        %7598 = vmatpush1.bf16.xpose.msra.mxu0 0
        %7599 = vmatprep.subr.bf16.mxu0 0
        %7600 = vmatpush1.bf16.xpose.msra.mxu0 0
        %7601 = vmatprep.subr.bf16.mxu0 0
        %7602 = vmatpush1.bf16.xpose.msra.mxu0 0
        %7603 = vmatprep.subr.bf16.mxu0 0
        %7604 = vmatpush1.bf16.xpose.msra.mxu0 0
        %7605 = vmatprep.subr.bf16.mxu0 0
        %7606 = vmatpush1.bf16.xpose.msra.mxu0 0
        %7607 = vmatprep.subr.bf16.mxu0 0
        %7608 = vmatpush1.bf16.xpose.msra.mxu0 0
        %7609 = vmatprep.subr.bf16.mxu0 0
        %7610 = vmatpush1.bf16.xpose.msra.mxu0 0
        %7611 = vmatprep.subr.bf16.mxu0 0
        %7612 = vmatpush1.bf16.xpose.msra.mxu0 0
        %7613 = vmatprep.subr.bf16.mxu0 0
        %7614 = vmatpush1.bf16.xpose.msra.mxu0 0
        %7615 = vmatprep.mubr.bf16.mxu0 0
        %7616 = vmatmul.mubr.bf16.gmra.mrb[0].mxu0 %v7578
        %v7617 = vpop.f32.mrb[0].mxu0
        %v7618 = vadd.f32 0.0, %v7617
        %v7619 = vpop.f32.mrb[0].mxu0
        %v7620 = vpop.f32.mrb[0].mxu0
        %v7621 = vpop.f32.mrb[0].mxu0
        %7622 = vdwg.mxu0
        %7623 = vrot.lane.b32.xlu0 %v452, 16
        %v7624 = vpop.permute.xlu0 %7623
        %7625 = vrot.lane.b32.xlu0 %v460, 16
        %v7626 = vpop.permute.xlu0 %7625
        %v7628 = vsel %vm485, %v7624, 0
        %v7631 = vsel %vm485, %v7626, 0
        %7633 = vmatprep.subr.bf16.mxu0 0
        %7634 = vmatpush1.bf16.xpose.msra.mxu0 %v7631
        %7635 = vmatprep.subr.bf16.mxu0 0
        %7636 = vmatpush1.bf16.xpose.msra.mxu0 0
        %7637 = vmatprep.subr.bf16.mxu0 0
        %7638 = vmatpush1.bf16.xpose.msra.mxu0 0
        %7639 = vmatprep.subr.bf16.mxu0 0
        %7640 = vmatpush1.bf16.xpose.msra.mxu0 0
        %7641 = vmatprep.subr.bf16.mxu0 0
        %7642 = vmatpush1.bf16.xpose.msra.mxu0 0
        %7643 = vmatprep.subr.bf16.mxu0 0
        %7644 = vmatpush1.bf16.xpose.msra.mxu0 0
        %7645 = vmatprep.subr.bf16.mxu0 0
        %7646 = vmatpush1.bf16.xpose.msra.mxu0 0
        %7647 = vmatprep.subr.bf16.mxu0 0
        %7648 = vmatpush1.bf16.xpose.msra.mxu0 0
        %7649 = vmatprep.subr.bf16.mxu0 0
        %7650 = vmatpush1.bf16.xpose.msra.mxu0 0
        %7651 = vmatprep.subr.bf16.mxu0 0
        %7652 = vmatpush1.bf16.xpose.msra.mxu0 0
        %7653 = vmatprep.subr.bf16.mxu0 0
        %7654 = vmatpush1.bf16.xpose.msra.mxu0 0
        %7655 = vmatprep.subr.bf16.mxu0 0
        %7656 = vmatpush1.bf16.xpose.msra.mxu0 0
        %7657 = vmatprep.subr.bf16.mxu0 0
        %7658 = vmatpush1.bf16.xpose.msra.mxu0 0
        %7659 = vmatprep.subr.bf16.mxu0 0
        %7660 = vmatpush1.bf16.xpose.msra.mxu0 0
        %7661 = vmatprep.subr.bf16.mxu0 0
        %7662 = vmatpush1.bf16.xpose.msra.mxu0 0
        %7663 = vmatprep.subr.bf16.mxu0 0
        %7664 = vmatpush1.bf16.xpose.msra.mxu0 0
        %7665 = vmatprep.mubr.bf16.mxu0 0
        %7666 = vmatmul.mubr.bf16.gmra.mrb[0].mxu0 %v7628
        %v7667 = vpop.f32.mrb[0].mxu0
        %v7668 = vadd.f32 0.0, %v7667
        %v7669 = vpop.f32.mrb[0].mxu0
        %v7670 = vpop.f32.mrb[0].mxu0
        %v7671 = vpop.f32.mrb[0].mxu0
        %7672 = vdwg.mxu0
        %v7673 = vsel %vm854, %v7318, -inf
        %7674 = vmax.xlane.f32.xlu0 %v7673
        %v7675 = vpop.xlane.xlu0 %7674
        %v7676 = vsel %vm854, %v7368, -inf
        %7677 = vmax.xlane.f32.xlu0 %v7676
        %v7678 = vpop.xlane.xlu0 %7677
        %v7679 = vsel %vm854, %v7418, -inf
        %7680 = vmax.xlane.f32.xlu0 %v7679
        %v7681 = vpop.xlane.xlu0 %7680
        %v7682 = vsel %vm854, %v7468, -inf
        %7683 = vmax.xlane.f32.xlu0 %v7682
        %v7684 = vpop.xlane.xlu0 %7683
        %v7685 = vsel %vm854, %v7518, -inf
        %7686 = vmax.xlane.f32.xlu0 %v7685
        %v7687 = vpop.xlane.xlu0 %7686
        %v7688 = vsel %vm854, %v7568, -inf
        %7689 = vmax.xlane.f32.xlu0 %v7688
        %v7690 = vpop.xlane.xlu0 %7689
        %v7691 = vsel %vm854, %v7618, -inf
        %7692 = vmax.xlane.f32.xlu0 %v7691
        %v7693 = vpop.xlane.xlu0 %7692
        %v7694 = vsel %vm854, %v7668, -inf
        %7695 = vmax.xlane.f32.xlu0 %v7694
        %v7696 = vpop.xlane.xlu0 %7695
        %v7697 = vsub.f32 %v7318, %v7675
        %v7698 = vsub.f32 %v7368, %v7678
        %v7699 = vsub.f32 %v7418, %v7681
        %v7700 = vsub.f32 %v7468, %v7684
        %v7701 = vsub.f32 %v7518, %v7687
        %v7702 = vsub.f32 %v7568, %v7690
        %v7703 = vsub.f32 %v7618, %v7693
        %v7704 = vsub.f32 %v7668, %v7696
        %v7705 = vmul.f32 %v7697, 1.442695
        %v7706 = vpow.pop %v7705
        %v7707 = vmul.f32 %v7698, 1.442695
        %v7708 = vpow.pop %v7707
        %v7709 = vmul.f32 %v7699, 1.442695
        %v7710 = vpow.pop %v7709
        %v7711 = vmul.f32 %v7700, 1.442695
        %v7712 = vpow.pop %v7711
        %v7713 = vmul.f32 %v7701, 1.442695
        %v7714 = vpow.pop %v7713
        %v7715 = vmul.f32 %v7702, 1.442695
        %v7716 = vpow.pop %v7715
        %v7717 = vmul.f32 %v7703, 1.442695
        %v7718 = vpow.pop %v7717
        %v7719 = vmul.f32 %v7704, 1.442695
        %v7720 = vpow.pop %v7719
        %v7721 = vsel %vm854, %v7706, 0.0
        %7722 = vadd.xlane.f32.xlu0 %v7721
        %v7723 = vpop.xlane.xlu0 %7722
        %v7724 = vsel %vm854, %v7708, 0.0
        %7725 = vadd.xlane.f32.xlu0 %v7724
        %v7726 = vpop.xlane.xlu0 %7725
        %v7727 = vsel %vm854, %v7710, 0.0
        %7728 = vadd.xlane.f32.xlu0 %v7727
        %v7729 = vpop.xlane.xlu0 %7728
        %v7730 = vsel %vm854, %v7712, 0.0
        %7731 = vadd.xlane.f32.xlu0 %v7730
        %v7732 = vpop.xlane.xlu0 %7731
        %v7733 = vsel %vm854, %v7714, 0.0
        %7734 = vadd.xlane.f32.xlu0 %v7733
        %v7735 = vpop.xlane.xlu0 %7734
        %v7736 = vsel %vm854, %v7716, 0.0
        %7737 = vadd.xlane.f32.xlu0 %v7736
        %v7738 = vpop.xlane.xlu0 %7737
        %v7739 = vsel %vm854, %v7718, 0.0
        %7740 = vadd.xlane.f32.xlu0 %v7739
        %v7741 = vpop.xlane.xlu0 %7740
        %v7742 = vsel %vm854, %v7720, 0.0
        %7743 = vadd.xlane.f32.xlu0 %v7742
        %v7744 = vpop.xlane.xlu0 %7743
        %v7745 = vrcp.pop %v7723
        %v7746 = vrcp.pop %v7726
        %v7747 = vrcp.pop %v7729
        %v7748 = vrcp.pop %v7732
        %v7749 = vrcp.pop %v7735
        %v7750 = vrcp.pop %v7738
        %v7751 = vrcp.pop %v7741
        %v7752 = vrcp.pop %v7744
        %v7753 = vmul.f32 %v7706, %v7745
        %v7754 = vmul.f32 %v7708, %v7746
        %v7755 = vmul.f32 %v7710, %v7747
        %v7756 = vmul.f32 %v7712, %v7748
        %v7757 = vmul.f32 %v7714, %v7749
        %v7758 = vmul.f32 %v7716, %v7750
        %v7759 = vmul.f32 %v7718, %v7751
        %v7760 = vmul.f32 %v7720, %v7752
        %v7761 = vpack.c.bf16 %v7753, %v7753
        %v7762 = vpack.c.bf16 %v7754, %v7754
        %v7763 = vpack.c.bf16 %v7755, %v7755
        %v7764 = vpack.c.bf16 %v7756, %v7756
        %v7765 = vpack.c.bf16 %v7757, %v7757
        %v7766 = vpack.c.bf16 %v7758, %v7758
        %v7767 = vpack.c.bf16 %v7759, %v7759
        %v7768 = vpack.c.bf16 %v7760, %v7760
        %7769 = vrot.lane.b32.xlu0 %v461, 16
        %v7770 = vpop.permute.xlu0 %7769
        %v7772 = vsel %vm854, %v7761, 0
        %v7775 = vsel %vm954, %v7770, 0
        %7777 = vmatprep.subr.bf16.mxu0 0
        %7778 = vmatpush1.bf16.msra.mxu0 %v7775
        %7779 = vmatprep.subr.bf16.mxu0 0
        %7780 = vmatpush1.bf16.msra.mxu0 0
        %7781 = vmatprep.subr.bf16.mxu0 0
        %7782 = vmatpush1.bf16.msra.mxu0 0
        %7783 = vmatprep.subr.bf16.mxu0 0
        %7784 = vmatpush1.bf16.msra.mxu0 0
        %7785 = vmatprep.subr.bf16.mxu0 0
        %7786 = vmatpush1.bf16.msra.mxu0 0
        %7787 = vmatprep.subr.bf16.mxu0 0
        %7788 = vmatpush1.bf16.msra.mxu0 0
        %7789 = vmatprep.subr.bf16.mxu0 0
        %7790 = vmatpush1.bf16.msra.mxu0 0
        %7791 = vmatprep.subr.bf16.mxu0 0
        %7792 = vmatpush1.bf16.msra.mxu0 0
        %7793 = vmatprep.subr.bf16.mxu0 0
        %7794 = vmatpush1.bf16.msra.mxu0 0
        %7795 = vmatprep.subr.bf16.mxu0 0
        %7796 = vmatpush1.bf16.msra.mxu0 0
        %7797 = vmatprep.subr.bf16.mxu0 0
        %7798 = vmatpush1.bf16.msra.mxu0 0
        %7799 = vmatprep.subr.bf16.mxu0 0
        %7800 = vmatpush1.bf16.msra.mxu0 0
        %7801 = vmatprep.subr.bf16.mxu0 0
        %7802 = vmatpush1.bf16.msra.mxu0 0
        %7803 = vmatprep.subr.bf16.mxu0 0
        %7804 = vmatpush1.bf16.msra.mxu0 0
        %7805 = vmatprep.subr.bf16.mxu0 0
        %7806 = vmatpush1.bf16.msra.mxu0 0
        %7807 = vmatprep.subr.bf16.mxu0 0
        %7808 = vmatpush1.bf16.msra.mxu0 0
        %7809 = vmatprep.mubr.bf16.mxu0 0
        %7810 = vmatmul.mubr.bf16.gmra.mrb[0].mxu0 %v7772
        %v7811 = vpop.f32.mrb[0].mxu0
        %v7812 = vadd.f32 0.0, %v7811
        %v7813 = vpop.f32.mrb[0].mxu0
        %v7814 = vpop.f32.mrb[0].mxu0
        %v7815 = vpop.f32.mrb[0].mxu0
        %7816 = vdwg.mxu0
        %7817 = vrot.lane.b32.xlu0 %v462, 16
        %v7818 = vpop.permute.xlu0 %7817
        %v7820 = vsel %vm854, %v7762, 0
        %v7823 = vsel %vm954, %v7818, 0
        %7825 = vmatprep.subr.bf16.mxu0 0
        %7826 = vmatpush1.bf16.msra.mxu0 %v7823
        %7827 = vmatprep.subr.bf16.mxu0 0
        %7828 = vmatpush1.bf16.msra.mxu0 0
        %7829 = vmatprep.subr.bf16.mxu0 0
        %7830 = vmatpush1.bf16.msra.mxu0 0
        %7831 = vmatprep.subr.bf16.mxu0 0
        %7832 = vmatpush1.bf16.msra.mxu0 0
        %7833 = vmatprep.subr.bf16.mxu0 0
        %7834 = vmatpush1.bf16.msra.mxu0 0
        %7835 = vmatprep.subr.bf16.mxu0 0
        %7836 = vmatpush1.bf16.msra.mxu0 0
        %7837 = vmatprep.subr.bf16.mxu0 0
        %7838 = vmatpush1.bf16.msra.mxu0 0
        %7839 = vmatprep.subr.bf16.mxu0 0
        %7840 = vmatpush1.bf16.msra.mxu0 0
        %7841 = vmatprep.subr.bf16.mxu0 0
        %7842 = vmatpush1.bf16.msra.mxu0 0
        %7843 = vmatprep.subr.bf16.mxu0 0
        %7844 = vmatpush1.bf16.msra.mxu0 0
        %7845 = vmatprep.subr.bf16.mxu0 0
        %7846 = vmatpush1.bf16.msra.mxu0 0
        %7847 = vmatprep.subr.bf16.mxu0 0
        %7848 = vmatpush1.bf16.msra.mxu0 0
        %7849 = vmatprep.subr.bf16.mxu0 0
        %7850 = vmatpush1.bf16.msra.mxu0 0
        %7851 = vmatprep.subr.bf16.mxu0 0
        %7852 = vmatpush1.bf16.msra.mxu0 0
        %7853 = vmatprep.subr.bf16.mxu0 0
        %7854 = vmatpush1.bf16.msra.mxu0 0
        %7855 = vmatprep.subr.bf16.mxu0 0
        %7856 = vmatpush1.bf16.msra.mxu0 0
        %7857 = vmatprep.mubr.bf16.mxu0 0
        %7858 = vmatmul.mubr.bf16.gmra.mrb[0].mxu0 %v7820
        %v7859 = vpop.f32.mrb[0].mxu0
        %v7860 = vadd.f32 0.0, %v7859
        %v7861 = vpop.f32.mrb[0].mxu0
        %v7862 = vpop.f32.mrb[0].mxu0
        %v7863 = vpop.f32.mrb[0].mxu0
        %7864 = vdwg.mxu0
        %7865 = vrot.lane.b32.xlu0 %v463, 16
        %v7866 = vpop.permute.xlu0 %7865
        %v7868 = vsel %vm854, %v7763, 0
        %v7871 = vsel %vm954, %v7866, 0
        %7873 = vmatprep.subr.bf16.mxu0 0
        %7874 = vmatpush1.bf16.msra.mxu0 %v7871
        %7875 = vmatprep.subr.bf16.mxu0 0
        %7876 = vmatpush1.bf16.msra.mxu0 0
        %7877 = vmatprep.subr.bf16.mxu0 0
        %7878 = vmatpush1.bf16.msra.mxu0 0
        %7879 = vmatprep.subr.bf16.mxu0 0
        %7880 = vmatpush1.bf16.msra.mxu0 0
        %7881 = vmatprep.subr.bf16.mxu0 0
        %7882 = vmatpush1.bf16.msra.mxu0 0
        %7883 = vmatprep.subr.bf16.mxu0 0
        %7884 = vmatpush1.bf16.msra.mxu0 0
        %7885 = vmatprep.subr.bf16.mxu0 0
        %7886 = vmatpush1.bf16.msra.mxu0 0
        %7887 = vmatprep.subr.bf16.mxu0 0
        %7888 = vmatpush1.bf16.msra.mxu0 0
        %7889 = vmatprep.subr.bf16.mxu0 0
        %7890 = vmatpush1.bf16.msra.mxu0 0
        %7891 = vmatprep.subr.bf16.mxu0 0
        %7892 = vmatpush1.bf16.msra.mxu0 0
        %7893 = vmatprep.subr.bf16.mxu0 0
        %7894 = vmatpush1.bf16.msra.mxu0 0
        %7895 = vmatprep.subr.bf16.mxu0 0
        %7896 = vmatpush1.bf16.msra.mxu0 0
        %7897 = vmatprep.subr.bf16.mxu0 0
        %7898 = vmatpush1.bf16.msra.mxu0 0
        %7899 = vmatprep.subr.bf16.mxu0 0
        %7900 = vmatpush1.bf16.msra.mxu0 0
        %7901 = vmatprep.subr.bf16.mxu0 0
        %7902 = vmatpush1.bf16.msra.mxu0 0
        %7903 = vmatprep.subr.bf16.mxu0 0
        %7904 = vmatpush1.bf16.msra.mxu0 0
        %7905 = vmatprep.mubr.bf16.mxu0 0
        %7906 = vmatmul.mubr.bf16.gmra.mrb[0].mxu0 %v7868
        %v7907 = vpop.f32.mrb[0].mxu0
        %v7908 = vadd.f32 0.0, %v7907
        %v7909 = vpop.f32.mrb[0].mxu0
        %v7910 = vpop.f32.mrb[0].mxu0
        %v7911 = vpop.f32.mrb[0].mxu0
        %7912 = vdwg.mxu0
        %7913 = vrot.lane.b32.xlu0 %v464, 16
        %v7914 = vpop.permute.xlu0 %7913
        %v7916 = vsel %vm854, %v7764, 0
        %v7919 = vsel %vm954, %v7914, 0
        %7921 = vmatprep.subr.bf16.mxu0 0
        %7922 = vmatpush1.bf16.msra.mxu0 %v7919
        %7923 = vmatprep.subr.bf16.mxu0 0
        %7924 = vmatpush1.bf16.msra.mxu0 0
        %7925 = vmatprep.subr.bf16.mxu0 0
        %7926 = vmatpush1.bf16.msra.mxu0 0
        %7927 = vmatprep.subr.bf16.mxu0 0
        %7928 = vmatpush1.bf16.msra.mxu0 0
        %7929 = vmatprep.subr.bf16.mxu0 0
        %7930 = vmatpush1.bf16.msra.mxu0 0
        %7931 = vmatprep.subr.bf16.mxu0 0
        %7932 = vmatpush1.bf16.msra.mxu0 0
        %7933 = vmatprep.subr.bf16.mxu0 0
        %7934 = vmatpush1.bf16.msra.mxu0 0
        %7935 = vmatprep.subr.bf16.mxu0 0
        %7936 = vmatpush1.bf16.msra.mxu0 0
        %7937 = vmatprep.subr.bf16.mxu0 0
        %7938 = vmatpush1.bf16.msra.mxu0 0
        %7939 = vmatprep.subr.bf16.mxu0 0
        %7940 = vmatpush1.bf16.msra.mxu0 0
        %7941 = vmatprep.subr.bf16.mxu0 0
        %7942 = vmatpush1.bf16.msra.mxu0 0
        %7943 = vmatprep.subr.bf16.mxu0 0
        %7944 = vmatpush1.bf16.msra.mxu0 0
        %7945 = vmatprep.subr.bf16.mxu0 0
        %7946 = vmatpush1.bf16.msra.mxu0 0
        %7947 = vmatprep.subr.bf16.mxu0 0
        %7948 = vmatpush1.bf16.msra.mxu0 0
        %7949 = vmatprep.subr.bf16.mxu0 0
        %7950 = vmatpush1.bf16.msra.mxu0 0
        %7951 = vmatprep.subr.bf16.mxu0 0
        %7952 = vmatpush1.bf16.msra.mxu0 0
        %7953 = vmatprep.mubr.bf16.mxu0 0
        %7954 = vmatmul.mubr.bf16.gmra.mrb[0].mxu0 %v7916
        %v7955 = vpop.f32.mrb[0].mxu0
        %v7956 = vadd.f32 0.0, %v7955
        %v7957 = vpop.f32.mrb[0].mxu0
        %v7958 = vpop.f32.mrb[0].mxu0
        %v7959 = vpop.f32.mrb[0].mxu0
        %7960 = vdwg.mxu0
        %7961 = vrot.lane.b32.xlu0 %v465, 16
        %v7962 = vpop.permute.xlu0 %7961
        %v7964 = vsel %vm854, %v7765, 0
        %v7967 = vsel %vm954, %v7962, 0
        %7969 = vmatprep.subr.bf16.mxu0 0
        %7970 = vmatpush1.bf16.msra.mxu0 %v7967
        %7971 = vmatprep.subr.bf16.mxu0 0
        %7972 = vmatpush1.bf16.msra.mxu0 0
        %7973 = vmatprep.subr.bf16.mxu0 0
        %7974 = vmatpush1.bf16.msra.mxu0 0
        %7975 = vmatprep.subr.bf16.mxu0 0
        %7976 = vmatpush1.bf16.msra.mxu0 0
        %7977 = vmatprep.subr.bf16.mxu0 0
        %7978 = vmatpush1.bf16.msra.mxu0 0
        %7979 = vmatprep.subr.bf16.mxu0 0
        %7980 = vmatpush1.bf16.msra.mxu0 0
        %7981 = vmatprep.subr.bf16.mxu0 0
        %7982 = vmatpush1.bf16.msra.mxu0 0
        %7983 = vmatprep.subr.bf16.mxu0 0
        %7984 = vmatpush1.bf16.msra.mxu0 0
        %7985 = vmatprep.subr.bf16.mxu0 0
        %7986 = vmatpush1.bf16.msra.mxu0 0
        %7987 = vmatprep.subr.bf16.mxu0 0
        %7988 = vmatpush1.bf16.msra.mxu0 0
        %7989 = vmatprep.subr.bf16.mxu0 0
        %7990 = vmatpush1.bf16.msra.mxu0 0
        %7991 = vmatprep.subr.bf16.mxu0 0
        %7992 = vmatpush1.bf16.msra.mxu0 0
        %7993 = vmatprep.subr.bf16.mxu0 0
        %7994 = vmatpush1.bf16.msra.mxu0 0
        %7995 = vmatprep.subr.bf16.mxu0 0
        %7996 = vmatpush1.bf16.msra.mxu0 0
        %7997 = vmatprep.subr.bf16.mxu0 0
        %7998 = vmatpush1.bf16.msra.mxu0 0
        %7999 = vmatprep.subr.bf16.mxu0 0
        %8000 = vmatpush1.bf16.msra.mxu0 0
        %8001 = vmatprep.mubr.bf16.mxu0 0
        %8002 = vmatmul.mubr.bf16.gmra.mrb[0].mxu0 %v7964
        %v8003 = vpop.f32.mrb[0].mxu0
        %v8004 = vadd.f32 0.0, %v8003
        %v8005 = vpop.f32.mrb[0].mxu0
        %v8006 = vpop.f32.mrb[0].mxu0
        %v8007 = vpop.f32.mrb[0].mxu0
        %8008 = vdwg.mxu0
        %8009 = vrot.lane.b32.xlu0 %v466, 16
        %v8010 = vpop.permute.xlu0 %8009
        %v8012 = vsel %vm854, %v7766, 0
        %v8015 = vsel %vm954, %v8010, 0
        %8017 = vmatprep.subr.bf16.mxu0 0
        %8018 = vmatpush1.bf16.msra.mxu0 %v8015
        %8019 = vmatprep.subr.bf16.mxu0 0
        %8020 = vmatpush1.bf16.msra.mxu0 0
        %8021 = vmatprep.subr.bf16.mxu0 0
        %8022 = vmatpush1.bf16.msra.mxu0 0
        %8023 = vmatprep.subr.bf16.mxu0 0
        %8024 = vmatpush1.bf16.msra.mxu0 0
        %8025 = vmatprep.subr.bf16.mxu0 0
        %8026 = vmatpush1.bf16.msra.mxu0 0
        %8027 = vmatprep.subr.bf16.mxu0 0
        %8028 = vmatpush1.bf16.msra.mxu0 0
        %8029 = vmatprep.subr.bf16.mxu0 0
        %8030 = vmatpush1.bf16.msra.mxu0 0
        %8031 = vmatprep.subr.bf16.mxu0 0
        %8032 = vmatpush1.bf16.msra.mxu0 0
        %8033 = vmatprep.subr.bf16.mxu0 0
        %8034 = vmatpush1.bf16.msra.mxu0 0
        %8035 = vmatprep.subr.bf16.mxu0 0
        %8036 = vmatpush1.bf16.msra.mxu0 0
        %8037 = vmatprep.subr.bf16.mxu0 0
        %8038 = vmatpush1.bf16.msra.mxu0 0
        %8039 = vmatprep.subr.bf16.mxu0 0
        %8040 = vmatpush1.bf16.msra.mxu0 0
        %8041 = vmatprep.subr.bf16.mxu0 0
        %8042 = vmatpush1.bf16.msra.mxu0 0
        %8043 = vmatprep.subr.bf16.mxu0 0
        %8044 = vmatpush1.bf16.msra.mxu0 0
        %8045 = vmatprep.subr.bf16.mxu0 0
        %8046 = vmatpush1.bf16.msra.mxu0 0
        %8047 = vmatprep.subr.bf16.mxu0 0
        %8048 = vmatpush1.bf16.msra.mxu0 0
        %8049 = vmatprep.mubr.bf16.mxu0 0
        %8050 = vmatmul.mubr.bf16.gmra.mrb[0].mxu0 %v8012
        %v8051 = vpop.f32.mrb[0].mxu0
        %v8052 = vadd.f32 0.0, %v8051
        %v8053 = vpop.f32.mrb[0].mxu0
        %v8054 = vpop.f32.mrb[0].mxu0
        %v8055 = vpop.f32.mrb[0].mxu0
        %8056 = vdwg.mxu0
        %8057 = vrot.lane.b32.xlu0 %v467, 16
        %v8058 = vpop.permute.xlu0 %8057
        %v8060 = vsel %vm854, %v7767, 0
        %v8063 = vsel %vm954, %v8058, 0
        %8065 = vmatprep.subr.bf16.mxu0 0
        %8066 = vmatpush1.bf16.msra.mxu0 %v8063
        %8067 = vmatprep.subr.bf16.mxu0 0
        %8068 = vmatpush1.bf16.msra.mxu0 0
        %8069 = vmatprep.subr.bf16.mxu0 0
        %8070 = vmatpush1.bf16.msra.mxu0 0
        %8071 = vmatprep.subr.bf16.mxu0 0
        %8072 = vmatpush1.bf16.msra.mxu0 0
        %8073 = vmatprep.subr.bf16.mxu0 0
        %8074 = vmatpush1.bf16.msra.mxu0 0
        %8075 = vmatprep.subr.bf16.mxu0 0
        %8076 = vmatpush1.bf16.msra.mxu0 0
        %8077 = vmatprep.subr.bf16.mxu0 0
        %8078 = vmatpush1.bf16.msra.mxu0 0
        %8079 = vmatprep.subr.bf16.mxu0 0
        %8080 = vmatpush1.bf16.msra.mxu0 0
        %8081 = vmatprep.subr.bf16.mxu0 0
        %8082 = vmatpush1.bf16.msra.mxu0 0
        %8083 = vmatprep.subr.bf16.mxu0 0
        %8084 = vmatpush1.bf16.msra.mxu0 0
        %8085 = vmatprep.subr.bf16.mxu0 0
        %8086 = vmatpush1.bf16.msra.mxu0 0
        %8087 = vmatprep.subr.bf16.mxu0 0
        %8088 = vmatpush1.bf16.msra.mxu0 0
        %8089 = vmatprep.subr.bf16.mxu0 0
        %8090 = vmatpush1.bf16.msra.mxu0 0
        %8091 = vmatprep.subr.bf16.mxu0 0
        %8092 = vmatpush1.bf16.msra.mxu0 0
        %8093 = vmatprep.subr.bf16.mxu0 0
        %8094 = vmatpush1.bf16.msra.mxu0 0
        %8095 = vmatprep.subr.bf16.mxu0 0
        %8096 = vmatpush1.bf16.msra.mxu0 0
        %8097 = vmatprep.mubr.bf16.mxu0 0
        %8098 = vmatmul.mubr.bf16.gmra.mrb[0].mxu0 %v8060
        %v8099 = vpop.f32.mrb[0].mxu0
        %v8100 = vadd.f32 0.0, %v8099
        %v8101 = vpop.f32.mrb[0].mxu0
        %v8102 = vpop.f32.mrb[0].mxu0
        %v8103 = vpop.f32.mrb[0].mxu0
        %8104 = vdwg.mxu0
        %8105 = vrot.lane.b32.xlu0 %v468, 16
        %v8106 = vpop.permute.xlu0 %8105
        %v8108 = vsel %vm854, %v7768, 0
        %v8111 = vsel %vm954, %v8106, 0
        %8113 = vmatprep.subr.bf16.mxu0 0
        %8114 = vmatpush1.bf16.msra.mxu0 %v8111
        %8115 = vmatprep.subr.bf16.mxu0 0
        %8116 = vmatpush1.bf16.msra.mxu0 0
        %8117 = vmatprep.subr.bf16.mxu0 0
        %8118 = vmatpush1.bf16.msra.mxu0 0
        %8119 = vmatprep.subr.bf16.mxu0 0
        %8120 = vmatpush1.bf16.msra.mxu0 0
        %8121 = vmatprep.subr.bf16.mxu0 0
        %8122 = vmatpush1.bf16.msra.mxu0 0
        %8123 = vmatprep.subr.bf16.mxu0 0
        %8124 = vmatpush1.bf16.msra.mxu0 0
        %8125 = vmatprep.subr.bf16.mxu0 0
        %8126 = vmatpush1.bf16.msra.mxu0 0
        %8127 = vmatprep.subr.bf16.mxu0 0
        %8128 = vmatpush1.bf16.msra.mxu0 0
        %8129 = vmatprep.subr.bf16.mxu0 0
        %8130 = vmatpush1.bf16.msra.mxu0 0
        %8131 = vmatprep.subr.bf16.mxu0 0
        %8132 = vmatpush1.bf16.msra.mxu0 0
        %8133 = vmatprep.subr.bf16.mxu0 0
        %8134 = vmatpush1.bf16.msra.mxu0 0
        %8135 = vmatprep.subr.bf16.mxu0 0
        %8136 = vmatpush1.bf16.msra.mxu0 0
        %8137 = vmatprep.subr.bf16.mxu0 0
        %8138 = vmatpush1.bf16.msra.mxu0 0
        %8139 = vmatprep.subr.bf16.mxu0 0
        %8140 = vmatpush1.bf16.msra.mxu0 0
        %8141 = vmatprep.subr.bf16.mxu0 0
        %8142 = vmatpush1.bf16.msra.mxu0 0
        %8143 = vmatprep.subr.bf16.mxu0 0
        %8144 = vmatpush1.bf16.msra.mxu0 0
        %8145 = vmatprep.mubr.bf16.mxu0 0
        %8146 = vmatmul.mubr.bf16.gmra.mrb[0].mxu0 %v8108
        %v8147 = vpop.f32.mrb[0].mxu0
        %v8148 = vadd.f32 0.0, %v8147
        %v8149 = vpop.f32.mrb[0].mxu0
        %v8150 = vpop.f32.mrb[0].mxu0
        %v8151 = vpop.f32.mrb[0].mxu0
        %8152 = vdwg.mxu0
        %v8153 = vpack.c.bf16 %v7860, %v7812
        %v8154 = vpack.c.bf16 %v7956, %v7908
        %v8155 = vpack.c.bf16 %v8052, %v8004
        %v8156 = vpack.c.bf16 %v8148, %v8100
        %v8159 = vunpack.c.l.b16 %v483
        %v8160 = vunpack.c.l.b16 %v484
        %v8161 = vpack.c.b16 %v8160, %v8159
        %v8164 = vsel %vm485, %v8153, 0
        %v8167 = vsel %vm485, %v8154, 0
        %v8170 = vsel %vm485, %v8155, 0
        %v8173 = vsel %vm485, %v8156, 0
        %8175 = vmatprep.subr.bf16.mxu0 0
        %8176 = vmatpush1.bf16.msra.mxu0 %v8161
        %8177 = vmatprep.subr.bf16.mxu0 0
        %8178 = vmatpush1.bf16.msra.mxu0 0
        %8179 = vmatprep.subr.bf16.mxu0 0
        %8180 = vmatpush1.bf16.msra.mxu0 0
        %8181 = vmatprep.subr.bf16.mxu0 0
        %8182 = vmatpush1.bf16.msra.mxu0 0
        %8183 = vmatprep.subr.bf16.mxu0 0
        %8184 = vmatpush1.bf16.msra.mxu0 0
        %8185 = vmatprep.subr.bf16.mxu0 0
        %8186 = vmatpush1.bf16.msra.mxu0 0
        %8187 = vmatprep.subr.bf16.mxu0 0
        %8188 = vmatpush1.bf16.msra.mxu0 0
        %8189 = vmatprep.subr.bf16.mxu0 0
        %8190 = vmatpush1.bf16.msra.mxu0 0
        %8191 = vmatprep.subr.bf16.mxu0 0
        %8192 = vmatpush1.bf16.msra.mxu0 0
        %8193 = vmatprep.subr.bf16.mxu0 0
        %8194 = vmatpush1.bf16.msra.mxu0 0
        %8195 = vmatprep.subr.bf16.mxu0 0
        %8196 = vmatpush1.bf16.msra.mxu0 0
        %8197 = vmatprep.subr.bf16.mxu0 0
        %8198 = vmatpush1.bf16.msra.mxu0 0
        %8199 = vmatprep.subr.bf16.mxu0 0
        %8200 = vmatpush1.bf16.msra.mxu0 0
        %8201 = vmatprep.subr.bf16.mxu0 0
        %8202 = vmatpush1.bf16.msra.mxu0 0
        %8203 = vmatprep.subr.bf16.mxu0 0
        %8204 = vmatpush1.bf16.msra.mxu0 0
        %8205 = vmatprep.subr.bf16.mxu0 0
        %8206 = vmatpush1.bf16.msra.mxu0 0
        %8207 = vmatprep.mubr.bf16.mxu0 0
        %8208 = vmatmul.mubr.bf16.gmra.mrb[0].mxu0 %v8164
        %v8209 = vpop.f32.mrb[0].mxu0
        %v8210 = vadd.f32 0.0, %v8209
        %v8211 = vpop.f32.mrb[0].mxu0
        %v8212 = vpop.f32.mrb[0].mxu0
        %v8213 = vadd.f32 0.0, %v8212
        %v8214 = vpop.f32.mrb[0].mxu0
        %8215 = vmatprep.mubr.bf16.mxu0 0
        %8216 = vmatmul.mubr.bf16.gmra.mrb[0].mxu0 %v8167
        %v8217 = vpop.f32.mrb[0].mxu0
        %v8218 = vadd.f32 0.0, %v8217
        %v8219 = vpop.f32.mrb[0].mxu0
        %v8220 = vpop.f32.mrb[0].mxu0
        %v8221 = vadd.f32 0.0, %v8220
        %v8222 = vpop.f32.mrb[0].mxu0
        %8223 = vmatprep.mubr.bf16.mxu0 0
        %8224 = vmatmul.mubr.bf16.gmra.mrb[0].mxu0 %v8170
        %v8225 = vpop.f32.mrb[0].mxu0
        %v8226 = vadd.f32 0.0, %v8225
        %v8227 = vpop.f32.mrb[0].mxu0
        %v8228 = vpop.f32.mrb[0].mxu0
        %v8229 = vadd.f32 0.0, %v8228
        %v8230 = vpop.f32.mrb[0].mxu0
        %8231 = vmatprep.mubr.bf16.mxu0 0
        %8232 = vmatmul.mubr.bf16.gmra.mrb[0].mxu0 %v8173
        %v8233 = vpop.f32.mrb[0].mxu0
        %v8234 = vadd.f32 0.0, %v8233
        %v8235 = vpop.f32.mrb[0].mxu0
        %v8236 = vpop.f32.mrb[0].mxu0
        %v8237 = vadd.f32 0.0, %v8236
        %v8238 = vpop.f32.mrb[0].mxu0
        %8239 = vdwg.mxu0
        %v8240 = vadd.f32 %v7265, %v8210
        %v8241 = vadd.f32 %v7266, %v8213
        %v8242 = vadd.f32 %v7267, %v8218
        %v8243 = vadd.f32 %v7268, %v8221
        %v8244 = vadd.f32 %v7269, %v8226
        %v8245 = vadd.f32 %v7270, %v8229
        %v8246 = vadd.f32 %v7271, %v8234
        %v8247 = vadd.f32 %v7272, %v8237
        %v8248 = vld [vmem:[%s4] sm:$0x1]
        %v8250 = vlaneseq
        %v8251 = vshrl.u32 %v8250, 7
        %v8252 = vsub.s32 0, %v8251
        %v8253 = vrot.slane %v8248, %v8252
        %v8255 = vadd.f32 %v8240, %v8253
        %v8256 = vadd.f32 %v8241, %v8253
        %v8257 = vadd.f32 %v8242, %v8253
        %v8258 = vadd.f32 %v8243, %v8253
        %v8259 = vadd.f32 %v8244, %v8253
        %v8260 = vadd.f32 %v8245, %v8253
        %v8261 = vadd.f32 %v8246, %v8253
        %v8262 = vadd.f32 %v8247, %v8253
        %v8263 = vpack.c.bf16 %v8255, %v8255
        %v8264 = vpack.c.bf16 %v8256, %v8256
        %v8265 = vpack.c.bf16 %v8257, %v8257
        %v8266 = vpack.c.bf16 %v8258, %v8258
        %v8267 = vpack.c.bf16 %v8259, %v8259
        %v8268 = vpack.c.bf16 %v8260, %v8260
        %v8269 = vpack.c.bf16 %v8261, %v8261
        %v8270 = vpack.c.bf16 %v8262, %v8262
        %8271 = vst [vmem:[%s218] sm:$0xf] %v8263
        %8272 = vst [vmem:[%s218 + $0x4] sm:$0xf] %v8264
        %8273 = vst [vmem:[%s218 + $0x8] sm:$0xf] %v8265
        %8274 = vst [vmem:[%s218 + $0xc] sm:$0xf] %v8266
        %8275 = vst [vmem:[%s218 + $0x10] sm:$0xf] %v8267
        %8276 = vst [vmem:[%s218 + $0x14] sm:$0xf] %v8268
        %8277 = vst [vmem:[%s218 + $0x18] sm:$0xf] %v8269
        %8278 = vst [vmem:[%s218 + $0x1c] sm:$0xf] %v8270
        %s8279 = sand.u32 %s137, 1
        %s8280 = scalar_lea.sflag [#allocation3], %s8279
        %s8281 = sand.u32 %s137, 1
        %s8282 = smul.addr %s8281, 32
        %s8283 = scalar_lea.vmem [#allocation2], %s8282
        // Predicated region
        $region41: #{tpu_custom_call.1} parent=39 // pred_check
          %p8284 = pneg %p147
        $region42: #{tpu_custom_call.1} parent=39 // pred_check_branch
          %8286 = sbr.rel (%p8284) target = $region44
        $region43: #{tpu_custom_call.1} parent=39 // pred_region
          %s8287 = smul.u32 8, %s19
          %s8289 = ssub.s32 512, 512
          %8290 = vsyncadd %s8280, %s8289
          %s8291 = smul.addr %s8287, 64
          %s8292 = scalar_lea.hbm %s5, %s8291
          %s8293 = sshll.u32 %s8283, 4
          %s8294 = int_to_ptr.vmem [resolvable:$true] %s8293
          %8299 = dma.vmem_to_hbm [thread:$0]  %s8294, 512, %s8292, %s8280, 64, 64, 4
        $region44: #{tpu_custom_call.1} parent=39 // pred_fallthru
          _
      $region40: #{tpu_custom_call.1} parent=5 // pred_fallthru
        _
      %p8300 = scmp.le.s32.totalorder 2, %s14
      // Predicated region
      $region45: #{tpu_custom_call.1} parent=5 // pred_check
        %p8301 = pneg %p8300
      $region46: #{tpu_custom_call.1} parent=5 // pred_check_branch
        %8303 = sbr.rel (%p8301) target = $region48
      $region47: #{tpu_custom_call.1} parent=5 // pred_region
        %s8304 = ssub.s32 %s14, 2
        // Predicated region
        $region49: #{tpu_custom_call.1} parent=47 // pred_check
          %p8305 = pneg %p153
        $region50: #{tpu_custom_call.1} parent=47 // pred_check_branch
          %8307 = sbr.rel (%p8305) target = $region52
        $region51: #{tpu_custom_call.1} parent=47 // pred_region
          %s8308 = sand.u32 %s138, 1
          %s8309 = scalar_lea.sflag [#allocation3], %s8308
          %s8310 = sand.u32 %s138, 1
          %s8311 = smul.addr %s8310, 32
          %s8312 = scalar_lea.vmem [#allocation2], %s8311
          %8313 = dma.done %s8309, 512
        $region52: #{tpu_custom_call.1} parent=47 // pred_fallthru
          _
      $region48: #{tpu_custom_call.1} parent=5 // pred_fallthru
        _
    $region6: #{tpu_custom_call.1} parent=1 // loop_footer
      %s18 = sadd.s32 1, %s14
    $region7: #{tpu_custom_call.1} parent=1 // loop_footer_branch
      %13 = sbr.rel target = $region3
    $region8: #{tpu_custom_call.1} parent=1 // loop_exit
      _
    %8314 = vsyncpa [#allocation3], 1
    %s8315 = scalar_lea.sflag [#allocation3], 1
    %8316 = vsyncpa %s8315, 1

</llo_original>
